<compile_context>
chip_gen: v7x
topology: tpu7x:2x2x1
jax: 0.10.0
libtpu: 0.0.40
codegen_flags: <defaults>
</compile_context>

<pallas_src>
import jax
import jax.numpy as jnp
from jax.experimental import pallas as pl
from jax.experimental.pallas import tpu as pltpu

EPS = 1e-5  # nn.InstanceNorm2d default (affine=False, biased variance)


# ----------------------------- Pallas kernel ------------------------------- #

def _instance_norm(y):
    """y: (HW, C) f32 -> per-channel normalized (HW, C). Two-pass biased stats."""
    mean = jnp.mean(y, axis=0, keepdims=True)
    d = y - mean
    var = jnp.mean(d * d, axis=0, keepdims=True)
    return d * jax.lax.rsqrt(var + EPS)


def _residual_block_kernel(x_ref, w1_ref, w2_ref, out_ref, xpad_ref, ypad_ref):
    # x_ref:    (1, H, W, C) f32      unpadded input block (one batch element)
    # w*_ref:   (3, 3C, C)   bf16     conv weights, kh-major, rows = kw*C + cin
    # out_ref:  (1, H, W, C)          output block
    # xpad_ref: (H+2, W+2, C) bf16    VMEM scratch: reflect-padded x
    # ypad_ref: (H+2, W+2, C) bf16    VMEM scratch: reflect-padded intermediate y
    _, H, W, C = out_ref.shape
    HW = H * W
    C3 = 3 * C

    def reflect_edges(pad_ref):
        # rows (reflect, pad=1): padded row 0 <- padded row 2; row H+1 <- row H-1
        pad_ref[pl.ds(0, 1), pl.ds(1, W), :] = pad_ref[pl.ds(2, 1), pl.ds(1, W), :]
        pad_ref[pl.ds(H + 1, 1), pl.ds(1, W), :] = pad_ref[pl.ds(H - 1, 1), pl.ds(1, W), :]
        # cols over ALL rows (fills corners; source cols are already valid there)
        pad_ref[:, pl.ds(0, 1), :] = pad_ref[:, pl.ds(2, 1), :]
        pad_ref[:, pl.ds(W + 1, 1), :] = pad_ref[:, pl.ds(W - 1, 1), :]

    def conv3x3(pad_ref, w_ref):
        # 3 fused-K matmuls: per kh, lane-concat the 3 kw-shifted bf16 slabs
        # sliced straight from the padded VMEM scratch ref.
        acc = None
        for kh in range(3):
            slab = jnp.concatenate(
                [pad_ref[kh:kh + H, kw:kw + W, :] for kw in range(3)], axis=-1)
            p = jnp.dot(slab.reshape(HW, C3), w_ref[kh],
                        preferred_element_type=jnp.float32)
            acc = p if acc is None else acc + p
        return acc                                           # (HW, C) f32

    # ---- reflect-pad x (bf16) into VMEM; conv1 -> InstanceNorm -> ReLU ----
    # (conv biases are exactly cancelled by IN's mean subtraction -> dropped)
    xpad_ref[pl.ds(1, H), pl.ds(1, W), :] = x_ref[0].astype(jnp.bfloat16)
    reflect_edges(xpad_ref)
    y = jnp.maximum(_instance_norm(conv3x3(xpad_ref, w1_ref)), 0.0)

    # ---- reflect-pad y (bf16) into VMEM; conv2 -> InstanceNorm ----
    ypad_ref[pl.ds(1, H), pl.ds(1, W), :] = y.reshape(H, W, C).astype(jnp.bfloat16)
    reflect_edges(ypad_ref)
    z = _instance_norm(conv3x3(ypad_ref, w2_ref))

    # ---- residual add against the exact f32 input block ----
    out_ref[0] = (z.reshape(H, W, C) + x_ref[0]).astype(out_ref.dtype)


# ------------------------------ JAX wrapper --------------------------------- #

def residual_block(x_nchw, params):
    """Fused Pallas implementation of ResidualBlock.forward. x_nchw: (N, C, H, W)."""
    w1, w2 = params                      # HWIO (3,3,C,C); biases are IN no-ops
    N, C, H, W = x_nchw.shape
    Hp, Wp = H + 2, W + 2

    x = jnp.transpose(x_nchw, (0, 2, 3, 1))          # NHWC: channels on lanes

    # kh-major fused weights: (3, 3C, C), row index = kw*C + cin, matching the
    # kernel's kw-order lane concatenation. bf16 for the MXU.
    w1f = w1.reshape(3, 3 * C, C).astype(jnp.bfloat16)
    w2f = w2.reshape(3, 3 * C, C).astype(jnp.bfloat16)

    out = pl.pallas_call(
        _residual_block_kernel,
        out_shape=jax.ShapeDtypeStruct((N, H, W, C), x.dtype),
        grid_spec=pltpu.PrefetchScalarGridSpec(
            num_scalar_prefetch=0,
            grid=(N,),
            in_specs=[
                pl.BlockSpec((1, H, W, C), lambda n: (n, 0, 0, 0)),
                pl.BlockSpec((3, 3 * C, C), lambda n: (0, 0, 0)),
                pl.BlockSpec((3, 3 * C, C), lambda n: (0, 0, 0)),
            ],
            out_specs=pl.BlockSpec((1, H, W, C), lambda n: (n, 0, 0, 0)),
            scratch_shapes=[
                pltpu.VMEM((Hp, Wp, C), jnp.bfloat16),   # reflect-padded x
                pltpu.VMEM((Hp, Wp, C), jnp.bfloat16),   # reflect-padded y
            ],
        ),
        compiler_params=pltpu.CompilerParams(
            dimension_semantics=("parallel",),
            # Fine for v5e/v6e (128 MiB physical); see v7x band-tiling TODO above.
            vmem_limit_bytes=64 * 1024 * 1024,
        ),
    )(x, w1f, w2f)

    return jnp.transpose(out, (0, 3, 1, 2))          # back to NCHW


# --------------------------- reference (pure JAX) --------------------------- #

def _reference(x_nchw, w1, b1, w2, b2):
    """Faithful f32 reference including conv biases (cancelled by InstanceNorm)."""
    def conv(x, w, b):
        xp = jnp.pad(x, ((0, 0), (0, 0), (1, 1), (1, 1)), mode="reflect")
        y = jax.lax.conv_general_dilated(
            xp, w, window_strides=(1, 1), padding="VALID",
            dimension_numbers=("NCHW", "HWIO", "NCHW"))
        return y + b[None, :, None, None]

    def inorm(x):
        m = jnp.mean(x, axis=(2, 3), keepdims=True)
        v = jnp.mean(jnp.square(x - m), axis=(2, 3), keepdims=True)
        return (x - m) * jax.lax.rsqrt(v + EPS)

    y = jnp.maximum(inorm(conv(x_nchw, w1, b1)), 0.0)
    z = inorm(conv(y, w2, b2))
    return x_nchw + z


# --------------------------------- main ------------------------------------ #

if __name__ == "__main__":
    N, C, H, W = 2, 4, 16, 16

    key = jax.random.PRNGKey(0)
    k_w1, k_b1, k_w2, k_b2, k_x = jax.random.split(key, 5)

    # Deterministic synthetic parameters (Conv2d-like uniform init, HWIO layout).
    fan_in = 9 * C
    bound = 1.0 / (fan_in ** 0.5)
    w1 = jax.random.uniform(k_w1, (3, 3, C, C), jnp.float32, -bound, bound)
    b1 = jax.random.uniform(k_b1, (C,), jnp.float32, -bound, bound)
    w2 = jax.random.uniform(k_w2, (3, 3, C, C), jnp.float32, -bound, bound)
    b2 = jax.random.uniform(k_b2, (C,), jnp.float32, -bound, bound)

    x = jax.random.normal(k_x, (N, C, H, W), jnp.float32)

    out = jax.jit(residual_block)(x, (w1, w2))
    out = jax.block_until_ready(out)

    assert out.shape == (N, C, H, W) and out.dtype == jnp.float32

    # Reference keeps the biases: they are exactly cancelled by InstanceNorm's
    # mean subtraction, which is why the Pallas kernel drops them.
    ref = _reference(x, w1, b1, w2, b2)
    max_err = float(jnp.max(jnp.abs(out - ref)))
    if max_err > 5e-2:
        raise AssertionError(f"Pallas output mismatch vs reference, max abs err = {max_err}")

    print("KERNEL_OK")
</pallas_src>

<mosaic_0001>
module attributes {stable_mosaic.version = 11 : i64} {
  func.func @_residual_block_kernel(%arg0: i32, %arg1: memref<1x16x16x4xf32, #tpu.memory_space<vmem>>, %arg2: memref<3x12x4xbf16, #tpu.memory_space<vmem>>, %arg3: memref<3x12x4xbf16, #tpu.memory_space<vmem>>, %arg4: memref<1x16x16x4xf32, #tpu.memory_space<vmem>>, %arg5: memref<18x18x4xbf16, #tpu.memory_space<vmem>>, %arg6: memref<18x18x4xbf16, #tpu.memory_space<vmem>>) attributes {dimension_semantics = [#tpu.dimension_semantics<parallel>], iteration_bounds = array<i64: 2>, scalar_prefetch = 0 : i64, scratch_operands = 2 : i64, tpu.core_type = #tpu.core_type<tc>, window_params = [{transform_indices = @transform_0, window_bounds = array<i64: 1, 16, 16, 4>}, {pipeline_mode = #tpu.pipeline_mode<synchronous>, transform_indices = @transform_1, window_bounds = array<i64: 3, 12, 4>}, {pipeline_mode = #tpu.pipeline_mode<synchronous>, transform_indices = @transform_2, window_bounds = array<i64: 3, 12, 4>}, {transform_indices = @transform_3, window_bounds = array<i64: 1, 16, 16, 4>}]} {
    %c0 = arith.constant 0 : index
    %c0_0 = arith.constant 0 : index
    %c0_1 = arith.constant 0 : index
    %c0_2 = arith.constant 0 : index
    %0 = vector.load %arg1[%c0, %c0_0, %c0_1, %c0_2] : memref<1x16x16x4xf32, #tpu.memory_space<vmem>>, vector<1x16x16x4xf32>
    %1 = vector.shape_cast %0 : vector<1x16x16x4xf32> to vector<16x16x4xf32>
    %2 = arith.truncf %1 : vector<16x16x4xf32> to vector<16x16x4xbf16>
    %c1 = arith.constant 1 : index
    %c1_3 = arith.constant 1 : index
    %c0_4 = arith.constant 0 : index
    %3 = vector.load %arg5[%c1, %c1_3, %c0_4] : memref<18x18x4xbf16, #tpu.memory_space<vmem>>, vector<16x16x4xbf16>
    tpu.vector_store %arg5[%c1, %c1_3, %c0_4], %2 {strides = array<i32>} : memref<18x18x4xbf16, #tpu.memory_space<vmem>>, vector<16x16x4xbf16>,
    %c2 = arith.constant 2 : index
    %c1_5 = arith.constant 1 : index
    %c0_6 = arith.constant 0 : index
    %4 = vector.load %arg5[%c2, %c1_5, %c0_6] : memref<18x18x4xbf16, #tpu.memory_space<vmem>>, vector<1x16x4xbf16>
    %c0_7 = arith.constant 0 : index
    %c1_8 = arith.constant 1 : index
    %c0_9 = arith.constant 0 : index
    %5 = vector.load %arg5[%c0_7, %c1_8, %c0_9] : memref<18x18x4xbf16, #tpu.memory_space<vmem>>, vector<1x16x4xbf16>
    tpu.vector_store %arg5[%c0_7, %c1_8, %c0_9], %4 {strides = array<i32>} : memref<18x18x4xbf16, #tpu.memory_space<vmem>>, vector<1x16x4xbf16>,
    %c15 = arith.constant 15 : index
    %c1_10 = arith.constant 1 : index
    %c0_11 = arith.constant 0 : index
    %6 = vector.load %arg5[%c15, %c1_10, %c0_11] : memref<18x18x4xbf16, #tpu.memory_space<vmem>>, vector<1x16x4xbf16>
    %c17 = arith.constant 17 : index
    %c1_12 = arith.constant 1 : index
    %c0_13 = arith.constant 0 : index
    %7 = vector.load %arg5[%c17, %c1_12, %c0_13] : memref<18x18x4xbf16, #tpu.memory_space<vmem>>, vector<1x16x4xbf16>
    tpu.vector_store %arg5[%c17, %c1_12, %c0_13], %6 {strides = array<i32>} : memref<18x18x4xbf16, #tpu.memory_space<vmem>>, vector<1x16x4xbf16>,
    %c0_14 = arith.constant 0 : index
    %c2_15 = arith.constant 2 : index
    %c0_16 = arith.constant 0 : index
    %8 = vector.load %arg5[%c0_14, %c2_15, %c0_16] : memref<18x18x4xbf16, #tpu.memory_space<vmem>>, vector<18x1x4xbf16>
    %c0_17 = arith.constant 0 : index
    %c0_18 = arith.constant 0 : index
    %c0_19 = arith.constant 0 : index
    %9 = vector.load %arg5[%c0_17, %c0_18, %c0_19] : memref<18x18x4xbf16, #tpu.memory_space<vmem>>, vector<18x1x4xbf16>
    tpu.vector_store %arg5[%c0_17, %c0_18, %c0_19], %8 {strides = array<i32>} : memref<18x18x4xbf16, #tpu.memory_space<vmem>>, vector<18x1x4xbf16>,
    %c0_20 = arith.constant 0 : index
    %c15_21 = arith.constant 15 : index
    %c0_22 = arith.constant 0 : index
    %10 = vector.load %arg5[%c0_20, %c15_21, %c0_22] : memref<18x18x4xbf16, #tpu.memory_space<vmem>>, vector<18x1x4xbf16>
    %c0_23 = arith.constant 0 : index
    %c17_24 = arith.constant 17 : index
    %c0_25 = arith.constant 0 : index
    %11 = vector.load %arg5[%c0_23, %c17_24, %c0_25] : memref<18x18x4xbf16, #tpu.memory_space<vmem>>, vector<18x1x4xbf16>
    tpu.vector_store %arg5[%c0_23, %c17_24, %c0_25], %10 {strides = array<i32>} : memref<18x18x4xbf16, #tpu.memory_space<vmem>>, vector<18x1x4xbf16>,
    %c0_26 = arith.constant 0 : index
    %c0_27 = arith.constant 0 : index
    %c0_28 = arith.constant 0 : index
    %12 = vector.load %arg5[%c0_26, %c0_27, %c0_28] : memref<18x18x4xbf16, #tpu.memory_space<vmem>>, vector<16x16x4xbf16>
    %c0_29 = arith.constant 0 : index
    %c1_30 = arith.constant 1 : index
    %c0_31 = arith.constant 0 : index
    %13 = vector.load %arg5[%c0_29, %c1_30, %c0_31] : memref<18x18x4xbf16, #tpu.memory_space<vmem>>, vector<16x16x4xbf16>
    %c0_32 = arith.constant 0 : index
    %c2_33 = arith.constant 2 : index
    %c0_34 = arith.constant 0 : index
    %14 = vector.load %arg5[%c0_32, %c2_33, %c0_34] : memref<18x18x4xbf16, #tpu.memory_space<vmem>>, vector<16x16x4xbf16>
    %15 = tpu.concatenate %12, %13, %14 in 2 : vector<16x16x4xbf16>, vector<16x16x4xbf16>, vector<16x16x4xbf16> -> vector<16x16x12xbf16>
    %16 = vector.shape_cast %15 : vector<16x16x12xbf16> to vector<256x12xbf16>
    %c0_35 = arith.constant 0 : index
    %c0_36 = arith.constant 0 : index
    %c0_37 = arith.constant 0 : index
    %17 = vector.load %arg2[%c0_35, %c0_36, %c0_37] : memref<3x12x4xbf16, #tpu.memory_space<vmem>>, vector<1x12x4xbf16>
    %18 = vector.shape_cast %17 : vector<1x12x4xbf16> to vector<12x4xbf16>
    %cst = arith.constant dense<0.000000e+00> : vector<256x4xf32>
    %19 = tpu.matmul %16, %18, %cst {dimension_numbers = #tpu.dot_dimension_numbers<[1], [0], [0], [1], [0, 0, 1, 1], [], []>} : vector<256x12xbf16>, vector<12x4xbf16>, vector<256x4xf32> -> vector<256x4xf32>
    %c1_38 = arith.constant 1 : index
    %c0_39 = arith.constant 0 : index
    %c0_40 = arith.constant 0 : index
    %20 = vector.load %arg5[%c1_38, %c0_39, %c0_40] : memref<18x18x4xbf16, #tpu.memory_space<vmem>>, vector<16x16x4xbf16>
    %c1_41 = arith.constant 1 : index
    %c1_42 = arith.constant 1 : index
    %c0_43 = arith.constant 0 : index
    %21 = vector.load %arg5[%c1_41, %c1_42, %c0_43] : memref<18x18x4xbf16, #tpu.memory_space<vmem>>, vector<16x16x4xbf16>
    %c1_44 = arith.constant 1 : index
    %c2_45 = arith.constant 2 : index
    %c0_46 = arith.constant 0 : index
    %22 = vector.load %arg5[%c1_44, %c2_45, %c0_46] : memref<18x18x4xbf16, #tpu.memory_space<vmem>>, vector<16x16x4xbf16>
    %23 = tpu.concatenate %20, %21, %22 in 2 : vector<16x16x4xbf16>, vector<16x16x4xbf16>, vector<16x16x4xbf16> -> vector<16x16x12xbf16>
    %24 = vector.shape_cast %23 : vector<16x16x12xbf16> to vector<256x12xbf16>
    %c1_47 = arith.constant 1 : index
    %c0_48 = arith.constant 0 : index
    %c0_49 = arith.constant 0 : index
    %25 = vector.load %arg2[%c1_47, %c0_48, %c0_49] : memref<3x12x4xbf16, #tpu.memory_space<vmem>>, vector<1x12x4xbf16>
    %26 = vector.shape_cast %25 : vector<1x12x4xbf16> to vector<12x4xbf16>
    %cst_50 = arith.constant dense<0.000000e+00> : vector<256x4xf32>
    %27 = tpu.matmul %24, %26, %cst_50 {dimension_numbers = #tpu.dot_dimension_numbers<[1], [0], [0], [1], [0, 0, 1, 1], [], []>} : vector<256x12xbf16>, vector<12x4xbf16>, vector<256x4xf32> -> vector<256x4xf32>
    %28 = arith.addf %19, %27 : vector<256x4xf32>
    %c2_51 = arith.constant 2 : index
    %c0_52 = arith.constant 0 : index
    %c0_53 = arith.constant 0 : index
    %29 = vector.load %arg5[%c2_51, %c0_52, %c0_53] : memref<18x18x4xbf16, #tpu.memory_space<vmem>>, vector<16x16x4xbf16>
    %c2_54 = arith.constant 2 : index
    %c1_55 = arith.constant 1 : index
    %c0_56 = arith.constant 0 : index
    %30 = vector.load %arg5[%c2_54, %c1_55, %c0_56] : memref<18x18x4xbf16, #tpu.memory_space<vmem>>, vector<16x16x4xbf16>
    %c2_57 = arith.constant 2 : index
    %c2_58 = arith.constant 2 : index
    %c0_59 = arith.constant 0 : index
    %31 = vector.load %arg5[%c2_57, %c2_58, %c0_59] : memref<18x18x4xbf16, #tpu.memory_space<vmem>>, vector<16x16x4xbf16>
    %32 = tpu.concatenate %29, %30, %31 in 2 : vector<16x16x4xbf16>, vector<16x16x4xbf16>, vector<16x16x4xbf16> -> vector<16x16x12xbf16>
    %33 = vector.shape_cast %32 : vector<16x16x12xbf16> to vector<256x12xbf16>
    %c2_60 = arith.constant 2 : index
    %c0_61 = arith.constant 0 : index
    %c0_62 = arith.constant 0 : index
    %34 = vector.load %arg2[%c2_60, %c0_61, %c0_62] : memref<3x12x4xbf16, #tpu.memory_space<vmem>>, vector<1x12x4xbf16>
    %35 = vector.shape_cast %34 : vector<1x12x4xbf16> to vector<12x4xbf16>
    %cst_63 = arith.constant dense<0.000000e+00> : vector<256x4xf32>
    %36 = tpu.matmul %33, %35, %cst_63 {dimension_numbers = #tpu.dot_dimension_numbers<[1], [0], [0], [1], [0, 0, 1, 1], [], []>} : vector<256x12xbf16>, vector<12x4xbf16>, vector<256x4xf32> -> vector<256x4xf32>
    %37 = arith.addf %28, %36 : vector<256x4xf32>
    %cst_64 = arith.constant dense<0.000000e+00> : vector<4xf32>
    %38 = vector.multi_reduction <add>, %37, %cst_64 [0] : vector<256x4xf32> to vector<4xf32>
    %39 = vector.shape_cast %38 : vector<4xf32> to vector<1x4xf32>
    %cst_65 = arith.constant 2.560000e+02 : f32
    %40 = vector.broadcast %cst_65 : f32 to vector<1x4xf32>
    %41 = arith.divf %39, %40 : vector<1x4xf32>
    %42 = vector.broadcast %41 : vector<1x4xf32> to vector<256x4xf32>
    %43 = arith.subf %37, %42 : vector<256x4xf32>
    %44 = arith.mulf %43, %43 : vector<256x4xf32>
    %cst_66 = arith.constant dense<0.000000e+00> : vector<4xf32>
    %45 = vector.multi_reduction <add>, %44, %cst_66 [0] : vector<256x4xf32> to vector<4xf32>
    %46 = vector.shape_cast %45 : vector<4xf32> to vector<1x4xf32>
    %cst_67 = arith.constant 2.560000e+02 : f32
    %47 = vector.broadcast %cst_67 : f32 to vector<1x4xf32>
    %48 = arith.divf %46, %47 : vector<1x4xf32>
    %cst_68 = arith.constant 9.99999974E-6 : f32
    %49 = vector.broadcast %cst_68 : f32 to vector<1x4xf32>
    %50 = arith.addf %48, %49 : vector<1x4xf32>
    %51 = math.rsqrt %50 : vector<1x4xf32>
    %52 = vector.broadcast %51 : vector<1x4xf32> to vector<256x4xf32>
    %53 = arith.mulf %43, %52 : vector<256x4xf32>
    %cst_69 = arith.constant 0.000000e+00 : f32
    %54 = vector.broadcast %cst_69 : f32 to vector<256x4xf32>
    %55 = arith.maximumf %53, %54 : vector<256x4xf32>
    %56 = vector.shape_cast %55 : vector<256x4xf32> to vector<16x16x4xf32>
    %57 = arith.truncf %56 : vector<16x16x4xf32> to vector<16x16x4xbf16>
    %c1_70 = arith.constant 1 : index
    %c1_71 = arith.constant 1 : index
    %c0_72 = arith.constant 0 : index
    %58 = vector.load %arg6[%c1_70, %c1_71, %c0_72] : memref<18x18x4xbf16, #tpu.memory_space<vmem>>, vector<16x16x4xbf16>
    tpu.vector_store %arg6[%c1_70, %c1_71, %c0_72], %57 {strides = array<i32>} : memref<18x18x4xbf16, #tpu.memory_space<vmem>>, vector<16x16x4xbf16>,
    %c2_73 = arith.constant 2 : index
    %c1_74 = arith.constant 1 : index
    %c0_75 = arith.constant 0 : index
    %59 = vector.load %arg6[%c2_73, %c1_74, %c0_75] : memref<18x18x4xbf16, #tpu.memory_space<vmem>>, vector<1x16x4xbf16>
    %c0_76 = arith.constant 0 : index
    %c1_77 = arith.constant 1 : index
    %c0_78 = arith.constant 0 : index
    %60 = vector.load %arg6[%c0_76, %c1_77, %c0_78] : memref<18x18x4xbf16, #tpu.memory_space<vmem>>, vector<1x16x4xbf16>
    tpu.vector_store %arg6[%c0_76, %c1_77, %c0_78], %59 {strides = array<i32>} : memref<18x18x4xbf16, #tpu.memory_space<vmem>>, vector<1x16x4xbf16>,
    %c15_79 = arith.constant 15 : index
    %c1_80 = arith.constant 1 : index
    %c0_81 = arith.constant 0 : index
    %61 = vector.load %arg6[%c15_79, %c1_80, %c0_81] : memref<18x18x4xbf16, #tpu.memory_space<vmem>>, vector<1x16x4xbf16>
    %c17_82 = arith.constant 17 : index
    %c1_83 = arith.constant 1 : index
    %c0_84 = arith.constant 0 : index
    %62 = vector.load %arg6[%c17_82, %c1_83, %c0_84] : memref<18x18x4xbf16, #tpu.memory_space<vmem>>, vector<1x16x4xbf16>
    tpu.vector_store %arg6[%c17_82, %c1_83, %c0_84], %61 {strides = array<i32>} : memref<18x18x4xbf16, #tpu.memory_space<vmem>>, vector<1x16x4xbf16>,
    %c0_85 = arith.constant 0 : index
    %c2_86 = arith.constant 2 : index
    %c0_87 = arith.constant 0 : index
    %63 = vector.load %arg6[%c0_85, %c2_86, %c0_87] : memref<18x18x4xbf16, #tpu.memory_space<vmem>>, vector<18x1x4xbf16>
    %c0_88 = arith.constant 0 : index
    %c0_89 = arith.constant 0 : index
    %c0_90 = arith.constant 0 : index
    %64 = vector.load %arg6[%c0_88, %c0_89, %c0_90] : memref<18x18x4xbf16, #tpu.memory_space<vmem>>, vector<18x1x4xbf16>
    tpu.vector_store %arg6[%c0_88, %c0_89, %c0_90], %63 {strides = array<i32>} : memref<18x18x4xbf16, #tpu.memory_space<vmem>>, vector<18x1x4xbf16>,
    %c0_91 = arith.constant 0 : index
    %c15_92 = arith.constant 15 : index
    %c0_93 = arith.constant 0 : index
    %65 = vector.load %arg6[%c0_91, %c15_92, %c0_93] : memref<18x18x4xbf16, #tpu.memory_space<vmem>>, vector<18x1x4xbf16>
    %c0_94 = arith.constant 0 : index
    %c17_95 = arith.constant 17 : index
    %c0_96 = arith.constant 0 : index
    %66 = vector.load %arg6[%c0_94, %c17_95, %c0_96] : memref<18x18x4xbf16, #tpu.memory_space<vmem>>, vector<18x1x4xbf16>
    tpu.vector_store %arg6[%c0_94, %c17_95, %c0_96], %65 {strides = array<i32>} : memref<18x18x4xbf16, #tpu.memory_space<vmem>>, vector<18x1x4xbf16>,
    %c0_97 = arith.constant 0 : index
    %c0_98 = arith.constant 0 : index
    %c0_99 = arith.constant 0 : index
    %67 = vector.load %arg6[%c0_97, %c0_98, %c0_99] : memref<18x18x4xbf16, #tpu.memory_space<vmem>>, vector<16x16x4xbf16>
    %c0_100 = arith.constant 0 : index
    %c1_101 = arith.constant 1 : index
    %c0_102 = arith.constant 0 : index
    %68 = vector.load %arg6[%c0_100, %c1_101, %c0_102] : memref<18x18x4xbf16, #tpu.memory_space<vmem>>, vector<16x16x4xbf16>
    %c0_103 = arith.constant 0 : index
    %c2_104 = arith.constant 2 : index
    %c0_105 = arith.constant 0 : index
    %69 = vector.load %arg6[%c0_103, %c2_104, %c0_105] : memref<18x18x4xbf16, #tpu.memory_space<vmem>>, vector<16x16x4xbf16>
    %70 = tpu.concatenate %67, %68, %69 in 2 : vector<16x16x4xbf16>, vector<16x16x4xbf16>, vector<16x16x4xbf16> -> vector<16x16x12xbf16>
    %71 = vector.shape_cast %70 : vector<16x16x12xbf16> to vector<256x12xbf16>
    %c0_106 = arith.constant 0 : index
    %c0_107 = arith.constant 0 : index
    %c0_108 = arith.constant 0 : index
    %72 = vector.load %arg3[%c0_106, %c0_107, %c0_108] : memref<3x12x4xbf16, #tpu.memory_space<vmem>>, vector<1x12x4xbf16>
    %73 = vector.shape_cast %72 : vector<1x12x4xbf16> to vector<12x4xbf16>
    %cst_109 = arith.constant dense<0.000000e+00> : vector<256x4xf32>
    %74 = tpu.matmul %71, %73, %cst_109 {dimension_numbers = #tpu.dot_dimension_numbers<[1], [0], [0], [1], [0, 0, 1, 1], [], []>} : vector<256x12xbf16>, vector<12x4xbf16>, vector<256x4xf32> -> vector<256x4xf32>
    %c1_110 = arith.constant 1 : index
    %c0_111 = arith.constant 0 : index
    %c0_112 = arith.constant 0 : index
    %75 = vector.load %arg6[%c1_110, %c0_111, %c0_112] : memref<18x18x4xbf16, #tpu.memory_space<vmem>>, vector<16x16x4xbf16>
    %c1_113 = arith.constant 1 : index
    %c1_114 = arith.constant 1 : index
    %c0_115 = arith.constant 0 : index
    %76 = vector.load %arg6[%c1_113, %c1_114, %c0_115] : memref<18x18x4xbf16, #tpu.memory_space<vmem>>, vector<16x16x4xbf16>
    %c1_116 = arith.constant 1 : index
    %c2_117 = arith.constant 2 : index
    %c0_118 = arith.constant 0 : index
    %77 = vector.load %arg6[%c1_116, %c2_117, %c0_118] : memref<18x18x4xbf16, #tpu.memory_space<vmem>>, vector<16x16x4xbf16>
    %78 = tpu.concatenate %75, %76, %77 in 2 : vector<16x16x4xbf16>, vector<16x16x4xbf16>, vector<16x16x4xbf16> -> vector<16x16x12xbf16>
    %79 = vector.shape_cast %78 : vector<16x16x12xbf16> to vector<256x12xbf16>
    %c1_119 = arith.constant 1 : index
    %c0_120 = arith.constant 0 : index
    %c0_121 = arith.constant 0 : index
    %80 = vector.load %arg3[%c1_119, %c0_120, %c0_121] : memref<3x12x4xbf16, #tpu.memory_space<vmem>>, vector<1x12x4xbf16>
    %81 = vector.shape_cast %80 : vector<1x12x4xbf16> to vector<12x4xbf16>
    %cst_122 = arith.constant dense<0.000000e+00> : vector<256x4xf32>
    %82 = tpu.matmul %79, %81, %cst_122 {dimension_numbers = #tpu.dot_dimension_numbers<[1], [0], [0], [1], [0, 0, 1, 1], [], []>} : vector<256x12xbf16>, vector<12x4xbf16>, vector<256x4xf32> -> vector<256x4xf32>
    %83 = arith.addf %74, %82 : vector<256x4xf32>
    %c2_123 = arith.constant 2 : index
    %c0_124 = arith.constant 0 : index
    %c0_125 = arith.constant 0 : index
    %84 = vector.load %arg6[%c2_123, %c0_124, %c0_125] : memref<18x18x4xbf16, #tpu.memory_space<vmem>>, vector<16x16x4xbf16>
    %c2_126 = arith.constant 2 : index
    %c1_127 = arith.constant 1 : index
    %c0_128 = arith.constant 0 : index
    %85 = vector.load %arg6[%c2_126, %c1_127, %c0_128] : memref<18x18x4xbf16, #tpu.memory_space<vmem>>, vector<16x16x4xbf16>
    %c2_129 = arith.constant 2 : index
    %c2_130 = arith.constant 2 : index
    %c0_131 = arith.constant 0 : index
    %86 = vector.load %arg6[%c2_129, %c2_130, %c0_131] : memref<18x18x4xbf16, #tpu.memory_space<vmem>>, vector<16x16x4xbf16>
    %87 = tpu.concatenate %84, %85, %86 in 2 : vector<16x16x4xbf16>, vector<16x16x4xbf16>, vector<16x16x4xbf16> -> vector<16x16x12xbf16>
    %88 = vector.shape_cast %87 : vector<16x16x12xbf16> to vector<256x12xbf16>
    %c2_132 = arith.constant 2 : index
    %c0_133 = arith.constant 0 : index
    %c0_134 = arith.constant 0 : index
    %89 = vector.load %arg3[%c2_132, %c0_133, %c0_134] : memref<3x12x4xbf16, #tpu.memory_space<vmem>>, vector<1x12x4xbf16>
    %90 = vector.shape_cast %89 : vector<1x12x4xbf16> to vector<12x4xbf16>
    %cst_135 = arith.constant dense<0.000000e+00> : vector<256x4xf32>
    %91 = tpu.matmul %88, %90, %cst_135 {dimension_numbers = #tpu.dot_dimension_numbers<[1], [0], [0], [1], [0, 0, 1, 1], [], []>} : vector<256x12xbf16>, vector<12x4xbf16>, vector<256x4xf32> -> vector<256x4xf32>
    %92 = arith.addf %83, %91 : vector<256x4xf32>
    %cst_136 = arith.constant dense<0.000000e+00> : vector<4xf32>
    %93 = vector.multi_reduction <add>, %92, %cst_136 [0] : vector<256x4xf32> to vector<4xf32>
    %94 = vector.shape_cast %93 : vector<4xf32> to vector<1x4xf32>
    %cst_137 = arith.constant 2.560000e+02 : f32
    %95 = vector.broadcast %cst_137 : f32 to vector<1x4xf32>
    %96 = arith.divf %94, %95 : vector<1x4xf32>
    %97 = vector.broadcast %96 : vector<1x4xf32> to vector<256x4xf32>
    %98 = arith.subf %92, %97 : vector<256x4xf32>
    %99 = arith.mulf %98, %98 : vector<256x4xf32>
    %cst_138 = arith.constant dense<0.000000e+00> : vector<4xf32>
    %100 = vector.multi_reduction <add>, %99, %cst_138 [0] : vector<256x4xf32> to vector<4xf32>
    %101 = vector.shape_cast %100 : vector<4xf32> to vector<1x4xf32>
    %cst_139 = arith.constant 2.560000e+02 : f32
    %102 = vector.broadcast %cst_139 : f32 to vector<1x4xf32>
    %103 = arith.divf %101, %102 : vector<1x4xf32>
    %cst_140 = arith.constant 9.99999974E-6 : f32
    %104 = vector.broadcast %cst_140 : f32 to vector<1x4xf32>
    %105 = arith.addf %103, %104 : vector<1x4xf32>
    %106 = math.rsqrt %105 : vector<1x4xf32>
    %107 = vector.broadcast %106 : vector<1x4xf32> to vector<256x4xf32>
    %108 = arith.mulf %98, %107 : vector<256x4xf32>
    %109 = vector.shape_cast %108 : vector<256x4xf32> to vector<16x16x4xf32>
    %c0_141 = arith.constant 0 : index
    %c0_142 = arith.constant 0 : index
    %c0_143 = arith.constant 0 : index
    %c0_144 = arith.constant 0 : index
    %110 = vector.load %arg1[%c0_141, %c0_142, %c0_143, %c0_144] : memref<1x16x16x4xf32, #tpu.memory_space<vmem>>, vector<1x16x16x4xf32>
    %111 = vector.shape_cast %110 : vector<1x16x16x4xf32> to vector<16x16x4xf32>
    %112 = arith.addf %109, %111 : vector<16x16x4xf32>
    %c0_145 = arith.constant 0 : index
    %c0_146 = arith.constant 0 : index
    %c0_147 = arith.constant 0 : index
    %c0_148 = arith.constant 0 : index
    %113 = vector.load %arg4[%c0_145, %c0_146, %c0_147, %c0_148] : memref<1x16x16x4xf32, #tpu.memory_space<vmem>>, vector<1x16x16x4xf32>
    %114 = vector.shape_cast %113 : vector<1x16x16x4xf32> to vector<16x16x4xf32>
    %115 = vector.shape_cast %112 : vector<16x16x4xf32> to vector<1x16x16x4xf32>
    tpu.vector_store %arg4[%c0_145, %c0_146, %c0_147, %c0_148], %115 {strides = array<i32>} : memref<1x16x16x4xf32, #tpu.memory_space<vmem>>, vector<1x16x16x4xf32>,
    return
  }
  func.func @transform_0(%arg0: i32) -> (i32, i32, i32, i32) {
    %c0_i32 = arith.constant 0 : i32
    %c0_i32_0 = arith.constant 0 : i32
    %c0_i32_1 = arith.constant 0 : i32
    %c0_i32_2 = arith.constant 0 : i32
    return %arg0, %c0_i32, %c0_i32_0, %c0_i32_1 : i32, i32, i32, i32
  }
  func.func @transform_1(%arg0: i32) -> (i32, i32, i32) {
    %c0_i32 = arith.constant 0 : i32
    %c0_i32_0 = arith.constant 0 : i32
    %c0_i32_1 = arith.constant 0 : i32
    %c0_i32_2 = arith.constant 0 : i32
    return %c0_i32, %c0_i32_0, %c0_i32_1 : i32, i32, i32
  }
  func.func @transform_2(%arg0: i32) -> (i32, i32, i32) {
    %c0_i32 = arith.constant 0 : i32
    %c0_i32_0 = arith.constant 0 : i32
    %c0_i32_1 = arith.constant 0 : i32
    %c0_i32_2 = arith.constant 0 : i32
    return %c0_i32, %c0_i32_0, %c0_i32_1 : i32, i32, i32
  }
  func.func @transform_3(%arg0: i32) -> (i32, i32, i32, i32) {
    %c0_i32 = arith.constant 0 : i32
    %c0_i32_0 = arith.constant 0 : i32
    %c0_i32_1 = arith.constant 0 : i32
    %c0_i32_2 = arith.constant 0 : i32
    return %arg0, %c0_i32, %c0_i32_0, %c0_i32_1 : i32, i32, i32, i32
  }
}

</mosaic_0001>

<llo_original>
// kernel: residual_block.1
$region0: #{residual_block.1}
  #allocation0 [shape = 'u32[]', space=smem, size = 0x4, offset = 0x4, fixed_abs, tag = 'smem constant byte address 0x4 - core index']
  #allocation1 [shape = 'u32[144,128]{1,0:T(1,128)}', space=vmem, size = 0x12000, scoped, tag = 'internal scratch']
  #allocation2 [shape = 'bf16[18,18,4]{2,1,0:T(8,128)(2,1)}', space=vmem, size = 0x1b000, scoped, tag = 'scratch operand']
  #allocation3 [shape = 'bf16[18,18,4]{2,1,0:T(8,128)(2,1)}', space=vmem, size = 0x1b000, scoped, tag = 'scratch operand']
  %s0 = inlined_call_operand.hbm [shape: f32[2,16,16,4], index: 0, kind: input, shape index: {}]
  %s1 = inlined_call_operand.hbm [shape: bf16[3,12,4], index: 1, kind: input, shape index: {}]
  %s2 = inlined_call_operand.hbm [shape: bf16[3,12,4], index: 2, kind: input, shape index: {}]
  %s3 = inlined_call_operand.hbm [shape: f32[2,16,16,4], index: 3, kind: output, shape index: {}]
  %s4 = sld [smem:[#allocation0]]
  $region57: #{residual_block.1} parent=0
    _
  %s6 = ssub.s32 1, %s4
  %s7 = scalar_select 0, %s6, %s4
  $region1: #{residual_block.1} parent=0
    #allocation4 [shape = 'u8[262144]{0}', space=vmem, size = 0x40000, scoped, tag = 'input window, operand 0']
    #allocation5 [shape = 's32[2]{0}', space=sflag, size = 0x8, scoped, tag = 'scoped memory for residual_block.1']
    #allocation6 [shape = 's32[2]{0}', space=sflag, size = 0x8, scoped, tag = 'scoped memory for residual_block.1']
    #allocation7 [shape = 'u8[12288]{0}', space=vmem, size = 0x3000, scoped, tag = 'input window, operand 1, single buffered']
    #allocation8 [shape = 's32[1]{0}', space=sflag, size = 0x4, scoped, tag = 'scoped memory for residual_block.1']
    #allocation9 [shape = 'u8[12288]{0}', space=vmem, size = 0x3000, scoped, tag = 'input window, operand 2, single buffered']
    #allocation10 [shape = 'u8[262144]{0}', space=vmem, size = 0x40000, scoped, tag = 'output window, operand 0']
    %8 = vsyncpa [#allocation5], 0
    %s9 = scalar_lea.sflag [#allocation5], 1
    %10 = vsyncpa %s9, 0
    %11 = vsyncpa [#allocation8], 0
    %12 = vsyncpa [#allocation6], 0
    %s13 = scalar_lea.sflag [#allocation6], 1
    %14 = vsyncpa %s13, 0
    loop: start=0, step=1, limit=4
    $region2: #{residual_block.1} parent=1 // loop_pre_header
      _
    $region3: #{residual_block.1} parent=1 // loop_header
      %s16 = sphi 0, %s20
      %p17 = scmp.ge.s32.totalorder %s16, 4
      %s26 = sphi 0, %s28
      %s29 = sphi 0, %s26
      %s30 = sphi 0, %s29
      %s46 = sphi 0, %s30
      %s50 = sphi 0, %s50
      %s52 = sphi 0, %s50
      %s53 = sphi 0, %s52
      %s67 = sphi 0, %s53
      %s71 = sphi 0, %s71
      %s73 = sphi 0, %s71
      %s74 = sphi 0, %s73
      %s88 = sphi 0, %s74
      %s94 = sphi 0, %s96
      %s97 = sphi 0, %s94
      %s98 = sphi 0, %s97
      %s114 = sphi 0, %s98
    $region4: #{residual_block.1} parent=1 // loop_header_branch
      %19 = sbr.rel (%p17) target = $region8
    $region5: #{residual_block.1} parent=1 // loop_body
      %s21 = ssub.s32 %s16, 1
      %s22 = ssub.s32 %s16, 2
      %s23 = sadd.s32 %s16, 1
      %s24 = ssub.s32 %s16, %s23
      %p25 = scmp.eq.s32.totalorder %s24, 0
      %s27 = sadd.s32 %s26, 1
      %s28 = scalar_select %p25, %s26, %s27
      %p31 = pneg %p25
      %p32 = scmp.eq.s32.totalorder %s16, 1
      %p33 = por %p31, %p32
      %p34 = scmp.ne.s32.totalorder %s26, %s29
      %p35 = scmp.eq.s32.totalorder %s16, 0
      %p36 = por %p34, %p35
      %p37 = scmp.ne.s32.totalorder %s26, %s29
      %p38 = scmp.eq.s32.totalorder %s21, 1
      %p39 = por %p37, %p38
      %p40 = scmp.ne.s32.totalorder %s29, %s30
      %p41 = scmp.eq.s32.totalorder %s21, 0
      %p42 = por %p40, %p41
      %p43 = scmp.ne.s32.totalorder %s29, %s30
      %p44 = scmp.eq.s32.totalorder %s22, 1
      %p45 = por %p43, %p44
      %p47 = scmp.ne.s32.totalorder %s30, %s46
      %p48 = scmp.eq.s32.totalorder %s22, 0
      %p49 = por %p47, %p48
      %s51 = sadd.s32 %s50, 1
      %p54 = scmp.eq.s32.totalorder %s16, 1
      %p55 = scmp.ne.s32.totalorder %s50, %s52
      %p56 = scmp.eq.s32.totalorder %s16, 0
      %p57 = por %p55, %p56
      %p58 = scmp.ne.s32.totalorder %s50, %s52
      %p59 = scmp.eq.s32.totalorder %s21, 1
      %p60 = por %p58, %p59
      %p61 = scmp.ne.s32.totalorder %s52, %s53
      %p62 = scmp.eq.s32.totalorder %s21, 0
      %p63 = por %p61, %p62
      %p64 = scmp.ne.s32.totalorder %s52, %s53
      %p65 = scmp.eq.s32.totalorder %s22, 1
      %p66 = por %p64, %p65
      %p68 = scmp.ne.s32.totalorder %s53, %s67
      %p69 = scmp.eq.s32.totalorder %s22, 0
      %p70 = por %p68, %p69
      %s72 = sadd.s32 %s71, 1
      %p75 = scmp.eq.s32.totalorder %s16, 1
      %p76 = scmp.ne.s32.totalorder %s71, %s73
      %p77 = scmp.eq.s32.totalorder %s16, 0
      %p78 = por %p76, %p77
      %p79 = scmp.ne.s32.totalorder %s71, %s73
      %p80 = scmp.eq.s32.totalorder %s21, 1
      %p81 = por %p79, %p80
      %p82 = scmp.ne.s32.totalorder %s73, %s74
      %p83 = scmp.eq.s32.totalorder %s21, 0
      %p84 = por %p82, %p83
      %p85 = scmp.ne.s32.totalorder %s73, %s74
      %p86 = scmp.eq.s32.totalorder %s22, 1
      %p87 = por %p85, %p86
      %p89 = scmp.ne.s32.totalorder %s74, %s88
      %p90 = scmp.eq.s32.totalorder %s22, 0
      %p91 = por %p89, %p90
      %s92 = ssub.s32 %s16, %s23
      %p93 = scmp.eq.s32.totalorder %s92, 0
      %s95 = sadd.s32 %s94, 1
      %s96 = scalar_select %p93, %s94, %s95
      %p99 = pneg %p93
      %p100 = scmp.eq.s32.totalorder %s16, 1
      %p101 = por %p99, %p100
      %p102 = scmp.ne.s32.totalorder %s94, %s97
      %p103 = scmp.eq.s32.totalorder %s16, 0
      %p104 = por %p102, %p103
      %p105 = scmp.ne.s32.totalorder %s94, %s97
      %p106 = scmp.eq.s32.totalorder %s21, 1
      %p107 = por %p105, %p106
      %p108 = scmp.ne.s32.totalorder %s97, %s98
      %p109 = scmp.eq.s32.totalorder %s21, 0
      %p110 = por %p108, %p109
      %p111 = scmp.ne.s32.totalorder %s97, %s98
      %p112 = scmp.eq.s32.totalorder %s22, 1
      %p113 = por %p111, %p112
      %p115 = scmp.ne.s32.totalorder %s98, %s114
      %p116 = scmp.eq.s32.totalorder %s22, 0
      %p117 = por %p115, %p116
      %p118 = scmp.le.s32.totalorder 1, %s16
      %p119 = scmp.lt.s32.totalorder %s16, 3
      %p120 = pnand %p118, %p119
      %p121 = pneg %p120
      // Predicated region
      $region9: #{residual_block.1} parent=5 // pred_check
        _
      $region10: #{residual_block.1} parent=5 // pred_check_branch
        %123 = sbr.rel (%p120) target = $region12
      $region11: #{residual_block.1} parent=5 // pred_region
        %s124 = ssub.s32 %s16, 1
        // Predicated region
        $region13: #{residual_block.1} parent=11 // pred_check
          %p125 = pneg %p63
        $region14: #{residual_block.1} parent=11 // pred_check_branch
          %127 = sbr.rel (%p125) target = $region16
        $region15: #{residual_block.1} parent=11 // pred_region
          %s129 = ssub.s32 384, 384
          %130 = vsyncadd [#allocation8], %s129
          %s131 = sshll.u32 [#allocation7], 4
          %s132 = int_to_ptr.vmem [resolvable:$true] %s131
          %137 = dma.hbm_to_vmem [thread:$0]  %s1, 384, %s132, [#allocation8], 64, 64, 4
        $region16: #{residual_block.1} parent=11 // pred_fallthru
          _
        // Predicated region
        $region17: #{residual_block.1} parent=11 // pred_check
          %p138 = pneg %p84
        $region18: #{residual_block.1} parent=11 // pred_check_branch
          %140 = sbr.rel (%p138) target = $region20
        $region19: #{residual_block.1} parent=11 // pred_region
          %s142 = ssub.s32 384, 384
          %143 = vsyncadd [#allocation8], %s142
          %s144 = sshll.u32 [#allocation9], 4
          %s145 = int_to_ptr.vmem [resolvable:$true] %s144
          %150 = dma.hbm_to_vmem [thread:$0]  %s2, 384, %s145, [#allocation8], 64, 64, 4
        $region20: #{residual_block.1} parent=11 // pred_fallthru
          _
      $region12: #{residual_block.1} parent=5 // pred_fallthru
        _
      %p151 = scmp.lt.s32.totalorder %s16, 2
      // Predicated region
      $region21: #{residual_block.1} parent=5 // pred_check
        %p152 = pneg %p151
      $region22: #{residual_block.1} parent=5 // pred_check_branch
        %154 = sbr.rel (%p152) target = $region24
      $region23: #{residual_block.1} parent=5 // pred_region
        // Predicated region
        $region25: #{residual_block.1} parent=23 // pred_check
          %p155 = pneg %p36
        $region26: #{residual_block.1} parent=23 // pred_check_branch
          %157 = sbr.rel (%p155) target = $region28
        $region27: #{residual_block.1} parent=23 // pred_region
          %s158 = sand.u32 %s26, 1
          %s159 = scalar_lea.sflag [#allocation5], %s158
          %s160 = sand.u32 %s26, 1
          %s161 = smul.addr %s160, 256
          %s162 = scalar_lea.vmem [#allocation4], %s161
          %s164 = ssub.s32 4096, 4096
          %165 = vsyncadd %s159, %s164
          %s166 = smul.addr %s16, 32
          %s167 = smul.addr %s166, 128
          %s168 = scalar_lea.hbm %s0, %s167
          %s169 = sshll.u32 %s162, 4
          %s170 = int_to_ptr.vmem [resolvable:$true] %s169
          %175 = dma.hbm_to_vmem [thread:$0]  %s168, 4096, %s170, %s159, 128, 128, 8
        $region28: #{residual_block.1} parent=23 // pred_fallthru
          _
      $region24: #{residual_block.1} parent=5 // pred_fallthru
        _
      %p176 = scmp.le.s32.totalorder 1, %s16
      %p177 = scmp.lt.s32.totalorder %s16, 3
      %p178 = pnand %p176, %p177
      %p179 = pneg %p178
      // Predicated region
      $region29: #{residual_block.1} parent=5 // pred_check
        _
      $region30: #{residual_block.1} parent=5 // pred_check_branch
        %181 = sbr.rel (%p178) target = $region32
      $region31: #{residual_block.1} parent=5 // pred_region
        %s182 = ssub.s32 %s16, 1
        %s183 = sand.u32 %s29, 1
        %s184 = scalar_lea.sflag [#allocation5], %s183
        %s185 = sand.u32 %s29, 1
        %s186 = smul.addr %s185, 256
        %s187 = scalar_lea.vmem [#allocation4], %s186
        // Predicated region
        $region33: #{residual_block.1} parent=31 // pred_check
          %p188 = pneg %p42
        $region34: #{residual_block.1} parent=31 // pred_check_branch
          %190 = sbr.rel (%p188) target = $region36
        $region35: #{residual_block.1} parent=31 // pred_region
          %191 = dma.done %s184, 4096
        $region36: #{residual_block.1} parent=31 // pred_fallthru
          _
        // Predicated region
        $region37: #{residual_block.1} parent=31 // pred_check
          %p192 = pneg %p63
        $region38: #{residual_block.1} parent=31 // pred_check_branch
          %194 = sbr.rel (%p192) target = $region40
        $region39: #{residual_block.1} parent=31 // pred_region
          %195 = dma.done [#allocation8], 384
        $region40: #{residual_block.1} parent=31 // pred_fallthru
          _
        // Predicated region
        $region41: #{residual_block.1} parent=31 // pred_check
          %p196 = pneg %p84
        $region42: #{residual_block.1} parent=31 // pred_check_branch
          %198 = sbr.rel (%p196) target = $region44
        $region43: #{residual_block.1} parent=31 // pred_region
          %199 = dma.done [#allocation8], 384
        $region44: #{residual_block.1} parent=31 // pred_fallthru
          _
        %s200 = sand.u32 %s29, 1
        %s201 = scalar_lea.sflag [#allocation5], %s200
        %s202 = sand.u32 %s29, 1
        %s203 = smul.addr %s202, 256
        %s204 = scalar_lea.vmem [#allocation4], %s203
        %p205 = pneg %p42
        %p206 = pneg %p39
        %p207 = pneg %p63
        %p208 = pneg %p60
        %p209 = pneg %p84
        %p210 = pneg %p81
        %p211 = pneg %p110
        %p212 = pneg %p107
        %s213 = sand.u32 %s97, 1
        %s214 = scalar_lea.sflag [#allocation6], %s213
        %s215 = sand.u32 %s97, 1
        %s216 = smul.addr %s215, 256
        %s217 = scalar_lea.vmem [#allocation10], %s216
        %v219 = vld [vmem:[%s187] sm:$0xff]
        %v220 = vld [vmem:[%s187 + $0x8] sm:$0xff]
        %v221 = vld [vmem:[%s187 + $0x10] sm:$0xff]
        %v222 = vld [vmem:[%s187 + $0x18] sm:$0xff]
        %v223 = vld [vmem:[%s187 + $0x20] sm:$0xff]
        %v224 = vld [vmem:[%s187 + $0x28] sm:$0xff]
        %v225 = vld [vmem:[%s187 + $0x30] sm:$0xff]
        %v226 = vld [vmem:[%s187 + $0x38] sm:$0xff]
        %v227 = vld [vmem:[%s187 + $0x40] sm:$0xff]
        %v228 = vld [vmem:[%s187 + $0x48] sm:$0xff]
        %v229 = vld [vmem:[%s187 + $0x50] sm:$0xff]
        %v230 = vld [vmem:[%s187 + $0x58] sm:$0xff]
        %v231 = vld [vmem:[%s187 + $0x60] sm:$0xff]
        %v232 = vld [vmem:[%s187 + $0x68] sm:$0xff]
        %v233 = vld [vmem:[%s187 + $0x70] sm:$0xff]
        %v234 = vld [vmem:[%s187 + $0x78] sm:$0xff]
        %v235 = vld [vmem:[%s187 + $0x80] sm:$0xff]
        %v236 = vld [vmem:[%s187 + $0x88] sm:$0xff]
        %v237 = vld [vmem:[%s187 + $0x90] sm:$0xff]
        %v238 = vld [vmem:[%s187 + $0x98] sm:$0xff]
        %v239 = vld [vmem:[%s187 + $0xa0] sm:$0xff]
        %v240 = vld [vmem:[%s187 + $0xa8] sm:$0xff]
        %v241 = vld [vmem:[%s187 + $0xb0] sm:$0xff]
        %v242 = vld [vmem:[%s187 + $0xb8] sm:$0xff]
        %v243 = vld [vmem:[%s187 + $0xc0] sm:$0xff]
        %v244 = vld [vmem:[%s187 + $0xc8] sm:$0xff]
        %v245 = vld [vmem:[%s187 + $0xd0] sm:$0xff]
        %v246 = vld [vmem:[%s187 + $0xd8] sm:$0xff]
        %v247 = vld [vmem:[%s187 + $0xe0] sm:$0xff]
        %v248 = vld [vmem:[%s187 + $0xe8] sm:$0xff]
        %v249 = vld [vmem:[%s187 + $0xf0] sm:$0xff]
        %v250 = vld [vmem:[%s187 + $0xf8] sm:$0xff]
        %v251 = vpack.c.bf16 %v220, %v219
        %v252 = vpack.c.bf16 %v222, %v221
        %v253 = vpack.c.bf16 %v224, %v223
        %v254 = vpack.c.bf16 %v226, %v225
        %v255 = vpack.c.bf16 %v228, %v227
        %v256 = vpack.c.bf16 %v230, %v229
        %v257 = vpack.c.bf16 %v232, %v231
        %v258 = vpack.c.bf16 %v234, %v233
        %v259 = vpack.c.bf16 %v236, %v235
        %v260 = vpack.c.bf16 %v238, %v237
        %v261 = vpack.c.bf16 %v240, %v239
        %v262 = vpack.c.bf16 %v242, %v241
        %v263 = vpack.c.bf16 %v244, %v243
        %v264 = vpack.c.bf16 %v246, %v245
        %v265 = vpack.c.bf16 %v248, %v247
        %v266 = vpack.c.bf16 %v250, %v249
        %v283 = vunpack.c.l.b16 %v251
        %v284 = vunpack.c.h.b16 %v251
        %v285 = vunpack.c.l.b16 %v252
        %v286 = vunpack.c.h.b16 %v252
        %v287 = vunpack.c.l.b16 %v253
        %v288 = vunpack.c.h.b16 %v253
        %v289 = vunpack.c.l.b16 %v254
        %v290 = vunpack.c.h.b16 %v254
        %v291 = vunpack.c.l.b16 %v255
        %v292 = vunpack.c.h.b16 %v255
        %v293 = vunpack.c.l.b16 %v256
        %v294 = vunpack.c.h.b16 %v256
        %v295 = vunpack.c.l.b16 %v257
        %v296 = vunpack.c.h.b16 %v257
        %v297 = vunpack.c.l.b16 %v258
        %v298 = vunpack.c.h.b16 %v258
        %v299 = vunpack.c.l.b16 %v259
        %v300 = vunpack.c.h.b16 %v259
        %v301 = vunpack.c.l.b16 %v260
        %v302 = vunpack.c.h.b16 %v260
        %v303 = vunpack.c.l.b16 %v261
        %v304 = vunpack.c.h.b16 %v261
        %v305 = vunpack.c.l.b16 %v262
        %v306 = vunpack.c.h.b16 %v262
        %v307 = vunpack.c.l.b16 %v263
        %v308 = vunpack.c.h.b16 %v263
        %v309 = vunpack.c.l.b16 %v264
        %v310 = vunpack.c.h.b16 %v264
        %v311 = vunpack.c.l.b16 %v265
        %v312 = vunpack.c.h.b16 %v265
        %v313 = vunpack.c.l.b16 %v266
        %v314 = vunpack.c.h.b16 %v266
        %v315 = vpack.c.b16 %v283, %v283
        %v316 = vpack.c.b16 %v284, %v284
        %v317 = vpack.c.b16 %v285, %v285
        %v318 = vpack.c.b16 %v286, %v286
        %v319 = vpack.c.b16 %v287, %v287
        %v320 = vpack.c.b16 %v288, %v288
        %v321 = vpack.c.b16 %v289, %v289
        %v322 = vpack.c.b16 %v290, %v290
        %v323 = vpack.c.b16 %v291, %v291
        %v324 = vpack.c.b16 %v292, %v292
        %v325 = vpack.c.b16 %v293, %v293
        %v326 = vpack.c.b16 %v294, %v294
        %v327 = vpack.c.b16 %v295, %v295
        %v328 = vpack.c.b16 %v296, %v296
        %v329 = vpack.c.b16 %v297, %v297
        %v330 = vpack.c.b16 %v298, %v298
        %v331 = vpack.c.b16 %v299, %v299
        %v332 = vpack.c.b16 %v300, %v300
        %v333 = vpack.c.b16 %v301, %v301
        %v334 = vpack.c.b16 %v302, %v302
        %v335 = vpack.c.b16 %v303, %v303
        %v336 = vpack.c.b16 %v304, %v304
        %v337 = vpack.c.b16 %v305, %v305
        %v338 = vpack.c.b16 %v306, %v306
        %v339 = vpack.c.b16 %v307, %v307
        %v340 = vpack.c.b16 %v308, %v308
        %v341 = vpack.c.b16 %v309, %v309
        %v342 = vpack.c.b16 %v310, %v310
        %v343 = vpack.c.b16 %v311, %v311
        %v344 = vpack.c.b16 %v312, %v312
        %v345 = vpack.c.b16 %v313, %v313
        %v346 = vpack.c.b16 %v314, %v314
        %vm347 = vsmask.f32 256
        %vm348 = vsmask.f32 4368
        %vm349 = vmor %vm347, %vm348
        %v351 = vshrl.u32 %v315, 16
        %v353 = vrot.slane %v351, 7
        %v354 = vshll.u32 %v315, 16
        %v356 = vor.u32 %v353, %v354
        %v357 = vrot.slane %v353, 4
        %v359 = vshrl.u32 %v316, 16
        %v361 = vrot.slane %v359, 7
        %v362 = vshll.u32 %v316, 16
        %v364 = vor.u32 %v361, %v362
        %v365 = vsel %vm349, %v357, %v364
        %v366 = vrot.slane %v361, 4
        %v368 = vshrl.u32 %v317, 16
        %v370 = vrot.slane %v368, 7
        %v371 = vshll.u32 %v317, 16
        %v373 = vor.u32 %v370, %v371
        %v374 = vrot.slane %v370, 4
        %v376 = vshrl.u32 %v318, 16
        %v378 = vrot.slane %v376, 7
        %v379 = vshll.u32 %v318, 16
        %v381 = vor.u32 %v378, %v379
        %v382 = vsel %vm349, %v374, %v381
        %v383 = vrot.slane %v378, 4
        %v385 = vshrl.u32 %v319, 16
        %v387 = vrot.slane %v385, 7
        %v388 = vshll.u32 %v319, 16
        %v390 = vor.u32 %v387, %v388
        %v391 = vrot.slane %v387, 4
        %v393 = vshrl.u32 %v320, 16
        %v395 = vrot.slane %v393, 7
        %v396 = vshll.u32 %v320, 16
        %v398 = vor.u32 %v395, %v396
        %v399 = vsel %vm349, %v391, %v398
        %v400 = vrot.slane %v395, 4
        %v402 = vshrl.u32 %v321, 16
        %v404 = vrot.slane %v402, 7
        %v405 = vshll.u32 %v321, 16
        %v407 = vor.u32 %v404, %v405
        %v408 = vrot.slane %v404, 4
        %v410 = vshrl.u32 %v322, 16
        %v412 = vrot.slane %v410, 7
        %v413 = vshll.u32 %v322, 16
        %v415 = vor.u32 %v412, %v413
        %v416 = vsel %vm349, %v408, %v415
        %v417 = vrot.slane %v412, 4
        %v419 = vshrl.u32 %v323, 16
        %v421 = vrot.slane %v419, 7
        %v422 = vshll.u32 %v323, 16
        %v424 = vor.u32 %v421, %v422
        %v425 = vrot.slane %v421, 4
        %v427 = vshrl.u32 %v324, 16
        %v429 = vrot.slane %v427, 7
        %v430 = vshll.u32 %v324, 16
        %v432 = vor.u32 %v429, %v430
        %v433 = vsel %vm349, %v425, %v432
        %v434 = vrot.slane %v429, 4
        %v436 = vshrl.u32 %v325, 16
        %v438 = vrot.slane %v436, 7
        %v439 = vshll.u32 %v325, 16
        %v441 = vor.u32 %v438, %v439
        %v442 = vrot.slane %v438, 4
        %v444 = vshrl.u32 %v326, 16
        %v446 = vrot.slane %v444, 7
        %v447 = vshll.u32 %v326, 16
        %v449 = vor.u32 %v446, %v447
        %v450 = vsel %vm349, %v442, %v449
        %v451 = vrot.slane %v446, 4
        %v453 = vshrl.u32 %v327, 16
        %v455 = vrot.slane %v453, 7
        %v456 = vshll.u32 %v327, 16
        %v458 = vor.u32 %v455, %v456
        %v459 = vrot.slane %v455, 4
        %v461 = vshrl.u32 %v328, 16
        %v463 = vrot.slane %v461, 7
        %v464 = vshll.u32 %v328, 16
        %v466 = vor.u32 %v463, %v464
        %v467 = vsel %vm349, %v459, %v466
        %v468 = vrot.slane %v463, 4
        %v470 = vshrl.u32 %v329, 16
        %v472 = vrot.slane %v470, 7
        %v473 = vshll.u32 %v329, 16
        %v475 = vor.u32 %v472, %v473
        %v476 = vrot.slane %v472, 4
        %v478 = vshrl.u32 %v330, 16
        %v480 = vrot.slane %v478, 7
        %v481 = vshll.u32 %v330, 16
        %v483 = vor.u32 %v480, %v481
        %v484 = vsel %vm349, %v476, %v483
        %v485 = vrot.slane %v480, 4
        %v487 = vshrl.u32 %v331, 16
        %v489 = vrot.slane %v487, 7
        %v490 = vshll.u32 %v331, 16
        %v492 = vor.u32 %v489, %v490
        %v493 = vrot.slane %v489, 4
        %v495 = vshrl.u32 %v332, 16
        %v497 = vrot.slane %v495, 7
        %v498 = vshll.u32 %v332, 16
        %v500 = vor.u32 %v497, %v498
        %v501 = vsel %vm349, %v493, %v500
        %v502 = vrot.slane %v497, 4
        %v504 = vshrl.u32 %v333, 16
        %v506 = vrot.slane %v504, 7
        %v507 = vshll.u32 %v333, 16
        %v509 = vor.u32 %v506, %v507
        %v510 = vrot.slane %v506, 4
        %v512 = vshrl.u32 %v334, 16
        %v514 = vrot.slane %v512, 7
        %v515 = vshll.u32 %v334, 16
        %v517 = vor.u32 %v514, %v515
        %v518 = vsel %vm349, %v510, %v517
        %v519 = vrot.slane %v514, 4
        %v521 = vshrl.u32 %v335, 16
        %v523 = vrot.slane %v521, 7
        %v524 = vshll.u32 %v335, 16
        %v526 = vor.u32 %v523, %v524
        %v527 = vrot.slane %v523, 4
        %v529 = vshrl.u32 %v336, 16
        %v531 = vrot.slane %v529, 7
        %v532 = vshll.u32 %v336, 16
        %v534 = vor.u32 %v531, %v532
        %v535 = vsel %vm349, %v527, %v534
        %v536 = vrot.slane %v531, 4
        %v538 = vshrl.u32 %v337, 16
        %v540 = vrot.slane %v538, 7
        %v541 = vshll.u32 %v337, 16
        %v543 = vor.u32 %v540, %v541
        %v544 = vrot.slane %v540, 4
        %v546 = vshrl.u32 %v338, 16
        %v548 = vrot.slane %v546, 7
        %v549 = vshll.u32 %v338, 16
        %v551 = vor.u32 %v548, %v549
        %v552 = vsel %vm349, %v544, %v551
        %v553 = vrot.slane %v548, 4
        %v555 = vshrl.u32 %v339, 16
        %v557 = vrot.slane %v555, 7
        %v558 = vshll.u32 %v339, 16
        %v560 = vor.u32 %v557, %v558
        %v561 = vrot.slane %v557, 4
        %v563 = vshrl.u32 %v340, 16
        %v565 = vrot.slane %v563, 7
        %v566 = vshll.u32 %v340, 16
        %v568 = vor.u32 %v565, %v566
        %v569 = vsel %vm349, %v561, %v568
        %v570 = vrot.slane %v565, 4
        %v572 = vshrl.u32 %v341, 16
        %v574 = vrot.slane %v572, 7
        %v575 = vshll.u32 %v341, 16
        %v577 = vor.u32 %v574, %v575
        %v578 = vrot.slane %v574, 4
        %v580 = vshrl.u32 %v342, 16
        %v582 = vrot.slane %v580, 7
        %v583 = vshll.u32 %v342, 16
        %v585 = vor.u32 %v582, %v583
        %v586 = vsel %vm349, %v578, %v585
        %v587 = vrot.slane %v582, 4
        %v589 = vshrl.u32 %v343, 16
        %v591 = vrot.slane %v589, 7
        %v592 = vshll.u32 %v343, 16
        %v594 = vor.u32 %v591, %v592
        %v595 = vrot.slane %v591, 4
        %v597 = vshrl.u32 %v344, 16
        %v599 = vrot.slane %v597, 7
        %v600 = vshll.u32 %v344, 16
        %v602 = vor.u32 %v599, %v600
        %v603 = vsel %vm349, %v595, %v602
        %v604 = vrot.slane %v599, 4
        %v606 = vshrl.u32 %v345, 16
        %v608 = vrot.slane %v606, 7
        %v609 = vshll.u32 %v345, 16
        %v611 = vor.u32 %v608, %v609
        %v612 = vrot.slane %v608, 4
        %v614 = vshrl.u32 %v346, 16
        %v616 = vrot.slane %v614, 7
        %v617 = vshll.u32 %v346, 16
        %v619 = vor.u32 %v616, %v617
        %v620 = vsel %vm349, %v612, %v619
        %v621 = vrot.slane %v616, 4
        %s670 = scalar_lea.vmem [#allocation2], 12
        %vm671 = vcmask 27648
        %vm672 = vsmask.f32 7938
        %vm673 = vmand %vm671, %vm672
        %v674 = vld [vmem:[%s670] sm:$0xf]
        %v675 = vsel %vm673, %v356, %v674
        %676 = vst [vmem:[%s670] sm:$0xf] %v675
        %vm677 = vcmask 27648
        %678 = vst.msk [vmem:[%s670 + $0x4] sm:$0xf] %vm677, %v365
        %vm679 = vcmask 24576
        %vm680 = vmand %vm679, %vm347
        %v681 = vld [vmem:[%s670 + $0x8] sm:$0x1]
        %v682 = vsel %vm680, %v366, %v681
        %683 = vst [vmem:[%s670 + $0x8] sm:$0x1] %v682
        %v684 = vld [vmem:[%s670 + $0xc] sm:$0xf]
        %v685 = vsel %vm673, %v373, %v684
        %686 = vst [vmem:[%s670 + $0xc] sm:$0xf] %v685
        %687 = vst.msk [vmem:[%s670 + $0x10] sm:$0xf] %vm677, %v382
        %v688 = vld [vmem:[%s670 + $0x14] sm:$0x1]
        %v689 = vsel %vm680, %v383, %v688
        %690 = vst [vmem:[%s670 + $0x14] sm:$0x1] %v689
        %v691 = vld [vmem:[%s670 + $0x18] sm:$0xf]
        %v692 = vsel %vm673, %v390, %v691
        %693 = vst [vmem:[%s670 + $0x18] sm:$0xf] %v692
        %694 = vst.msk [vmem:[%s670 + $0x1c] sm:$0xf] %vm677, %v399
        %v695 = vld [vmem:[%s670 + $0x20] sm:$0x1]
        %v696 = vsel %vm680, %v400, %v695
        %697 = vst [vmem:[%s670 + $0x20] sm:$0x1] %v696
        %v698 = vld [vmem:[%s670 + $0x24] sm:$0xf]
        %v699 = vsel %vm673, %v407, %v698
        %700 = vst [vmem:[%s670 + $0x24] sm:$0xf] %v699
        %701 = vst.msk [vmem:[%s670 + $0x28] sm:$0xf] %vm677, %v416
        %v702 = vld [vmem:[%s670 + $0x2c] sm:$0x1]
        %v703 = vsel %vm680, %v417, %v702
        %704 = vst [vmem:[%s670 + $0x2c] sm:$0x1] %v703
        %v705 = vld [vmem:[%s670 + $0x30] sm:$0xf]
        %v706 = vsel %vm673, %v424, %v705
        %707 = vst [vmem:[%s670 + $0x30] sm:$0xf] %v706
        %708 = vst.msk [vmem:[%s670 + $0x34] sm:$0xf] %vm677, %v433
        %v709 = vld [vmem:[%s670 + $0x38] sm:$0x1]
        %v710 = vsel %vm680, %v434, %v709
        %711 = vst [vmem:[%s670 + $0x38] sm:$0x1] %v710
        %v712 = vld [vmem:[%s670 + $0x3c] sm:$0xf]
        %v713 = vsel %vm673, %v441, %v712
        %714 = vst [vmem:[%s670 + $0x3c] sm:$0xf] %v713
        %715 = vst.msk [vmem:[%s670 + $0x40] sm:$0xf] %vm677, %v450
        %v716 = vld [vmem:[%s670 + $0x44] sm:$0x1]
        %v717 = vsel %vm680, %v451, %v716
        %718 = vst [vmem:[%s670 + $0x44] sm:$0x1] %v717
        %v719 = vld [vmem:[%s670 + $0x48] sm:$0xf]
        %v720 = vsel %vm673, %v458, %v719
        %721 = vst [vmem:[%s670 + $0x48] sm:$0xf] %v720
        %722 = vst.msk [vmem:[%s670 + $0x4c] sm:$0xf] %vm677, %v467
        %v723 = vld [vmem:[%s670 + $0x50] sm:$0x1]
        %v724 = vsel %vm680, %v468, %v723
        %725 = vst [vmem:[%s670 + $0x50] sm:$0x1] %v724
        %v726 = vld [vmem:[%s670 + $0x54] sm:$0xf]
        %v727 = vsel %vm673, %v475, %v726
        %728 = vst [vmem:[%s670 + $0x54] sm:$0xf] %v727
        %729 = vst.msk [vmem:[%s670 + $0x58] sm:$0xf] %vm677, %v484
        %v730 = vld [vmem:[%s670 + $0x5c] sm:$0x1]
        %v731 = vsel %vm680, %v485, %v730
        %732 = vst [vmem:[%s670 + $0x5c] sm:$0x1] %v731
        %v733 = vld [vmem:[%s670 + $0x60] sm:$0xf]
        %v734 = vsel %vm673, %v492, %v733
        %735 = vst [vmem:[%s670 + $0x60] sm:$0xf] %v734
        %736 = vst.msk [vmem:[%s670 + $0x64] sm:$0xf] %vm677, %v501
        %v737 = vld [vmem:[%s670 + $0x68] sm:$0x1]
        %v738 = vsel %vm680, %v502, %v737
        %739 = vst [vmem:[%s670 + $0x68] sm:$0x1] %v738
        %v740 = vld [vmem:[%s670 + $0x6c] sm:$0xf]
        %v741 = vsel %vm673, %v509, %v740
        %742 = vst [vmem:[%s670 + $0x6c] sm:$0xf] %v741
        %743 = vst.msk [vmem:[%s670 + $0x70] sm:$0xf] %vm677, %v518
        %v744 = vld [vmem:[%s670 + $0x74] sm:$0x1]
        %v745 = vsel %vm680, %v519, %v744
        %746 = vst [vmem:[%s670 + $0x74] sm:$0x1] %v745
        %v747 = vld [vmem:[%s670 + $0x78] sm:$0xf]
        %v748 = vsel %vm673, %v526, %v747
        %749 = vst [vmem:[%s670 + $0x78] sm:$0xf] %v748
        %750 = vst.msk [vmem:[%s670 + $0x7c] sm:$0xf] %vm677, %v535
        %v751 = vld [vmem:[%s670 + $0x80] sm:$0x1]
        %v752 = vsel %vm680, %v536, %v751
        %753 = vst [vmem:[%s670 + $0x80] sm:$0x1] %v752
        %v754 = vld [vmem:[%s670 + $0x84] sm:$0xf]
        %v755 = vsel %vm673, %v543, %v754
        %756 = vst [vmem:[%s670 + $0x84] sm:$0xf] %v755
        %757 = vst.msk [vmem:[%s670 + $0x88] sm:$0xf] %vm677, %v552
        %v758 = vld [vmem:[%s670 + $0x8c] sm:$0x1]
        %v759 = vsel %vm680, %v553, %v758
        %760 = vst [vmem:[%s670 + $0x8c] sm:$0x1] %v759
        %v761 = vld [vmem:[%s670 + $0x90] sm:$0xf]
        %v762 = vsel %vm673, %v560, %v761
        %763 = vst [vmem:[%s670 + $0x90] sm:$0xf] %v762
        %764 = vst.msk [vmem:[%s670 + $0x94] sm:$0xf] %vm677, %v569
        %v765 = vld [vmem:[%s670 + $0x98] sm:$0x1]
        %v766 = vsel %vm680, %v570, %v765
        %767 = vst [vmem:[%s670 + $0x98] sm:$0x1] %v766
        %v768 = vld [vmem:[%s670 + $0x9c] sm:$0xf]
        %v769 = vsel %vm673, %v577, %v768
        %770 = vst [vmem:[%s670 + $0x9c] sm:$0xf] %v769
        %771 = vst.msk [vmem:[%s670 + $0xa0] sm:$0xf] %vm677, %v586
        %v772 = vld [vmem:[%s670 + $0xa4] sm:$0x1]
        %v773 = vsel %vm680, %v587, %v772
        %774 = vst [vmem:[%s670 + $0xa4] sm:$0x1] %v773
        %v775 = vld [vmem:[%s670 + $0xa8] sm:$0xf]
        %v776 = vsel %vm673, %v594, %v775
        %777 = vst [vmem:[%s670 + $0xa8] sm:$0xf] %v776
        %778 = vst.msk [vmem:[%s670 + $0xac] sm:$0xf] %vm677, %v603
        %v779 = vld [vmem:[%s670 + $0xb0] sm:$0x1]
        %v780 = vsel %vm680, %v604, %v779
        %781 = vst [vmem:[%s670 + $0xb0] sm:$0x1] %v780
        %v782 = vld [vmem:[%s670 + $0xb4] sm:$0xf]
        %v783 = vsel %vm673, %v611, %v782
        %784 = vst [vmem:[%s670 + $0xb4] sm:$0xf] %v783
        %785 = vst.msk [vmem:[%s670 + $0xb8] sm:$0xf] %vm677, %v620
        %v786 = vld [vmem:[%s670 + $0xbc] sm:$0x1]
        %v787 = vsel %vm680, %v621, %v786
        %788 = vst [vmem:[%s670 + $0xbc] sm:$0x1] %v787
        %s789 = scalar_lea.vmem [#allocation2], 24
        %v790 = vld [vmem:[%s789] sm:$0xf]
        %v791 = vld [vmem:[%s789 + $0x4] sm:$0xf]
        %v792 = vld [vmem:[%s789 + $0x8] sm:$0x1]
        %v793 = vld [vmem:[#allocation2] sm:$0xf]
        %v794 = vsel %vm673, %v790, %v793
        %795 = vst [vmem:[#allocation2] sm:$0xf] %v794
        %796 = vst.msk [vmem:[#allocation2 + $0x4] sm:$0xf] %vm677, %v791
        %v797 = vld [vmem:[#allocation2 + $0x8] sm:$0x1]
        %v798 = vsel %vm680, %v792, %v797
        %799 = vst [vmem:[#allocation2 + $0x8] sm:$0x1] %v798
        %s800 = scalar_lea.vmem [#allocation2], 180
        %v801 = vld [vmem:[%s800] sm:$0xf]
        %v802 = vld [vmem:[%s800 + $0x4] sm:$0xf]
        %v803 = vld [vmem:[%s800 + $0x8] sm:$0x1]
        %s804 = scalar_lea.vmem [#allocation2], 204
        %v805 = vld [vmem:[%s804] sm:$0xf]
        %v806 = vsel %vm673, %v801, %v805
        %807 = vst [vmem:[%s804] sm:$0xf] %v806
        %808 = vst.msk [vmem:[%s804 + $0x4] sm:$0xf] %vm677, %v802
        %v809 = vld [vmem:[%s804 + $0x8] sm:$0x1]
        %v810 = vsel %vm680, %v803, %v809
        %811 = vst [vmem:[%s804 + $0x8] sm:$0x1] %v810
        %v812 = vld [vmem:[#allocation2] sm:$0x2]
        %v813 = vld [vmem:[#allocation2 + $0xc] sm:$0x2]
        %v814 = vld [vmem:[#allocation2 + $0x18] sm:$0x2]
        %v815 = vld [vmem:[#allocation2 + $0x24] sm:$0x2]
        %v816 = vld [vmem:[#allocation2 + $0x30] sm:$0x2]
        %v817 = vld [vmem:[#allocation2 + $0x3c] sm:$0x2]
        %v818 = vld [vmem:[#allocation2 + $0x48] sm:$0x2]
        %v819 = vld [vmem:[#allocation2 + $0x54] sm:$0x2]
        %v820 = vld [vmem:[#allocation2 + $0x60] sm:$0x2]
        %v821 = vld [vmem:[#allocation2 + $0x6c] sm:$0x2]
        %v822 = vld [vmem:[#allocation2 + $0x78] sm:$0x2]
        %v823 = vld [vmem:[#allocation2 + $0x84] sm:$0x2]
        %v824 = vld [vmem:[#allocation2 + $0x90] sm:$0x2]
        %v825 = vld [vmem:[#allocation2 + $0x9c] sm:$0x2]
        %v826 = vld [vmem:[#allocation2 + $0xa8] sm:$0x2]
        %v827 = vld [vmem:[#allocation2 + $0xb4] sm:$0x2]
        %v828 = vld [vmem:[#allocation2 + $0xc0] sm:$0x2]
        %v829 = vld [vmem:[#allocation2 + $0xcc] sm:$0x2]
        %v848 = vrot.slane %v812, 5
        %v849 = vrot.slane %v848, 4
        %v850 = vrot.slane %v813, 5
        %v851 = vrot.slane %v850, 4
        %v852 = vrot.slane %v814, 5
        %v853 = vrot.slane %v852, 4
        %v854 = vrot.slane %v815, 5
        %v855 = vrot.slane %v854, 4
        %v856 = vrot.slane %v816, 5
        %v857 = vrot.slane %v856, 4
        %v858 = vrot.slane %v817, 5
        %v859 = vrot.slane %v858, 4
        %v860 = vrot.slane %v818, 5
        %v861 = vrot.slane %v860, 4
        %v862 = vrot.slane %v819, 5
        %v863 = vrot.slane %v862, 4
        %v864 = vrot.slane %v820, 5
        %v865 = vrot.slane %v864, 4
        %v866 = vrot.slane %v821, 5
        %v867 = vrot.slane %v866, 4
        %v868 = vrot.slane %v822, 5
        %v869 = vrot.slane %v868, 4
        %v870 = vrot.slane %v823, 5
        %v871 = vrot.slane %v870, 4
        %v872 = vrot.slane %v824, 5
        %v873 = vrot.slane %v872, 4
        %v874 = vrot.slane %v825, 5
        %v875 = vrot.slane %v874, 4
        %v876 = vrot.slane %v826, 5
        %v877 = vrot.slane %v876, 4
        %v878 = vrot.slane %v827, 5
        %v879 = vrot.slane %v878, 4
        %v880 = vrot.slane %v828, 5
        %v881 = vrot.slane %v880, 4
        %v882 = vrot.slane %v829, 5
        %v883 = vrot.slane %v882, 4
        %v902 = vld [vmem:[#allocation2] sm:$0x1]
        %v903 = vsel %vm680, %v849, %v902
        %904 = vst [vmem:[#allocation2] sm:$0x1] %v903
        %v905 = vld [vmem:[#allocation2 + $0xc] sm:$0x1]
        %v906 = vsel %vm680, %v851, %v905
        %907 = vst [vmem:[#allocation2 + $0xc] sm:$0x1] %v906
        %v908 = vld [vmem:[#allocation2 + $0x18] sm:$0x1]
        %v909 = vsel %vm680, %v853, %v908
        %910 = vst [vmem:[#allocation2 + $0x18] sm:$0x1] %v909
        %v911 = vld [vmem:[#allocation2 + $0x24] sm:$0x1]
        %v912 = vsel %vm680, %v855, %v911
        %913 = vst [vmem:[#allocation2 + $0x24] sm:$0x1] %v912
        %v914 = vld [vmem:[#allocation2 + $0x30] sm:$0x1]
        %v915 = vsel %vm680, %v857, %v914
        %916 = vst [vmem:[#allocation2 + $0x30] sm:$0x1] %v915
        %v917 = vld [vmem:[#allocation2 + $0x3c] sm:$0x1]
        %v918 = vsel %vm680, %v859, %v917
        %919 = vst [vmem:[#allocation2 + $0x3c] sm:$0x1] %v918
        %v920 = vld [vmem:[#allocation2 + $0x48] sm:$0x1]
        %v921 = vsel %vm680, %v861, %v920
        %922 = vst [vmem:[#allocation2 + $0x48] sm:$0x1] %v921
        %v923 = vld [vmem:[#allocation2 + $0x54] sm:$0x1]
        %v924 = vsel %vm680, %v863, %v923
        %925 = vst [vmem:[#allocation2 + $0x54] sm:$0x1] %v924
        %v926 = vld [vmem:[#allocation2 + $0x60] sm:$0x1]
        %v927 = vsel %vm680, %v865, %v926
        %928 = vst [vmem:[#allocation2 + $0x60] sm:$0x1] %v927
        %v929 = vld [vmem:[#allocation2 + $0x6c] sm:$0x1]
        %v930 = vsel %vm680, %v867, %v929
        %931 = vst [vmem:[#allocation2 + $0x6c] sm:$0x1] %v930
        %v932 = vld [vmem:[#allocation2 + $0x78] sm:$0x1]
        %v933 = vsel %vm680, %v869, %v932
        %934 = vst [vmem:[#allocation2 + $0x78] sm:$0x1] %v933
        %v935 = vld [vmem:[#allocation2 + $0x84] sm:$0x1]
        %v936 = vsel %vm680, %v871, %v935
        %937 = vst [vmem:[#allocation2 + $0x84] sm:$0x1] %v936
        %v938 = vld [vmem:[#allocation2 + $0x90] sm:$0x1]
        %v939 = vsel %vm680, %v873, %v938
        %940 = vst [vmem:[#allocation2 + $0x90] sm:$0x1] %v939
        %v941 = vld [vmem:[#allocation2 + $0x9c] sm:$0x1]
        %v942 = vsel %vm680, %v875, %v941
        %943 = vst [vmem:[#allocation2 + $0x9c] sm:$0x1] %v942
        %v944 = vld [vmem:[#allocation2 + $0xa8] sm:$0x1]
        %v945 = vsel %vm680, %v877, %v944
        %946 = vst [vmem:[#allocation2 + $0xa8] sm:$0x1] %v945
        %v947 = vld [vmem:[#allocation2 + $0xb4] sm:$0x1]
        %v948 = vsel %vm680, %v879, %v947
        %949 = vst [vmem:[#allocation2 + $0xb4] sm:$0x1] %v948
        %v950 = vld [vmem:[#allocation2 + $0xc0] sm:$0x1]
        %v951 = vsel %vm680, %v881, %v950
        %952 = vst [vmem:[#allocation2 + $0xc0] sm:$0x1] %v951
        %v953 = vld [vmem:[#allocation2 + $0xcc] sm:$0x1]
        %v954 = vsel %vm680, %v883, %v953
        %955 = vst [vmem:[#allocation2 + $0xcc] sm:$0x1] %v954
        %v956 = vld [vmem:[#allocation2 + $0x4] sm:$0x8]
        %v957 = vld [vmem:[#allocation2 + $0x10] sm:$0x8]
        %v958 = vld [vmem:[#allocation2 + $0x1c] sm:$0x8]
        %v959 = vld [vmem:[#allocation2 + $0x28] sm:$0x8]
        %v960 = vld [vmem:[#allocation2 + $0x34] sm:$0x8]
        %v961 = vld [vmem:[#allocation2 + $0x40] sm:$0x8]
        %v962 = vld [vmem:[#allocation2 + $0x4c] sm:$0x8]
        %v963 = vld [vmem:[#allocation2 + $0x58] sm:$0x8]
        %v964 = vld [vmem:[#allocation2 + $0x64] sm:$0x8]
        %v965 = vld [vmem:[#allocation2 + $0x70] sm:$0x8]
        %v966 = vld [vmem:[#allocation2 + $0x7c] sm:$0x8]
        %v967 = vld [vmem:[#allocation2 + $0x88] sm:$0x8]
        %v968 = vld [vmem:[#allocation2 + $0x94] sm:$0x8]
        %v969 = vld [vmem:[#allocation2 + $0xa0] sm:$0x8]
        %v970 = vld [vmem:[#allocation2 + $0xac] sm:$0x8]
        %v971 = vld [vmem:[#allocation2 + $0xb8] sm:$0x8]
        %v972 = vld [vmem:[#allocation2 + $0xc4] sm:$0x8]
        %v973 = vld [vmem:[#allocation2 + $0xd0] sm:$0x8]
        %v992 = vrot.slane %v956, 7
        %v993 = vrot.slane %v992, 4
        %v994 = vrot.slane %v957, 7
        %v995 = vrot.slane %v994, 4
        %v996 = vrot.slane %v958, 7
        %v997 = vrot.slane %v996, 4
        %v998 = vrot.slane %v959, 7
        %v999 = vrot.slane %v998, 4
        %v1000 = vrot.slane %v960, 7
        %v1001 = vrot.slane %v1000, 4
        %v1002 = vrot.slane %v961, 7
        %v1003 = vrot.slane %v1002, 4
        %v1004 = vrot.slane %v962, 7
        %v1005 = vrot.slane %v1004, 4
        %v1006 = vrot.slane %v963, 7
        %v1007 = vrot.slane %v1006, 4
        %v1008 = vrot.slane %v964, 7
        %v1009 = vrot.slane %v1008, 4
        %v1010 = vrot.slane %v965, 7
        %v1011 = vrot.slane %v1010, 4
        %v1012 = vrot.slane %v966, 7
        %v1013 = vrot.slane %v1012, 4
        %v1014 = vrot.slane %v967, 7
        %v1015 = vrot.slane %v1014, 4
        %v1016 = vrot.slane %v968, 7
        %v1017 = vrot.slane %v1016, 4
        %v1018 = vrot.slane %v969, 7
        %v1019 = vrot.slane %v1018, 4
        %v1020 = vrot.slane %v970, 7
        %v1021 = vrot.slane %v1020, 4
        %v1022 = vrot.slane %v971, 7
        %v1023 = vrot.slane %v1022, 4
        %v1024 = vrot.slane %v972, 7
        %v1025 = vrot.slane %v1024, 4
        %v1026 = vrot.slane %v973, 7
        %v1027 = vrot.slane %v1026, 4
        %vm1046 = vmand %vm679, %vm672
        %v1047 = vld [vmem:[#allocation2 + $0x8] sm:$0x1]
        %v1048 = vsel %vm1046, %v993, %v1047
        %1049 = vst [vmem:[#allocation2 + $0x8] sm:$0x1] %v1048
        %v1050 = vld [vmem:[#allocation2 + $0x14] sm:$0x1]
        %v1051 = vsel %vm1046, %v995, %v1050
        %1052 = vst [vmem:[#allocation2 + $0x14] sm:$0x1] %v1051
        %v1053 = vld [vmem:[#allocation2 + $0x20] sm:$0x1]
        %v1054 = vsel %vm1046, %v997, %v1053
        %1055 = vst [vmem:[#allocation2 + $0x20] sm:$0x1] %v1054
        %v1056 = vld [vmem:[#allocation2 + $0x2c] sm:$0x1]
        %v1057 = vsel %vm1046, %v999, %v1056
        %1058 = vst [vmem:[#allocation2 + $0x2c] sm:$0x1] %v1057
        %v1059 = vld [vmem:[#allocation2 + $0x38] sm:$0x1]
        %v1060 = vsel %vm1046, %v1001, %v1059
        %1061 = vst [vmem:[#allocation2 + $0x38] sm:$0x1] %v1060
        %v1062 = vld [vmem:[#allocation2 + $0x44] sm:$0x1]
        %v1063 = vsel %vm1046, %v1003, %v1062
        %1064 = vst [vmem:[#allocation2 + $0x44] sm:$0x1] %v1063
        %v1065 = vld [vmem:[#allocation2 + $0x50] sm:$0x1]
        %v1066 = vsel %vm1046, %v1005, %v1065
        %1067 = vst [vmem:[#allocation2 + $0x50] sm:$0x1] %v1066
        %v1068 = vld [vmem:[#allocation2 + $0x5c] sm:$0x1]
        %v1069 = vsel %vm1046, %v1007, %v1068
        %1070 = vst [vmem:[#allocation2 + $0x5c] sm:$0x1] %v1069
        %v1071 = vld [vmem:[#allocation2 + $0x68] sm:$0x1]
        %v1072 = vsel %vm1046, %v1009, %v1071
        %1073 = vst [vmem:[#allocation2 + $0x68] sm:$0x1] %v1072
        %v1074 = vld [vmem:[#allocation2 + $0x74] sm:$0x1]
        %v1075 = vsel %vm1046, %v1011, %v1074
        %1076 = vst [vmem:[#allocation2 + $0x74] sm:$0x1] %v1075
        %v1077 = vld [vmem:[#allocation2 + $0x80] sm:$0x1]
        %v1078 = vsel %vm1046, %v1013, %v1077
        %1079 = vst [vmem:[#allocation2 + $0x80] sm:$0x1] %v1078
        %v1080 = vld [vmem:[#allocation2 + $0x8c] sm:$0x1]
        %v1081 = vsel %vm1046, %v1015, %v1080
        %1082 = vst [vmem:[#allocation2 + $0x8c] sm:$0x1] %v1081
        %v1083 = vld [vmem:[#allocation2 + $0x98] sm:$0x1]
        %v1084 = vsel %vm1046, %v1017, %v1083
        %1085 = vst [vmem:[#allocation2 + $0x98] sm:$0x1] %v1084
        %v1086 = vld [vmem:[#allocation2 + $0xa4] sm:$0x1]
        %v1087 = vsel %vm1046, %v1019, %v1086
        %1088 = vst [vmem:[#allocation2 + $0xa4] sm:$0x1] %v1087
        %v1089 = vld [vmem:[#allocation2 + $0xb0] sm:$0x1]
        %v1090 = vsel %vm1046, %v1021, %v1089
        %1091 = vst [vmem:[#allocation2 + $0xb0] sm:$0x1] %v1090
        %v1092 = vld [vmem:[#allocation2 + $0xbc] sm:$0x1]
        %v1093 = vsel %vm1046, %v1023, %v1092
        %1094 = vst [vmem:[#allocation2 + $0xbc] sm:$0x1] %v1093
        %v1095 = vld [vmem:[#allocation2 + $0xc8] sm:$0x1]
        %v1096 = vsel %vm1046, %v1025, %v1095
        %1097 = vst [vmem:[#allocation2 + $0xc8] sm:$0x1] %v1096
        %v1098 = vld [vmem:[#allocation2 + $0xd4] sm:$0x1]
        %v1099 = vsel %vm1046, %v1027, %v1098
        %1100 = vst [vmem:[#allocation2 + $0xd4] sm:$0x1] %v1099
        %v1101 = vld [vmem:[#allocation2] sm:$0xf]
        %v1102 = vld [vmem:[#allocation2 + $0x4] sm:$0xf]
        %v1103 = vld [vmem:[#allocation2 + $0xc] sm:$0xf]
        %v1104 = vld [vmem:[#allocation2 + $0x10] sm:$0xf]
        %v1105 = vld [vmem:[#allocation2 + $0x18] sm:$0xf]
        %v1106 = vld [vmem:[#allocation2 + $0x1c] sm:$0xf]
        %v1107 = vld [vmem:[#allocation2 + $0x24] sm:$0xf]
        %v1108 = vld [vmem:[#allocation2 + $0x28] sm:$0xf]
        %v1109 = vld [vmem:[#allocation2 + $0x30] sm:$0xf]
        %v1110 = vld [vmem:[#allocation2 + $0x34] sm:$0xf]
        %v1111 = vld [vmem:[#allocation2 + $0x3c] sm:$0xf]
        %v1112 = vld [vmem:[#allocation2 + $0x40] sm:$0xf]
        %v1113 = vld [vmem:[#allocation2 + $0x48] sm:$0xf]
        %v1114 = vld [vmem:[#allocation2 + $0x4c] sm:$0xf]
        %v1115 = vld [vmem:[#allocation2 + $0x54] sm:$0xf]
        %v1116 = vld [vmem:[#allocation2 + $0x58] sm:$0xf]
        %v1117 = vld [vmem:[#allocation2 + $0x60] sm:$0xf]
        %v1118 = vld [vmem:[#allocation2 + $0x64] sm:$0xf]
        %v1119 = vld [vmem:[#allocation2 + $0x6c] sm:$0xf]
        %v1120 = vld [vmem:[#allocation2 + $0x70] sm:$0xf]
        %v1121 = vld [vmem:[#allocation2 + $0x78] sm:$0xf]
        %v1122 = vld [vmem:[#allocation2 + $0x7c] sm:$0xf]
        %v1123 = vld [vmem:[#allocation2 + $0x84] sm:$0xf]
        %v1124 = vld [vmem:[#allocation2 + $0x88] sm:$0xf]
        %v1125 = vld [vmem:[#allocation2 + $0x90] sm:$0xf]
        %v1126 = vld [vmem:[#allocation2 + $0x94] sm:$0xf]
        %v1127 = vld [vmem:[#allocation2 + $0x9c] sm:$0xf]
        %v1128 = vld [vmem:[#allocation2 + $0xa0] sm:$0xf]
        %v1129 = vld [vmem:[#allocation2 + $0xa8] sm:$0xf]
        %v1130 = vld [vmem:[#allocation2 + $0xac] sm:$0xf]
        %v1131 = vld [vmem:[#allocation2 + $0xb4] sm:$0xf]
        %v1132 = vld [vmem:[#allocation2 + $0xb8] sm:$0xf]
        %v1133 = vld [vmem:[#allocation2 + $0x8] sm:$0x1]
        %v1134 = vld [vmem:[#allocation2 + $0x14] sm:$0x1]
        %v1135 = vld [vmem:[#allocation2 + $0x20] sm:$0x1]
        %v1136 = vld [vmem:[#allocation2 + $0x2c] sm:$0x1]
        %v1137 = vld [vmem:[#allocation2 + $0x38] sm:$0x1]
        %v1138 = vld [vmem:[#allocation2 + $0x44] sm:$0x1]
        %v1139 = vld [vmem:[#allocation2 + $0x50] sm:$0x1]
        %v1140 = vld [vmem:[#allocation2 + $0x5c] sm:$0x1]
        %v1141 = vld [vmem:[#allocation2 + $0x68] sm:$0x1]
        %v1142 = vld [vmem:[#allocation2 + $0x74] sm:$0x1]
        %v1143 = vld [vmem:[#allocation2 + $0x80] sm:$0x1]
        %v1144 = vld [vmem:[#allocation2 + $0x8c] sm:$0x1]
        %v1145 = vld [vmem:[#allocation2 + $0x98] sm:$0x1]
        %v1146 = vld [vmem:[#allocation2 + $0xa4] sm:$0x1]
        %v1147 = vld [vmem:[#allocation2 + $0xb0] sm:$0x1]
        %v1148 = vld [vmem:[#allocation2 + $0xbc] sm:$0x1]
        %v1149 = vld [vmem:[#allocation2] sm:$0xe]
        %v1150 = vld [vmem:[#allocation2 + $0xc] sm:$0xe]
        %v1151 = vld [vmem:[#allocation2 + $0x18] sm:$0xe]
        %v1152 = vld [vmem:[#allocation2 + $0x24] sm:$0xe]
        %v1153 = vld [vmem:[#allocation2 + $0x30] sm:$0xe]
        %v1154 = vld [vmem:[#allocation2 + $0x3c] sm:$0xe]
        %v1155 = vld [vmem:[#allocation2 + $0x48] sm:$0xe]
        %v1156 = vld [vmem:[#allocation2 + $0x54] sm:$0xe]
        %v1157 = vld [vmem:[#allocation2 + $0x60] sm:$0xe]
        %v1158 = vld [vmem:[#allocation2 + $0x6c] sm:$0xe]
        %v1159 = vld [vmem:[#allocation2 + $0x78] sm:$0xe]
        %v1160 = vld [vmem:[#allocation2 + $0x84] sm:$0xe]
        %v1161 = vld [vmem:[#allocation2 + $0x90] sm:$0xe]
        %v1162 = vld [vmem:[#allocation2 + $0x9c] sm:$0xe]
        %v1163 = vld [vmem:[#allocation2 + $0xa8] sm:$0xe]
        %v1164 = vld [vmem:[#allocation2 + $0xb4] sm:$0xe]
        %v1197 = vunpack.c.l.b16 %v1101
        %v1198 = vunpack.c.l.b16 %v1102
        %v1199 = vunpack.c.l.b16 %v1103
        %v1200 = vunpack.c.l.b16 %v1104
        %v1201 = vunpack.c.l.b16 %v1105
        %v1202 = vunpack.c.l.b16 %v1106
        %v1203 = vunpack.c.l.b16 %v1107
        %v1204 = vunpack.c.l.b16 %v1108
        %v1205 = vunpack.c.l.b16 %v1109
        %v1206 = vunpack.c.l.b16 %v1110
        %v1207 = vunpack.c.l.b16 %v1111
        %v1208 = vunpack.c.l.b16 %v1112
        %v1209 = vunpack.c.l.b16 %v1113
        %v1210 = vunpack.c.l.b16 %v1114
        %v1211 = vunpack.c.l.b16 %v1115
        %v1212 = vunpack.c.l.b16 %v1116
        %v1213 = vunpack.c.l.b16 %v1117
        %v1214 = vunpack.c.l.b16 %v1118
        %v1215 = vunpack.c.l.b16 %v1119
        %v1216 = vunpack.c.l.b16 %v1120
        %v1217 = vunpack.c.l.b16 %v1121
        %v1218 = vunpack.c.l.b16 %v1122
        %v1219 = vunpack.c.l.b16 %v1123
        %v1220 = vunpack.c.l.b16 %v1124
        %v1221 = vunpack.c.l.b16 %v1125
        %v1222 = vunpack.c.l.b16 %v1126
        %v1223 = vunpack.c.l.b16 %v1127
        %v1224 = vunpack.c.l.b16 %v1128
        %v1225 = vunpack.c.l.b16 %v1129
        %v1226 = vunpack.c.l.b16 %v1130
        %v1227 = vunpack.c.l.b16 %v1131
        %v1228 = vunpack.c.l.b16 %v1132
        %v1229 = vpack.c.b16 %v1198, %v1197
        %v1230 = vpack.c.b16 %v1200, %v1199
        %v1231 = vpack.c.b16 %v1202, %v1201
        %v1232 = vpack.c.b16 %v1204, %v1203
        %v1233 = vpack.c.b16 %v1206, %v1205
        %v1234 = vpack.c.b16 %v1208, %v1207
        %v1235 = vpack.c.b16 %v1210, %v1209
        %v1236 = vpack.c.b16 %v1212, %v1211
        %v1237 = vpack.c.b16 %v1214, %v1213
        %v1238 = vpack.c.b16 %v1216, %v1215
        %v1239 = vpack.c.b16 %v1218, %v1217
        %v1240 = vpack.c.b16 %v1220, %v1219
        %v1241 = vpack.c.b16 %v1222, %v1221
        %v1242 = vpack.c.b16 %v1224, %v1223
        %v1243 = vpack.c.b16 %v1226, %v1225
        %v1244 = vpack.c.b16 %v1228, %v1227
        %v1261 = vunpack.c.l.b16 %v1133
        %v1262 = vunpack.c.l.b16 %v1134
        %v1263 = vunpack.c.l.b16 %v1135
        %v1264 = vunpack.c.l.b16 %v1136
        %v1265 = vunpack.c.l.b16 %v1137
        %v1266 = vunpack.c.l.b16 %v1138
        %v1267 = vunpack.c.l.b16 %v1139
        %v1268 = vunpack.c.l.b16 %v1140
        %v1269 = vunpack.c.l.b16 %v1141
        %v1270 = vunpack.c.l.b16 %v1142
        %v1271 = vunpack.c.l.b16 %v1143
        %v1272 = vunpack.c.l.b16 %v1144
        %v1273 = vunpack.c.l.b16 %v1145
        %v1274 = vunpack.c.l.b16 %v1146
        %v1275 = vunpack.c.l.b16 %v1147
        %v1276 = vunpack.c.l.b16 %v1148
        %v1277 = vpack.c.b16 %v1261, %v1261
        %v1278 = vpack.c.b16 %v1262, %v1262
        %v1279 = vpack.c.b16 %v1263, %v1263
        %v1280 = vpack.c.b16 %v1264, %v1264
        %v1281 = vpack.c.b16 %v1265, %v1265
        %v1282 = vpack.c.b16 %v1266, %v1266
        %v1283 = vpack.c.b16 %v1267, %v1267
        %v1284 = vpack.c.b16 %v1268, %v1268
        %v1285 = vpack.c.b16 %v1269, %v1269
        %v1286 = vpack.c.b16 %v1270, %v1270
        %v1287 = vpack.c.b16 %v1271, %v1271
        %v1288 = vpack.c.b16 %v1272, %v1272
        %v1289 = vpack.c.b16 %v1273, %v1273
        %v1290 = vpack.c.b16 %v1274, %v1274
        %v1291 = vpack.c.b16 %v1275, %v1275
        %v1292 = vpack.c.b16 %v1276, %v1276
        %vm1293 = vsmask.f32 7424
        %v1295 = vshrl.u32 %v1229, 16
        %v1297 = vshll.u32 %v1229, 16
        %v1299 = vrot.slane %v1297, 1
        %v1300 = vor.u32 %v1295, %v1299
        %v1302 = vshll.u32 %v1277, 16
        %v1304 = vrot.slane %v1302, 1
        %v1305 = vsel %vm1293, %v1300, %v1304
        %v1307 = vshrl.u32 %v1230, 16
        %v1309 = vshll.u32 %v1230, 16
        %v1311 = vrot.slane %v1309, 1
        %v1312 = vor.u32 %v1307, %v1311
        %v1314 = vshll.u32 %v1278, 16
        %v1316 = vrot.slane %v1314, 1
        %v1317 = vsel %vm1293, %v1312, %v1316
        %v1319 = vshrl.u32 %v1231, 16
        %v1321 = vshll.u32 %v1231, 16
        %v1323 = vrot.slane %v1321, 1
        %v1324 = vor.u32 %v1319, %v1323
        %v1326 = vshll.u32 %v1279, 16
        %v1328 = vrot.slane %v1326, 1
        %v1329 = vsel %vm1293, %v1324, %v1328
        %v1331 = vshrl.u32 %v1232, 16
        %v1333 = vshll.u32 %v1232, 16
        %v1335 = vrot.slane %v1333, 1
        %v1336 = vor.u32 %v1331, %v1335
        %v1338 = vshll.u32 %v1280, 16
        %v1340 = vrot.slane %v1338, 1
        %v1341 = vsel %vm1293, %v1336, %v1340
        %v1343 = vshrl.u32 %v1233, 16
        %v1345 = vshll.u32 %v1233, 16
        %v1347 = vrot.slane %v1345, 1
        %v1348 = vor.u32 %v1343, %v1347
        %v1350 = vshll.u32 %v1281, 16
        %v1352 = vrot.slane %v1350, 1
        %v1353 = vsel %vm1293, %v1348, %v1352
        %v1355 = vshrl.u32 %v1234, 16
        %v1357 = vshll.u32 %v1234, 16
        %v1359 = vrot.slane %v1357, 1
        %v1360 = vor.u32 %v1355, %v1359
        %v1362 = vshll.u32 %v1282, 16
        %v1364 = vrot.slane %v1362, 1
        %v1365 = vsel %vm1293, %v1360, %v1364
        %v1367 = vshrl.u32 %v1235, 16
        %v1369 = vshll.u32 %v1235, 16
        %v1371 = vrot.slane %v1369, 1
        %v1372 = vor.u32 %v1367, %v1371
        %v1374 = vshll.u32 %v1283, 16
        %v1376 = vrot.slane %v1374, 1
        %v1377 = vsel %vm1293, %v1372, %v1376
        %v1379 = vshrl.u32 %v1236, 16
        %v1381 = vshll.u32 %v1236, 16
        %v1383 = vrot.slane %v1381, 1
        %v1384 = vor.u32 %v1379, %v1383
        %v1386 = vshll.u32 %v1284, 16
        %v1388 = vrot.slane %v1386, 1
        %v1389 = vsel %vm1293, %v1384, %v1388
        %v1391 = vshrl.u32 %v1237, 16
        %v1393 = vshll.u32 %v1237, 16
        %v1395 = vrot.slane %v1393, 1
        %v1396 = vor.u32 %v1391, %v1395
        %v1398 = vshll.u32 %v1285, 16
        %v1400 = vrot.slane %v1398, 1
        %v1401 = vsel %vm1293, %v1396, %v1400
        %v1403 = vshrl.u32 %v1238, 16
        %v1405 = vshll.u32 %v1238, 16
        %v1407 = vrot.slane %v1405, 1
        %v1408 = vor.u32 %v1403, %v1407
        %v1410 = vshll.u32 %v1286, 16
        %v1412 = vrot.slane %v1410, 1
        %v1413 = vsel %vm1293, %v1408, %v1412
        %v1415 = vshrl.u32 %v1239, 16
        %v1417 = vshll.u32 %v1239, 16
        %v1419 = vrot.slane %v1417, 1
        %v1420 = vor.u32 %v1415, %v1419
        %v1422 = vshll.u32 %v1287, 16
        %v1424 = vrot.slane %v1422, 1
        %v1425 = vsel %vm1293, %v1420, %v1424
        %v1427 = vshrl.u32 %v1240, 16
        %v1429 = vshll.u32 %v1240, 16
        %v1431 = vrot.slane %v1429, 1
        %v1432 = vor.u32 %v1427, %v1431
        %v1434 = vshll.u32 %v1288, 16
        %v1436 = vrot.slane %v1434, 1
        %v1437 = vsel %vm1293, %v1432, %v1436
        %v1439 = vshrl.u32 %v1241, 16
        %v1441 = vshll.u32 %v1241, 16
        %v1443 = vrot.slane %v1441, 1
        %v1444 = vor.u32 %v1439, %v1443
        %v1446 = vshll.u32 %v1289, 16
        %v1448 = vrot.slane %v1446, 1
        %v1449 = vsel %vm1293, %v1444, %v1448
        %v1451 = vshrl.u32 %v1242, 16
        %v1453 = vshll.u32 %v1242, 16
        %v1455 = vrot.slane %v1453, 1
        %v1456 = vor.u32 %v1451, %v1455
        %v1458 = vshll.u32 %v1290, 16
        %v1460 = vrot.slane %v1458, 1
        %v1461 = vsel %vm1293, %v1456, %v1460
        %v1463 = vshrl.u32 %v1243, 16
        %v1465 = vshll.u32 %v1243, 16
        %v1467 = vrot.slane %v1465, 1
        %v1468 = vor.u32 %v1463, %v1467
        %v1470 = vshll.u32 %v1291, 16
        %v1472 = vrot.slane %v1470, 1
        %v1473 = vsel %vm1293, %v1468, %v1472
        %v1475 = vshrl.u32 %v1244, 16
        %v1477 = vshll.u32 %v1244, 16
        %v1479 = vrot.slane %v1477, 1
        %v1480 = vor.u32 %v1475, %v1479
        %v1482 = vshll.u32 %v1292, 16
        %v1484 = vrot.slane %v1482, 1
        %v1485 = vsel %vm1293, %v1480, %v1484
        %1486 = vrot.lane.b32.xlu0 %v1305, 4
        %v1487 = vpop.permute.xlu0 %1486
        %1488 = vrot.lane.b32.xlu0 %v1317, 4
        %v1489 = vpop.permute.xlu0 %1488
        %1490 = vrot.lane.b32.xlu0 %v1329, 4
        %v1491 = vpop.permute.xlu0 %1490
        %1492 = vrot.lane.b32.xlu0 %v1341, 4
        %v1493 = vpop.permute.xlu0 %1492
        %1494 = vrot.lane.b32.xlu0 %v1353, 4
        %v1495 = vpop.permute.xlu0 %1494
        %1496 = vrot.lane.b32.xlu0 %v1365, 4
        %v1497 = vpop.permute.xlu0 %1496
        %1498 = vrot.lane.b32.xlu0 %v1377, 4
        %v1499 = vpop.permute.xlu0 %1498
        %1500 = vrot.lane.b32.xlu0 %v1389, 4
        %v1501 = vpop.permute.xlu0 %1500
        %1502 = vrot.lane.b32.xlu0 %v1401, 4
        %v1503 = vpop.permute.xlu0 %1502
        %1504 = vrot.lane.b32.xlu0 %v1413, 4
        %v1505 = vpop.permute.xlu0 %1504
        %1506 = vrot.lane.b32.xlu0 %v1425, 4
        %v1507 = vpop.permute.xlu0 %1506
        %1508 = vrot.lane.b32.xlu0 %v1437, 4
        %v1509 = vpop.permute.xlu0 %1508
        %1510 = vrot.lane.b32.xlu0 %v1449, 4
        %v1511 = vpop.permute.xlu0 %1510
        %1512 = vrot.lane.b32.xlu0 %v1461, 4
        %v1513 = vpop.permute.xlu0 %1512
        %1514 = vrot.lane.b32.xlu0 %v1473, 4
        %v1515 = vpop.permute.xlu0 %1514
        %1516 = vrot.lane.b32.xlu0 %v1485, 4
        %v1517 = vpop.permute.xlu0 %1516
        %v1534 = vunpack.c.l.b16 %v1149
        %v1535 = vunpack.c.l.b16 %v1150
        %v1536 = vunpack.c.l.b16 %v1151
        %v1537 = vunpack.c.l.b16 %v1152
        %v1538 = vunpack.c.l.b16 %v1153
        %v1539 = vunpack.c.l.b16 %v1154
        %v1540 = vunpack.c.l.b16 %v1155
        %v1541 = vunpack.c.l.b16 %v1156
        %v1542 = vunpack.c.l.b16 %v1157
        %v1543 = vunpack.c.l.b16 %v1158
        %v1544 = vunpack.c.l.b16 %v1159
        %v1545 = vunpack.c.l.b16 %v1160
        %v1546 = vunpack.c.l.b16 %v1161
        %v1547 = vunpack.c.l.b16 %v1162
        %v1548 = vunpack.c.l.b16 %v1163
        %v1549 = vunpack.c.l.b16 %v1164
        %v1550 = vpack.c.b16 %v1198, %v1534
        %v1551 = vpack.c.b16 %v1200, %v1535
        %v1552 = vpack.c.b16 %v1202, %v1536
        %v1553 = vpack.c.b16 %v1204, %v1537
        %v1554 = vpack.c.b16 %v1206, %v1538
        %v1555 = vpack.c.b16 %v1208, %v1539
        %v1556 = vpack.c.b16 %v1210, %v1540
        %v1557 = vpack.c.b16 %v1212, %v1541
        %v1558 = vpack.c.b16 %v1214, %v1542
        %v1559 = vpack.c.b16 %v1216, %v1543
        %v1560 = vpack.c.b16 %v1218, %v1544
        %v1561 = vpack.c.b16 %v1220, %v1545
        %v1562 = vpack.c.b16 %v1222, %v1546
        %v1563 = vpack.c.b16 %v1224, %v1547
        %v1564 = vpack.c.b16 %v1226, %v1548
        %v1565 = vpack.c.b16 %v1228, %v1549
        %vm1566 = vcmask 1046528
        %v1567 = vrot.slane %v1550, 1
        %v1568 = vrot.slane %v1277, 1
        %v1569 = vsel %vm1566, %v1567, %v1568
        %v1570 = vrot.slane %v1551, 1
        %v1571 = vrot.slane %v1278, 1
        %v1572 = vsel %vm1566, %v1570, %v1571
        %v1573 = vrot.slane %v1552, 1
        %v1574 = vrot.slane %v1279, 1
        %v1575 = vsel %vm1566, %v1573, %v1574
        %v1576 = vrot.slane %v1553, 1
        %v1577 = vrot.slane %v1280, 1
        %v1578 = vsel %vm1566, %v1576, %v1577
        %v1579 = vrot.slane %v1554, 1
        %v1580 = vrot.slane %v1281, 1
        %v1581 = vsel %vm1566, %v1579, %v1580
        %v1582 = vrot.slane %v1555, 1
        %v1583 = vrot.slane %v1282, 1
        %v1584 = vsel %vm1566, %v1582, %v1583
        %v1585 = vrot.slane %v1556, 1
        %v1586 = vrot.slane %v1283, 1
        %v1587 = vsel %vm1566, %v1585, %v1586
        %v1588 = vrot.slane %v1557, 1
        %v1589 = vrot.slane %v1284, 1
        %v1590 = vsel %vm1566, %v1588, %v1589
        %v1591 = vrot.slane %v1558, 1
        %v1592 = vrot.slane %v1285, 1
        %v1593 = vsel %vm1566, %v1591, %v1592
        %v1594 = vrot.slane %v1559, 1
        %v1595 = vrot.slane %v1286, 1
        %v1596 = vsel %vm1566, %v1594, %v1595
        %v1597 = vrot.slane %v1560, 1
        %v1598 = vrot.slane %v1287, 1
        %v1599 = vsel %vm1566, %v1597, %v1598
        %v1600 = vrot.slane %v1561, 1
        %v1601 = vrot.slane %v1288, 1
        %v1602 = vsel %vm1566, %v1600, %v1601
        %v1603 = vrot.slane %v1562, 1
        %v1604 = vrot.slane %v1289, 1
        %v1605 = vsel %vm1566, %v1603, %v1604
        %v1606 = vrot.slane %v1563, 1
        %v1607 = vrot.slane %v1290, 1
        %v1608 = vsel %vm1566, %v1606, %v1607
        %v1609 = vrot.slane %v1564, 1
        %v1610 = vrot.slane %v1291, 1
        %v1611 = vsel %vm1566, %v1609, %v1610
        %v1612 = vrot.slane %v1565, 1
        %v1613 = vrot.slane %v1292, 1
        %v1614 = vsel %vm1566, %v1612, %v1613
        %1615 = vrot.lane.b32.xlu0 %v1569, 8
        %v1616 = vpop.permute.xlu0 %1615
        %1617 = vrot.lane.b32.xlu0 %v1572, 8
        %v1618 = vpop.permute.xlu0 %1617
        %1619 = vrot.lane.b32.xlu0 %v1575, 8
        %v1620 = vpop.permute.xlu0 %1619
        %1621 = vrot.lane.b32.xlu0 %v1578, 8
        %v1622 = vpop.permute.xlu0 %1621
        %1623 = vrot.lane.b32.xlu0 %v1581, 8
        %v1624 = vpop.permute.xlu0 %1623
        %1625 = vrot.lane.b32.xlu0 %v1584, 8
        %v1626 = vpop.permute.xlu0 %1625
        %1627 = vrot.lane.b32.xlu0 %v1587, 8
        %v1628 = vpop.permute.xlu0 %1627
        %1629 = vrot.lane.b32.xlu0 %v1590, 8
        %v1630 = vpop.permute.xlu0 %1629
        %1631 = vrot.lane.b32.xlu0 %v1593, 8
        %v1632 = vpop.permute.xlu0 %1631
        %1633 = vrot.lane.b32.xlu0 %v1596, 8
        %v1634 = vpop.permute.xlu0 %1633
        %1635 = vrot.lane.b32.xlu0 %v1599, 8
        %v1636 = vpop.permute.xlu0 %1635
        %1637 = vrot.lane.b32.xlu0 %v1602, 8
        %v1638 = vpop.permute.xlu0 %1637
        %1639 = vrot.lane.b32.xlu0 %v1605, 8
        %v1640 = vpop.permute.xlu0 %1639
        %1641 = vrot.lane.b32.xlu0 %v1608, 8
        %v1642 = vpop.permute.xlu0 %1641
        %1643 = vrot.lane.b32.xlu0 %v1611, 8
        %v1644 = vpop.permute.xlu0 %1643
        %1645 = vrot.lane.b32.xlu0 %v1614, 8
        %v1646 = vpop.permute.xlu0 %1645
        %vm1647 = vcmask 31744
        %v1649 = vsel %vm1647, %v1229, %v1487
        %v1651 = vsel %vm1647, %v1230, %v1489
        %v1653 = vsel %vm1647, %v1231, %v1491
        %v1655 = vsel %vm1647, %v1232, %v1493
        %v1657 = vsel %vm1647, %v1233, %v1495
        %v1659 = vsel %vm1647, %v1234, %v1497
        %v1661 = vsel %vm1647, %v1235, %v1499
        %v1663 = vsel %vm1647, %v1236, %v1501
        %v1665 = vsel %vm1647, %v1237, %v1503
        %v1667 = vsel %vm1647, %v1238, %v1505
        %v1669 = vsel %vm1647, %v1239, %v1507
        %v1671 = vsel %vm1647, %v1240, %v1509
        %v1673 = vsel %vm1647, %v1241, %v1511
        %v1675 = vsel %vm1647, %v1242, %v1513
        %v1677 = vsel %vm1647, %v1243, %v1515
        %v1679 = vsel %vm1647, %v1244, %v1517
        %vm1680 = vcmask 64512
        %v1682 = vsel %vm1680, %v1649, %v1616
        %v1684 = vsel %vm1680, %v1651, %v1618
        %v1686 = vsel %vm1680, %v1653, %v1620
        %v1688 = vsel %vm1680, %v1655, %v1622
        %v1690 = vsel %vm1680, %v1657, %v1624
        %v1692 = vsel %vm1680, %v1659, %v1626
        %v1694 = vsel %vm1680, %v1661, %v1628
        %v1696 = vsel %vm1680, %v1663, %v1630
        %v1698 = vsel %vm1680, %v1665, %v1632
        %v1700 = vsel %vm1680, %v1667, %v1634
        %v1702 = vsel %vm1680, %v1669, %v1636
        %v1704 = vsel %vm1680, %v1671, %v1638
        %v1706 = vsel %vm1680, %v1673, %v1640
        %v1708 = vsel %vm1680, %v1675, %v1642
        %v1710 = vsel %vm1680, %v1677, %v1644
        %v1712 = vsel %vm1680, %v1679, %v1646
        %v1713 = vld [vmem:[#allocation7] sm:$0xf]
        %v1714 = vld [vmem:[#allocation7 + $0x4] sm:$0x3]
        %v1715 = vld [vmem:[%s670] sm:$0xf]
        %v1716 = vld [vmem:[%s670 + $0x4] sm:$0xf]
        %v1717 = vld [vmem:[%s670 + $0xc] sm:$0xf]
        %v1718 = vld [vmem:[%s670 + $0x10] sm:$0xf]
        %v1719 = vld [vmem:[%s670 + $0x18] sm:$0xf]
        %v1720 = vld [vmem:[%s670 + $0x1c] sm:$0xf]
        %v1721 = vld [vmem:[%s670 + $0x24] sm:$0xf]
        %v1722 = vld [vmem:[%s670 + $0x28] sm:$0xf]
        %v1723 = vld [vmem:[%s670 + $0x30] sm:$0xf]
        %v1724 = vld [vmem:[%s670 + $0x34] sm:$0xf]
        %v1725 = vld [vmem:[%s670 + $0x3c] sm:$0xf]
        %v1726 = vld [vmem:[%s670 + $0x40] sm:$0xf]
        %v1727 = vld [vmem:[%s670 + $0x48] sm:$0xf]
        %v1728 = vld [vmem:[%s670 + $0x4c] sm:$0xf]
        %v1729 = vld [vmem:[%s670 + $0x54] sm:$0xf]
        %v1730 = vld [vmem:[%s670 + $0x58] sm:$0xf]
        %v1731 = vld [vmem:[%s670 + $0x60] sm:$0xf]
        %v1732 = vld [vmem:[%s670 + $0x64] sm:$0xf]
        %v1733 = vld [vmem:[%s670 + $0x6c] sm:$0xf]
        %v1734 = vld [vmem:[%s670 + $0x70] sm:$0xf]
        %v1735 = vld [vmem:[%s670 + $0x78] sm:$0xf]
        %v1736 = vld [vmem:[%s670 + $0x7c] sm:$0xf]
        %v1737 = vld [vmem:[%s670 + $0x84] sm:$0xf]
        %v1738 = vld [vmem:[%s670 + $0x88] sm:$0xf]
        %v1739 = vld [vmem:[%s670 + $0x90] sm:$0xf]
        %v1740 = vld [vmem:[%s670 + $0x94] sm:$0xf]
        %v1741 = vld [vmem:[%s670 + $0x9c] sm:$0xf]
        %v1742 = vld [vmem:[%s670 + $0xa0] sm:$0xf]
        %v1743 = vld [vmem:[%s670 + $0xa8] sm:$0xf]
        %v1744 = vld [vmem:[%s670 + $0xac] sm:$0xf]
        %v1745 = vld [vmem:[%s670 + $0xb4] sm:$0xf]
        %v1746 = vld [vmem:[%s670 + $0xb8] sm:$0xf]
        %v1747 = vld [vmem:[%s670 + $0x8] sm:$0x1]
        %v1748 = vld [vmem:[%s670 + $0x14] sm:$0x1]
        %v1749 = vld [vmem:[%s670 + $0x20] sm:$0x1]
        %v1750 = vld [vmem:[%s670 + $0x2c] sm:$0x1]
        %v1751 = vld [vmem:[%s670 + $0x38] sm:$0x1]
        %v1752 = vld [vmem:[%s670 + $0x44] sm:$0x1]
        %v1753 = vld [vmem:[%s670 + $0x50] sm:$0x1]
        %v1754 = vld [vmem:[%s670 + $0x5c] sm:$0x1]
        %v1755 = vld [vmem:[%s670 + $0x68] sm:$0x1]
        %v1756 = vld [vmem:[%s670 + $0x74] sm:$0x1]
        %v1757 = vld [vmem:[%s670 + $0x80] sm:$0x1]
        %v1758 = vld [vmem:[%s670 + $0x8c] sm:$0x1]
        %v1759 = vld [vmem:[%s670 + $0x98] sm:$0x1]
        %v1760 = vld [vmem:[%s670 + $0xa4] sm:$0x1]
        %v1761 = vld [vmem:[%s670 + $0xb0] sm:$0x1]
        %v1762 = vld [vmem:[%s670 + $0xbc] sm:$0x1]
        %v1763 = vld [vmem:[%s670] sm:$0xe]
        %v1764 = vld [vmem:[%s670 + $0xc] sm:$0xe]
        %v1765 = vld [vmem:[%s670 + $0x18] sm:$0xe]
        %v1766 = vld [vmem:[%s670 + $0x24] sm:$0xe]
        %v1767 = vld [vmem:[%s670 + $0x30] sm:$0xe]
        %v1768 = vld [vmem:[%s670 + $0x3c] sm:$0xe]
        %v1769 = vld [vmem:[%s670 + $0x48] sm:$0xe]
        %v1770 = vld [vmem:[%s670 + $0x54] sm:$0xe]
        %v1771 = vld [vmem:[%s670 + $0x60] sm:$0xe]
        %v1772 = vld [vmem:[%s670 + $0x6c] sm:$0xe]
        %v1773 = vld [vmem:[%s670 + $0x78] sm:$0xe]
        %v1774 = vld [vmem:[%s670 + $0x84] sm:$0xe]
        %v1775 = vld [vmem:[%s670 + $0x90] sm:$0xe]
        %v1776 = vld [vmem:[%s670 + $0x9c] sm:$0xe]
        %v1777 = vld [vmem:[%s670 + $0xa8] sm:$0xe]
        %v1778 = vld [vmem:[%s670 + $0xb4] sm:$0xe]
        %v1811 = vunpack.c.l.b16 %v1715
        %v1812 = vunpack.c.l.b16 %v1716
        %v1813 = vunpack.c.l.b16 %v1717
        %v1814 = vunpack.c.l.b16 %v1718
        %v1815 = vunpack.c.l.b16 %v1719
        %v1816 = vunpack.c.l.b16 %v1720
        %v1817 = vunpack.c.l.b16 %v1721
        %v1818 = vunpack.c.l.b16 %v1722
        %v1819 = vunpack.c.l.b16 %v1723
        %v1820 = vunpack.c.l.b16 %v1724
        %v1821 = vunpack.c.l.b16 %v1725
        %v1822 = vunpack.c.l.b16 %v1726
        %v1823 = vunpack.c.l.b16 %v1727
        %v1824 = vunpack.c.l.b16 %v1728
        %v1825 = vunpack.c.l.b16 %v1729
        %v1826 = vunpack.c.l.b16 %v1730
        %v1827 = vunpack.c.l.b16 %v1731
        %v1828 = vunpack.c.l.b16 %v1732
        %v1829 = vunpack.c.l.b16 %v1733
        %v1830 = vunpack.c.l.b16 %v1734
        %v1831 = vunpack.c.l.b16 %v1735
        %v1832 = vunpack.c.l.b16 %v1736
        %v1833 = vunpack.c.l.b16 %v1737
        %v1834 = vunpack.c.l.b16 %v1738
        %v1835 = vunpack.c.l.b16 %v1739
        %v1836 = vunpack.c.l.b16 %v1740
        %v1837 = vunpack.c.l.b16 %v1741
        %v1838 = vunpack.c.l.b16 %v1742
        %v1839 = vunpack.c.l.b16 %v1743
        %v1840 = vunpack.c.l.b16 %v1744
        %v1841 = vunpack.c.l.b16 %v1745
        %v1842 = vunpack.c.l.b16 %v1746
        %v1843 = vpack.c.b16 %v1812, %v1811
        %v1844 = vpack.c.b16 %v1814, %v1813
        %v1845 = vpack.c.b16 %v1816, %v1815
        %v1846 = vpack.c.b16 %v1818, %v1817
        %v1847 = vpack.c.b16 %v1820, %v1819
        %v1848 = vpack.c.b16 %v1822, %v1821
        %v1849 = vpack.c.b16 %v1824, %v1823
        %v1850 = vpack.c.b16 %v1826, %v1825
        %v1851 = vpack.c.b16 %v1828, %v1827
        %v1852 = vpack.c.b16 %v1830, %v1829
        %v1853 = vpack.c.b16 %v1832, %v1831
        %v1854 = vpack.c.b16 %v1834, %v1833
        %v1855 = vpack.c.b16 %v1836, %v1835
        %v1856 = vpack.c.b16 %v1838, %v1837
        %v1857 = vpack.c.b16 %v1840, %v1839
        %v1858 = vpack.c.b16 %v1842, %v1841
        %v1875 = vunpack.c.l.b16 %v1747
        %v1876 = vunpack.c.l.b16 %v1748
        %v1877 = vunpack.c.l.b16 %v1749
        %v1878 = vunpack.c.l.b16 %v1750
        %v1879 = vunpack.c.l.b16 %v1751
        %v1880 = vunpack.c.l.b16 %v1752
        %v1881 = vunpack.c.l.b16 %v1753
        %v1882 = vunpack.c.l.b16 %v1754
        %v1883 = vunpack.c.l.b16 %v1755
        %v1884 = vunpack.c.l.b16 %v1756
        %v1885 = vunpack.c.l.b16 %v1757
        %v1886 = vunpack.c.l.b16 %v1758
        %v1887 = vunpack.c.l.b16 %v1759
        %v1888 = vunpack.c.l.b16 %v1760
        %v1889 = vunpack.c.l.b16 %v1761
        %v1890 = vunpack.c.l.b16 %v1762
        %v1891 = vpack.c.b16 %v1875, %v1875
        %v1892 = vpack.c.b16 %v1876, %v1876
        %v1893 = vpack.c.b16 %v1877, %v1877
        %v1894 = vpack.c.b16 %v1878, %v1878
        %v1895 = vpack.c.b16 %v1879, %v1879
        %v1896 = vpack.c.b16 %v1880, %v1880
        %v1897 = vpack.c.b16 %v1881, %v1881
        %v1898 = vpack.c.b16 %v1882, %v1882
        %v1899 = vpack.c.b16 %v1883, %v1883
        %v1900 = vpack.c.b16 %v1884, %v1884
        %v1901 = vpack.c.b16 %v1885, %v1885
        %v1902 = vpack.c.b16 %v1886, %v1886
        %v1903 = vpack.c.b16 %v1887, %v1887
        %v1904 = vpack.c.b16 %v1888, %v1888
        %v1905 = vpack.c.b16 %v1889, %v1889
        %v1906 = vpack.c.b16 %v1890, %v1890
        %v1908 = vshrl.u32 %v1843, 16
        %v1910 = vshll.u32 %v1843, 16
        %v1912 = vrot.slane %v1910, 1
        %v1913 = vor.u32 %v1908, %v1912
        %v1915 = vshll.u32 %v1891, 16
        %v1917 = vrot.slane %v1915, 1
        %v1918 = vsel %vm1293, %v1913, %v1917
        %v1920 = vshrl.u32 %v1844, 16
        %v1922 = vshll.u32 %v1844, 16
        %v1924 = vrot.slane %v1922, 1
        %v1925 = vor.u32 %v1920, %v1924
        %v1927 = vshll.u32 %v1892, 16
        %v1929 = vrot.slane %v1927, 1
        %v1930 = vsel %vm1293, %v1925, %v1929
        %v1932 = vshrl.u32 %v1845, 16
        %v1934 = vshll.u32 %v1845, 16
        %v1936 = vrot.slane %v1934, 1
        %v1937 = vor.u32 %v1932, %v1936
        %v1939 = vshll.u32 %v1893, 16
        %v1941 = vrot.slane %v1939, 1
        %v1942 = vsel %vm1293, %v1937, %v1941
        %v1944 = vshrl.u32 %v1846, 16
        %v1946 = vshll.u32 %v1846, 16
        %v1948 = vrot.slane %v1946, 1
        %v1949 = vor.u32 %v1944, %v1948
        %v1951 = vshll.u32 %v1894, 16
        %v1953 = vrot.slane %v1951, 1
        %v1954 = vsel %vm1293, %v1949, %v1953
        %v1956 = vshrl.u32 %v1847, 16
        %v1958 = vshll.u32 %v1847, 16
        %v1960 = vrot.slane %v1958, 1
        %v1961 = vor.u32 %v1956, %v1960
        %v1963 = vshll.u32 %v1895, 16
        %v1965 = vrot.slane %v1963, 1
        %v1966 = vsel %vm1293, %v1961, %v1965
        %v1968 = vshrl.u32 %v1848, 16
        %v1970 = vshll.u32 %v1848, 16
        %v1972 = vrot.slane %v1970, 1
        %v1973 = vor.u32 %v1968, %v1972
        %v1975 = vshll.u32 %v1896, 16
        %v1977 = vrot.slane %v1975, 1
        %v1978 = vsel %vm1293, %v1973, %v1977
        %v1980 = vshrl.u32 %v1849, 16
        %v1982 = vshll.u32 %v1849, 16
        %v1984 = vrot.slane %v1982, 1
        %v1985 = vor.u32 %v1980, %v1984
        %v1987 = vshll.u32 %v1897, 16
        %v1989 = vrot.slane %v1987, 1
        %v1990 = vsel %vm1293, %v1985, %v1989
        %v1992 = vshrl.u32 %v1850, 16
        %v1994 = vshll.u32 %v1850, 16
        %v1996 = vrot.slane %v1994, 1
        %v1997 = vor.u32 %v1992, %v1996
        %v1999 = vshll.u32 %v1898, 16
        %v2001 = vrot.slane %v1999, 1
        %v2002 = vsel %vm1293, %v1997, %v2001
        %v2004 = vshrl.u32 %v1851, 16
        %v2006 = vshll.u32 %v1851, 16
        %v2008 = vrot.slane %v2006, 1
        %v2009 = vor.u32 %v2004, %v2008
        %v2011 = vshll.u32 %v1899, 16
        %v2013 = vrot.slane %v2011, 1
        %v2014 = vsel %vm1293, %v2009, %v2013
        %v2016 = vshrl.u32 %v1852, 16
        %v2018 = vshll.u32 %v1852, 16
        %v2020 = vrot.slane %v2018, 1
        %v2021 = vor.u32 %v2016, %v2020
        %v2023 = vshll.u32 %v1900, 16
        %v2025 = vrot.slane %v2023, 1
        %v2026 = vsel %vm1293, %v2021, %v2025
        %v2028 = vshrl.u32 %v1853, 16
        %v2030 = vshll.u32 %v1853, 16
        %v2032 = vrot.slane %v2030, 1
        %v2033 = vor.u32 %v2028, %v2032
        %v2035 = vshll.u32 %v1901, 16
        %v2037 = vrot.slane %v2035, 1
        %v2038 = vsel %vm1293, %v2033, %v2037
        %v2040 = vshrl.u32 %v1854, 16
        %v2042 = vshll.u32 %v1854, 16
        %v2044 = vrot.slane %v2042, 1
        %v2045 = vor.u32 %v2040, %v2044
        %v2047 = vshll.u32 %v1902, 16
        %v2049 = vrot.slane %v2047, 1
        %v2050 = vsel %vm1293, %v2045, %v2049
        %v2052 = vshrl.u32 %v1855, 16
        %v2054 = vshll.u32 %v1855, 16
        %v2056 = vrot.slane %v2054, 1
        %v2057 = vor.u32 %v2052, %v2056
        %v2059 = vshll.u32 %v1903, 16
        %v2061 = vrot.slane %v2059, 1
        %v2062 = vsel %vm1293, %v2057, %v2061
        %v2064 = vshrl.u32 %v1856, 16
        %v2066 = vshll.u32 %v1856, 16
        %v2068 = vrot.slane %v2066, 1
        %v2069 = vor.u32 %v2064, %v2068
        %v2071 = vshll.u32 %v1904, 16
        %v2073 = vrot.slane %v2071, 1
        %v2074 = vsel %vm1293, %v2069, %v2073
        %v2076 = vshrl.u32 %v1857, 16
        %v2078 = vshll.u32 %v1857, 16
        %v2080 = vrot.slane %v2078, 1
        %v2081 = vor.u32 %v2076, %v2080
        %v2083 = vshll.u32 %v1905, 16
        %v2085 = vrot.slane %v2083, 1
        %v2086 = vsel %vm1293, %v2081, %v2085
        %v2088 = vshrl.u32 %v1858, 16
        %v2090 = vshll.u32 %v1858, 16
        %v2092 = vrot.slane %v2090, 1
        %v2093 = vor.u32 %v2088, %v2092
        %v2095 = vshll.u32 %v1906, 16
        %v2097 = vrot.slane %v2095, 1
        %v2098 = vsel %vm1293, %v2093, %v2097
        %2099 = vrot.lane.b32.xlu0 %v1918, 4
        %v2100 = vpop.permute.xlu0 %2099
        %2101 = vrot.lane.b32.xlu0 %v1930, 4
        %v2102 = vpop.permute.xlu0 %2101
        %2103 = vrot.lane.b32.xlu0 %v1942, 4
        %v2104 = vpop.permute.xlu0 %2103
        %2105 = vrot.lane.b32.xlu0 %v1954, 4
        %v2106 = vpop.permute.xlu0 %2105
        %2107 = vrot.lane.b32.xlu0 %v1966, 4
        %v2108 = vpop.permute.xlu0 %2107
        %2109 = vrot.lane.b32.xlu0 %v1978, 4
        %v2110 = vpop.permute.xlu0 %2109
        %2111 = vrot.lane.b32.xlu0 %v1990, 4
        %v2112 = vpop.permute.xlu0 %2111
        %2113 = vrot.lane.b32.xlu0 %v2002, 4
        %v2114 = vpop.permute.xlu0 %2113
        %2115 = vrot.lane.b32.xlu0 %v2014, 4
        %v2116 = vpop.permute.xlu0 %2115
        %2117 = vrot.lane.b32.xlu0 %v2026, 4
        %v2118 = vpop.permute.xlu0 %2117
        %2119 = vrot.lane.b32.xlu0 %v2038, 4
        %v2120 = vpop.permute.xlu0 %2119
        %2121 = vrot.lane.b32.xlu0 %v2050, 4
        %v2122 = vpop.permute.xlu0 %2121
        %2123 = vrot.lane.b32.xlu0 %v2062, 4
        %v2124 = vpop.permute.xlu0 %2123
        %2125 = vrot.lane.b32.xlu0 %v2074, 4
        %v2126 = vpop.permute.xlu0 %2125
        %2127 = vrot.lane.b32.xlu0 %v2086, 4
        %v2128 = vpop.permute.xlu0 %2127
        %2129 = vrot.lane.b32.xlu0 %v2098, 4
        %v2130 = vpop.permute.xlu0 %2129
        %v2147 = vunpack.c.l.b16 %v1763
        %v2148 = vunpack.c.l.b16 %v1764
        %v2149 = vunpack.c.l.b16 %v1765
        %v2150 = vunpack.c.l.b16 %v1766
        %v2151 = vunpack.c.l.b16 %v1767
        %v2152 = vunpack.c.l.b16 %v1768
        %v2153 = vunpack.c.l.b16 %v1769
        %v2154 = vunpack.c.l.b16 %v1770
        %v2155 = vunpack.c.l.b16 %v1771
        %v2156 = vunpack.c.l.b16 %v1772
        %v2157 = vunpack.c.l.b16 %v1773
        %v2158 = vunpack.c.l.b16 %v1774
        %v2159 = vunpack.c.l.b16 %v1775
        %v2160 = vunpack.c.l.b16 %v1776
        %v2161 = vunpack.c.l.b16 %v1777
        %v2162 = vunpack.c.l.b16 %v1778
        %v2163 = vpack.c.b16 %v1812, %v2147
        %v2164 = vpack.c.b16 %v1814, %v2148
        %v2165 = vpack.c.b16 %v1816, %v2149
        %v2166 = vpack.c.b16 %v1818, %v2150
        %v2167 = vpack.c.b16 %v1820, %v2151
        %v2168 = vpack.c.b16 %v1822, %v2152
        %v2169 = vpack.c.b16 %v1824, %v2153
        %v2170 = vpack.c.b16 %v1826, %v2154
        %v2171 = vpack.c.b16 %v1828, %v2155
        %v2172 = vpack.c.b16 %v1830, %v2156
        %v2173 = vpack.c.b16 %v1832, %v2157
        %v2174 = vpack.c.b16 %v1834, %v2158
        %v2175 = vpack.c.b16 %v1836, %v2159
        %v2176 = vpack.c.b16 %v1838, %v2160
        %v2177 = vpack.c.b16 %v1840, %v2161
        %v2178 = vpack.c.b16 %v1842, %v2162
        %v2179 = vrot.slane %v2163, 1
        %v2180 = vrot.slane %v1891, 1
        %v2181 = vsel %vm1566, %v2179, %v2180
        %v2182 = vrot.slane %v2164, 1
        %v2183 = vrot.slane %v1892, 1
        %v2184 = vsel %vm1566, %v2182, %v2183
        %v2185 = vrot.slane %v2165, 1
        %v2186 = vrot.slane %v1893, 1
        %v2187 = vsel %vm1566, %v2185, %v2186
        %v2188 = vrot.slane %v2166, 1
        %v2189 = vrot.slane %v1894, 1
        %v2190 = vsel %vm1566, %v2188, %v2189
        %v2191 = vrot.slane %v2167, 1
        %v2192 = vrot.slane %v1895, 1
        %v2193 = vsel %vm1566, %v2191, %v2192
        %v2194 = vrot.slane %v2168, 1
        %v2195 = vrot.slane %v1896, 1
        %v2196 = vsel %vm1566, %v2194, %v2195
        %v2197 = vrot.slane %v2169, 1
        %v2198 = vrot.slane %v1897, 1
        %v2199 = vsel %vm1566, %v2197, %v2198
        %v2200 = vrot.slane %v2170, 1
        %v2201 = vrot.slane %v1898, 1
        %v2202 = vsel %vm1566, %v2200, %v2201
        %v2203 = vrot.slane %v2171, 1
        %v2204 = vrot.slane %v1899, 1
        %v2205 = vsel %vm1566, %v2203, %v2204
        %v2206 = vrot.slane %v2172, 1
        %v2207 = vrot.slane %v1900, 1
        %v2208 = vsel %vm1566, %v2206, %v2207
        %v2209 = vrot.slane %v2173, 1
        %v2210 = vrot.slane %v1901, 1
        %v2211 = vsel %vm1566, %v2209, %v2210
        %v2212 = vrot.slane %v2174, 1
        %v2213 = vrot.slane %v1902, 1
        %v2214 = vsel %vm1566, %v2212, %v2213
        %v2215 = vrot.slane %v2175, 1
        %v2216 = vrot.slane %v1903, 1
        %v2217 = vsel %vm1566, %v2215, %v2216
        %v2218 = vrot.slane %v2176, 1
        %v2219 = vrot.slane %v1904, 1
        %v2220 = vsel %vm1566, %v2218, %v2219
        %v2221 = vrot.slane %v2177, 1
        %v2222 = vrot.slane %v1905, 1
        %v2223 = vsel %vm1566, %v2221, %v2222
        %v2224 = vrot.slane %v2178, 1
        %v2225 = vrot.slane %v1906, 1
        %v2226 = vsel %vm1566, %v2224, %v2225
        %2227 = vrot.lane.b32.xlu0 %v2181, 8
        %v2228 = vpop.permute.xlu0 %2227
        %2229 = vrot.lane.b32.xlu0 %v2184, 8
        %v2230 = vpop.permute.xlu0 %2229
        %2231 = vrot.lane.b32.xlu0 %v2187, 8
        %v2232 = vpop.permute.xlu0 %2231
        %2233 = vrot.lane.b32.xlu0 %v2190, 8
        %v2234 = vpop.permute.xlu0 %2233
        %2235 = vrot.lane.b32.xlu0 %v2193, 8
        %v2236 = vpop.permute.xlu0 %2235
        %2237 = vrot.lane.b32.xlu0 %v2196, 8
        %v2238 = vpop.permute.xlu0 %2237
        %2239 = vrot.lane.b32.xlu0 %v2199, 8
        %v2240 = vpop.permute.xlu0 %2239
        %2241 = vrot.lane.b32.xlu0 %v2202, 8
        %v2242 = vpop.permute.xlu0 %2241
        %2243 = vrot.lane.b32.xlu0 %v2205, 8
        %v2244 = vpop.permute.xlu0 %2243
        %2245 = vrot.lane.b32.xlu0 %v2208, 8
        %v2246 = vpop.permute.xlu0 %2245
        %2247 = vrot.lane.b32.xlu0 %v2211, 8
        %v2248 = vpop.permute.xlu0 %2247
        %2249 = vrot.lane.b32.xlu0 %v2214, 8
        %v2250 = vpop.permute.xlu0 %2249
        %2251 = vrot.lane.b32.xlu0 %v2217, 8
        %v2252 = vpop.permute.xlu0 %2251
        %2253 = vrot.lane.b32.xlu0 %v2220, 8
        %v2254 = vpop.permute.xlu0 %2253
        %2255 = vrot.lane.b32.xlu0 %v2223, 8
        %v2256 = vpop.permute.xlu0 %2255
        %2257 = vrot.lane.b32.xlu0 %v2226, 8
        %v2258 = vpop.permute.xlu0 %2257
        %v2260 = vsel %vm1647, %v1843, %v2100
        %v2262 = vsel %vm1647, %v1844, %v2102
        %v2264 = vsel %vm1647, %v1845, %v2104
        %v2266 = vsel %vm1647, %v1846, %v2106
        %v2268 = vsel %vm1647, %v1847, %v2108
        %v2270 = vsel %vm1647, %v1848, %v2110
        %v2272 = vsel %vm1647, %v1849, %v2112
        %v2274 = vsel %vm1647, %v1850, %v2114
        %v2276 = vsel %vm1647, %v1851, %v2116
        %v2278 = vsel %vm1647, %v1852, %v2118
        %v2280 = vsel %vm1647, %v1853, %v2120
        %v2282 = vsel %vm1647, %v1854, %v2122
        %v2284 = vsel %vm1647, %v1855, %v2124
        %v2286 = vsel %vm1647, %v1856, %v2126
        %v2288 = vsel %vm1647, %v1857, %v2128
        %v2290 = vsel %vm1647, %v1858, %v2130
        %v2292 = vsel %vm1680, %v2260, %v2228
        %v2294 = vsel %vm1680, %v2262, %v2230
        %v2296 = vsel %vm1680, %v2264, %v2232
        %v2298 = vsel %vm1680, %v2266, %v2234
        %v2300 = vsel %vm1680, %v2268, %v2236
        %v2302 = vsel %vm1680, %v2270, %v2238
        %v2304 = vsel %vm1680, %v2272, %v2240
        %v2306 = vsel %vm1680, %v2274, %v2242
        %v2308 = vsel %vm1680, %v2276, %v2244
        %v2310 = vsel %vm1680, %v2278, %v2246
        %v2312 = vsel %vm1680, %v2280, %v2248
        %v2314 = vsel %vm1680, %v2282, %v2250
        %v2316 = vsel %vm1680, %v2284, %v2252
        %v2318 = vsel %vm1680, %v2286, %v2254
        %v2320 = vsel %vm1680, %v2288, %v2256
        %v2322 = vsel %vm1680, %v2290, %v2258
        %s2323 = scalar_lea.vmem [#allocation7], 8
        %v2324 = vld [vmem:[%s2323] sm:$0xf]
        %v2325 = vld [vmem:[%s2323 + $0x4] sm:$0x3]
        %v2328 = vunpack.c.l.b16 %v2324
        %v2329 = vunpack.c.l.b16 %v2325
        %v2330 = vpack.c.b16 %v2329, %v2328
        %vm2331 = vcmask 97280
        %v2332 = vsel %vm2331, %v2292, 0
        %v2334 = vsel %vm2331, %v2294, 0
        %v2336 = vsel %vm2331, %v2296, 0
        %v2338 = vsel %vm2331, %v2298, 0
        %v2340 = vsel %vm2331, %v2300, 0
        %v2342 = vsel %vm2331, %v2302, 0
        %v2344 = vsel %vm2331, %v2304, 0
        %v2346 = vsel %vm2331, %v2306, 0
        %v2348 = vsel %vm2331, %v2308, 0
        %v2350 = vsel %vm2331, %v2310, 0
        %v2352 = vsel %vm2331, %v2312, 0
        %v2354 = vsel %vm2331, %v2314, 0
        %v2356 = vsel %vm2331, %v2316, 0
        %v2358 = vsel %vm2331, %v2318, 0
        %v2360 = vsel %vm2331, %v2320, 0
        %v2362 = vsel %vm2331, %v2322, 0
        %vm2364 = vcmask 1045504
        %v2366 = vsel %vm2364, %v2330, 0
        %2368 = vmatprep.subr.bf16.mxu0 0
        %2369 = vmatpush1.bf16.msra.mxu0 %v2366
        %2370 = vmatprep.subr.bf16.mxu0 0
        %2371 = vmatpush1.bf16.msra.mxu0 0
        %2372 = vmatprep.subr.bf16.mxu0 0
        %2373 = vmatpush1.bf16.msra.mxu0 0
        %2374 = vmatprep.subr.bf16.mxu0 0
        %2375 = vmatpush1.bf16.msra.mxu0 0
        %2376 = vmatprep.subr.bf16.mxu0 0
        %2377 = vmatpush1.bf16.msra.mxu0 0
        %2378 = vmatprep.subr.bf16.mxu0 0
        %2379 = vmatpush1.bf16.msra.mxu0 0
        %2380 = vmatprep.subr.bf16.mxu0 0
        %2381 = vmatpush1.bf16.msra.mxu0 0
        %2382 = vmatprep.subr.bf16.mxu0 0
        %2383 = vmatpush1.bf16.msra.mxu0 0
        %2384 = vmatprep.subr.bf16.mxu0 0
        %2385 = vmatpush1.bf16.msra.mxu0 0
        %2386 = vmatprep.subr.bf16.mxu0 0
        %2387 = vmatpush1.bf16.msra.mxu0 0
        %2388 = vmatprep.subr.bf16.mxu0 0
        %2389 = vmatpush1.bf16.msra.mxu0 0
        %2390 = vmatprep.subr.bf16.mxu0 0
        %2391 = vmatpush1.bf16.msra.mxu0 0
        %2392 = vmatprep.subr.bf16.mxu0 0
        %2393 = vmatpush1.bf16.msra.mxu0 0
        %2394 = vmatprep.subr.bf16.mxu0 0
        %2395 = vmatpush1.bf16.msra.mxu0 0
        %2396 = vmatprep.subr.bf16.mxu0 0
        %2397 = vmatpush1.bf16.msra.mxu0 0
        %2398 = vmatprep.subr.bf16.mxu0 0
        %2399 = vmatpush1.bf16.msra.mxu0 0
        %2400 = vmatprep.mubr.bf16.mxu0 0
        %2401 = vmatmul.mubr.bf16.gmra.mrb[0].mxu0 %v2332
        %v2402 = vpop.f32.mrb[0].mxu0
        %v2403 = vadd.f32 0.0, %v2402
        %v2404 = vpop.f32.mrb[0].mxu0
        %v2405 = vpop.f32.mrb[0].mxu0
        %v2406 = vadd.f32 0.0, %v2405
        %v2407 = vpop.f32.mrb[0].mxu0
        %2408 = vmatprep.mubr.bf16.mxu0 0
        %2409 = vmatmul.mubr.bf16.gmra.mrb[0].mxu0 %v2334
        %v2410 = vpop.f32.mrb[0].mxu0
        %v2411 = vadd.f32 0.0, %v2410
        %v2412 = vpop.f32.mrb[0].mxu0
        %v2413 = vpop.f32.mrb[0].mxu0
        %v2414 = vadd.f32 0.0, %v2413
        %v2415 = vpop.f32.mrb[0].mxu0
        %2416 = vmatprep.mubr.bf16.mxu0 0
        %2417 = vmatmul.mubr.bf16.gmra.mrb[0].mxu0 %v2336
        %v2418 = vpop.f32.mrb[0].mxu0
        %v2419 = vadd.f32 0.0, %v2418
        %v2420 = vpop.f32.mrb[0].mxu0
        %v2421 = vpop.f32.mrb[0].mxu0
        %v2422 = vadd.f32 0.0, %v2421
        %v2423 = vpop.f32.mrb[0].mxu0
        %2424 = vmatprep.mubr.bf16.mxu0 0
        %2425 = vmatmul.mubr.bf16.gmra.mrb[0].mxu0 %v2338
        %v2426 = vpop.f32.mrb[0].mxu0
        %v2427 = vadd.f32 0.0, %v2426
        %v2428 = vpop.f32.mrb[0].mxu0
        %v2429 = vpop.f32.mrb[0].mxu0
        %v2430 = vadd.f32 0.0, %v2429
        %v2431 = vpop.f32.mrb[0].mxu0
        %2432 = vmatprep.mubr.bf16.mxu0 0
        %2433 = vmatmul.mubr.bf16.gmra.mrb[0].mxu0 %v2340
        %v2434 = vpop.f32.mrb[0].mxu0
        %v2435 = vadd.f32 0.0, %v2434
        %v2436 = vpop.f32.mrb[0].mxu0
        %v2437 = vpop.f32.mrb[0].mxu0
        %v2438 = vadd.f32 0.0, %v2437
        %v2439 = vpop.f32.mrb[0].mxu0
        %2440 = vmatprep.mubr.bf16.mxu0 0
        %2441 = vmatmul.mubr.bf16.gmra.mrb[0].mxu0 %v2342
        %v2442 = vpop.f32.mrb[0].mxu0
        %v2443 = vadd.f32 0.0, %v2442
        %v2444 = vpop.f32.mrb[0].mxu0
        %v2445 = vpop.f32.mrb[0].mxu0
        %v2446 = vadd.f32 0.0, %v2445
        %v2447 = vpop.f32.mrb[0].mxu0
        %2448 = vmatprep.mubr.bf16.mxu0 0
        %2449 = vmatmul.mubr.bf16.gmra.mrb[0].mxu0 %v2344
        %v2450 = vpop.f32.mrb[0].mxu0
        %v2451 = vadd.f32 0.0, %v2450
        %v2452 = vpop.f32.mrb[0].mxu0
        %v2453 = vpop.f32.mrb[0].mxu0
        %v2454 = vadd.f32 0.0, %v2453
        %v2455 = vpop.f32.mrb[0].mxu0
        %2456 = vmatprep.mubr.bf16.mxu0 0
        %2457 = vmatmul.mubr.bf16.gmra.mrb[0].mxu0 %v2346
        %v2458 = vpop.f32.mrb[0].mxu0
        %v2459 = vadd.f32 0.0, %v2458
        %v2460 = vpop.f32.mrb[0].mxu0
        %v2461 = vpop.f32.mrb[0].mxu0
        %v2462 = vadd.f32 0.0, %v2461
        %v2463 = vpop.f32.mrb[0].mxu0
        %2464 = vmatprep.mubr.bf16.mxu0 0
        %2465 = vmatmul.mubr.bf16.gmra.mrb[0].mxu0 %v2348
        %v2466 = vpop.f32.mrb[0].mxu0
        %v2467 = vadd.f32 0.0, %v2466
        %v2468 = vpop.f32.mrb[0].mxu0
        %v2469 = vpop.f32.mrb[0].mxu0
        %v2470 = vadd.f32 0.0, %v2469
        %v2471 = vpop.f32.mrb[0].mxu0
        %2472 = vmatprep.mubr.bf16.mxu0 0
        %2473 = vmatmul.mubr.bf16.gmra.mrb[0].mxu0 %v2350
        %v2474 = vpop.f32.mrb[0].mxu0
        %v2475 = vadd.f32 0.0, %v2474
        %v2476 = vpop.f32.mrb[0].mxu0
        %v2477 = vpop.f32.mrb[0].mxu0
        %v2478 = vadd.f32 0.0, %v2477
        %v2479 = vpop.f32.mrb[0].mxu0
        %2480 = vmatprep.mubr.bf16.mxu0 0
        %2481 = vmatmul.mubr.bf16.gmra.mrb[0].mxu0 %v2352
        %v2482 = vpop.f32.mrb[0].mxu0
        %v2483 = vadd.f32 0.0, %v2482
        %v2484 = vpop.f32.mrb[0].mxu0
        %v2485 = vpop.f32.mrb[0].mxu0
        %v2486 = vadd.f32 0.0, %v2485
        %v2487 = vpop.f32.mrb[0].mxu0
        %2488 = vmatprep.mubr.bf16.mxu0 0
        %2489 = vmatmul.mubr.bf16.gmra.mrb[0].mxu0 %v2354
        %v2490 = vpop.f32.mrb[0].mxu0
        %v2491 = vadd.f32 0.0, %v2490
        %v2492 = vpop.f32.mrb[0].mxu0
        %v2493 = vpop.f32.mrb[0].mxu0
        %v2494 = vadd.f32 0.0, %v2493
        %v2495 = vpop.f32.mrb[0].mxu0
        %2496 = vmatprep.mubr.bf16.mxu0 0
        %2497 = vmatmul.mubr.bf16.gmra.mrb[0].mxu0 %v2356
        %v2498 = vpop.f32.mrb[0].mxu0
        %v2499 = vadd.f32 0.0, %v2498
        %v2500 = vpop.f32.mrb[0].mxu0
        %v2501 = vpop.f32.mrb[0].mxu0
        %v2502 = vadd.f32 0.0, %v2501
        %v2503 = vpop.f32.mrb[0].mxu0
        %2504 = vmatprep.mubr.bf16.mxu0 0
        %2505 = vmatmul.mubr.bf16.gmra.mrb[0].mxu0 %v2358
        %v2506 = vpop.f32.mrb[0].mxu0
        %v2507 = vadd.f32 0.0, %v2506
        %v2508 = vpop.f32.mrb[0].mxu0
        %v2509 = vpop.f32.mrb[0].mxu0
        %v2510 = vadd.f32 0.0, %v2509
        %v2511 = vpop.f32.mrb[0].mxu0
        %2512 = vmatprep.mubr.bf16.mxu0 0
        %2513 = vmatmul.mubr.bf16.gmra.mrb[0].mxu0 %v2360
        %v2514 = vpop.f32.mrb[0].mxu0
        %v2515 = vadd.f32 0.0, %v2514
        %v2516 = vpop.f32.mrb[0].mxu0
        %v2517 = vpop.f32.mrb[0].mxu0
        %v2518 = vadd.f32 0.0, %v2517
        %v2519 = vpop.f32.mrb[0].mxu0
        %2520 = vmatprep.mubr.bf16.mxu0 0
        %2521 = vmatmul.mubr.bf16.gmra.mrb[0].mxu0 %v2362
        %v2522 = vpop.f32.mrb[0].mxu0
        %v2523 = vadd.f32 0.0, %v2522
        %v2524 = vpop.f32.mrb[0].mxu0
        %v2525 = vpop.f32.mrb[0].mxu0
        %v2526 = vadd.f32 0.0, %v2525
        %v2527 = vpop.f32.mrb[0].mxu0
        %2528 = vdwg.mxu0
        %v2531 = vunpack.c.l.b16 %v1713
        %v2532 = vunpack.c.l.b16 %v1714
        %v2533 = vpack.c.b16 %v2532, %v2531
        %v2534 = vsel %vm2331, %v1682, 0
        %v2536 = vsel %vm2331, %v1684, 0
        %v2538 = vsel %vm2331, %v1686, 0
        %v2540 = vsel %vm2331, %v1688, 0
        %v2542 = vsel %vm2331, %v1690, 0
        %v2544 = vsel %vm2331, %v1692, 0
        %v2546 = vsel %vm2331, %v1694, 0
        %v2548 = vsel %vm2331, %v1696, 0
        %v2550 = vsel %vm2331, %v1698, 0
        %v2552 = vsel %vm2331, %v1700, 0
        %v2554 = vsel %vm2331, %v1702, 0
        %v2556 = vsel %vm2331, %v1704, 0
        %v2558 = vsel %vm2331, %v1706, 0
        %v2560 = vsel %vm2331, %v1708, 0
        %v2562 = vsel %vm2331, %v1710, 0
        %v2564 = vsel %vm2331, %v1712, 0
        %v2567 = vsel %vm2364, %v2533, 0
        %2569 = vmatprep.subr.bf16.mxu0 0
        %2570 = vmatpush1.bf16.msra.mxu0 %v2567
        %2571 = vmatprep.subr.bf16.mxu0 0
        %2572 = vmatpush1.bf16.msra.mxu0 0
        %2573 = vmatprep.subr.bf16.mxu0 0
        %2574 = vmatpush1.bf16.msra.mxu0 0
        %2575 = vmatprep.subr.bf16.mxu0 0
        %2576 = vmatpush1.bf16.msra.mxu0 0
        %2577 = vmatprep.subr.bf16.mxu0 0
        %2578 = vmatpush1.bf16.msra.mxu0 0
        %2579 = vmatprep.subr.bf16.mxu0 0
        %2580 = vmatpush1.bf16.msra.mxu0 0
        %2581 = vmatprep.subr.bf16.mxu0 0
        %2582 = vmatpush1.bf16.msra.mxu0 0
        %2583 = vmatprep.subr.bf16.mxu0 0
        %2584 = vmatpush1.bf16.msra.mxu0 0
        %2585 = vmatprep.subr.bf16.mxu0 0
        %2586 = vmatpush1.bf16.msra.mxu0 0
        %2587 = vmatprep.subr.bf16.mxu0 0
        %2588 = vmatpush1.bf16.msra.mxu0 0
        %2589 = vmatprep.subr.bf16.mxu0 0
        %2590 = vmatpush1.bf16.msra.mxu0 0
        %2591 = vmatprep.subr.bf16.mxu0 0
        %2592 = vmatpush1.bf16.msra.mxu0 0
        %2593 = vmatprep.subr.bf16.mxu0 0
        %2594 = vmatpush1.bf16.msra.mxu0 0
        %2595 = vmatprep.subr.bf16.mxu0 0
        %2596 = vmatpush1.bf16.msra.mxu0 0
        %2597 = vmatprep.subr.bf16.mxu0 0
        %2598 = vmatpush1.bf16.msra.mxu0 0
        %2599 = vmatprep.subr.bf16.mxu0 0
        %2600 = vmatpush1.bf16.msra.mxu0 0
        %2601 = vmatprep.mubr.bf16.mxu0 0
        %2602 = vmatmul.mubr.bf16.gmra.mrb[0].mxu0 %v2534
        %v2603 = vpop.f32.mrb[0].mxu0
        %v2604 = vadd.f32 %v2403, %v2603
        %v2605 = vpop.f32.mrb[0].mxu0
        %v2606 = vpop.f32.mrb[0].mxu0
        %v2607 = vadd.f32 %v2406, %v2606
        %v2608 = vpop.f32.mrb[0].mxu0
        %2609 = vmatprep.mubr.bf16.mxu0 0
        %2610 = vmatmul.mubr.bf16.gmra.mrb[0].mxu0 %v2536
        %v2611 = vpop.f32.mrb[0].mxu0
        %v2612 = vadd.f32 %v2411, %v2611
        %v2613 = vpop.f32.mrb[0].mxu0
        %v2614 = vpop.f32.mrb[0].mxu0
        %v2615 = vadd.f32 %v2414, %v2614
        %v2616 = vpop.f32.mrb[0].mxu0
        %2617 = vmatprep.mubr.bf16.mxu0 0
        %2618 = vmatmul.mubr.bf16.gmra.mrb[0].mxu0 %v2538
        %v2619 = vpop.f32.mrb[0].mxu0
        %v2620 = vadd.f32 %v2419, %v2619
        %v2621 = vpop.f32.mrb[0].mxu0
        %v2622 = vpop.f32.mrb[0].mxu0
        %v2623 = vadd.f32 %v2422, %v2622
        %v2624 = vpop.f32.mrb[0].mxu0
        %2625 = vmatprep.mubr.bf16.mxu0 0
        %2626 = vmatmul.mubr.bf16.gmra.mrb[0].mxu0 %v2540
        %v2627 = vpop.f32.mrb[0].mxu0
        %v2628 = vadd.f32 %v2427, %v2627
        %v2629 = vpop.f32.mrb[0].mxu0
        %v2630 = vpop.f32.mrb[0].mxu0
        %v2631 = vadd.f32 %v2430, %v2630
        %v2632 = vpop.f32.mrb[0].mxu0
        %2633 = vmatprep.mubr.bf16.mxu0 0
        %2634 = vmatmul.mubr.bf16.gmra.mrb[0].mxu0 %v2542
        %v2635 = vpop.f32.mrb[0].mxu0
        %v2636 = vadd.f32 %v2435, %v2635
        %v2637 = vpop.f32.mrb[0].mxu0
        %v2638 = vpop.f32.mrb[0].mxu0
        %v2639 = vadd.f32 %v2438, %v2638
        %v2640 = vpop.f32.mrb[0].mxu0
        %2641 = vmatprep.mubr.bf16.mxu0 0
        %2642 = vmatmul.mubr.bf16.gmra.mrb[0].mxu0 %v2544
        %v2643 = vpop.f32.mrb[0].mxu0
        %v2644 = vadd.f32 %v2443, %v2643
        %v2645 = vpop.f32.mrb[0].mxu0
        %v2646 = vpop.f32.mrb[0].mxu0
        %v2647 = vadd.f32 %v2446, %v2646
        %v2648 = vpop.f32.mrb[0].mxu0
        %2649 = vmatprep.mubr.bf16.mxu0 0
        %2650 = vmatmul.mubr.bf16.gmra.mrb[0].mxu0 %v2546
        %v2651 = vpop.f32.mrb[0].mxu0
        %v2652 = vadd.f32 %v2451, %v2651
        %v2653 = vpop.f32.mrb[0].mxu0
        %v2654 = vpop.f32.mrb[0].mxu0
        %v2655 = vadd.f32 %v2454, %v2654
        %v2656 = vpop.f32.mrb[0].mxu0
        %2657 = vmatprep.mubr.bf16.mxu0 0
        %2658 = vmatmul.mubr.bf16.gmra.mrb[0].mxu0 %v2548
        %v2659 = vpop.f32.mrb[0].mxu0
        %v2660 = vadd.f32 %v2459, %v2659
        %v2661 = vpop.f32.mrb[0].mxu0
        %v2662 = vpop.f32.mrb[0].mxu0
        %v2663 = vadd.f32 %v2462, %v2662
        %v2664 = vpop.f32.mrb[0].mxu0
        %2665 = vmatprep.mubr.bf16.mxu0 0
        %2666 = vmatmul.mubr.bf16.gmra.mrb[0].mxu0 %v2550
        %v2667 = vpop.f32.mrb[0].mxu0
        %v2668 = vadd.f32 %v2467, %v2667
        %v2669 = vpop.f32.mrb[0].mxu0
        %v2670 = vpop.f32.mrb[0].mxu0
        %v2671 = vadd.f32 %v2470, %v2670
        %v2672 = vpop.f32.mrb[0].mxu0
        %2673 = vmatprep.mubr.bf16.mxu0 0
        %2674 = vmatmul.mubr.bf16.gmra.mrb[0].mxu0 %v2552
        %v2675 = vpop.f32.mrb[0].mxu0
        %v2676 = vadd.f32 %v2475, %v2675
        %v2677 = vpop.f32.mrb[0].mxu0
        %v2678 = vpop.f32.mrb[0].mxu0
        %v2679 = vadd.f32 %v2478, %v2678
        %v2680 = vpop.f32.mrb[0].mxu0
        %2681 = vmatprep.mubr.bf16.mxu0 0
        %2682 = vmatmul.mubr.bf16.gmra.mrb[0].mxu0 %v2554
        %v2683 = vpop.f32.mrb[0].mxu0
        %v2684 = vadd.f32 %v2483, %v2683
        %v2685 = vpop.f32.mrb[0].mxu0
        %v2686 = vpop.f32.mrb[0].mxu0
        %v2687 = vadd.f32 %v2486, %v2686
        %v2688 = vpop.f32.mrb[0].mxu0
        %2689 = vmatprep.mubr.bf16.mxu0 0
        %2690 = vmatmul.mubr.bf16.gmra.mrb[0].mxu0 %v2556
        %v2691 = vpop.f32.mrb[0].mxu0
        %v2692 = vadd.f32 %v2491, %v2691
        %v2693 = vpop.f32.mrb[0].mxu0
        %v2694 = vpop.f32.mrb[0].mxu0
        %v2695 = vadd.f32 %v2494, %v2694
        %v2696 = vpop.f32.mrb[0].mxu0
        %2697 = vmatprep.mubr.bf16.mxu0 0
        %2698 = vmatmul.mubr.bf16.gmra.mrb[0].mxu0 %v2558
        %v2699 = vpop.f32.mrb[0].mxu0
        %v2700 = vadd.f32 %v2499, %v2699
        %v2701 = vpop.f32.mrb[0].mxu0
        %v2702 = vpop.f32.mrb[0].mxu0
        %v2703 = vadd.f32 %v2502, %v2702
        %v2704 = vpop.f32.mrb[0].mxu0
        %2705 = vmatprep.mubr.bf16.mxu0 0
        %2706 = vmatmul.mubr.bf16.gmra.mrb[0].mxu0 %v2560
        %v2707 = vpop.f32.mrb[0].mxu0
        %v2708 = vadd.f32 %v2507, %v2707
        %v2709 = vpop.f32.mrb[0].mxu0
        %v2710 = vpop.f32.mrb[0].mxu0
        %v2711 = vadd.f32 %v2510, %v2710
        %v2712 = vpop.f32.mrb[0].mxu0
        %2713 = vmatprep.mubr.bf16.mxu0 0
        %2714 = vmatmul.mubr.bf16.gmra.mrb[0].mxu0 %v2562
        %v2715 = vpop.f32.mrb[0].mxu0
        %v2716 = vadd.f32 %v2515, %v2715
        %v2717 = vpop.f32.mrb[0].mxu0
        %v2718 = vpop.f32.mrb[0].mxu0
        %v2719 = vadd.f32 %v2518, %v2718
        %v2720 = vpop.f32.mrb[0].mxu0
        %2721 = vmatprep.mubr.bf16.mxu0 0
        %2722 = vmatmul.mubr.bf16.gmra.mrb[0].mxu0 %v2564
        %v2723 = vpop.f32.mrb[0].mxu0
        %v2724 = vadd.f32 %v2523, %v2723
        %v2725 = vpop.f32.mrb[0].mxu0
        %v2726 = vpop.f32.mrb[0].mxu0
        %v2727 = vadd.f32 %v2526, %v2726
        %v2728 = vpop.f32.mrb[0].mxu0
        %2729 = vdwg.mxu0
        %v2730 = vld [vmem:[%s789] sm:$0xf]
        %v2731 = vld [vmem:[%s789 + $0x4] sm:$0xf]
        %v2732 = vld [vmem:[%s789 + $0xc] sm:$0xf]
        %v2733 = vld [vmem:[%s789 + $0x10] sm:$0xf]
        %v2734 = vld [vmem:[%s789 + $0x18] sm:$0xf]
        %v2735 = vld [vmem:[%s789 + $0x1c] sm:$0xf]
        %v2736 = vld [vmem:[%s789 + $0x24] sm:$0xf]
        %v2737 = vld [vmem:[%s789 + $0x28] sm:$0xf]
        %v2738 = vld [vmem:[%s789 + $0x30] sm:$0xf]
        %v2739 = vld [vmem:[%s789 + $0x34] sm:$0xf]
        %v2740 = vld [vmem:[%s789 + $0x3c] sm:$0xf]
        %v2741 = vld [vmem:[%s789 + $0x40] sm:$0xf]
        %v2742 = vld [vmem:[%s789 + $0x48] sm:$0xf]
        %v2743 = vld [vmem:[%s789 + $0x4c] sm:$0xf]
        %v2744 = vld [vmem:[%s789 + $0x54] sm:$0xf]
        %v2745 = vld [vmem:[%s789 + $0x58] sm:$0xf]
        %v2746 = vld [vmem:[%s789 + $0x60] sm:$0xf]
        %v2747 = vld [vmem:[%s789 + $0x64] sm:$0xf]
        %v2748 = vld [vmem:[%s789 + $0x6c] sm:$0xf]
        %v2749 = vld [vmem:[%s789 + $0x70] sm:$0xf]
        %v2750 = vld [vmem:[%s789 + $0x78] sm:$0xf]
        %v2751 = vld [vmem:[%s789 + $0x7c] sm:$0xf]
        %v2752 = vld [vmem:[%s789 + $0x84] sm:$0xf]
        %v2753 = vld [vmem:[%s789 + $0x88] sm:$0xf]
        %v2754 = vld [vmem:[%s789 + $0x90] sm:$0xf]
        %v2755 = vld [vmem:[%s789 + $0x94] sm:$0xf]
        %v2756 = vld [vmem:[%s789 + $0x9c] sm:$0xf]
        %v2757 = vld [vmem:[%s789 + $0xa0] sm:$0xf]
        %v2758 = vld [vmem:[%s789 + $0xa8] sm:$0xf]
        %v2759 = vld [vmem:[%s789 + $0xac] sm:$0xf]
        %v2760 = vld [vmem:[%s789 + $0xb4] sm:$0xf]
        %v2761 = vld [vmem:[%s789 + $0xb8] sm:$0xf]
        %v2762 = vld [vmem:[%s789 + $0x8] sm:$0x1]
        %v2763 = vld [vmem:[%s789 + $0x14] sm:$0x1]
        %v2764 = vld [vmem:[%s789 + $0x20] sm:$0x1]
        %v2765 = vld [vmem:[%s789 + $0x2c] sm:$0x1]
        %v2766 = vld [vmem:[%s789 + $0x38] sm:$0x1]
        %v2767 = vld [vmem:[%s789 + $0x44] sm:$0x1]
        %v2768 = vld [vmem:[%s789 + $0x50] sm:$0x1]
        %v2769 = vld [vmem:[%s789 + $0x5c] sm:$0x1]
        %v2770 = vld [vmem:[%s789 + $0x68] sm:$0x1]
        %v2771 = vld [vmem:[%s789 + $0x74] sm:$0x1]
        %v2772 = vld [vmem:[%s789 + $0x80] sm:$0x1]
        %v2773 = vld [vmem:[%s789 + $0x8c] sm:$0x1]
        %v2774 = vld [vmem:[%s789 + $0x98] sm:$0x1]
        %v2775 = vld [vmem:[%s789 + $0xa4] sm:$0x1]
        %v2776 = vld [vmem:[%s789 + $0xb0] sm:$0x1]
        %v2777 = vld [vmem:[%s789 + $0xbc] sm:$0x1]
        %v2778 = vld [vmem:[%s789] sm:$0xe]
        %v2779 = vld [vmem:[%s789 + $0xc] sm:$0xe]
        %v2780 = vld [vmem:[%s789 + $0x18] sm:$0xe]
        %v2781 = vld [vmem:[%s789 + $0x24] sm:$0xe]
        %v2782 = vld [vmem:[%s789 + $0x30] sm:$0xe]
        %v2783 = vld [vmem:[%s789 + $0x3c] sm:$0xe]
        %v2784 = vld [vmem:[%s789 + $0x48] sm:$0xe]
        %v2785 = vld [vmem:[%s789 + $0x54] sm:$0xe]
        %v2786 = vld [vmem:[%s789 + $0x60] sm:$0xe]
        %v2787 = vld [vmem:[%s789 + $0x6c] sm:$0xe]
        %v2788 = vld [vmem:[%s789 + $0x78] sm:$0xe]
        %v2789 = vld [vmem:[%s789 + $0x84] sm:$0xe]
        %v2790 = vld [vmem:[%s789 + $0x90] sm:$0xe]
        %v2791 = vld [vmem:[%s789 + $0x9c] sm:$0xe]
        %v2792 = vld [vmem:[%s789 + $0xa8] sm:$0xe]
        %v2793 = vld [vmem:[%s789 + $0xb4] sm:$0xe]
        %v2826 = vunpack.c.l.b16 %v2730
        %v2827 = vunpack.c.l.b16 %v2731
        %v2828 = vunpack.c.l.b16 %v2732
        %v2829 = vunpack.c.l.b16 %v2733
        %v2830 = vunpack.c.l.b16 %v2734
        %v2831 = vunpack.c.l.b16 %v2735
        %v2832 = vunpack.c.l.b16 %v2736
        %v2833 = vunpack.c.l.b16 %v2737
        %v2834 = vunpack.c.l.b16 %v2738
        %v2835 = vunpack.c.l.b16 %v2739
        %v2836 = vunpack.c.l.b16 %v2740
        %v2837 = vunpack.c.l.b16 %v2741
        %v2838 = vunpack.c.l.b16 %v2742
        %v2839 = vunpack.c.l.b16 %v2743
        %v2840 = vunpack.c.l.b16 %v2744
        %v2841 = vunpack.c.l.b16 %v2745
        %v2842 = vunpack.c.l.b16 %v2746
        %v2843 = vunpack.c.l.b16 %v2747
        %v2844 = vunpack.c.l.b16 %v2748
        %v2845 = vunpack.c.l.b16 %v2749
        %v2846 = vunpack.c.l.b16 %v2750
        %v2847 = vunpack.c.l.b16 %v2751
        %v2848 = vunpack.c.l.b16 %v2752
        %v2849 = vunpack.c.l.b16 %v2753
        %v2850 = vunpack.c.l.b16 %v2754
        %v2851 = vunpack.c.l.b16 %v2755
        %v2852 = vunpack.c.l.b16 %v2756
        %v2853 = vunpack.c.l.b16 %v2757
        %v2854 = vunpack.c.l.b16 %v2758
        %v2855 = vunpack.c.l.b16 %v2759
        %v2856 = vunpack.c.l.b16 %v2760
        %v2857 = vunpack.c.l.b16 %v2761
        %v2858 = vpack.c.b16 %v2827, %v2826
        %v2859 = vpack.c.b16 %v2829, %v2828
        %v2860 = vpack.c.b16 %v2831, %v2830
        %v2861 = vpack.c.b16 %v2833, %v2832
        %v2862 = vpack.c.b16 %v2835, %v2834
        %v2863 = vpack.c.b16 %v2837, %v2836
        %v2864 = vpack.c.b16 %v2839, %v2838
        %v2865 = vpack.c.b16 %v2841, %v2840
        %v2866 = vpack.c.b16 %v2843, %v2842
        %v2867 = vpack.c.b16 %v2845, %v2844
        %v2868 = vpack.c.b16 %v2847, %v2846
        %v2869 = vpack.c.b16 %v2849, %v2848
        %v2870 = vpack.c.b16 %v2851, %v2850
        %v2871 = vpack.c.b16 %v2853, %v2852
        %v2872 = vpack.c.b16 %v2855, %v2854
        %v2873 = vpack.c.b16 %v2857, %v2856
        %v2890 = vunpack.c.l.b16 %v2762
        %v2891 = vunpack.c.l.b16 %v2763
        %v2892 = vunpack.c.l.b16 %v2764
        %v2893 = vunpack.c.l.b16 %v2765
        %v2894 = vunpack.c.l.b16 %v2766
        %v2895 = vunpack.c.l.b16 %v2767
        %v2896 = vunpack.c.l.b16 %v2768
        %v2897 = vunpack.c.l.b16 %v2769
        %v2898 = vunpack.c.l.b16 %v2770
        %v2899 = vunpack.c.l.b16 %v2771
        %v2900 = vunpack.c.l.b16 %v2772
        %v2901 = vunpack.c.l.b16 %v2773
        %v2902 = vunpack.c.l.b16 %v2774
        %v2903 = vunpack.c.l.b16 %v2775
        %v2904 = vunpack.c.l.b16 %v2776
        %v2905 = vunpack.c.l.b16 %v2777
        %v2906 = vpack.c.b16 %v2890, %v2890
        %v2907 = vpack.c.b16 %v2891, %v2891
        %v2908 = vpack.c.b16 %v2892, %v2892
        %v2909 = vpack.c.b16 %v2893, %v2893
        %v2910 = vpack.c.b16 %v2894, %v2894
        %v2911 = vpack.c.b16 %v2895, %v2895
        %v2912 = vpack.c.b16 %v2896, %v2896
        %v2913 = vpack.c.b16 %v2897, %v2897
        %v2914 = vpack.c.b16 %v2898, %v2898
        %v2915 = vpack.c.b16 %v2899, %v2899
        %v2916 = vpack.c.b16 %v2900, %v2900
        %v2917 = vpack.c.b16 %v2901, %v2901
        %v2918 = vpack.c.b16 %v2902, %v2902
        %v2919 = vpack.c.b16 %v2903, %v2903
        %v2920 = vpack.c.b16 %v2904, %v2904
        %v2921 = vpack.c.b16 %v2905, %v2905
        %v2923 = vshrl.u32 %v2858, 16
        %v2925 = vshll.u32 %v2858, 16
        %v2927 = vrot.slane %v2925, 1
        %v2928 = vor.u32 %v2923, %v2927
        %v2930 = vshll.u32 %v2906, 16
        %v2932 = vrot.slane %v2930, 1
        %v2933 = vsel %vm1293, %v2928, %v2932
        %v2935 = vshrl.u32 %v2859, 16
        %v2937 = vshll.u32 %v2859, 16
        %v2939 = vrot.slane %v2937, 1
        %v2940 = vor.u32 %v2935, %v2939
        %v2942 = vshll.u32 %v2907, 16
        %v2944 = vrot.slane %v2942, 1
        %v2945 = vsel %vm1293, %v2940, %v2944
        %v2947 = vshrl.u32 %v2860, 16
        %v2949 = vshll.u32 %v2860, 16
        %v2951 = vrot.slane %v2949, 1
        %v2952 = vor.u32 %v2947, %v2951
        %v2954 = vshll.u32 %v2908, 16
        %v2956 = vrot.slane %v2954, 1
        %v2957 = vsel %vm1293, %v2952, %v2956
        %v2959 = vshrl.u32 %v2861, 16
        %v2961 = vshll.u32 %v2861, 16
        %v2963 = vrot.slane %v2961, 1
        %v2964 = vor.u32 %v2959, %v2963
        %v2966 = vshll.u32 %v2909, 16
        %v2968 = vrot.slane %v2966, 1
        %v2969 = vsel %vm1293, %v2964, %v2968
        %v2971 = vshrl.u32 %v2862, 16
        %v2973 = vshll.u32 %v2862, 16
        %v2975 = vrot.slane %v2973, 1
        %v2976 = vor.u32 %v2971, %v2975
        %v2978 = vshll.u32 %v2910, 16
        %v2980 = vrot.slane %v2978, 1
        %v2981 = vsel %vm1293, %v2976, %v2980
        %v2983 = vshrl.u32 %v2863, 16
        %v2985 = vshll.u32 %v2863, 16
        %v2987 = vrot.slane %v2985, 1
        %v2988 = vor.u32 %v2983, %v2987
        %v2990 = vshll.u32 %v2911, 16
        %v2992 = vrot.slane %v2990, 1
        %v2993 = vsel %vm1293, %v2988, %v2992
        %v2995 = vshrl.u32 %v2864, 16
        %v2997 = vshll.u32 %v2864, 16
        %v2999 = vrot.slane %v2997, 1
        %v3000 = vor.u32 %v2995, %v2999
        %v3002 = vshll.u32 %v2912, 16
        %v3004 = vrot.slane %v3002, 1
        %v3005 = vsel %vm1293, %v3000, %v3004
        %v3007 = vshrl.u32 %v2865, 16
        %v3009 = vshll.u32 %v2865, 16
        %v3011 = vrot.slane %v3009, 1
        %v3012 = vor.u32 %v3007, %v3011
        %v3014 = vshll.u32 %v2913, 16
        %v3016 = vrot.slane %v3014, 1
        %v3017 = vsel %vm1293, %v3012, %v3016
        %v3019 = vshrl.u32 %v2866, 16
        %v3021 = vshll.u32 %v2866, 16
        %v3023 = vrot.slane %v3021, 1
        %v3024 = vor.u32 %v3019, %v3023
        %v3026 = vshll.u32 %v2914, 16
        %v3028 = vrot.slane %v3026, 1
        %v3029 = vsel %vm1293, %v3024, %v3028
        %v3031 = vshrl.u32 %v2867, 16
        %v3033 = vshll.u32 %v2867, 16
        %v3035 = vrot.slane %v3033, 1
        %v3036 = vor.u32 %v3031, %v3035
        %v3038 = vshll.u32 %v2915, 16
        %v3040 = vrot.slane %v3038, 1
        %v3041 = vsel %vm1293, %v3036, %v3040
        %v3043 = vshrl.u32 %v2868, 16
        %v3045 = vshll.u32 %v2868, 16
        %v3047 = vrot.slane %v3045, 1
        %v3048 = vor.u32 %v3043, %v3047
        %v3050 = vshll.u32 %v2916, 16
        %v3052 = vrot.slane %v3050, 1
        %v3053 = vsel %vm1293, %v3048, %v3052
        %v3055 = vshrl.u32 %v2869, 16
        %v3057 = vshll.u32 %v2869, 16
        %v3059 = vrot.slane %v3057, 1
        %v3060 = vor.u32 %v3055, %v3059
        %v3062 = vshll.u32 %v2917, 16
        %v3064 = vrot.slane %v3062, 1
        %v3065 = vsel %vm1293, %v3060, %v3064
        %v3067 = vshrl.u32 %v2870, 16
        %v3069 = vshll.u32 %v2870, 16
        %v3071 = vrot.slane %v3069, 1
        %v3072 = vor.u32 %v3067, %v3071
        %v3074 = vshll.u32 %v2918, 16
        %v3076 = vrot.slane %v3074, 1
        %v3077 = vsel %vm1293, %v3072, %v3076
        %v3079 = vshrl.u32 %v2871, 16
        %v3081 = vshll.u32 %v2871, 16
        %v3083 = vrot.slane %v3081, 1
        %v3084 = vor.u32 %v3079, %v3083
        %v3086 = vshll.u32 %v2919, 16
        %v3088 = vrot.slane %v3086, 1
        %v3089 = vsel %vm1293, %v3084, %v3088
        %v3091 = vshrl.u32 %v2872, 16
        %v3093 = vshll.u32 %v2872, 16
        %v3095 = vrot.slane %v3093, 1
        %v3096 = vor.u32 %v3091, %v3095
        %v3098 = vshll.u32 %v2920, 16
        %v3100 = vrot.slane %v3098, 1
        %v3101 = vsel %vm1293, %v3096, %v3100
        %v3103 = vshrl.u32 %v2873, 16
        %v3105 = vshll.u32 %v2873, 16
        %v3107 = vrot.slane %v3105, 1
        %v3108 = vor.u32 %v3103, %v3107
        %v3110 = vshll.u32 %v2921, 16
        %v3112 = vrot.slane %v3110, 1
        %v3113 = vsel %vm1293, %v3108, %v3112
        %3114 = vrot.lane.b32.xlu0 %v2933, 4
        %v3115 = vpop.permute.xlu0 %3114
        %3116 = vrot.lane.b32.xlu0 %v2945, 4
        %v3117 = vpop.permute.xlu0 %3116
        %3118 = vrot.lane.b32.xlu0 %v2957, 4
        %v3119 = vpop.permute.xlu0 %3118
        %3120 = vrot.lane.b32.xlu0 %v2969, 4
        %v3121 = vpop.permute.xlu0 %3120
        %3122 = vrot.lane.b32.xlu0 %v2981, 4
        %v3123 = vpop.permute.xlu0 %3122
        %3124 = vrot.lane.b32.xlu0 %v2993, 4
        %v3125 = vpop.permute.xlu0 %3124
        %3126 = vrot.lane.b32.xlu0 %v3005, 4
        %v3127 = vpop.permute.xlu0 %3126
        %3128 = vrot.lane.b32.xlu0 %v3017, 4
        %v3129 = vpop.permute.xlu0 %3128
        %3130 = vrot.lane.b32.xlu0 %v3029, 4
        %v3131 = vpop.permute.xlu0 %3130
        %3132 = vrot.lane.b32.xlu0 %v3041, 4
        %v3133 = vpop.permute.xlu0 %3132
        %3134 = vrot.lane.b32.xlu0 %v3053, 4
        %v3135 = vpop.permute.xlu0 %3134
        %3136 = vrot.lane.b32.xlu0 %v3065, 4
        %v3137 = vpop.permute.xlu0 %3136
        %3138 = vrot.lane.b32.xlu0 %v3077, 4
        %v3139 = vpop.permute.xlu0 %3138
        %3140 = vrot.lane.b32.xlu0 %v3089, 4
        %v3141 = vpop.permute.xlu0 %3140
        %3142 = vrot.lane.b32.xlu0 %v3101, 4
        %v3143 = vpop.permute.xlu0 %3142
        %3144 = vrot.lane.b32.xlu0 %v3113, 4
        %v3145 = vpop.permute.xlu0 %3144
        %v3162 = vunpack.c.l.b16 %v2778
        %v3163 = vunpack.c.l.b16 %v2779
        %v3164 = vunpack.c.l.b16 %v2780
        %v3165 = vunpack.c.l.b16 %v2781
        %v3166 = vunpack.c.l.b16 %v2782
        %v3167 = vunpack.c.l.b16 %v2783
        %v3168 = vunpack.c.l.b16 %v2784
        %v3169 = vunpack.c.l.b16 %v2785
        %v3170 = vunpack.c.l.b16 %v2786
        %v3171 = vunpack.c.l.b16 %v2787
        %v3172 = vunpack.c.l.b16 %v2788
        %v3173 = vunpack.c.l.b16 %v2789
        %v3174 = vunpack.c.l.b16 %v2790
        %v3175 = vunpack.c.l.b16 %v2791
        %v3176 = vunpack.c.l.b16 %v2792
        %v3177 = vunpack.c.l.b16 %v2793
        %v3178 = vpack.c.b16 %v2827, %v3162
        %v3179 = vpack.c.b16 %v2829, %v3163
        %v3180 = vpack.c.b16 %v2831, %v3164
        %v3181 = vpack.c.b16 %v2833, %v3165
        %v3182 = vpack.c.b16 %v2835, %v3166
        %v3183 = vpack.c.b16 %v2837, %v3167
        %v3184 = vpack.c.b16 %v2839, %v3168
        %v3185 = vpack.c.b16 %v2841, %v3169
        %v3186 = vpack.c.b16 %v2843, %v3170
        %v3187 = vpack.c.b16 %v2845, %v3171
        %v3188 = vpack.c.b16 %v2847, %v3172
        %v3189 = vpack.c.b16 %v2849, %v3173
        %v3190 = vpack.c.b16 %v2851, %v3174
        %v3191 = vpack.c.b16 %v2853, %v3175
        %v3192 = vpack.c.b16 %v2855, %v3176
        %v3193 = vpack.c.b16 %v2857, %v3177
        %v3194 = vrot.slane %v3178, 1
        %v3195 = vrot.slane %v2906, 1
        %v3196 = vsel %vm1566, %v3194, %v3195
        %v3197 = vrot.slane %v3179, 1
        %v3198 = vrot.slane %v2907, 1
        %v3199 = vsel %vm1566, %v3197, %v3198
        %v3200 = vrot.slane %v3180, 1
        %v3201 = vrot.slane %v2908, 1
        %v3202 = vsel %vm1566, %v3200, %v3201
        %v3203 = vrot.slane %v3181, 1
        %v3204 = vrot.slane %v2909, 1
        %v3205 = vsel %vm1566, %v3203, %v3204
        %v3206 = vrot.slane %v3182, 1
        %v3207 = vrot.slane %v2910, 1
        %v3208 = vsel %vm1566, %v3206, %v3207
        %v3209 = vrot.slane %v3183, 1
        %v3210 = vrot.slane %v2911, 1
        %v3211 = vsel %vm1566, %v3209, %v3210
        %v3212 = vrot.slane %v3184, 1
        %v3213 = vrot.slane %v2912, 1
        %v3214 = vsel %vm1566, %v3212, %v3213
        %v3215 = vrot.slane %v3185, 1
        %v3216 = vrot.slane %v2913, 1
        %v3217 = vsel %vm1566, %v3215, %v3216
        %v3218 = vrot.slane %v3186, 1
        %v3219 = vrot.slane %v2914, 1
        %v3220 = vsel %vm1566, %v3218, %v3219
        %v3221 = vrot.slane %v3187, 1
        %v3222 = vrot.slane %v2915, 1
        %v3223 = vsel %vm1566, %v3221, %v3222
        %v3224 = vrot.slane %v3188, 1
        %v3225 = vrot.slane %v2916, 1
        %v3226 = vsel %vm1566, %v3224, %v3225
        %v3227 = vrot.slane %v3189, 1
        %v3228 = vrot.slane %v2917, 1
        %v3229 = vsel %vm1566, %v3227, %v3228
        %v3230 = vrot.slane %v3190, 1
        %v3231 = vrot.slane %v2918, 1
        %v3232 = vsel %vm1566, %v3230, %v3231
        %v3233 = vrot.slane %v3191, 1
        %v3234 = vrot.slane %v2919, 1
        %v3235 = vsel %vm1566, %v3233, %v3234
        %v3236 = vrot.slane %v3192, 1
        %v3237 = vrot.slane %v2920, 1
        %v3238 = vsel %vm1566, %v3236, %v3237
        %v3239 = vrot.slane %v3193, 1
        %v3240 = vrot.slane %v2921, 1
        %v3241 = vsel %vm1566, %v3239, %v3240
        %3242 = vrot.lane.b32.xlu0 %v3196, 8
        %v3243 = vpop.permute.xlu0 %3242
        %3244 = vrot.lane.b32.xlu0 %v3199, 8
        %v3245 = vpop.permute.xlu0 %3244
        %3246 = vrot.lane.b32.xlu0 %v3202, 8
        %v3247 = vpop.permute.xlu0 %3246
        %3248 = vrot.lane.b32.xlu0 %v3205, 8
        %v3249 = vpop.permute.xlu0 %3248
        %3250 = vrot.lane.b32.xlu0 %v3208, 8
        %v3251 = vpop.permute.xlu0 %3250
        %3252 = vrot.lane.b32.xlu0 %v3211, 8
        %v3253 = vpop.permute.xlu0 %3252
        %3254 = vrot.lane.b32.xlu0 %v3214, 8
        %v3255 = vpop.permute.xlu0 %3254
        %3256 = vrot.lane.b32.xlu0 %v3217, 8
        %v3257 = vpop.permute.xlu0 %3256
        %3258 = vrot.lane.b32.xlu0 %v3220, 8
        %v3259 = vpop.permute.xlu0 %3258
        %3260 = vrot.lane.b32.xlu0 %v3223, 8
        %v3261 = vpop.permute.xlu0 %3260
        %3262 = vrot.lane.b32.xlu0 %v3226, 8
        %v3263 = vpop.permute.xlu0 %3262
        %3264 = vrot.lane.b32.xlu0 %v3229, 8
        %v3265 = vpop.permute.xlu0 %3264
        %3266 = vrot.lane.b32.xlu0 %v3232, 8
        %v3267 = vpop.permute.xlu0 %3266
        %3268 = vrot.lane.b32.xlu0 %v3235, 8
        %v3269 = vpop.permute.xlu0 %3268
        %3270 = vrot.lane.b32.xlu0 %v3238, 8
        %v3271 = vpop.permute.xlu0 %3270
        %3272 = vrot.lane.b32.xlu0 %v3241, 8
        %v3273 = vpop.permute.xlu0 %3272
        %v3275 = vsel %vm1647, %v2858, %v3115
        %v3277 = vsel %vm1647, %v2859, %v3117
        %v3279 = vsel %vm1647, %v2860, %v3119
        %v3281 = vsel %vm1647, %v2861, %v3121
        %v3283 = vsel %vm1647, %v2862, %v3123
        %v3285 = vsel %vm1647, %v2863, %v3125
        %v3287 = vsel %vm1647, %v2864, %v3127
        %v3289 = vsel %vm1647, %v2865, %v3129
        %v3291 = vsel %vm1647, %v2866, %v3131
        %v3293 = vsel %vm1647, %v2867, %v3133
        %v3295 = vsel %vm1647, %v2868, %v3135
        %v3297 = vsel %vm1647, %v2869, %v3137
        %v3299 = vsel %vm1647, %v2870, %v3139
        %v3301 = vsel %vm1647, %v2871, %v3141
        %v3303 = vsel %vm1647, %v2872, %v3143
        %v3305 = vsel %vm1647, %v2873, %v3145
        %v3307 = vsel %vm1680, %v3275, %v3243
        %v3309 = vsel %vm1680, %v3277, %v3245
        %v3311 = vsel %vm1680, %v3279, %v3247
        %v3313 = vsel %vm1680, %v3281, %v3249
        %v3315 = vsel %vm1680, %v3283, %v3251
        %v3317 = vsel %vm1680, %v3285, %v3253
        %v3319 = vsel %vm1680, %v3287, %v3255
        %v3321 = vsel %vm1680, %v3289, %v3257
        %v3323 = vsel %vm1680, %v3291, %v3259
        %v3325 = vsel %vm1680, %v3293, %v3261
        %v3327 = vsel %vm1680, %v3295, %v3263
        %v3329 = vsel %vm1680, %v3297, %v3265
        %v3331 = vsel %vm1680, %v3299, %v3267
        %v3333 = vsel %vm1680, %v3301, %v3269
        %v3335 = vsel %vm1680, %v3303, %v3271
        %v3337 = vsel %vm1680, %v3305, %v3273
        %s3338 = scalar_lea.vmem [#allocation7], 16
        %v3339 = vld [vmem:[%s3338] sm:$0xf]
        %v3340 = vld [vmem:[%s3338 + $0x4] sm:$0x3]
        %v3343 = vunpack.c.l.b16 %v3339
        %v3344 = vunpack.c.l.b16 %v3340
        %v3345 = vpack.c.b16 %v3344, %v3343
        %v3346 = vsel %vm2331, %v3307, 0
        %v3348 = vsel %vm2331, %v3309, 0
        %v3350 = vsel %vm2331, %v3311, 0
        %v3352 = vsel %vm2331, %v3313, 0
        %v3354 = vsel %vm2331, %v3315, 0
        %v3356 = vsel %vm2331, %v3317, 0
        %v3358 = vsel %vm2331, %v3319, 0
        %v3360 = vsel %vm2331, %v3321, 0
        %v3362 = vsel %vm2331, %v3323, 0
        %v3364 = vsel %vm2331, %v3325, 0
        %v3366 = vsel %vm2331, %v3327, 0
        %v3368 = vsel %vm2331, %v3329, 0
        %v3370 = vsel %vm2331, %v3331, 0
        %v3372 = vsel %vm2331, %v3333, 0
        %v3374 = vsel %vm2331, %v3335, 0
        %v3376 = vsel %vm2331, %v3337, 0
        %v3379 = vsel %vm2364, %v3345, 0
        %3381 = vmatprep.subr.bf16.mxu0 0
        %3382 = vmatpush1.bf16.msra.mxu0 %v3379
        %3383 = vmatprep.subr.bf16.mxu0 0
        %3384 = vmatpush1.bf16.msra.mxu0 0
        %3385 = vmatprep.subr.bf16.mxu0 0
        %3386 = vmatpush1.bf16.msra.mxu0 0
        %3387 = vmatprep.subr.bf16.mxu0 0
        %3388 = vmatpush1.bf16.msra.mxu0 0
        %3389 = vmatprep.subr.bf16.mxu0 0
        %3390 = vmatpush1.bf16.msra.mxu0 0
        %3391 = vmatprep.subr.bf16.mxu0 0
        %3392 = vmatpush1.bf16.msra.mxu0 0
        %3393 = vmatprep.subr.bf16.mxu0 0
        %3394 = vmatpush1.bf16.msra.mxu0 0
        %3395 = vmatprep.subr.bf16.mxu0 0
        %3396 = vmatpush1.bf16.msra.mxu0 0
        %3397 = vmatprep.subr.bf16.mxu0 0
        %3398 = vmatpush1.bf16.msra.mxu0 0
        %3399 = vmatprep.subr.bf16.mxu0 0
        %3400 = vmatpush1.bf16.msra.mxu0 0
        %3401 = vmatprep.subr.bf16.mxu0 0
        %3402 = vmatpush1.bf16.msra.mxu0 0
        %3403 = vmatprep.subr.bf16.mxu0 0
        %3404 = vmatpush1.bf16.msra.mxu0 0
        %3405 = vmatprep.subr.bf16.mxu0 0
        %3406 = vmatpush1.bf16.msra.mxu0 0
        %3407 = vmatprep.subr.bf16.mxu0 0
        %3408 = vmatpush1.bf16.msra.mxu0 0
        %3409 = vmatprep.subr.bf16.mxu0 0
        %3410 = vmatpush1.bf16.msra.mxu0 0
        %3411 = vmatprep.subr.bf16.mxu0 0
        %3412 = vmatpush1.bf16.msra.mxu0 0
        %3413 = vmatprep.mubr.bf16.mxu0 0
        %3414 = vmatmul.mubr.bf16.gmra.mrb[0].mxu0 %v3346
        %v3415 = vpop.f32.mrb[0].mxu0
        %v3416 = vadd.f32 0.0, %v3415
        %v3417 = vpop.f32.mrb[0].mxu0
        %v3418 = vpop.f32.mrb[0].mxu0
        %v3419 = vadd.f32 0.0, %v3418
        %v3420 = vpop.f32.mrb[0].mxu0
        %3421 = vmatprep.mubr.bf16.mxu0 0
        %3422 = vmatmul.mubr.bf16.gmra.mrb[0].mxu0 %v3348
        %v3423 = vpop.f32.mrb[0].mxu0
        %v3424 = vadd.f32 0.0, %v3423
        %v3425 = vpop.f32.mrb[0].mxu0
        %v3426 = vpop.f32.mrb[0].mxu0
        %v3427 = vadd.f32 0.0, %v3426
        %v3428 = vpop.f32.mrb[0].mxu0
        %3429 = vmatprep.mubr.bf16.mxu0 0
        %3430 = vmatmul.mubr.bf16.gmra.mrb[0].mxu0 %v3350
        %v3431 = vpop.f32.mrb[0].mxu0
        %v3432 = vadd.f32 0.0, %v3431
        %v3433 = vpop.f32.mrb[0].mxu0
        %v3434 = vpop.f32.mrb[0].mxu0
        %v3435 = vadd.f32 0.0, %v3434
        %v3436 = vpop.f32.mrb[0].mxu0
        %3437 = vmatprep.mubr.bf16.mxu0 0
        %3438 = vmatmul.mubr.bf16.gmra.mrb[0].mxu0 %v3352
        %v3439 = vpop.f32.mrb[0].mxu0
        %v3440 = vadd.f32 0.0, %v3439
        %v3441 = vpop.f32.mrb[0].mxu0
        %v3442 = vpop.f32.mrb[0].mxu0
        %v3443 = vadd.f32 0.0, %v3442
        %v3444 = vpop.f32.mrb[0].mxu0
        %3445 = vmatprep.mubr.bf16.mxu0 0
        %3446 = vmatmul.mubr.bf16.gmra.mrb[0].mxu0 %v3354
        %v3447 = vpop.f32.mrb[0].mxu0
        %v3448 = vadd.f32 0.0, %v3447
        %v3449 = vpop.f32.mrb[0].mxu0
        %v3450 = vpop.f32.mrb[0].mxu0
        %v3451 = vadd.f32 0.0, %v3450
        %v3452 = vpop.f32.mrb[0].mxu0
        %3453 = vmatprep.mubr.bf16.mxu0 0
        %3454 = vmatmul.mubr.bf16.gmra.mrb[0].mxu0 %v3356
        %v3455 = vpop.f32.mrb[0].mxu0
        %v3456 = vadd.f32 0.0, %v3455
        %v3457 = vpop.f32.mrb[0].mxu0
        %v3458 = vpop.f32.mrb[0].mxu0
        %v3459 = vadd.f32 0.0, %v3458
        %v3460 = vpop.f32.mrb[0].mxu0
        %3461 = vmatprep.mubr.bf16.mxu0 0
        %3462 = vmatmul.mubr.bf16.gmra.mrb[0].mxu0 %v3358
        %v3463 = vpop.f32.mrb[0].mxu0
        %v3464 = vadd.f32 0.0, %v3463
        %v3465 = vpop.f32.mrb[0].mxu0
        %v3466 = vpop.f32.mrb[0].mxu0
        %v3467 = vadd.f32 0.0, %v3466
        %v3468 = vpop.f32.mrb[0].mxu0
        %3469 = vmatprep.mubr.bf16.mxu0 0
        %3470 = vmatmul.mubr.bf16.gmra.mrb[0].mxu0 %v3360
        %v3471 = vpop.f32.mrb[0].mxu0
        %v3472 = vadd.f32 0.0, %v3471
        %v3473 = vpop.f32.mrb[0].mxu0
        %v3474 = vpop.f32.mrb[0].mxu0
        %v3475 = vadd.f32 0.0, %v3474
        %v3476 = vpop.f32.mrb[0].mxu0
        %3477 = vmatprep.mubr.bf16.mxu0 0
        %3478 = vmatmul.mubr.bf16.gmra.mrb[0].mxu0 %v3362
        %v3479 = vpop.f32.mrb[0].mxu0
        %v3480 = vadd.f32 0.0, %v3479
        %v3481 = vpop.f32.mrb[0].mxu0
        %v3482 = vpop.f32.mrb[0].mxu0
        %v3483 = vadd.f32 0.0, %v3482
        %v3484 = vpop.f32.mrb[0].mxu0
        %3485 = vmatprep.mubr.bf16.mxu0 0
        %3486 = vmatmul.mubr.bf16.gmra.mrb[0].mxu0 %v3364
        %v3487 = vpop.f32.mrb[0].mxu0
        %v3488 = vadd.f32 0.0, %v3487
        %v3489 = vpop.f32.mrb[0].mxu0
        %v3490 = vpop.f32.mrb[0].mxu0
        %v3491 = vadd.f32 0.0, %v3490
        %v3492 = vpop.f32.mrb[0].mxu0
        %3493 = vmatprep.mubr.bf16.mxu0 0
        %3494 = vmatmul.mubr.bf16.gmra.mrb[0].mxu0 %v3366
        %v3495 = vpop.f32.mrb[0].mxu0
        %v3496 = vadd.f32 0.0, %v3495
        %v3497 = vpop.f32.mrb[0].mxu0
        %v3498 = vpop.f32.mrb[0].mxu0
        %v3499 = vadd.f32 0.0, %v3498
        %v3500 = vpop.f32.mrb[0].mxu0
        %3501 = vmatprep.mubr.bf16.mxu0 0
        %3502 = vmatmul.mubr.bf16.gmra.mrb[0].mxu0 %v3368
        %v3503 = vpop.f32.mrb[0].mxu0
        %v3504 = vadd.f32 0.0, %v3503
        %v3505 = vpop.f32.mrb[0].mxu0
        %v3506 = vpop.f32.mrb[0].mxu0
        %v3507 = vadd.f32 0.0, %v3506
        %v3508 = vpop.f32.mrb[0].mxu0
        %3509 = vmatprep.mubr.bf16.mxu0 0
        %3510 = vmatmul.mubr.bf16.gmra.mrb[0].mxu0 %v3370
        %v3511 = vpop.f32.mrb[0].mxu0
        %v3512 = vadd.f32 0.0, %v3511
        %v3513 = vpop.f32.mrb[0].mxu0
        %v3514 = vpop.f32.mrb[0].mxu0
        %v3515 = vadd.f32 0.0, %v3514
        %v3516 = vpop.f32.mrb[0].mxu0
        %3517 = vmatprep.mubr.bf16.mxu0 0
        %3518 = vmatmul.mubr.bf16.gmra.mrb[0].mxu0 %v3372
        %v3519 = vpop.f32.mrb[0].mxu0
        %v3520 = vadd.f32 0.0, %v3519
        %v3521 = vpop.f32.mrb[0].mxu0
        %v3522 = vpop.f32.mrb[0].mxu0
        %v3523 = vadd.f32 0.0, %v3522
        %v3524 = vpop.f32.mrb[0].mxu0
        %3525 = vmatprep.mubr.bf16.mxu0 0
        %3526 = vmatmul.mubr.bf16.gmra.mrb[0].mxu0 %v3374
        %v3527 = vpop.f32.mrb[0].mxu0
        %v3528 = vadd.f32 0.0, %v3527
        %v3529 = vpop.f32.mrb[0].mxu0
        %v3530 = vpop.f32.mrb[0].mxu0
        %v3531 = vadd.f32 0.0, %v3530
        %v3532 = vpop.f32.mrb[0].mxu0
        %3533 = vmatprep.mubr.bf16.mxu0 0
        %3534 = vmatmul.mubr.bf16.gmra.mrb[0].mxu0 %v3376
        %v3535 = vpop.f32.mrb[0].mxu0
        %v3536 = vadd.f32 0.0, %v3535
        %v3537 = vpop.f32.mrb[0].mxu0
        %v3538 = vpop.f32.mrb[0].mxu0
        %v3539 = vadd.f32 0.0, %v3538
        %v3540 = vpop.f32.mrb[0].mxu0
        %3541 = vdwg.mxu0
        %v3542 = vadd.f32 %v2604, %v3416
        %v3543 = vadd.f32 %v2607, %v3419
        %v3544 = vadd.f32 %v2612, %v3424
        %v3545 = vadd.f32 %v2615, %v3427
        %v3546 = vadd.f32 %v2620, %v3432
        %v3547 = vadd.f32 %v2623, %v3435
        %v3548 = vadd.f32 %v2628, %v3440
        %v3549 = vadd.f32 %v2631, %v3443
        %v3550 = vadd.f32 %v2636, %v3448
        %v3551 = vadd.f32 %v2639, %v3451
        %v3552 = vadd.f32 %v2644, %v3456
        %v3553 = vadd.f32 %v2647, %v3459
        %v3554 = vadd.f32 %v2652, %v3464
        %v3555 = vadd.f32 %v2655, %v3467
        %v3556 = vadd.f32 %v2660, %v3472
        %v3557 = vadd.f32 %v2663, %v3475
        %v3558 = vadd.f32 %v2668, %v3480
        %v3559 = vadd.f32 %v2671, %v3483
        %v3560 = vadd.f32 %v2676, %v3488
        %v3561 = vadd.f32 %v2679, %v3491
        %v3562 = vadd.f32 %v2684, %v3496
        %v3563 = vadd.f32 %v2687, %v3499
        %v3564 = vadd.f32 %v2692, %v3504
        %v3565 = vadd.f32 %v2695, %v3507
        %v3566 = vadd.f32 %v2700, %v3512
        %v3567 = vadd.f32 %v2703, %v3515
        %v3568 = vadd.f32 %v2708, %v3520
        %v3569 = vadd.f32 %v2711, %v3523
        %v3570 = vadd.f32 %v2716, %v3528
        %v3571 = vadd.f32 %v2719, %v3531
        %v3572 = vadd.f32 %v2724, %v3536
        %v3573 = vadd.f32 %v2727, %v3539
        %v3574 = vsel %vm1647, %v3542, 0.0
        %v3575 = vsel %vm1647, %v3543, 0.0
        %v3576 = vadd.f32 %v3574, %v3575
        %v3577 = vsel %vm1647, %v3544, 0.0
        %v3578 = vadd.f32 %v3576, %v3577
        %v3579 = vsel %vm1647, %v3545, 0.0
        %v3580 = vadd.f32 %v3578, %v3579
        %v3581 = vsel %vm1647, %v3546, 0.0
        %v3582 = vadd.f32 %v3580, %v3581
        %v3583 = vsel %vm1647, %v3547, 0.0
        %v3584 = vadd.f32 %v3582, %v3583
        %v3585 = vsel %vm1647, %v3548, 0.0
        %v3586 = vadd.f32 %v3584, %v3585
        %v3587 = vsel %vm1647, %v3549, 0.0
        %v3588 = vadd.f32 %v3586, %v3587
        %v3589 = vsel %vm1647, %v3550, 0.0
        %v3590 = vadd.f32 %v3588, %v3589
        %v3591 = vsel %vm1647, %v3551, 0.0
        %v3592 = vadd.f32 %v3590, %v3591
        %v3593 = vsel %vm1647, %v3552, 0.0
        %v3594 = vadd.f32 %v3592, %v3593
        %v3595 = vsel %vm1647, %v3553, 0.0
        %v3596 = vadd.f32 %v3594, %v3595
        %v3597 = vsel %vm1647, %v3554, 0.0
        %v3598 = vadd.f32 %v3596, %v3597
        %v3599 = vsel %vm1647, %v3555, 0.0
        %v3600 = vadd.f32 %v3598, %v3599
        %v3601 = vsel %vm1647, %v3556, 0.0
        %v3602 = vadd.f32 %v3600, %v3601
        %v3603 = vsel %vm1647, %v3557, 0.0
        %v3604 = vadd.f32 %v3602, %v3603
        %v3605 = vsel %vm1647, %v3558, 0.0
        %v3606 = vadd.f32 %v3604, %v3605
        %v3607 = vsel %vm1647, %v3559, 0.0
        %v3608 = vadd.f32 %v3606, %v3607
        %v3609 = vsel %vm1647, %v3560, 0.0
        %v3610 = vadd.f32 %v3608, %v3609
        %v3611 = vsel %vm1647, %v3561, 0.0
        %v3612 = vadd.f32 %v3610, %v3611
        %v3613 = vsel %vm1647, %v3562, 0.0
        %v3614 = vadd.f32 %v3612, %v3613
        %v3615 = vsel %vm1647, %v3563, 0.0
        %v3616 = vadd.f32 %v3614, %v3615
        %v3617 = vsel %vm1647, %v3564, 0.0
        %v3618 = vadd.f32 %v3616, %v3617
        %v3619 = vsel %vm1647, %v3565, 0.0
        %v3620 = vadd.f32 %v3618, %v3619
        %v3621 = vsel %vm1647, %v3566, 0.0
        %v3622 = vadd.f32 %v3620, %v3621
        %v3623 = vsel %vm1647, %v3567, 0.0
        %v3624 = vadd.f32 %v3622, %v3623
        %v3625 = vsel %vm1647, %v3568, 0.0
        %v3626 = vadd.f32 %v3624, %v3625
        %v3627 = vsel %vm1647, %v3569, 0.0
        %v3628 = vadd.f32 %v3626, %v3627
        %v3629 = vsel %vm1647, %v3570, 0.0
        %v3630 = vadd.f32 %v3628, %v3629
        %v3631 = vsel %vm1647, %v3571, 0.0
        %v3632 = vadd.f32 %v3630, %v3631
        %v3633 = vsel %vm1647, %v3572, 0.0
        %v3634 = vadd.f32 %v3632, %v3633
        %v3635 = vsel %vm1647, %v3573, 0.0
        %v3636 = vadd.f32 %v3634, %v3635
        %v3637 = vrot.slane %v3636, 4
        %v3638 = vadd.f32 %v3636, %v3637
        %v3639 = vrot.slane %v3638, 2
        %v3640 = vadd.f32 %v3638, %v3639
        %v3641 = vrot.slane %v3640, 1
        %v3642 = vadd.f32 %v3640, %v3641
        %v3643 = vrcp.pop 256.0
        %v3644 = vmul.f32 %v3642, %v3643
        %v3645 = vsub.f32 %v3542, %v3644
        %v3646 = vsub.f32 %v3543, %v3644
        %v3647 = vsub.f32 %v3544, %v3644
        %v3648 = vsub.f32 %v3545, %v3644
        %v3649 = vsub.f32 %v3546, %v3644
        %v3650 = vsub.f32 %v3547, %v3644
        %v3651 = vsub.f32 %v3548, %v3644
        %v3652 = vsub.f32 %v3549, %v3644
        %v3653 = vsub.f32 %v3550, %v3644
        %v3654 = vsub.f32 %v3551, %v3644
        %v3655 = vsub.f32 %v3552, %v3644
        %v3656 = vsub.f32 %v3553, %v3644
        %v3657 = vsub.f32 %v3554, %v3644
        %v3658 = vsub.f32 %v3555, %v3644
        %v3659 = vsub.f32 %v3556, %v3644
        %v3660 = vsub.f32 %v3557, %v3644
        %v3661 = vsub.f32 %v3558, %v3644
        %v3662 = vsub.f32 %v3559, %v3644
        %v3663 = vsub.f32 %v3560, %v3644
        %v3664 = vsub.f32 %v3561, %v3644
        %v3665 = vsub.f32 %v3562, %v3644
        %v3666 = vsub.f32 %v3563, %v3644
        %v3667 = vsub.f32 %v3564, %v3644
        %v3668 = vsub.f32 %v3565, %v3644
        %v3669 = vsub.f32 %v3566, %v3644
        %v3670 = vsub.f32 %v3567, %v3644
        %v3671 = vsub.f32 %v3568, %v3644
        %v3672 = vsub.f32 %v3569, %v3644
        %v3673 = vsub.f32 %v3570, %v3644
        %v3674 = vsub.f32 %v3571, %v3644
        %v3675 = vsub.f32 %v3572, %v3644
        %v3676 = vsub.f32 %v3573, %v3644
        %v3677 = vmul.f32 %v3645, %v3645
        %v3678 = vmul.f32 %v3646, %v3646
        %v3679 = vmul.f32 %v3647, %v3647
        %v3680 = vmul.f32 %v3648, %v3648
        %v3681 = vmul.f32 %v3649, %v3649
        %v3682 = vmul.f32 %v3650, %v3650
        %v3683 = vmul.f32 %v3651, %v3651
        %v3684 = vmul.f32 %v3652, %v3652
        %v3685 = vmul.f32 %v3653, %v3653
        %v3686 = vmul.f32 %v3654, %v3654
        %v3687 = vmul.f32 %v3655, %v3655
        %v3688 = vmul.f32 %v3656, %v3656
        %v3689 = vmul.f32 %v3657, %v3657
        %v3690 = vmul.f32 %v3658, %v3658
        %v3691 = vmul.f32 %v3659, %v3659
        %v3692 = vmul.f32 %v3660, %v3660
        %v3693 = vmul.f32 %v3661, %v3661
        %v3694 = vmul.f32 %v3662, %v3662
        %v3695 = vmul.f32 %v3663, %v3663
        %v3696 = vmul.f32 %v3664, %v3664
        %v3697 = vmul.f32 %v3665, %v3665
        %v3698 = vmul.f32 %v3666, %v3666
        %v3699 = vmul.f32 %v3667, %v3667
        %v3700 = vmul.f32 %v3668, %v3668
        %v3701 = vmul.f32 %v3669, %v3669
        %v3702 = vmul.f32 %v3670, %v3670
        %v3703 = vmul.f32 %v3671, %v3671
        %v3704 = vmul.f32 %v3672, %v3672
        %v3705 = vmul.f32 %v3673, %v3673
        %v3706 = vmul.f32 %v3674, %v3674
        %v3707 = vmul.f32 %v3675, %v3675
        %v3708 = vmul.f32 %v3676, %v3676
        %v3709 = vsel %vm1647, %v3677, 0.0
        %v3710 = vsel %vm1647, %v3678, 0.0
        %v3711 = vadd.f32 %v3709, %v3710
        %v3712 = vsel %vm1647, %v3679, 0.0
        %v3713 = vadd.f32 %v3711, %v3712
        %v3714 = vsel %vm1647, %v3680, 0.0
        %v3715 = vadd.f32 %v3713, %v3714
        %v3716 = vsel %vm1647, %v3681, 0.0
        %v3717 = vadd.f32 %v3715, %v3716
        %v3718 = vsel %vm1647, %v3682, 0.0
        %v3719 = vadd.f32 %v3717, %v3718
        %v3720 = vsel %vm1647, %v3683, 0.0
        %v3721 = vadd.f32 %v3719, %v3720
        %v3722 = vsel %vm1647, %v3684, 0.0
        %v3723 = vadd.f32 %v3721, %v3722
        %v3724 = vsel %vm1647, %v3685, 0.0
        %v3725 = vadd.f32 %v3723, %v3724
        %v3726 = vsel %vm1647, %v3686, 0.0
        %v3727 = vadd.f32 %v3725, %v3726
        %v3728 = vsel %vm1647, %v3687, 0.0
        %v3729 = vadd.f32 %v3727, %v3728
        %v3730 = vsel %vm1647, %v3688, 0.0
        %v3731 = vadd.f32 %v3729, %v3730
        %v3732 = vsel %vm1647, %v3689, 0.0
        %v3733 = vadd.f32 %v3731, %v3732
        %v3734 = vsel %vm1647, %v3690, 0.0
        %v3735 = vadd.f32 %v3733, %v3734
        %v3736 = vsel %vm1647, %v3691, 0.0
        %v3737 = vadd.f32 %v3735, %v3736
        %v3738 = vsel %vm1647, %v3692, 0.0
        %v3739 = vadd.f32 %v3737, %v3738
        %v3740 = vsel %vm1647, %v3693, 0.0
        %v3741 = vadd.f32 %v3739, %v3740
        %v3742 = vsel %vm1647, %v3694, 0.0
        %v3743 = vadd.f32 %v3741, %v3742
        %v3744 = vsel %vm1647, %v3695, 0.0
        %v3745 = vadd.f32 %v3743, %v3744
        %v3746 = vsel %vm1647, %v3696, 0.0
        %v3747 = vadd.f32 %v3745, %v3746
        %v3748 = vsel %vm1647, %v3697, 0.0
        %v3749 = vadd.f32 %v3747, %v3748
        %v3750 = vsel %vm1647, %v3698, 0.0
        %v3751 = vadd.f32 %v3749, %v3750
        %v3752 = vsel %vm1647, %v3699, 0.0
        %v3753 = vadd.f32 %v3751, %v3752
        %v3754 = vsel %vm1647, %v3700, 0.0
        %v3755 = vadd.f32 %v3753, %v3754
        %v3756 = vsel %vm1647, %v3701, 0.0
        %v3757 = vadd.f32 %v3755, %v3756
        %v3758 = vsel %vm1647, %v3702, 0.0
        %v3759 = vadd.f32 %v3757, %v3758
        %v3760 = vsel %vm1647, %v3703, 0.0
        %v3761 = vadd.f32 %v3759, %v3760
        %v3762 = vsel %vm1647, %v3704, 0.0
        %v3763 = vadd.f32 %v3761, %v3762
        %v3764 = vsel %vm1647, %v3705, 0.0
        %v3765 = vadd.f32 %v3763, %v3764
        %v3766 = vsel %vm1647, %v3706, 0.0
        %v3767 = vadd.f32 %v3765, %v3766
        %v3768 = vsel %vm1647, %v3707, 0.0
        %v3769 = vadd.f32 %v3767, %v3768
        %v3770 = vsel %vm1647, %v3708, 0.0
        %v3771 = vadd.f32 %v3769, %v3770
        %v3772 = vrot.slane %v3771, 4
        %v3773 = vadd.f32 %v3771, %v3772
        %v3774 = vrot.slane %v3773, 2
        %v3775 = vadd.f32 %v3773, %v3774
        %v3776 = vrot.slane %v3775, 1
        %v3777 = vadd.f32 %v3775, %v3776
        %v3778 = vmul.f32 %v3777, %v3643
        %v3779 = vadd.f32 %v3778, 1e-05
        %v3780 = vrsqrt.pop %v3779
        %v3781 = vmul.f32 %v3645, %v3780
        %v3782 = vmul.f32 %v3646, %v3780
        %v3783 = vmul.f32 %v3647, %v3780
        %v3784 = vmul.f32 %v3648, %v3780
        %v3785 = vmul.f32 %v3649, %v3780
        %v3786 = vmul.f32 %v3650, %v3780
        %v3787 = vmul.f32 %v3651, %v3780
        %v3788 = vmul.f32 %v3652, %v3780
        %v3789 = vmul.f32 %v3653, %v3780
        %v3790 = vmul.f32 %v3654, %v3780
        %v3791 = vmul.f32 %v3655, %v3780
        %v3792 = vmul.f32 %v3656, %v3780
        %v3793 = vmul.f32 %v3657, %v3780
        %v3794 = vmul.f32 %v3658, %v3780
        %v3795 = vmul.f32 %v3659, %v3780
        %v3796 = vmul.f32 %v3660, %v3780
        %v3797 = vmul.f32 %v3661, %v3780
        %v3798 = vmul.f32 %v3662, %v3780
        %v3799 = vmul.f32 %v3663, %v3780
        %v3800 = vmul.f32 %v3664, %v3780
        %v3801 = vmul.f32 %v3665, %v3780
        %v3802 = vmul.f32 %v3666, %v3780
        %v3803 = vmul.f32 %v3667, %v3780
        %v3804 = vmul.f32 %v3668, %v3780
        %v3805 = vmul.f32 %v3669, %v3780
        %v3806 = vmul.f32 %v3670, %v3780
        %v3807 = vmul.f32 %v3671, %v3780
        %v3808 = vmul.f32 %v3672, %v3780
        %v3809 = vmul.f32 %v3673, %v3780
        %v3810 = vmul.f32 %v3674, %v3780
        %v3811 = vmul.f32 %v3675, %v3780
        %v3812 = vmul.f32 %v3676, %v3780
        %v3813 = vmax.f32 %v3781, 0.0
        %v3814 = vmax.f32 %v3782, 0.0
        %v3815 = vmax.f32 %v3783, 0.0
        %v3816 = vmax.f32 %v3784, 0.0
        %v3817 = vmax.f32 %v3785, 0.0
        %v3818 = vmax.f32 %v3786, 0.0
        %v3819 = vmax.f32 %v3787, 0.0
        %v3820 = vmax.f32 %v3788, 0.0
        %v3821 = vmax.f32 %v3789, 0.0
        %v3822 = vmax.f32 %v3790, 0.0
        %v3823 = vmax.f32 %v3791, 0.0
        %v3824 = vmax.f32 %v3792, 0.0
        %v3825 = vmax.f32 %v3793, 0.0
        %v3826 = vmax.f32 %v3794, 0.0
        %v3827 = vmax.f32 %v3795, 0.0
        %v3828 = vmax.f32 %v3796, 0.0
        %v3829 = vmax.f32 %v3797, 0.0
        %v3830 = vmax.f32 %v3798, 0.0
        %v3831 = vmax.f32 %v3799, 0.0
        %v3832 = vmax.f32 %v3800, 0.0
        %v3833 = vmax.f32 %v3801, 0.0
        %v3834 = vmax.f32 %v3802, 0.0
        %v3835 = vmax.f32 %v3803, 0.0
        %v3836 = vmax.f32 %v3804, 0.0
        %v3837 = vmax.f32 %v3805, 0.0
        %v3838 = vmax.f32 %v3806, 0.0
        %v3839 = vmax.f32 %v3807, 0.0
        %v3840 = vmax.f32 %v3808, 0.0
        %v3841 = vmax.f32 %v3809, 0.0
        %v3842 = vmax.f32 %v3810, 0.0
        %v3843 = vmax.f32 %v3811, 0.0
        %v3844 = vmax.f32 %v3812, 0.0
        %v3845 = vpack.c.bf16 %v3814, %v3813
        %v3846 = vpack.c.bf16 %v3816, %v3815
        %v3847 = vpack.c.bf16 %v3818, %v3817
        %v3848 = vpack.c.bf16 %v3820, %v3819
        %v3849 = vpack.c.bf16 %v3822, %v3821
        %v3850 = vpack.c.bf16 %v3824, %v3823
        %v3851 = vpack.c.bf16 %v3826, %v3825
        %v3852 = vpack.c.bf16 %v3828, %v3827
        %v3853 = vpack.c.bf16 %v3830, %v3829
        %v3854 = vpack.c.bf16 %v3832, %v3831
        %v3855 = vpack.c.bf16 %v3834, %v3833
        %v3856 = vpack.c.bf16 %v3836, %v3835
        %v3857 = vpack.c.bf16 %v3838, %v3837
        %v3858 = vpack.c.bf16 %v3840, %v3839
        %v3859 = vpack.c.bf16 %v3842, %v3841
        %v3860 = vpack.c.bf16 %v3844, %v3843
        %v3877 = vunpack.c.l.b16 %v3845
        %v3878 = vunpack.c.h.b16 %v3845
        %v3879 = vunpack.c.l.b16 %v3846
        %v3880 = vunpack.c.h.b16 %v3846
        %v3881 = vunpack.c.l.b16 %v3847
        %v3882 = vunpack.c.h.b16 %v3847
        %v3883 = vunpack.c.l.b16 %v3848
        %v3884 = vunpack.c.h.b16 %v3848
        %v3885 = vunpack.c.l.b16 %v3849
        %v3886 = vunpack.c.h.b16 %v3849
        %v3887 = vunpack.c.l.b16 %v3850
        %v3888 = vunpack.c.h.b16 %v3850
        %v3889 = vunpack.c.l.b16 %v3851
        %v3890 = vunpack.c.h.b16 %v3851
        %v3891 = vunpack.c.l.b16 %v3852
        %v3892 = vunpack.c.h.b16 %v3852
        %v3893 = vunpack.c.l.b16 %v3853
        %v3894 = vunpack.c.h.b16 %v3853
        %v3895 = vunpack.c.l.b16 %v3854
        %v3896 = vunpack.c.h.b16 %v3854
        %v3897 = vunpack.c.l.b16 %v3855
        %v3898 = vunpack.c.h.b16 %v3855
        %v3899 = vunpack.c.l.b16 %v3856
        %v3900 = vunpack.c.h.b16 %v3856
        %v3901 = vunpack.c.l.b16 %v3857
        %v3902 = vunpack.c.h.b16 %v3857
        %v3903 = vunpack.c.l.b16 %v3858
        %v3904 = vunpack.c.h.b16 %v3858
        %v3905 = vunpack.c.l.b16 %v3859
        %v3906 = vunpack.c.h.b16 %v3859
        %v3907 = vunpack.c.l.b16 %v3860
        %v3908 = vunpack.c.h.b16 %v3860
        %v3909 = vpack.c.b16 %v3877, %v3877
        %v3910 = vpack.c.b16 %v3878, %v3878
        %v3911 = vpack.c.b16 %v3879, %v3879
        %v3912 = vpack.c.b16 %v3880, %v3880
        %v3913 = vpack.c.b16 %v3881, %v3881
        %v3914 = vpack.c.b16 %v3882, %v3882
        %v3915 = vpack.c.b16 %v3883, %v3883
        %v3916 = vpack.c.b16 %v3884, %v3884
        %v3917 = vpack.c.b16 %v3885, %v3885
        %v3918 = vpack.c.b16 %v3886, %v3886
        %v3919 = vpack.c.b16 %v3887, %v3887
        %v3920 = vpack.c.b16 %v3888, %v3888
        %v3921 = vpack.c.b16 %v3889, %v3889
        %v3922 = vpack.c.b16 %v3890, %v3890
        %v3923 = vpack.c.b16 %v3891, %v3891
        %v3924 = vpack.c.b16 %v3892, %v3892
        %v3925 = vpack.c.b16 %v3893, %v3893
        %v3926 = vpack.c.b16 %v3894, %v3894
        %v3927 = vpack.c.b16 %v3895, %v3895
        %v3928 = vpack.c.b16 %v3896, %v3896
        %v3929 = vpack.c.b16 %v3897, %v3897
        %v3930 = vpack.c.b16 %v3898, %v3898
        %v3931 = vpack.c.b16 %v3899, %v3899
        %v3932 = vpack.c.b16 %v3900, %v3900
        %v3933 = vpack.c.b16 %v3901, %v3901
        %v3934 = vpack.c.b16 %v3902, %v3902
        %v3935 = vpack.c.b16 %v3903, %v3903
        %v3936 = vpack.c.b16 %v3904, %v3904
        %v3937 = vpack.c.b16 %v3905, %v3905
        %v3938 = vpack.c.b16 %v3906, %v3906
        %v3939 = vpack.c.b16 %v3907, %v3907
        %v3940 = vpack.c.b16 %v3908, %v3908
        %v3942 = vshrl.u32 %v3909, 16
        %v3944 = vrot.slane %v3942, 7
        %v3945 = vshll.u32 %v3909, 16
        %v3947 = vor.u32 %v3944, %v3945
        %v3948 = vrot.slane %v3944, 4
        %v3950 = vshrl.u32 %v3910, 16
        %v3952 = vrot.slane %v3950, 7
        %v3953 = vshll.u32 %v3910, 16
        %v3955 = vor.u32 %v3952, %v3953
        %v3956 = vsel %vm349, %v3948, %v3955
        %v3957 = vrot.slane %v3952, 4
        %v3959 = vshrl.u32 %v3911, 16
        %v3961 = vrot.slane %v3959, 7
        %v3962 = vshll.u32 %v3911, 16
        %v3964 = vor.u32 %v3961, %v3962
        %v3965 = vrot.slane %v3961, 4
        %v3967 = vshrl.u32 %v3912, 16
        %v3969 = vrot.slane %v3967, 7
        %v3970 = vshll.u32 %v3912, 16
        %v3972 = vor.u32 %v3969, %v3970
        %v3973 = vsel %vm349, %v3965, %v3972
        %v3974 = vrot.slane %v3969, 4
        %v3976 = vshrl.u32 %v3913, 16
        %v3978 = vrot.slane %v3976, 7
        %v3979 = vshll.u32 %v3913, 16
        %v3981 = vor.u32 %v3978, %v3979
        %v3982 = vrot.slane %v3978, 4
        %v3984 = vshrl.u32 %v3914, 16
        %v3986 = vrot.slane %v3984, 7
        %v3987 = vshll.u32 %v3914, 16
        %v3989 = vor.u32 %v3986, %v3987
        %v3990 = vsel %vm349, %v3982, %v3989
        %v3991 = vrot.slane %v3986, 4
        %v3993 = vshrl.u32 %v3915, 16
        %v3995 = vrot.slane %v3993, 7
        %v3996 = vshll.u32 %v3915, 16
        %v3998 = vor.u32 %v3995, %v3996
        %v3999 = vrot.slane %v3995, 4
        %v4001 = vshrl.u32 %v3916, 16
        %v4003 = vrot.slane %v4001, 7
        %v4004 = vshll.u32 %v3916, 16
        %v4006 = vor.u32 %v4003, %v4004
        %v4007 = vsel %vm349, %v3999, %v4006
        %v4008 = vrot.slane %v4003, 4
        %v4010 = vshrl.u32 %v3917, 16
        %v4012 = vrot.slane %v4010, 7
        %v4013 = vshll.u32 %v3917, 16
        %v4015 = vor.u32 %v4012, %v4013
        %v4016 = vrot.slane %v4012, 4
        %v4018 = vshrl.u32 %v3918, 16
        %v4020 = vrot.slane %v4018, 7
        %v4021 = vshll.u32 %v3918, 16
        %v4023 = vor.u32 %v4020, %v4021
        %v4024 = vsel %vm349, %v4016, %v4023
        %v4025 = vrot.slane %v4020, 4
        %v4027 = vshrl.u32 %v3919, 16
        %v4029 = vrot.slane %v4027, 7
        %v4030 = vshll.u32 %v3919, 16
        %v4032 = vor.u32 %v4029, %v4030
        %v4033 = vrot.slane %v4029, 4
        %v4035 = vshrl.u32 %v3920, 16
        %v4037 = vrot.slane %v4035, 7
        %v4038 = vshll.u32 %v3920, 16
        %v4040 = vor.u32 %v4037, %v4038
        %v4041 = vsel %vm349, %v4033, %v4040
        %v4042 = vrot.slane %v4037, 4
        %v4044 = vshrl.u32 %v3921, 16
        %v4046 = vrot.slane %v4044, 7
        %v4047 = vshll.u32 %v3921, 16
        %v4049 = vor.u32 %v4046, %v4047
        %v4050 = vrot.slane %v4046, 4
        %v4052 = vshrl.u32 %v3922, 16
        %v4054 = vrot.slane %v4052, 7
        %v4055 = vshll.u32 %v3922, 16
        %v4057 = vor.u32 %v4054, %v4055
        %v4058 = vsel %vm349, %v4050, %v4057
        %v4059 = vrot.slane %v4054, 4
        %v4061 = vshrl.u32 %v3923, 16
        %v4063 = vrot.slane %v4061, 7
        %v4064 = vshll.u32 %v3923, 16
        %v4066 = vor.u32 %v4063, %v4064
        %v4067 = vrot.slane %v4063, 4
        %v4069 = vshrl.u32 %v3924, 16
        %v4071 = vrot.slane %v4069, 7
        %v4072 = vshll.u32 %v3924, 16
        %v4074 = vor.u32 %v4071, %v4072
        %v4075 = vsel %vm349, %v4067, %v4074
        %v4076 = vrot.slane %v4071, 4
        %v4078 = vshrl.u32 %v3925, 16
        %v4080 = vrot.slane %v4078, 7
        %v4081 = vshll.u32 %v3925, 16
        %v4083 = vor.u32 %v4080, %v4081
        %v4084 = vrot.slane %v4080, 4
        %v4086 = vshrl.u32 %v3926, 16
        %v4088 = vrot.slane %v4086, 7
        %v4089 = vshll.u32 %v3926, 16
        %v4091 = vor.u32 %v4088, %v4089
        %v4092 = vsel %vm349, %v4084, %v4091
        %v4093 = vrot.slane %v4088, 4
        %v4095 = vshrl.u32 %v3927, 16
        %v4097 = vrot.slane %v4095, 7
        %v4098 = vshll.u32 %v3927, 16
        %v4100 = vor.u32 %v4097, %v4098
        %v4101 = vrot.slane %v4097, 4
        %v4103 = vshrl.u32 %v3928, 16
        %v4105 = vrot.slane %v4103, 7
        %v4106 = vshll.u32 %v3928, 16
        %v4108 = vor.u32 %v4105, %v4106
        %v4109 = vsel %vm349, %v4101, %v4108
        %v4110 = vrot.slane %v4105, 4
        %v4112 = vshrl.u32 %v3929, 16
        %v4114 = vrot.slane %v4112, 7
        %v4115 = vshll.u32 %v3929, 16
        %v4117 = vor.u32 %v4114, %v4115
        %v4118 = vrot.slane %v4114, 4
        %v4120 = vshrl.u32 %v3930, 16
        %v4122 = vrot.slane %v4120, 7
        %v4123 = vshll.u32 %v3930, 16
        %v4125 = vor.u32 %v4122, %v4123
        %v4126 = vsel %vm349, %v4118, %v4125
        %v4127 = vrot.slane %v4122, 4
        %v4129 = vshrl.u32 %v3931, 16
        %v4131 = vrot.slane %v4129, 7
        %v4132 = vshll.u32 %v3931, 16
        %v4134 = vor.u32 %v4131, %v4132
        %v4135 = vrot.slane %v4131, 4
        %v4137 = vshrl.u32 %v3932, 16
        %v4139 = vrot.slane %v4137, 7
        %v4140 = vshll.u32 %v3932, 16
        %v4142 = vor.u32 %v4139, %v4140
        %v4143 = vsel %vm349, %v4135, %v4142
        %v4144 = vrot.slane %v4139, 4
        %v4146 = vshrl.u32 %v3933, 16
        %v4148 = vrot.slane %v4146, 7
        %v4149 = vshll.u32 %v3933, 16
        %v4151 = vor.u32 %v4148, %v4149
        %v4152 = vrot.slane %v4148, 4
        %v4154 = vshrl.u32 %v3934, 16
        %v4156 = vrot.slane %v4154, 7
        %v4157 = vshll.u32 %v3934, 16
        %v4159 = vor.u32 %v4156, %v4157
        %v4160 = vsel %vm349, %v4152, %v4159
        %v4161 = vrot.slane %v4156, 4
        %v4163 = vshrl.u32 %v3935, 16
        %v4165 = vrot.slane %v4163, 7
        %v4166 = vshll.u32 %v3935, 16
        %v4168 = vor.u32 %v4165, %v4166
        %v4169 = vrot.slane %v4165, 4
        %v4171 = vshrl.u32 %v3936, 16
        %v4173 = vrot.slane %v4171, 7
        %v4174 = vshll.u32 %v3936, 16
        %v4176 = vor.u32 %v4173, %v4174
        %v4177 = vsel %vm349, %v4169, %v4176
        %v4178 = vrot.slane %v4173, 4
        %v4180 = vshrl.u32 %v3937, 16
        %v4182 = vrot.slane %v4180, 7
        %v4183 = vshll.u32 %v3937, 16
        %v4185 = vor.u32 %v4182, %v4183
        %v4186 = vrot.slane %v4182, 4
        %v4188 = vshrl.u32 %v3938, 16
        %v4190 = vrot.slane %v4188, 7
        %v4191 = vshll.u32 %v3938, 16
        %v4193 = vor.u32 %v4190, %v4191
        %v4194 = vsel %vm349, %v4186, %v4193
        %v4195 = vrot.slane %v4190, 4
        %v4197 = vshrl.u32 %v3939, 16
        %v4199 = vrot.slane %v4197, 7
        %v4200 = vshll.u32 %v3939, 16
        %v4202 = vor.u32 %v4199, %v4200
        %v4203 = vrot.slane %v4199, 4
        %v4205 = vshrl.u32 %v3940, 16
        %v4207 = vrot.slane %v4205, 7
        %v4208 = vshll.u32 %v3940, 16
        %v4210 = vor.u32 %v4207, %v4208
        %v4211 = vsel %vm349, %v4203, %v4210
        %v4212 = vrot.slane %v4207, 4
        %s4261 = scalar_lea.vmem [#allocation3], 12
        %v4262 = vld [vmem:[%s4261] sm:$0xf]
        %v4263 = vsel %vm673, %v3947, %v4262
        %4264 = vst [vmem:[%s4261] sm:$0xf] %v4263
        %4265 = vst.msk [vmem:[%s4261 + $0x4] sm:$0xf] %vm677, %v3956
        %v4266 = vld [vmem:[%s4261 + $0x8] sm:$0x1]
        %v4267 = vsel %vm680, %v3957, %v4266
        %4268 = vst [vmem:[%s4261 + $0x8] sm:$0x1] %v4267
        %v4269 = vld [vmem:[%s4261 + $0xc] sm:$0xf]
        %v4270 = vsel %vm673, %v3964, %v4269
        %4271 = vst [vmem:[%s4261 + $0xc] sm:$0xf] %v4270
        %4272 = vst.msk [vmem:[%s4261 + $0x10] sm:$0xf] %vm677, %v3973
        %v4273 = vld [vmem:[%s4261 + $0x14] sm:$0x1]
        %v4274 = vsel %vm680, %v3974, %v4273
        %4275 = vst [vmem:[%s4261 + $0x14] sm:$0x1] %v4274
        %v4276 = vld [vmem:[%s4261 + $0x18] sm:$0xf]
        %v4277 = vsel %vm673, %v3981, %v4276
        %4278 = vst [vmem:[%s4261 + $0x18] sm:$0xf] %v4277
        %4279 = vst.msk [vmem:[%s4261 + $0x1c] sm:$0xf] %vm677, %v3990
        %v4280 = vld [vmem:[%s4261 + $0x20] sm:$0x1]
        %v4281 = vsel %vm680, %v3991, %v4280
        %4282 = vst [vmem:[%s4261 + $0x20] sm:$0x1] %v4281
        %v4283 = vld [vmem:[%s4261 + $0x24] sm:$0xf]
        %v4284 = vsel %vm673, %v3998, %v4283
        %4285 = vst [vmem:[%s4261 + $0x24] sm:$0xf] %v4284
        %4286 = vst.msk [vmem:[%s4261 + $0x28] sm:$0xf] %vm677, %v4007
        %v4287 = vld [vmem:[%s4261 + $0x2c] sm:$0x1]
        %v4288 = vsel %vm680, %v4008, %v4287
        %4289 = vst [vmem:[%s4261 + $0x2c] sm:$0x1] %v4288
        %v4290 = vld [vmem:[%s4261 + $0x30] sm:$0xf]
        %v4291 = vsel %vm673, %v4015, %v4290
        %4292 = vst [vmem:[%s4261 + $0x30] sm:$0xf] %v4291
        %4293 = vst.msk [vmem:[%s4261 + $0x34] sm:$0xf] %vm677, %v4024
        %v4294 = vld [vmem:[%s4261 + $0x38] sm:$0x1]
        %v4295 = vsel %vm680, %v4025, %v4294
        %4296 = vst [vmem:[%s4261 + $0x38] sm:$0x1] %v4295
        %v4297 = vld [vmem:[%s4261 + $0x3c] sm:$0xf]
        %v4298 = vsel %vm673, %v4032, %v4297
        %4299 = vst [vmem:[%s4261 + $0x3c] sm:$0xf] %v4298
        %4300 = vst.msk [vmem:[%s4261 + $0x40] sm:$0xf] %vm677, %v4041
        %v4301 = vld [vmem:[%s4261 + $0x44] sm:$0x1]
        %v4302 = vsel %vm680, %v4042, %v4301
        %4303 = vst [vmem:[%s4261 + $0x44] sm:$0x1] %v4302
        %v4304 = vld [vmem:[%s4261 + $0x48] sm:$0xf]
        %v4305 = vsel %vm673, %v4049, %v4304
        %4306 = vst [vmem:[%s4261 + $0x48] sm:$0xf] %v4305
        %4307 = vst.msk [vmem:[%s4261 + $0x4c] sm:$0xf] %vm677, %v4058
        %v4308 = vld [vmem:[%s4261 + $0x50] sm:$0x1]
        %v4309 = vsel %vm680, %v4059, %v4308
        %4310 = vst [vmem:[%s4261 + $0x50] sm:$0x1] %v4309
        %v4311 = vld [vmem:[%s4261 + $0x54] sm:$0xf]
        %v4312 = vsel %vm673, %v4066, %v4311
        %4313 = vst [vmem:[%s4261 + $0x54] sm:$0xf] %v4312
        %4314 = vst.msk [vmem:[%s4261 + $0x58] sm:$0xf] %vm677, %v4075
        %v4315 = vld [vmem:[%s4261 + $0x5c] sm:$0x1]
        %v4316 = vsel %vm680, %v4076, %v4315
        %4317 = vst [vmem:[%s4261 + $0x5c] sm:$0x1] %v4316
        %v4318 = vld [vmem:[%s4261 + $0x60] sm:$0xf]
        %v4319 = vsel %vm673, %v4083, %v4318
        %4320 = vst [vmem:[%s4261 + $0x60] sm:$0xf] %v4319
        %4321 = vst.msk [vmem:[%s4261 + $0x64] sm:$0xf] %vm677, %v4092
        %v4322 = vld [vmem:[%s4261 + $0x68] sm:$0x1]
        %v4323 = vsel %vm680, %v4093, %v4322
        %4324 = vst [vmem:[%s4261 + $0x68] sm:$0x1] %v4323
        %v4325 = vld [vmem:[%s4261 + $0x6c] sm:$0xf]
        %v4326 = vsel %vm673, %v4100, %v4325
        %4327 = vst [vmem:[%s4261 + $0x6c] sm:$0xf] %v4326
        %4328 = vst.msk [vmem:[%s4261 + $0x70] sm:$0xf] %vm677, %v4109
        %v4329 = vld [vmem:[%s4261 + $0x74] sm:$0x1]
        %v4330 = vsel %vm680, %v4110, %v4329
        %4331 = vst [vmem:[%s4261 + $0x74] sm:$0x1] %v4330
        %v4332 = vld [vmem:[%s4261 + $0x78] sm:$0xf]
        %v4333 = vsel %vm673, %v4117, %v4332
        %4334 = vst [vmem:[%s4261 + $0x78] sm:$0xf] %v4333
        %4335 = vst.msk [vmem:[%s4261 + $0x7c] sm:$0xf] %vm677, %v4126
        %v4336 = vld [vmem:[%s4261 + $0x80] sm:$0x1]
        %v4337 = vsel %vm680, %v4127, %v4336
        %4338 = vst [vmem:[%s4261 + $0x80] sm:$0x1] %v4337
        %v4339 = vld [vmem:[%s4261 + $0x84] sm:$0xf]
        %v4340 = vsel %vm673, %v4134, %v4339
        %4341 = vst [vmem:[%s4261 + $0x84] sm:$0xf] %v4340
        %4342 = vst.msk [vmem:[%s4261 + $0x88] sm:$0xf] %vm677, %v4143
        %v4343 = vld [vmem:[%s4261 + $0x8c] sm:$0x1]
        %v4344 = vsel %vm680, %v4144, %v4343
        %4345 = vst [vmem:[%s4261 + $0x8c] sm:$0x1] %v4344
        %v4346 = vld [vmem:[%s4261 + $0x90] sm:$0xf]
        %v4347 = vsel %vm673, %v4151, %v4346
        %4348 = vst [vmem:[%s4261 + $0x90] sm:$0xf] %v4347
        %4349 = vst.msk [vmem:[%s4261 + $0x94] sm:$0xf] %vm677, %v4160
        %v4350 = vld [vmem:[%s4261 + $0x98] sm:$0x1]
        %v4351 = vsel %vm680, %v4161, %v4350
        %4352 = vst [vmem:[%s4261 + $0x98] sm:$0x1] %v4351
        %v4353 = vld [vmem:[%s4261 + $0x9c] sm:$0xf]
        %v4354 = vsel %vm673, %v4168, %v4353
        %4355 = vst [vmem:[%s4261 + $0x9c] sm:$0xf] %v4354
        %4356 = vst.msk [vmem:[%s4261 + $0xa0] sm:$0xf] %vm677, %v4177
        %v4357 = vld [vmem:[%s4261 + $0xa4] sm:$0x1]
        %v4358 = vsel %vm680, %v4178, %v4357
        %4359 = vst [vmem:[%s4261 + $0xa4] sm:$0x1] %v4358
        %v4360 = vld [vmem:[%s4261 + $0xa8] sm:$0xf]
        %v4361 = vsel %vm673, %v4185, %v4360
        %4362 = vst [vmem:[%s4261 + $0xa8] sm:$0xf] %v4361
        %4363 = vst.msk [vmem:[%s4261 + $0xac] sm:$0xf] %vm677, %v4194
        %v4364 = vld [vmem:[%s4261 + $0xb0] sm:$0x1]
        %v4365 = vsel %vm680, %v4195, %v4364
        %4366 = vst [vmem:[%s4261 + $0xb0] sm:$0x1] %v4365
        %v4367 = vld [vmem:[%s4261 + $0xb4] sm:$0xf]
        %v4368 = vsel %vm673, %v4202, %v4367
        %4369 = vst [vmem:[%s4261 + $0xb4] sm:$0xf] %v4368
        %4370 = vst.msk [vmem:[%s4261 + $0xb8] sm:$0xf] %vm677, %v4211
        %v4371 = vld [vmem:[%s4261 + $0xbc] sm:$0x1]
        %v4372 = vsel %vm680, %v4212, %v4371
        %4373 = vst [vmem:[%s4261 + $0xbc] sm:$0x1] %v4372
        %s4374 = scalar_lea.vmem [#allocation3], 24
        %v4375 = vld [vmem:[%s4374] sm:$0xf]
        %v4376 = vld [vmem:[%s4374 + $0x4] sm:$0xf]
        %v4377 = vld [vmem:[%s4374 + $0x8] sm:$0x1]
        %v4378 = vld [vmem:[#allocation3] sm:$0xf]
        %v4379 = vsel %vm673, %v4375, %v4378
        %4380 = vst [vmem:[#allocation3] sm:$0xf] %v4379
        %4381 = vst.msk [vmem:[#allocation3 + $0x4] sm:$0xf] %vm677, %v4376
        %v4382 = vld [vmem:[#allocation3 + $0x8] sm:$0x1]
        %v4383 = vsel %vm680, %v4377, %v4382
        %4384 = vst [vmem:[#allocation3 + $0x8] sm:$0x1] %v4383
        %s4385 = scalar_lea.vmem [#allocation3], 180
        %v4386 = vld [vmem:[%s4385] sm:$0xf]
        %v4387 = vld [vmem:[%s4385 + $0x4] sm:$0xf]
        %v4388 = vld [vmem:[%s4385 + $0x8] sm:$0x1]
        %s4389 = scalar_lea.vmem [#allocation3], 204
        %v4390 = vld [vmem:[%s4389] sm:$0xf]
        %v4391 = vsel %vm673, %v4386, %v4390
        %4392 = vst [vmem:[%s4389] sm:$0xf] %v4391
        %4393 = vst.msk [vmem:[%s4389 + $0x4] sm:$0xf] %vm677, %v4387
        %v4394 = vld [vmem:[%s4389 + $0x8] sm:$0x1]
        %v4395 = vsel %vm680, %v4388, %v4394
        %4396 = vst [vmem:[%s4389 + $0x8] sm:$0x1] %v4395
        %v4397 = vld [vmem:[#allocation3] sm:$0x2]
        %v4398 = vld [vmem:[#allocation3 + $0xc] sm:$0x2]
        %v4399 = vld [vmem:[#allocation3 + $0x18] sm:$0x2]
        %v4400 = vld [vmem:[#allocation3 + $0x24] sm:$0x2]
        %v4401 = vld [vmem:[#allocation3 + $0x30] sm:$0x2]
        %v4402 = vld [vmem:[#allocation3 + $0x3c] sm:$0x2]
        %v4403 = vld [vmem:[#allocation3 + $0x48] sm:$0x2]
        %v4404 = vld [vmem:[#allocation3 + $0x54] sm:$0x2]
        %v4405 = vld [vmem:[#allocation3 + $0x60] sm:$0x2]
        %v4406 = vld [vmem:[#allocation3 + $0x6c] sm:$0x2]
        %v4407 = vld [vmem:[#allocation3 + $0x78] sm:$0x2]
        %v4408 = vld [vmem:[#allocation3 + $0x84] sm:$0x2]
        %v4409 = vld [vmem:[#allocation3 + $0x90] sm:$0x2]
        %v4410 = vld [vmem:[#allocation3 + $0x9c] sm:$0x2]
        %v4411 = vld [vmem:[#allocation3 + $0xa8] sm:$0x2]
        %v4412 = vld [vmem:[#allocation3 + $0xb4] sm:$0x2]
        %v4413 = vld [vmem:[#allocation3 + $0xc0] sm:$0x2]
        %v4414 = vld [vmem:[#allocation3 + $0xcc] sm:$0x2]
        %v4433 = vrot.slane %v4397, 5
        %v4434 = vrot.slane %v4433, 4
        %v4435 = vrot.slane %v4398, 5
        %v4436 = vrot.slane %v4435, 4
        %v4437 = vrot.slane %v4399, 5
        %v4438 = vrot.slane %v4437, 4
        %v4439 = vrot.slane %v4400, 5
        %v4440 = vrot.slane %v4439, 4
        %v4441 = vrot.slane %v4401, 5
        %v4442 = vrot.slane %v4441, 4
        %v4443 = vrot.slane %v4402, 5
        %v4444 = vrot.slane %v4443, 4
        %v4445 = vrot.slane %v4403, 5
        %v4446 = vrot.slane %v4445, 4
        %v4447 = vrot.slane %v4404, 5
        %v4448 = vrot.slane %v4447, 4
        %v4449 = vrot.slane %v4405, 5
        %v4450 = vrot.slane %v4449, 4
        %v4451 = vrot.slane %v4406, 5
        %v4452 = vrot.slane %v4451, 4
        %v4453 = vrot.slane %v4407, 5
        %v4454 = vrot.slane %v4453, 4
        %v4455 = vrot.slane %v4408, 5
        %v4456 = vrot.slane %v4455, 4
        %v4457 = vrot.slane %v4409, 5
        %v4458 = vrot.slane %v4457, 4
        %v4459 = vrot.slane %v4410, 5
        %v4460 = vrot.slane %v4459, 4
        %v4461 = vrot.slane %v4411, 5
        %v4462 = vrot.slane %v4461, 4
        %v4463 = vrot.slane %v4412, 5
        %v4464 = vrot.slane %v4463, 4
        %v4465 = vrot.slane %v4413, 5
        %v4466 = vrot.slane %v4465, 4
        %v4467 = vrot.slane %v4414, 5
        %v4468 = vrot.slane %v4467, 4
        %v4487 = vld [vmem:[#allocation3] sm:$0x1]
        %v4488 = vsel %vm680, %v4434, %v4487
        %4489 = vst [vmem:[#allocation3] sm:$0x1] %v4488
        %v4490 = vld [vmem:[#allocation3 + $0xc] sm:$0x1]
        %v4491 = vsel %vm680, %v4436, %v4490
        %4492 = vst [vmem:[#allocation3 + $0xc] sm:$0x1] %v4491
        %v4493 = vld [vmem:[#allocation3 + $0x18] sm:$0x1]
        %v4494 = vsel %vm680, %v4438, %v4493
        %4495 = vst [vmem:[#allocation3 + $0x18] sm:$0x1] %v4494
        %v4496 = vld [vmem:[#allocation3 + $0x24] sm:$0x1]
        %v4497 = vsel %vm680, %v4440, %v4496
        %4498 = vst [vmem:[#allocation3 + $0x24] sm:$0x1] %v4497
        %v4499 = vld [vmem:[#allocation3 + $0x30] sm:$0x1]
        %v4500 = vsel %vm680, %v4442, %v4499
        %4501 = vst [vmem:[#allocation3 + $0x30] sm:$0x1] %v4500
        %v4502 = vld [vmem:[#allocation3 + $0x3c] sm:$0x1]
        %v4503 = vsel %vm680, %v4444, %v4502
        %4504 = vst [vmem:[#allocation3 + $0x3c] sm:$0x1] %v4503
        %v4505 = vld [vmem:[#allocation3 + $0x48] sm:$0x1]
        %v4506 = vsel %vm680, %v4446, %v4505
        %4507 = vst [vmem:[#allocation3 + $0x48] sm:$0x1] %v4506
        %v4508 = vld [vmem:[#allocation3 + $0x54] sm:$0x1]
        %v4509 = vsel %vm680, %v4448, %v4508
        %4510 = vst [vmem:[#allocation3 + $0x54] sm:$0x1] %v4509
        %v4511 = vld [vmem:[#allocation3 + $0x60] sm:$0x1]
        %v4512 = vsel %vm680, %v4450, %v4511
        %4513 = vst [vmem:[#allocation3 + $0x60] sm:$0x1] %v4512
        %v4514 = vld [vmem:[#allocation3 + $0x6c] sm:$0x1]
        %v4515 = vsel %vm680, %v4452, %v4514
        %4516 = vst [vmem:[#allocation3 + $0x6c] sm:$0x1] %v4515
        %v4517 = vld [vmem:[#allocation3 + $0x78] sm:$0x1]
        %v4518 = vsel %vm680, %v4454, %v4517
        %4519 = vst [vmem:[#allocation3 + $0x78] sm:$0x1] %v4518
        %v4520 = vld [vmem:[#allocation3 + $0x84] sm:$0x1]
        %v4521 = vsel %vm680, %v4456, %v4520
        %4522 = vst [vmem:[#allocation3 + $0x84] sm:$0x1] %v4521
        %v4523 = vld [vmem:[#allocation3 + $0x90] sm:$0x1]
        %v4524 = vsel %vm680, %v4458, %v4523
        %4525 = vst [vmem:[#allocation3 + $0x90] sm:$0x1] %v4524
        %v4526 = vld [vmem:[#allocation3 + $0x9c] sm:$0x1]
        %v4527 = vsel %vm680, %v4460, %v4526
        %4528 = vst [vmem:[#allocation3 + $0x9c] sm:$0x1] %v4527
        %v4529 = vld [vmem:[#allocation3 + $0xa8] sm:$0x1]
        %v4530 = vsel %vm680, %v4462, %v4529
        %4531 = vst [vmem:[#allocation3 + $0xa8] sm:$0x1] %v4530
        %v4532 = vld [vmem:[#allocation3 + $0xb4] sm:$0x1]
        %v4533 = vsel %vm680, %v4464, %v4532
        %4534 = vst [vmem:[#allocation3 + $0xb4] sm:$0x1] %v4533
        %v4535 = vld [vmem:[#allocation3 + $0xc0] sm:$0x1]
        %v4536 = vsel %vm680, %v4466, %v4535
        %4537 = vst [vmem:[#allocation3 + $0xc0] sm:$0x1] %v4536
        %v4538 = vld [vmem:[#allocation3 + $0xcc] sm:$0x1]
        %v4539 = vsel %vm680, %v4468, %v4538
        %4540 = vst [vmem:[#allocation3 + $0xcc] sm:$0x1] %v4539
        %v4541 = vld [vmem:[#allocation3 + $0x4] sm:$0x8]
        %v4542 = vld [vmem:[#allocation3 + $0x10] sm:$0x8]
        %v4543 = vld [vmem:[#allocation3 + $0x1c] sm:$0x8]
        %v4544 = vld [vmem:[#allocation3 + $0x28] sm:$0x8]
        %v4545 = vld [vmem:[#allocation3 + $0x34] sm:$0x8]
        %v4546 = vld [vmem:[#allocation3 + $0x40] sm:$0x8]
        %v4547 = vld [vmem:[#allocation3 + $0x4c] sm:$0x8]
        %v4548 = vld [vmem:[#allocation3 + $0x58] sm:$0x8]
        %v4549 = vld [vmem:[#allocation3 + $0x64] sm:$0x8]
        %v4550 = vld [vmem:[#allocation3 + $0x70] sm:$0x8]
        %v4551 = vld [vmem:[#allocation3 + $0x7c] sm:$0x8]
        %v4552 = vld [vmem:[#allocation3 + $0x88] sm:$0x8]
        %v4553 = vld [vmem:[#allocation3 + $0x94] sm:$0x8]
        %v4554 = vld [vmem:[#allocation3 + $0xa0] sm:$0x8]
        %v4555 = vld [vmem:[#allocation3 + $0xac] sm:$0x8]
        %v4556 = vld [vmem:[#allocation3 + $0xb8] sm:$0x8]
        %v4557 = vld [vmem:[#allocation3 + $0xc4] sm:$0x8]
        %v4558 = vld [vmem:[#allocation3 + $0xd0] sm:$0x8]
        %v4577 = vrot.slane %v4541, 7
        %v4578 = vrot.slane %v4577, 4
        %v4579 = vrot.slane %v4542, 7
        %v4580 = vrot.slane %v4579, 4
        %v4581 = vrot.slane %v4543, 7
        %v4582 = vrot.slane %v4581, 4
        %v4583 = vrot.slane %v4544, 7
        %v4584 = vrot.slane %v4583, 4
        %v4585 = vrot.slane %v4545, 7
        %v4586 = vrot.slane %v4585, 4
        %v4587 = vrot.slane %v4546, 7
        %v4588 = vrot.slane %v4587, 4
        %v4589 = vrot.slane %v4547, 7
        %v4590 = vrot.slane %v4589, 4
        %v4591 = vrot.slane %v4548, 7
        %v4592 = vrot.slane %v4591, 4
        %v4593 = vrot.slane %v4549, 7
        %v4594 = vrot.slane %v4593, 4
        %v4595 = vrot.slane %v4550, 7
        %v4596 = vrot.slane %v4595, 4
        %v4597 = vrot.slane %v4551, 7
        %v4598 = vrot.slane %v4597, 4
        %v4599 = vrot.slane %v4552, 7
        %v4600 = vrot.slane %v4599, 4
        %v4601 = vrot.slane %v4553, 7
        %v4602 = vrot.slane %v4601, 4
        %v4603 = vrot.slane %v4554, 7
        %v4604 = vrot.slane %v4603, 4
        %v4605 = vrot.slane %v4555, 7
        %v4606 = vrot.slane %v4605, 4
        %v4607 = vrot.slane %v4556, 7
        %v4608 = vrot.slane %v4607, 4
        %v4609 = vrot.slane %v4557, 7
        %v4610 = vrot.slane %v4609, 4
        %v4611 = vrot.slane %v4558, 7
        %v4612 = vrot.slane %v4611, 4
        %v4631 = vld [vmem:[#allocation3 + $0x8] sm:$0x1]
        %v4632 = vsel %vm1046, %v4578, %v4631
        %4633 = vst [vmem:[#allocation3 + $0x8] sm:$0x1] %v4632
        %v4634 = vld [vmem:[#allocation3 + $0x14] sm:$0x1]
        %v4635 = vsel %vm1046, %v4580, %v4634
        %4636 = vst [vmem:[#allocation3 + $0x14] sm:$0x1] %v4635
        %v4637 = vld [vmem:[#allocation3 + $0x20] sm:$0x1]
        %v4638 = vsel %vm1046, %v4582, %v4637
        %4639 = vst [vmem:[#allocation3 + $0x20] sm:$0x1] %v4638
        %v4640 = vld [vmem:[#allocation3 + $0x2c] sm:$0x1]
        %v4641 = vsel %vm1046, %v4584, %v4640
        %4642 = vst [vmem:[#allocation3 + $0x2c] sm:$0x1] %v4641
        %v4643 = vld [vmem:[#allocation3 + $0x38] sm:$0x1]
        %v4644 = vsel %vm1046, %v4586, %v4643
        %4645 = vst [vmem:[#allocation3 + $0x38] sm:$0x1] %v4644
        %v4646 = vld [vmem:[#allocation3 + $0x44] sm:$0x1]
        %v4647 = vsel %vm1046, %v4588, %v4646
        %4648 = vst [vmem:[#allocation3 + $0x44] sm:$0x1] %v4647
        %v4649 = vld [vmem:[#allocation3 + $0x50] sm:$0x1]
        %v4650 = vsel %vm1046, %v4590, %v4649
        %4651 = vst [vmem:[#allocation3 + $0x50] sm:$0x1] %v4650
        %v4652 = vld [vmem:[#allocation3 + $0x5c] sm:$0x1]
        %v4653 = vsel %vm1046, %v4592, %v4652
        %4654 = vst [vmem:[#allocation3 + $0x5c] sm:$0x1] %v4653
        %v4655 = vld [vmem:[#allocation3 + $0x68] sm:$0x1]
        %v4656 = vsel %vm1046, %v4594, %v4655
        %4657 = vst [vmem:[#allocation3 + $0x68] sm:$0x1] %v4656
        %v4658 = vld [vmem:[#allocation3 + $0x74] sm:$0x1]
        %v4659 = vsel %vm1046, %v4596, %v4658
        %4660 = vst [vmem:[#allocation3 + $0x74] sm:$0x1] %v4659
        %v4661 = vld [vmem:[#allocation3 + $0x80] sm:$0x1]
        %v4662 = vsel %vm1046, %v4598, %v4661
        %4663 = vst [vmem:[#allocation3 + $0x80] sm:$0x1] %v4662
        %v4664 = vld [vmem:[#allocation3 + $0x8c] sm:$0x1]
        %v4665 = vsel %vm1046, %v4600, %v4664
        %4666 = vst [vmem:[#allocation3 + $0x8c] sm:$0x1] %v4665
        %v4667 = vld [vmem:[#allocation3 + $0x98] sm:$0x1]
        %v4668 = vsel %vm1046, %v4602, %v4667
        %4669 = vst [vmem:[#allocation3 + $0x98] sm:$0x1] %v4668
        %v4670 = vld [vmem:[#allocation3 + $0xa4] sm:$0x1]
        %v4671 = vsel %vm1046, %v4604, %v4670
        %4672 = vst [vmem:[#allocation3 + $0xa4] sm:$0x1] %v4671
        %v4673 = vld [vmem:[#allocation3 + $0xb0] sm:$0x1]
        %v4674 = vsel %vm1046, %v4606, %v4673
        %4675 = vst [vmem:[#allocation3 + $0xb0] sm:$0x1] %v4674
        %v4676 = vld [vmem:[#allocation3 + $0xbc] sm:$0x1]
        %v4677 = vsel %vm1046, %v4608, %v4676
        %4678 = vst [vmem:[#allocation3 + $0xbc] sm:$0x1] %v4677
        %v4679 = vld [vmem:[#allocation3 + $0xc8] sm:$0x1]
        %v4680 = vsel %vm1046, %v4610, %v4679
        %4681 = vst [vmem:[#allocation3 + $0xc8] sm:$0x1] %v4680
        %v4682 = vld [vmem:[#allocation3 + $0xd4] sm:$0x1]
        %v4683 = vsel %vm1046, %v4612, %v4682
        %4684 = vst [vmem:[#allocation3 + $0xd4] sm:$0x1] %v4683
        %v4685 = vld [vmem:[#allocation3] sm:$0xf]
        %v4686 = vld [vmem:[#allocation3 + $0x4] sm:$0xf]
        %v4687 = vld [vmem:[#allocation3 + $0xc] sm:$0xf]
        %v4688 = vld [vmem:[#allocation3 + $0x10] sm:$0xf]
        %v4689 = vld [vmem:[#allocation3 + $0x18] sm:$0xf]
        %v4690 = vld [vmem:[#allocation3 + $0x1c] sm:$0xf]
        %v4691 = vld [vmem:[#allocation3 + $0x24] sm:$0xf]
        %v4692 = vld [vmem:[#allocation3 + $0x28] sm:$0xf]
        %v4693 = vld [vmem:[#allocation3 + $0x30] sm:$0xf]
        %v4694 = vld [vmem:[#allocation3 + $0x34] sm:$0xf]
        %v4695 = vld [vmem:[#allocation3 + $0x3c] sm:$0xf]
        %v4696 = vld [vmem:[#allocation3 + $0x40] sm:$0xf]
        %v4697 = vld [vmem:[#allocation3 + $0x48] sm:$0xf]
        %v4698 = vld [vmem:[#allocation3 + $0x4c] sm:$0xf]
        %v4699 = vld [vmem:[#allocation3 + $0x54] sm:$0xf]
        %v4700 = vld [vmem:[#allocation3 + $0x58] sm:$0xf]
        %v4701 = vld [vmem:[#allocation3 + $0x60] sm:$0xf]
        %v4702 = vld [vmem:[#allocation3 + $0x64] sm:$0xf]
        %v4703 = vld [vmem:[#allocation3 + $0x6c] sm:$0xf]
        %v4704 = vld [vmem:[#allocation3 + $0x70] sm:$0xf]
        %v4705 = vld [vmem:[#allocation3 + $0x78] sm:$0xf]
        %v4706 = vld [vmem:[#allocation3 + $0x7c] sm:$0xf]
        %v4707 = vld [vmem:[#allocation3 + $0x84] sm:$0xf]
        %v4708 = vld [vmem:[#allocation3 + $0x88] sm:$0xf]
        %v4709 = vld [vmem:[#allocation3 + $0x90] sm:$0xf]
        %v4710 = vld [vmem:[#allocation3 + $0x94] sm:$0xf]
        %v4711 = vld [vmem:[#allocation3 + $0x9c] sm:$0xf]
        %v4712 = vld [vmem:[#allocation3 + $0xa0] sm:$0xf]
        %v4713 = vld [vmem:[#allocation3 + $0xa8] sm:$0xf]
        %v4714 = vld [vmem:[#allocation3 + $0xac] sm:$0xf]
        %v4715 = vld [vmem:[#allocation3 + $0xb4] sm:$0xf]
        %v4716 = vld [vmem:[#allocation3 + $0xb8] sm:$0xf]
        %v4717 = vld [vmem:[#allocation3 + $0x8] sm:$0x1]
        %v4718 = vld [vmem:[#allocation3 + $0x14] sm:$0x1]
        %v4719 = vld [vmem:[#allocation3 + $0x20] sm:$0x1]
        %v4720 = vld [vmem:[#allocation3 + $0x2c] sm:$0x1]
        %v4721 = vld [vmem:[#allocation3 + $0x38] sm:$0x1]
        %v4722 = vld [vmem:[#allocation3 + $0x44] sm:$0x1]
        %v4723 = vld [vmem:[#allocation3 + $0x50] sm:$0x1]
        %v4724 = vld [vmem:[#allocation3 + $0x5c] sm:$0x1]
        %v4725 = vld [vmem:[#allocation3 + $0x68] sm:$0x1]
        %v4726 = vld [vmem:[#allocation3 + $0x74] sm:$0x1]
        %v4727 = vld [vmem:[#allocation3 + $0x80] sm:$0x1]
        %v4728 = vld [vmem:[#allocation3 + $0x8c] sm:$0x1]
        %v4729 = vld [vmem:[#allocation3 + $0x98] sm:$0x1]
        %v4730 = vld [vmem:[#allocation3 + $0xa4] sm:$0x1]
        %v4731 = vld [vmem:[#allocation3 + $0xb0] sm:$0x1]
        %v4732 = vld [vmem:[#allocation3 + $0xbc] sm:$0x1]
        %v4733 = vld [vmem:[#allocation3] sm:$0xe]
        %v4734 = vld [vmem:[#allocation3 + $0xc] sm:$0xe]
        %v4735 = vld [vmem:[#allocation3 + $0x18] sm:$0xe]
        %v4736 = vld [vmem:[#allocation3 + $0x24] sm:$0xe]
        %v4737 = vld [vmem:[#allocation3 + $0x30] sm:$0xe]
        %v4738 = vld [vmem:[#allocation3 + $0x3c] sm:$0xe]
        %v4739 = vld [vmem:[#allocation3 + $0x48] sm:$0xe]
        %v4740 = vld [vmem:[#allocation3 + $0x54] sm:$0xe]
        %v4741 = vld [vmem:[#allocation3 + $0x60] sm:$0xe]
        %v4742 = vld [vmem:[#allocation3 + $0x6c] sm:$0xe]
        %v4743 = vld [vmem:[#allocation3 + $0x78] sm:$0xe]
        %v4744 = vld [vmem:[#allocation3 + $0x84] sm:$0xe]
        %v4745 = vld [vmem:[#allocation3 + $0x90] sm:$0xe]
        %v4746 = vld [vmem:[#allocation3 + $0x9c] sm:$0xe]
        %v4747 = vld [vmem:[#allocation3 + $0xa8] sm:$0xe]
        %v4748 = vld [vmem:[#allocation3 + $0xb4] sm:$0xe]
        %v4781 = vunpack.c.l.b16 %v4685
        %v4782 = vunpack.c.l.b16 %v4686
        %v4783 = vunpack.c.l.b16 %v4687
        %v4784 = vunpack.c.l.b16 %v4688
        %v4785 = vunpack.c.l.b16 %v4689
        %v4786 = vunpack.c.l.b16 %v4690
        %v4787 = vunpack.c.l.b16 %v4691
        %v4788 = vunpack.c.l.b16 %v4692
        %v4789 = vunpack.c.l.b16 %v4693
        %v4790 = vunpack.c.l.b16 %v4694
        %v4791 = vunpack.c.l.b16 %v4695
        %v4792 = vunpack.c.l.b16 %v4696
        %v4793 = vunpack.c.l.b16 %v4697
        %v4794 = vunpack.c.l.b16 %v4698
        %v4795 = vunpack.c.l.b16 %v4699
        %v4796 = vunpack.c.l.b16 %v4700
        %v4797 = vunpack.c.l.b16 %v4701
        %v4798 = vunpack.c.l.b16 %v4702
        %v4799 = vunpack.c.l.b16 %v4703
        %v4800 = vunpack.c.l.b16 %v4704
        %v4801 = vunpack.c.l.b16 %v4705
        %v4802 = vunpack.c.l.b16 %v4706
        %v4803 = vunpack.c.l.b16 %v4707
        %v4804 = vunpack.c.l.b16 %v4708
        %v4805 = vunpack.c.l.b16 %v4709
        %v4806 = vunpack.c.l.b16 %v4710
        %v4807 = vunpack.c.l.b16 %v4711
        %v4808 = vunpack.c.l.b16 %v4712
        %v4809 = vunpack.c.l.b16 %v4713
        %v4810 = vunpack.c.l.b16 %v4714
        %v4811 = vunpack.c.l.b16 %v4715
        %v4812 = vunpack.c.l.b16 %v4716
        %v4813 = vpack.c.b16 %v4782, %v4781
        %v4814 = vpack.c.b16 %v4784, %v4783
        %v4815 = vpack.c.b16 %v4786, %v4785
        %v4816 = vpack.c.b16 %v4788, %v4787
        %v4817 = vpack.c.b16 %v4790, %v4789
        %v4818 = vpack.c.b16 %v4792, %v4791
        %v4819 = vpack.c.b16 %v4794, %v4793
        %v4820 = vpack.c.b16 %v4796, %v4795
        %v4821 = vpack.c.b16 %v4798, %v4797
        %v4822 = vpack.c.b16 %v4800, %v4799
        %v4823 = vpack.c.b16 %v4802, %v4801
        %v4824 = vpack.c.b16 %v4804, %v4803
        %v4825 = vpack.c.b16 %v4806, %v4805
        %v4826 = vpack.c.b16 %v4808, %v4807
        %v4827 = vpack.c.b16 %v4810, %v4809
        %v4828 = vpack.c.b16 %v4812, %v4811
        %v4845 = vunpack.c.l.b16 %v4717
        %v4846 = vunpack.c.l.b16 %v4718
        %v4847 = vunpack.c.l.b16 %v4719
        %v4848 = vunpack.c.l.b16 %v4720
        %v4849 = vunpack.c.l.b16 %v4721
        %v4850 = vunpack.c.l.b16 %v4722
        %v4851 = vunpack.c.l.b16 %v4723
        %v4852 = vunpack.c.l.b16 %v4724
        %v4853 = vunpack.c.l.b16 %v4725
        %v4854 = vunpack.c.l.b16 %v4726
        %v4855 = vunpack.c.l.b16 %v4727
        %v4856 = vunpack.c.l.b16 %v4728
        %v4857 = vunpack.c.l.b16 %v4729
        %v4858 = vunpack.c.l.b16 %v4730
        %v4859 = vunpack.c.l.b16 %v4731
        %v4860 = vunpack.c.l.b16 %v4732
        %v4861 = vpack.c.b16 %v4845, %v4845
        %v4862 = vpack.c.b16 %v4846, %v4846
        %v4863 = vpack.c.b16 %v4847, %v4847
        %v4864 = vpack.c.b16 %v4848, %v4848
        %v4865 = vpack.c.b16 %v4849, %v4849
        %v4866 = vpack.c.b16 %v4850, %v4850
        %v4867 = vpack.c.b16 %v4851, %v4851
        %v4868 = vpack.c.b16 %v4852, %v4852
        %v4869 = vpack.c.b16 %v4853, %v4853
        %v4870 = vpack.c.b16 %v4854, %v4854
        %v4871 = vpack.c.b16 %v4855, %v4855
        %v4872 = vpack.c.b16 %v4856, %v4856
        %v4873 = vpack.c.b16 %v4857, %v4857
        %v4874 = vpack.c.b16 %v4858, %v4858
        %v4875 = vpack.c.b16 %v4859, %v4859
        %v4876 = vpack.c.b16 %v4860, %v4860
        %v4878 = vshrl.u32 %v4813, 16
        %v4880 = vshll.u32 %v4813, 16
        %v4882 = vrot.slane %v4880, 1
        %v4883 = vor.u32 %v4878, %v4882
        %v4885 = vshll.u32 %v4861, 16
        %v4887 = vrot.slane %v4885, 1
        %v4888 = vsel %vm1293, %v4883, %v4887
        %v4890 = vshrl.u32 %v4814, 16
        %v4892 = vshll.u32 %v4814, 16
        %v4894 = vrot.slane %v4892, 1
        %v4895 = vor.u32 %v4890, %v4894
        %v4897 = vshll.u32 %v4862, 16
        %v4899 = vrot.slane %v4897, 1
        %v4900 = vsel %vm1293, %v4895, %v4899
        %v4902 = vshrl.u32 %v4815, 16
        %v4904 = vshll.u32 %v4815, 16
        %v4906 = vrot.slane %v4904, 1
        %v4907 = vor.u32 %v4902, %v4906
        %v4909 = vshll.u32 %v4863, 16
        %v4911 = vrot.slane %v4909, 1
        %v4912 = vsel %vm1293, %v4907, %v4911
        %v4914 = vshrl.u32 %v4816, 16
        %v4916 = vshll.u32 %v4816, 16
        %v4918 = vrot.slane %v4916, 1
        %v4919 = vor.u32 %v4914, %v4918
        %v4921 = vshll.u32 %v4864, 16
        %v4923 = vrot.slane %v4921, 1
        %v4924 = vsel %vm1293, %v4919, %v4923
        %v4926 = vshrl.u32 %v4817, 16
        %v4928 = vshll.u32 %v4817, 16
        %v4930 = vrot.slane %v4928, 1
        %v4931 = vor.u32 %v4926, %v4930
        %v4933 = vshll.u32 %v4865, 16
        %v4935 = vrot.slane %v4933, 1
        %v4936 = vsel %vm1293, %v4931, %v4935
        %v4938 = vshrl.u32 %v4818, 16
        %v4940 = vshll.u32 %v4818, 16
        %v4942 = vrot.slane %v4940, 1
        %v4943 = vor.u32 %v4938, %v4942
        %v4945 = vshll.u32 %v4866, 16
        %v4947 = vrot.slane %v4945, 1
        %v4948 = vsel %vm1293, %v4943, %v4947
        %v4950 = vshrl.u32 %v4819, 16
        %v4952 = vshll.u32 %v4819, 16
        %v4954 = vrot.slane %v4952, 1
        %v4955 = vor.u32 %v4950, %v4954
        %v4957 = vshll.u32 %v4867, 16
        %v4959 = vrot.slane %v4957, 1
        %v4960 = vsel %vm1293, %v4955, %v4959
        %v4962 = vshrl.u32 %v4820, 16
        %v4964 = vshll.u32 %v4820, 16
        %v4966 = vrot.slane %v4964, 1
        %v4967 = vor.u32 %v4962, %v4966
        %v4969 = vshll.u32 %v4868, 16
        %v4971 = vrot.slane %v4969, 1
        %v4972 = vsel %vm1293, %v4967, %v4971
        %v4974 = vshrl.u32 %v4821, 16
        %v4976 = vshll.u32 %v4821, 16
        %v4978 = vrot.slane %v4976, 1
        %v4979 = vor.u32 %v4974, %v4978
        %v4981 = vshll.u32 %v4869, 16
        %v4983 = vrot.slane %v4981, 1
        %v4984 = vsel %vm1293, %v4979, %v4983
        %v4986 = vshrl.u32 %v4822, 16
        %v4988 = vshll.u32 %v4822, 16
        %v4990 = vrot.slane %v4988, 1
        %v4991 = vor.u32 %v4986, %v4990
        %v4993 = vshll.u32 %v4870, 16
        %v4995 = vrot.slane %v4993, 1
        %v4996 = vsel %vm1293, %v4991, %v4995
        %v4998 = vshrl.u32 %v4823, 16
        %v5000 = vshll.u32 %v4823, 16
        %v5002 = vrot.slane %v5000, 1
        %v5003 = vor.u32 %v4998, %v5002
        %v5005 = vshll.u32 %v4871, 16
        %v5007 = vrot.slane %v5005, 1
        %v5008 = vsel %vm1293, %v5003, %v5007
        %v5010 = vshrl.u32 %v4824, 16
        %v5012 = vshll.u32 %v4824, 16
        %v5014 = vrot.slane %v5012, 1
        %v5015 = vor.u32 %v5010, %v5014
        %v5017 = vshll.u32 %v4872, 16
        %v5019 = vrot.slane %v5017, 1
        %v5020 = vsel %vm1293, %v5015, %v5019
        %v5022 = vshrl.u32 %v4825, 16
        %v5024 = vshll.u32 %v4825, 16
        %v5026 = vrot.slane %v5024, 1
        %v5027 = vor.u32 %v5022, %v5026
        %v5029 = vshll.u32 %v4873, 16
        %v5031 = vrot.slane %v5029, 1
        %v5032 = vsel %vm1293, %v5027, %v5031
        %v5034 = vshrl.u32 %v4826, 16
        %v5036 = vshll.u32 %v4826, 16
        %v5038 = vrot.slane %v5036, 1
        %v5039 = vor.u32 %v5034, %v5038
        %v5041 = vshll.u32 %v4874, 16
        %v5043 = vrot.slane %v5041, 1
        %v5044 = vsel %vm1293, %v5039, %v5043
        %v5046 = vshrl.u32 %v4827, 16
        %v5048 = vshll.u32 %v4827, 16
        %v5050 = vrot.slane %v5048, 1
        %v5051 = vor.u32 %v5046, %v5050
        %v5053 = vshll.u32 %v4875, 16
        %v5055 = vrot.slane %v5053, 1
        %v5056 = vsel %vm1293, %v5051, %v5055
        %v5058 = vshrl.u32 %v4828, 16
        %v5060 = vshll.u32 %v4828, 16
        %v5062 = vrot.slane %v5060, 1
        %v5063 = vor.u32 %v5058, %v5062
        %v5065 = vshll.u32 %v4876, 16
        %v5067 = vrot.slane %v5065, 1
        %v5068 = vsel %vm1293, %v5063, %v5067
        %5069 = vrot.lane.b32.xlu0 %v4888, 4
        %v5070 = vpop.permute.xlu0 %5069
        %5071 = vrot.lane.b32.xlu0 %v4900, 4
        %v5072 = vpop.permute.xlu0 %5071
        %5073 = vrot.lane.b32.xlu0 %v4912, 4
        %v5074 = vpop.permute.xlu0 %5073
        %5075 = vrot.lane.b32.xlu0 %v4924, 4
        %v5076 = vpop.permute.xlu0 %5075
        %5077 = vrot.lane.b32.xlu0 %v4936, 4
        %v5078 = vpop.permute.xlu0 %5077
        %5079 = vrot.lane.b32.xlu0 %v4948, 4
        %v5080 = vpop.permute.xlu0 %5079
        %5081 = vrot.lane.b32.xlu0 %v4960, 4
        %v5082 = vpop.permute.xlu0 %5081
        %5083 = vrot.lane.b32.xlu0 %v4972, 4
        %v5084 = vpop.permute.xlu0 %5083
        %5085 = vrot.lane.b32.xlu0 %v4984, 4
        %v5086 = vpop.permute.xlu0 %5085
        %5087 = vrot.lane.b32.xlu0 %v4996, 4
        %v5088 = vpop.permute.xlu0 %5087
        %5089 = vrot.lane.b32.xlu0 %v5008, 4
        %v5090 = vpop.permute.xlu0 %5089
        %5091 = vrot.lane.b32.xlu0 %v5020, 4
        %v5092 = vpop.permute.xlu0 %5091
        %5093 = vrot.lane.b32.xlu0 %v5032, 4
        %v5094 = vpop.permute.xlu0 %5093
        %5095 = vrot.lane.b32.xlu0 %v5044, 4
        %v5096 = vpop.permute.xlu0 %5095
        %5097 = vrot.lane.b32.xlu0 %v5056, 4
        %v5098 = vpop.permute.xlu0 %5097
        %5099 = vrot.lane.b32.xlu0 %v5068, 4
        %v5100 = vpop.permute.xlu0 %5099
        %v5117 = vunpack.c.l.b16 %v4733
        %v5118 = vunpack.c.l.b16 %v4734
        %v5119 = vunpack.c.l.b16 %v4735
        %v5120 = vunpack.c.l.b16 %v4736
        %v5121 = vunpack.c.l.b16 %v4737
        %v5122 = vunpack.c.l.b16 %v4738
        %v5123 = vunpack.c.l.b16 %v4739
        %v5124 = vunpack.c.l.b16 %v4740
        %v5125 = vunpack.c.l.b16 %v4741
        %v5126 = vunpack.c.l.b16 %v4742
        %v5127 = vunpack.c.l.b16 %v4743
        %v5128 = vunpack.c.l.b16 %v4744
        %v5129 = vunpack.c.l.b16 %v4745
        %v5130 = vunpack.c.l.b16 %v4746
        %v5131 = vunpack.c.l.b16 %v4747
        %v5132 = vunpack.c.l.b16 %v4748
        %v5133 = vpack.c.b16 %v4782, %v5117
        %v5134 = vpack.c.b16 %v4784, %v5118
        %v5135 = vpack.c.b16 %v4786, %v5119
        %v5136 = vpack.c.b16 %v4788, %v5120
        %v5137 = vpack.c.b16 %v4790, %v5121
        %v5138 = vpack.c.b16 %v4792, %v5122
        %v5139 = vpack.c.b16 %v4794, %v5123
        %v5140 = vpack.c.b16 %v4796, %v5124
        %v5141 = vpack.c.b16 %v4798, %v5125
        %v5142 = vpack.c.b16 %v4800, %v5126
        %v5143 = vpack.c.b16 %v4802, %v5127
        %v5144 = vpack.c.b16 %v4804, %v5128
        %v5145 = vpack.c.b16 %v4806, %v5129
        %v5146 = vpack.c.b16 %v4808, %v5130
        %v5147 = vpack.c.b16 %v4810, %v5131
        %v5148 = vpack.c.b16 %v4812, %v5132
        %v5149 = vrot.slane %v5133, 1
        %v5150 = vrot.slane %v4861, 1
        %v5151 = vsel %vm1566, %v5149, %v5150
        %v5152 = vrot.slane %v5134, 1
        %v5153 = vrot.slane %v4862, 1
        %v5154 = vsel %vm1566, %v5152, %v5153
        %v5155 = vrot.slane %v5135, 1
        %v5156 = vrot.slane %v4863, 1
        %v5157 = vsel %vm1566, %v5155, %v5156
        %v5158 = vrot.slane %v5136, 1
        %v5159 = vrot.slane %v4864, 1
        %v5160 = vsel %vm1566, %v5158, %v5159
        %v5161 = vrot.slane %v5137, 1
        %v5162 = vrot.slane %v4865, 1
        %v5163 = vsel %vm1566, %v5161, %v5162
        %v5164 = vrot.slane %v5138, 1
        %v5165 = vrot.slane %v4866, 1
        %v5166 = vsel %vm1566, %v5164, %v5165
        %v5167 = vrot.slane %v5139, 1
        %v5168 = vrot.slane %v4867, 1
        %v5169 = vsel %vm1566, %v5167, %v5168
        %v5170 = vrot.slane %v5140, 1
        %v5171 = vrot.slane %v4868, 1
        %v5172 = vsel %vm1566, %v5170, %v5171
        %v5173 = vrot.slane %v5141, 1
        %v5174 = vrot.slane %v4869, 1
        %v5175 = vsel %vm1566, %v5173, %v5174
        %v5176 = vrot.slane %v5142, 1
        %v5177 = vrot.slane %v4870, 1
        %v5178 = vsel %vm1566, %v5176, %v5177
        %v5179 = vrot.slane %v5143, 1
        %v5180 = vrot.slane %v4871, 1
        %v5181 = vsel %vm1566, %v5179, %v5180
        %v5182 = vrot.slane %v5144, 1
        %v5183 = vrot.slane %v4872, 1
        %v5184 = vsel %vm1566, %v5182, %v5183
        %v5185 = vrot.slane %v5145, 1
        %v5186 = vrot.slane %v4873, 1
        %v5187 = vsel %vm1566, %v5185, %v5186
        %v5188 = vrot.slane %v5146, 1
        %v5189 = vrot.slane %v4874, 1
        %v5190 = vsel %vm1566, %v5188, %v5189
        %v5191 = vrot.slane %v5147, 1
        %v5192 = vrot.slane %v4875, 1
        %v5193 = vsel %vm1566, %v5191, %v5192
        %v5194 = vrot.slane %v5148, 1
        %v5195 = vrot.slane %v4876, 1
        %v5196 = vsel %vm1566, %v5194, %v5195
        %5197 = vrot.lane.b32.xlu0 %v5151, 8
        %v5198 = vpop.permute.xlu0 %5197
        %5199 = vrot.lane.b32.xlu0 %v5154, 8
        %v5200 = vpop.permute.xlu0 %5199
        %5201 = vrot.lane.b32.xlu0 %v5157, 8
        %v5202 = vpop.permute.xlu0 %5201
        %5203 = vrot.lane.b32.xlu0 %v5160, 8
        %v5204 = vpop.permute.xlu0 %5203
        %5205 = vrot.lane.b32.xlu0 %v5163, 8
        %v5206 = vpop.permute.xlu0 %5205
        %5207 = vrot.lane.b32.xlu0 %v5166, 8
        %v5208 = vpop.permute.xlu0 %5207
        %5209 = vrot.lane.b32.xlu0 %v5169, 8
        %v5210 = vpop.permute.xlu0 %5209
        %5211 = vrot.lane.b32.xlu0 %v5172, 8
        %v5212 = vpop.permute.xlu0 %5211
        %5213 = vrot.lane.b32.xlu0 %v5175, 8
        %v5214 = vpop.permute.xlu0 %5213
        %5215 = vrot.lane.b32.xlu0 %v5178, 8
        %v5216 = vpop.permute.xlu0 %5215
        %5217 = vrot.lane.b32.xlu0 %v5181, 8
        %v5218 = vpop.permute.xlu0 %5217
        %5219 = vrot.lane.b32.xlu0 %v5184, 8
        %v5220 = vpop.permute.xlu0 %5219
        %5221 = vrot.lane.b32.xlu0 %v5187, 8
        %v5222 = vpop.permute.xlu0 %5221
        %5223 = vrot.lane.b32.xlu0 %v5190, 8
        %v5224 = vpop.permute.xlu0 %5223
        %5225 = vrot.lane.b32.xlu0 %v5193, 8
        %v5226 = vpop.permute.xlu0 %5225
        %5227 = vrot.lane.b32.xlu0 %v5196, 8
        %v5228 = vpop.permute.xlu0 %5227
        %v5230 = vsel %vm1647, %v4813, %v5070
        %v5232 = vsel %vm1647, %v4814, %v5072
        %v5234 = vsel %vm1647, %v4815, %v5074
        %v5236 = vsel %vm1647, %v4816, %v5076
        %v5238 = vsel %vm1647, %v4817, %v5078
        %v5240 = vsel %vm1647, %v4818, %v5080
        %v5242 = vsel %vm1647, %v4819, %v5082
        %v5244 = vsel %vm1647, %v4820, %v5084
        %v5246 = vsel %vm1647, %v4821, %v5086
        %v5248 = vsel %vm1647, %v4822, %v5088
        %v5250 = vsel %vm1647, %v4823, %v5090
        %v5252 = vsel %vm1647, %v4824, %v5092
        %v5254 = vsel %vm1647, %v4825, %v5094
        %v5256 = vsel %vm1647, %v4826, %v5096
        %v5258 = vsel %vm1647, %v4827, %v5098
        %v5260 = vsel %vm1647, %v4828, %v5100
        %v5262 = vsel %vm1680, %v5230, %v5198
        %v5264 = vsel %vm1680, %v5232, %v5200
        %v5266 = vsel %vm1680, %v5234, %v5202
        %v5268 = vsel %vm1680, %v5236, %v5204
        %v5270 = vsel %vm1680, %v5238, %v5206
        %v5272 = vsel %vm1680, %v5240, %v5208
        %v5274 = vsel %vm1680, %v5242, %v5210
        %v5276 = vsel %vm1680, %v5244, %v5212
        %v5278 = vsel %vm1680, %v5246, %v5214
        %v5280 = vsel %vm1680, %v5248, %v5216
        %v5282 = vsel %vm1680, %v5250, %v5218
        %v5284 = vsel %vm1680, %v5252, %v5220
        %v5286 = vsel %vm1680, %v5254, %v5222
        %v5288 = vsel %vm1680, %v5256, %v5224
        %v5290 = vsel %vm1680, %v5258, %v5226
        %v5292 = vsel %vm1680, %v5260, %v5228
        %v5293 = vld [vmem:[#allocation9] sm:$0xf]
        %v5294 = vld [vmem:[#allocation9 + $0x4] sm:$0x3]
        %v5295 = vld [vmem:[%s4261] sm:$0xf]
        %v5296 = vld [vmem:[%s4261 + $0x4] sm:$0xf]
        %v5297 = vld [vmem:[%s4261 + $0xc] sm:$0xf]
        %v5298 = vld [vmem:[%s4261 + $0x10] sm:$0xf]
        %v5299 = vld [vmem:[%s4261 + $0x18] sm:$0xf]
        %v5300 = vld [vmem:[%s4261 + $0x1c] sm:$0xf]
        %v5301 = vld [vmem:[%s4261 + $0x24] sm:$0xf]
        %v5302 = vld [vmem:[%s4261 + $0x28] sm:$0xf]
        %v5303 = vld [vmem:[%s4261 + $0x30] sm:$0xf]
        %v5304 = vld [vmem:[%s4261 + $0x34] sm:$0xf]
        %v5305 = vld [vmem:[%s4261 + $0x3c] sm:$0xf]
        %v5306 = vld [vmem:[%s4261 + $0x40] sm:$0xf]
        %v5307 = vld [vmem:[%s4261 + $0x48] sm:$0xf]
        %v5308 = vld [vmem:[%s4261 + $0x4c] sm:$0xf]
        %v5309 = vld [vmem:[%s4261 + $0x54] sm:$0xf]
        %v5310 = vld [vmem:[%s4261 + $0x58] sm:$0xf]
        %v5311 = vld [vmem:[%s4261 + $0x60] sm:$0xf]
        %v5312 = vld [vmem:[%s4261 + $0x64] sm:$0xf]
        %v5313 = vld [vmem:[%s4261 + $0x6c] sm:$0xf]
        %v5314 = vld [vmem:[%s4261 + $0x70] sm:$0xf]
        %v5315 = vld [vmem:[%s4261 + $0x78] sm:$0xf]
        %v5316 = vld [vmem:[%s4261 + $0x7c] sm:$0xf]
        %v5317 = vld [vmem:[%s4261 + $0x84] sm:$0xf]
        %v5318 = vld [vmem:[%s4261 + $0x88] sm:$0xf]
        %v5319 = vld [vmem:[%s4261 + $0x90] sm:$0xf]
        %v5320 = vld [vmem:[%s4261 + $0x94] sm:$0xf]
        %v5321 = vld [vmem:[%s4261 + $0x9c] sm:$0xf]
        %v5322 = vld [vmem:[%s4261 + $0xa0] sm:$0xf]
        %v5323 = vld [vmem:[%s4261 + $0xa8] sm:$0xf]
        %v5324 = vld [vmem:[%s4261 + $0xac] sm:$0xf]
        %v5325 = vld [vmem:[%s4261 + $0xb4] sm:$0xf]
        %v5326 = vld [vmem:[%s4261 + $0xb8] sm:$0xf]
        %v5327 = vld [vmem:[%s4261 + $0x8] sm:$0x1]
        %v5328 = vld [vmem:[%s4261 + $0x14] sm:$0x1]
        %v5329 = vld [vmem:[%s4261 + $0x20] sm:$0x1]
        %v5330 = vld [vmem:[%s4261 + $0x2c] sm:$0x1]
        %v5331 = vld [vmem:[%s4261 + $0x38] sm:$0x1]
        %v5332 = vld [vmem:[%s4261 + $0x44] sm:$0x1]
        %v5333 = vld [vmem:[%s4261 + $0x50] sm:$0x1]
        %v5334 = vld [vmem:[%s4261 + $0x5c] sm:$0x1]
        %v5335 = vld [vmem:[%s4261 + $0x68] sm:$0x1]
        %v5336 = vld [vmem:[%s4261 + $0x74] sm:$0x1]
        %v5337 = vld [vmem:[%s4261 + $0x80] sm:$0x1]
        %v5338 = vld [vmem:[%s4261 + $0x8c] sm:$0x1]
        %v5339 = vld [vmem:[%s4261 + $0x98] sm:$0x1]
        %v5340 = vld [vmem:[%s4261 + $0xa4] sm:$0x1]
        %v5341 = vld [vmem:[%s4261 + $0xb0] sm:$0x1]
        %v5342 = vld [vmem:[%s4261 + $0xbc] sm:$0x1]
        %v5343 = vld [vmem:[%s4261] sm:$0xe]
        %v5344 = vld [vmem:[%s4261 + $0xc] sm:$0xe]
        %v5345 = vld [vmem:[%s4261 + $0x18] sm:$0xe]
        %v5346 = vld [vmem:[%s4261 + $0x24] sm:$0xe]
        %v5347 = vld [vmem:[%s4261 + $0x30] sm:$0xe]
        %v5348 = vld [vmem:[%s4261 + $0x3c] sm:$0xe]
        %v5349 = vld [vmem:[%s4261 + $0x48] sm:$0xe]
        %v5350 = vld [vmem:[%s4261 + $0x54] sm:$0xe]
        %v5351 = vld [vmem:[%s4261 + $0x60] sm:$0xe]
        %v5352 = vld [vmem:[%s4261 + $0x6c] sm:$0xe]
        %v5353 = vld [vmem:[%s4261 + $0x78] sm:$0xe]
        %v5354 = vld [vmem:[%s4261 + $0x84] sm:$0xe]
        %v5355 = vld [vmem:[%s4261 + $0x90] sm:$0xe]
        %v5356 = vld [vmem:[%s4261 + $0x9c] sm:$0xe]
        %v5357 = vld [vmem:[%s4261 + $0xa8] sm:$0xe]
        %v5358 = vld [vmem:[%s4261 + $0xb4] sm:$0xe]
        %v5391 = vunpack.c.l.b16 %v5295
        %v5392 = vunpack.c.l.b16 %v5296
        %v5393 = vunpack.c.l.b16 %v5297
        %v5394 = vunpack.c.l.b16 %v5298
        %v5395 = vunpack.c.l.b16 %v5299
        %v5396 = vunpack.c.l.b16 %v5300
        %v5397 = vunpack.c.l.b16 %v5301
        %v5398 = vunpack.c.l.b16 %v5302
        %v5399 = vunpack.c.l.b16 %v5303
        %v5400 = vunpack.c.l.b16 %v5304
        %v5401 = vunpack.c.l.b16 %v5305
        %v5402 = vunpack.c.l.b16 %v5306
        %v5403 = vunpack.c.l.b16 %v5307
        %v5404 = vunpack.c.l.b16 %v5308
        %v5405 = vunpack.c.l.b16 %v5309
        %v5406 = vunpack.c.l.b16 %v5310
        %v5407 = vunpack.c.l.b16 %v5311
        %v5408 = vunpack.c.l.b16 %v5312
        %v5409 = vunpack.c.l.b16 %v5313
        %v5410 = vunpack.c.l.b16 %v5314
        %v5411 = vunpack.c.l.b16 %v5315
        %v5412 = vunpack.c.l.b16 %v5316
        %v5413 = vunpack.c.l.b16 %v5317
        %v5414 = vunpack.c.l.b16 %v5318
        %v5415 = vunpack.c.l.b16 %v5319
        %v5416 = vunpack.c.l.b16 %v5320
        %v5417 = vunpack.c.l.b16 %v5321
        %v5418 = vunpack.c.l.b16 %v5322
        %v5419 = vunpack.c.l.b16 %v5323
        %v5420 = vunpack.c.l.b16 %v5324
        %v5421 = vunpack.c.l.b16 %v5325
        %v5422 = vunpack.c.l.b16 %v5326
        %v5423 = vpack.c.b16 %v5392, %v5391
        %v5424 = vpack.c.b16 %v5394, %v5393
        %v5425 = vpack.c.b16 %v5396, %v5395
        %v5426 = vpack.c.b16 %v5398, %v5397
        %v5427 = vpack.c.b16 %v5400, %v5399
        %v5428 = vpack.c.b16 %v5402, %v5401
        %v5429 = vpack.c.b16 %v5404, %v5403
        %v5430 = vpack.c.b16 %v5406, %v5405
        %v5431 = vpack.c.b16 %v5408, %v5407
        %v5432 = vpack.c.b16 %v5410, %v5409
        %v5433 = vpack.c.b16 %v5412, %v5411
        %v5434 = vpack.c.b16 %v5414, %v5413
        %v5435 = vpack.c.b16 %v5416, %v5415
        %v5436 = vpack.c.b16 %v5418, %v5417
        %v5437 = vpack.c.b16 %v5420, %v5419
        %v5438 = vpack.c.b16 %v5422, %v5421
        %v5455 = vunpack.c.l.b16 %v5327
        %v5456 = vunpack.c.l.b16 %v5328
        %v5457 = vunpack.c.l.b16 %v5329
        %v5458 = vunpack.c.l.b16 %v5330
        %v5459 = vunpack.c.l.b16 %v5331
        %v5460 = vunpack.c.l.b16 %v5332
        %v5461 = vunpack.c.l.b16 %v5333
        %v5462 = vunpack.c.l.b16 %v5334
        %v5463 = vunpack.c.l.b16 %v5335
        %v5464 = vunpack.c.l.b16 %v5336
        %v5465 = vunpack.c.l.b16 %v5337
        %v5466 = vunpack.c.l.b16 %v5338
        %v5467 = vunpack.c.l.b16 %v5339
        %v5468 = vunpack.c.l.b16 %v5340
        %v5469 = vunpack.c.l.b16 %v5341
        %v5470 = vunpack.c.l.b16 %v5342
        %v5471 = vpack.c.b16 %v5455, %v5455
        %v5472 = vpack.c.b16 %v5456, %v5456
        %v5473 = vpack.c.b16 %v5457, %v5457
        %v5474 = vpack.c.b16 %v5458, %v5458
        %v5475 = vpack.c.b16 %v5459, %v5459
        %v5476 = vpack.c.b16 %v5460, %v5460
        %v5477 = vpack.c.b16 %v5461, %v5461
        %v5478 = vpack.c.b16 %v5462, %v5462
        %v5479 = vpack.c.b16 %v5463, %v5463
        %v5480 = vpack.c.b16 %v5464, %v5464
        %v5481 = vpack.c.b16 %v5465, %v5465
        %v5482 = vpack.c.b16 %v5466, %v5466
        %v5483 = vpack.c.b16 %v5467, %v5467
        %v5484 = vpack.c.b16 %v5468, %v5468
        %v5485 = vpack.c.b16 %v5469, %v5469
        %v5486 = vpack.c.b16 %v5470, %v5470
        %v5488 = vshrl.u32 %v5423, 16
        %v5490 = vshll.u32 %v5423, 16
        %v5492 = vrot.slane %v5490, 1
        %v5493 = vor.u32 %v5488, %v5492
        %v5495 = vshll.u32 %v5471, 16
        %v5497 = vrot.slane %v5495, 1
        %v5498 = vsel %vm1293, %v5493, %v5497
        %v5500 = vshrl.u32 %v5424, 16
        %v5502 = vshll.u32 %v5424, 16
        %v5504 = vrot.slane %v5502, 1
        %v5505 = vor.u32 %v5500, %v5504
        %v5507 = vshll.u32 %v5472, 16
        %v5509 = vrot.slane %v5507, 1
        %v5510 = vsel %vm1293, %v5505, %v5509
        %v5512 = vshrl.u32 %v5425, 16
        %v5514 = vshll.u32 %v5425, 16
        %v5516 = vrot.slane %v5514, 1
        %v5517 = vor.u32 %v5512, %v5516
        %v5519 = vshll.u32 %v5473, 16
        %v5521 = vrot.slane %v5519, 1
        %v5522 = vsel %vm1293, %v5517, %v5521
        %v5524 = vshrl.u32 %v5426, 16
        %v5526 = vshll.u32 %v5426, 16
        %v5528 = vrot.slane %v5526, 1
        %v5529 = vor.u32 %v5524, %v5528
        %v5531 = vshll.u32 %v5474, 16
        %v5533 = vrot.slane %v5531, 1
        %v5534 = vsel %vm1293, %v5529, %v5533
        %v5536 = vshrl.u32 %v5427, 16
        %v5538 = vshll.u32 %v5427, 16
        %v5540 = vrot.slane %v5538, 1
        %v5541 = vor.u32 %v5536, %v5540
        %v5543 = vshll.u32 %v5475, 16
        %v5545 = vrot.slane %v5543, 1
        %v5546 = vsel %vm1293, %v5541, %v5545
        %v5548 = vshrl.u32 %v5428, 16
        %v5550 = vshll.u32 %v5428, 16
        %v5552 = vrot.slane %v5550, 1
        %v5553 = vor.u32 %v5548, %v5552
        %v5555 = vshll.u32 %v5476, 16
        %v5557 = vrot.slane %v5555, 1
        %v5558 = vsel %vm1293, %v5553, %v5557
        %v5560 = vshrl.u32 %v5429, 16
        %v5562 = vshll.u32 %v5429, 16
        %v5564 = vrot.slane %v5562, 1
        %v5565 = vor.u32 %v5560, %v5564
        %v5567 = vshll.u32 %v5477, 16
        %v5569 = vrot.slane %v5567, 1
        %v5570 = vsel %vm1293, %v5565, %v5569
        %v5572 = vshrl.u32 %v5430, 16
        %v5574 = vshll.u32 %v5430, 16
        %v5576 = vrot.slane %v5574, 1
        %v5577 = vor.u32 %v5572, %v5576
        %v5579 = vshll.u32 %v5478, 16
        %v5581 = vrot.slane %v5579, 1
        %v5582 = vsel %vm1293, %v5577, %v5581
        %v5584 = vshrl.u32 %v5431, 16
        %v5586 = vshll.u32 %v5431, 16
        %v5588 = vrot.slane %v5586, 1
        %v5589 = vor.u32 %v5584, %v5588
        %v5591 = vshll.u32 %v5479, 16
        %v5593 = vrot.slane %v5591, 1
        %v5594 = vsel %vm1293, %v5589, %v5593
        %v5596 = vshrl.u32 %v5432, 16
        %v5598 = vshll.u32 %v5432, 16
        %v5600 = vrot.slane %v5598, 1
        %v5601 = vor.u32 %v5596, %v5600
        %v5603 = vshll.u32 %v5480, 16
        %v5605 = vrot.slane %v5603, 1
        %v5606 = vsel %vm1293, %v5601, %v5605
        %v5608 = vshrl.u32 %v5433, 16
        %v5610 = vshll.u32 %v5433, 16
        %v5612 = vrot.slane %v5610, 1
        %v5613 = vor.u32 %v5608, %v5612
        %v5615 = vshll.u32 %v5481, 16
        %v5617 = vrot.slane %v5615, 1
        %v5618 = vsel %vm1293, %v5613, %v5617
        %v5620 = vshrl.u32 %v5434, 16
        %v5622 = vshll.u32 %v5434, 16
        %v5624 = vrot.slane %v5622, 1
        %v5625 = vor.u32 %v5620, %v5624
        %v5627 = vshll.u32 %v5482, 16
        %v5629 = vrot.slane %v5627, 1
        %v5630 = vsel %vm1293, %v5625, %v5629
        %v5632 = vshrl.u32 %v5435, 16
        %v5634 = vshll.u32 %v5435, 16
        %v5636 = vrot.slane %v5634, 1
        %v5637 = vor.u32 %v5632, %v5636
        %v5639 = vshll.u32 %v5483, 16
        %v5641 = vrot.slane %v5639, 1
        %v5642 = vsel %vm1293, %v5637, %v5641
        %v5644 = vshrl.u32 %v5436, 16
        %v5646 = vshll.u32 %v5436, 16
        %v5648 = vrot.slane %v5646, 1
        %v5649 = vor.u32 %v5644, %v5648
        %v5651 = vshll.u32 %v5484, 16
        %v5653 = vrot.slane %v5651, 1
        %v5654 = vsel %vm1293, %v5649, %v5653
        %v5656 = vshrl.u32 %v5437, 16
        %v5658 = vshll.u32 %v5437, 16
        %v5660 = vrot.slane %v5658, 1
        %v5661 = vor.u32 %v5656, %v5660
        %v5663 = vshll.u32 %v5485, 16
        %v5665 = vrot.slane %v5663, 1
        %v5666 = vsel %vm1293, %v5661, %v5665
        %v5668 = vshrl.u32 %v5438, 16
        %v5670 = vshll.u32 %v5438, 16
        %v5672 = vrot.slane %v5670, 1
        %v5673 = vor.u32 %v5668, %v5672
        %v5675 = vshll.u32 %v5486, 16
        %v5677 = vrot.slane %v5675, 1
        %v5678 = vsel %vm1293, %v5673, %v5677
        %5679 = vrot.lane.b32.xlu0 %v5498, 4
        %v5680 = vpop.permute.xlu0 %5679
        %5681 = vrot.lane.b32.xlu0 %v5510, 4
        %v5682 = vpop.permute.xlu0 %5681
        %5683 = vrot.lane.b32.xlu0 %v5522, 4
        %v5684 = vpop.permute.xlu0 %5683
        %5685 = vrot.lane.b32.xlu0 %v5534, 4
        %v5686 = vpop.permute.xlu0 %5685
        %5687 = vrot.lane.b32.xlu0 %v5546, 4
        %v5688 = vpop.permute.xlu0 %5687
        %5689 = vrot.lane.b32.xlu0 %v5558, 4
        %v5690 = vpop.permute.xlu0 %5689
        %5691 = vrot.lane.b32.xlu0 %v5570, 4
        %v5692 = vpop.permute.xlu0 %5691
        %5693 = vrot.lane.b32.xlu0 %v5582, 4
        %v5694 = vpop.permute.xlu0 %5693
        %5695 = vrot.lane.b32.xlu0 %v5594, 4
        %v5696 = vpop.permute.xlu0 %5695
        %5697 = vrot.lane.b32.xlu0 %v5606, 4
        %v5698 = vpop.permute.xlu0 %5697
        %5699 = vrot.lane.b32.xlu0 %v5618, 4
        %v5700 = vpop.permute.xlu0 %5699
        %5701 = vrot.lane.b32.xlu0 %v5630, 4
        %v5702 = vpop.permute.xlu0 %5701
        %5703 = vrot.lane.b32.xlu0 %v5642, 4
        %v5704 = vpop.permute.xlu0 %5703
        %5705 = vrot.lane.b32.xlu0 %v5654, 4
        %v5706 = vpop.permute.xlu0 %5705
        %5707 = vrot.lane.b32.xlu0 %v5666, 4
        %v5708 = vpop.permute.xlu0 %5707
        %5709 = vrot.lane.b32.xlu0 %v5678, 4
        %v5710 = vpop.permute.xlu0 %5709
        %v5727 = vunpack.c.l.b16 %v5343
        %v5728 = vunpack.c.l.b16 %v5344
        %v5729 = vunpack.c.l.b16 %v5345
        %v5730 = vunpack.c.l.b16 %v5346
        %v5731 = vunpack.c.l.b16 %v5347
        %v5732 = vunpack.c.l.b16 %v5348
        %v5733 = vunpack.c.l.b16 %v5349
        %v5734 = vunpack.c.l.b16 %v5350
        %v5735 = vunpack.c.l.b16 %v5351
        %v5736 = vunpack.c.l.b16 %v5352
        %v5737 = vunpack.c.l.b16 %v5353
        %v5738 = vunpack.c.l.b16 %v5354
        %v5739 = vunpack.c.l.b16 %v5355
        %v5740 = vunpack.c.l.b16 %v5356
        %v5741 = vunpack.c.l.b16 %v5357
        %v5742 = vunpack.c.l.b16 %v5358
        %v5743 = vpack.c.b16 %v5392, %v5727
        %v5744 = vpack.c.b16 %v5394, %v5728
        %v5745 = vpack.c.b16 %v5396, %v5729
        %v5746 = vpack.c.b16 %v5398, %v5730
        %v5747 = vpack.c.b16 %v5400, %v5731
        %v5748 = vpack.c.b16 %v5402, %v5732
        %v5749 = vpack.c.b16 %v5404, %v5733
        %v5750 = vpack.c.b16 %v5406, %v5734
        %v5751 = vpack.c.b16 %v5408, %v5735
        %v5752 = vpack.c.b16 %v5410, %v5736
        %v5753 = vpack.c.b16 %v5412, %v5737
        %v5754 = vpack.c.b16 %v5414, %v5738
        %v5755 = vpack.c.b16 %v5416, %v5739
        %v5756 = vpack.c.b16 %v5418, %v5740
        %v5757 = vpack.c.b16 %v5420, %v5741
        %v5758 = vpack.c.b16 %v5422, %v5742
        %v5759 = vrot.slane %v5743, 1
        %v5760 = vrot.slane %v5471, 1
        %v5761 = vsel %vm1566, %v5759, %v5760
        %v5762 = vrot.slane %v5744, 1
        %v5763 = vrot.slane %v5472, 1
        %v5764 = vsel %vm1566, %v5762, %v5763
        %v5765 = vrot.slane %v5745, 1
        %v5766 = vrot.slane %v5473, 1
        %v5767 = vsel %vm1566, %v5765, %v5766
        %v5768 = vrot.slane %v5746, 1
        %v5769 = vrot.slane %v5474, 1
        %v5770 = vsel %vm1566, %v5768, %v5769
        %v5771 = vrot.slane %v5747, 1
        %v5772 = vrot.slane %v5475, 1
        %v5773 = vsel %vm1566, %v5771, %v5772
        %v5774 = vrot.slane %v5748, 1
        %v5775 = vrot.slane %v5476, 1
        %v5776 = vsel %vm1566, %v5774, %v5775
        %v5777 = vrot.slane %v5749, 1
        %v5778 = vrot.slane %v5477, 1
        %v5779 = vsel %vm1566, %v5777, %v5778
        %v5780 = vrot.slane %v5750, 1
        %v5781 = vrot.slane %v5478, 1
        %v5782 = vsel %vm1566, %v5780, %v5781
        %v5783 = vrot.slane %v5751, 1
        %v5784 = vrot.slane %v5479, 1
        %v5785 = vsel %vm1566, %v5783, %v5784
        %v5786 = vrot.slane %v5752, 1
        %v5787 = vrot.slane %v5480, 1
        %v5788 = vsel %vm1566, %v5786, %v5787
        %v5789 = vrot.slane %v5753, 1
        %v5790 = vrot.slane %v5481, 1
        %v5791 = vsel %vm1566, %v5789, %v5790
        %v5792 = vrot.slane %v5754, 1
        %v5793 = vrot.slane %v5482, 1
        %v5794 = vsel %vm1566, %v5792, %v5793
        %v5795 = vrot.slane %v5755, 1
        %v5796 = vrot.slane %v5483, 1
        %v5797 = vsel %vm1566, %v5795, %v5796
        %v5798 = vrot.slane %v5756, 1
        %v5799 = vrot.slane %v5484, 1
        %v5800 = vsel %vm1566, %v5798, %v5799
        %v5801 = vrot.slane %v5757, 1
        %v5802 = vrot.slane %v5485, 1
        %v5803 = vsel %vm1566, %v5801, %v5802
        %v5804 = vrot.slane %v5758, 1
        %v5805 = vrot.slane %v5486, 1
        %v5806 = vsel %vm1566, %v5804, %v5805
        %5807 = vrot.lane.b32.xlu0 %v5761, 8
        %v5808 = vpop.permute.xlu0 %5807
        %5809 = vrot.lane.b32.xlu0 %v5764, 8
        %v5810 = vpop.permute.xlu0 %5809
        %5811 = vrot.lane.b32.xlu0 %v5767, 8
        %v5812 = vpop.permute.xlu0 %5811
        %5813 = vrot.lane.b32.xlu0 %v5770, 8
        %v5814 = vpop.permute.xlu0 %5813
        %5815 = vrot.lane.b32.xlu0 %v5773, 8
        %v5816 = vpop.permute.xlu0 %5815
        %5817 = vrot.lane.b32.xlu0 %v5776, 8
        %v5818 = vpop.permute.xlu0 %5817
        %5819 = vrot.lane.b32.xlu0 %v5779, 8
        %v5820 = vpop.permute.xlu0 %5819
        %5821 = vrot.lane.b32.xlu0 %v5782, 8
        %v5822 = vpop.permute.xlu0 %5821
        %5823 = vrot.lane.b32.xlu0 %v5785, 8
        %v5824 = vpop.permute.xlu0 %5823
        %5825 = vrot.lane.b32.xlu0 %v5788, 8
        %v5826 = vpop.permute.xlu0 %5825
        %5827 = vrot.lane.b32.xlu0 %v5791, 8
        %v5828 = vpop.permute.xlu0 %5827
        %5829 = vrot.lane.b32.xlu0 %v5794, 8
        %v5830 = vpop.permute.xlu0 %5829
        %5831 = vrot.lane.b32.xlu0 %v5797, 8
        %v5832 = vpop.permute.xlu0 %5831
        %5833 = vrot.lane.b32.xlu0 %v5800, 8
        %v5834 = vpop.permute.xlu0 %5833
        %5835 = vrot.lane.b32.xlu0 %v5803, 8
        %v5836 = vpop.permute.xlu0 %5835
        %5837 = vrot.lane.b32.xlu0 %v5806, 8
        %v5838 = vpop.permute.xlu0 %5837
        %v5840 = vsel %vm1647, %v5423, %v5680
        %v5842 = vsel %vm1647, %v5424, %v5682
        %v5844 = vsel %vm1647, %v5425, %v5684
        %v5846 = vsel %vm1647, %v5426, %v5686
        %v5848 = vsel %vm1647, %v5427, %v5688
        %v5850 = vsel %vm1647, %v5428, %v5690
        %v5852 = vsel %vm1647, %v5429, %v5692
        %v5854 = vsel %vm1647, %v5430, %v5694
        %v5856 = vsel %vm1647, %v5431, %v5696
        %v5858 = vsel %vm1647, %v5432, %v5698
        %v5860 = vsel %vm1647, %v5433, %v5700
        %v5862 = vsel %vm1647, %v5434, %v5702
        %v5864 = vsel %vm1647, %v5435, %v5704
        %v5866 = vsel %vm1647, %v5436, %v5706
        %v5868 = vsel %vm1647, %v5437, %v5708
        %v5870 = vsel %vm1647, %v5438, %v5710
        %v5872 = vsel %vm1680, %v5840, %v5808
        %v5874 = vsel %vm1680, %v5842, %v5810
        %v5876 = vsel %vm1680, %v5844, %v5812
        %v5878 = vsel %vm1680, %v5846, %v5814
        %v5880 = vsel %vm1680, %v5848, %v5816
        %v5882 = vsel %vm1680, %v5850, %v5818
        %v5884 = vsel %vm1680, %v5852, %v5820
        %v5886 = vsel %vm1680, %v5854, %v5822
        %v5888 = vsel %vm1680, %v5856, %v5824
        %v5890 = vsel %vm1680, %v5858, %v5826
        %v5892 = vsel %vm1680, %v5860, %v5828
        %v5894 = vsel %vm1680, %v5862, %v5830
        %v5896 = vsel %vm1680, %v5864, %v5832
        %v5898 = vsel %vm1680, %v5866, %v5834
        %v5900 = vsel %vm1680, %v5868, %v5836
        %v5902 = vsel %vm1680, %v5870, %v5838
        %s5903 = scalar_lea.vmem [#allocation9], 8
        %v5904 = vld [vmem:[%s5903] sm:$0xf]
        %v5905 = vld [vmem:[%s5903 + $0x4] sm:$0x3]
        %v5908 = vunpack.c.l.b16 %v5904
        %v5909 = vunpack.c.l.b16 %v5905
        %v5910 = vpack.c.b16 %v5909, %v5908
        %v5911 = vsel %vm2331, %v5872, 0
        %v5913 = vsel %vm2331, %v5874, 0
        %v5915 = vsel %vm2331, %v5876, 0
        %v5917 = vsel %vm2331, %v5878, 0
        %v5919 = vsel %vm2331, %v5880, 0
        %v5921 = vsel %vm2331, %v5882, 0
        %v5923 = vsel %vm2331, %v5884, 0
        %v5925 = vsel %vm2331, %v5886, 0
        %v5927 = vsel %vm2331, %v5888, 0
        %v5929 = vsel %vm2331, %v5890, 0
        %v5931 = vsel %vm2331, %v5892, 0
        %v5933 = vsel %vm2331, %v5894, 0
        %v5935 = vsel %vm2331, %v5896, 0
        %v5937 = vsel %vm2331, %v5898, 0
        %v5939 = vsel %vm2331, %v5900, 0
        %v5941 = vsel %vm2331, %v5902, 0
        %v5944 = vsel %vm2364, %v5910, 0
        %5946 = vmatprep.subr.bf16.mxu0 0
        %5947 = vmatpush1.bf16.msra.mxu0 %v5944
        %5948 = vmatprep.subr.bf16.mxu0 0
        %5949 = vmatpush1.bf16.msra.mxu0 0
        %5950 = vmatprep.subr.bf16.mxu0 0
        %5951 = vmatpush1.bf16.msra.mxu0 0
        %5952 = vmatprep.subr.bf16.mxu0 0
        %5953 = vmatpush1.bf16.msra.mxu0 0
        %5954 = vmatprep.subr.bf16.mxu0 0
        %5955 = vmatpush1.bf16.msra.mxu0 0
        %5956 = vmatprep.subr.bf16.mxu0 0
        %5957 = vmatpush1.bf16.msra.mxu0 0
        %5958 = vmatprep.subr.bf16.mxu0 0
        %5959 = vmatpush1.bf16.msra.mxu0 0
        %5960 = vmatprep.subr.bf16.mxu0 0
        %5961 = vmatpush1.bf16.msra.mxu0 0
        %5962 = vmatprep.subr.bf16.mxu0 0
        %5963 = vmatpush1.bf16.msra.mxu0 0
        %5964 = vmatprep.subr.bf16.mxu0 0
        %5965 = vmatpush1.bf16.msra.mxu0 0
        %5966 = vmatprep.subr.bf16.mxu0 0
        %5967 = vmatpush1.bf16.msra.mxu0 0
        %5968 = vmatprep.subr.bf16.mxu0 0
        %5969 = vmatpush1.bf16.msra.mxu0 0
        %5970 = vmatprep.subr.bf16.mxu0 0
        %5971 = vmatpush1.bf16.msra.mxu0 0
        %5972 = vmatprep.subr.bf16.mxu0 0
        %5973 = vmatpush1.bf16.msra.mxu0 0
        %5974 = vmatprep.subr.bf16.mxu0 0
        %5975 = vmatpush1.bf16.msra.mxu0 0
        %5976 = vmatprep.subr.bf16.mxu0 0
        %5977 = vmatpush1.bf16.msra.mxu0 0
        %5978 = vmatprep.mubr.bf16.mxu0 0
        %5979 = vmatmul.mubr.bf16.gmra.mrb[0].mxu0 %v5911
        %v5980 = vpop.f32.mrb[0].mxu0
        %v5981 = vadd.f32 0.0, %v5980
        %v5982 = vpop.f32.mrb[0].mxu0
        %v5983 = vpop.f32.mrb[0].mxu0
        %v5984 = vadd.f32 0.0, %v5983
        %v5985 = vpop.f32.mrb[0].mxu0
        %5986 = vmatprep.mubr.bf16.mxu0 0
        %5987 = vmatmul.mubr.bf16.gmra.mrb[0].mxu0 %v5913
        %v5988 = vpop.f32.mrb[0].mxu0
        %v5989 = vadd.f32 0.0, %v5988
        %v5990 = vpop.f32.mrb[0].mxu0
        %v5991 = vpop.f32.mrb[0].mxu0
        %v5992 = vadd.f32 0.0, %v5991
        %v5993 = vpop.f32.mrb[0].mxu0
        %5994 = vmatprep.mubr.bf16.mxu0 0
        %5995 = vmatmul.mubr.bf16.gmra.mrb[0].mxu0 %v5915
        %v5996 = vpop.f32.mrb[0].mxu0
        %v5997 = vadd.f32 0.0, %v5996
        %v5998 = vpop.f32.mrb[0].mxu0
        %v5999 = vpop.f32.mrb[0].mxu0
        %v6000 = vadd.f32 0.0, %v5999
        %v6001 = vpop.f32.mrb[0].mxu0
        %6002 = vmatprep.mubr.bf16.mxu0 0
        %6003 = vmatmul.mubr.bf16.gmra.mrb[0].mxu0 %v5917
        %v6004 = vpop.f32.mrb[0].mxu0
        %v6005 = vadd.f32 0.0, %v6004
        %v6006 = vpop.f32.mrb[0].mxu0
        %v6007 = vpop.f32.mrb[0].mxu0
        %v6008 = vadd.f32 0.0, %v6007
        %v6009 = vpop.f32.mrb[0].mxu0
        %6010 = vmatprep.mubr.bf16.mxu0 0
        %6011 = vmatmul.mubr.bf16.gmra.mrb[0].mxu0 %v5919
        %v6012 = vpop.f32.mrb[0].mxu0
        %v6013 = vadd.f32 0.0, %v6012
        %v6014 = vpop.f32.mrb[0].mxu0
        %v6015 = vpop.f32.mrb[0].mxu0
        %v6016 = vadd.f32 0.0, %v6015
        %v6017 = vpop.f32.mrb[0].mxu0
        %6018 = vmatprep.mubr.bf16.mxu0 0
        %6019 = vmatmul.mubr.bf16.gmra.mrb[0].mxu0 %v5921
        %v6020 = vpop.f32.mrb[0].mxu0
        %v6021 = vadd.f32 0.0, %v6020
        %v6022 = vpop.f32.mrb[0].mxu0
        %v6023 = vpop.f32.mrb[0].mxu0
        %v6024 = vadd.f32 0.0, %v6023
        %v6025 = vpop.f32.mrb[0].mxu0
        %6026 = vmatprep.mubr.bf16.mxu0 0
        %6027 = vmatmul.mubr.bf16.gmra.mrb[0].mxu0 %v5923
        %v6028 = vpop.f32.mrb[0].mxu0
        %v6029 = vadd.f32 0.0, %v6028
        %v6030 = vpop.f32.mrb[0].mxu0
        %v6031 = vpop.f32.mrb[0].mxu0
        %v6032 = vadd.f32 0.0, %v6031
        %v6033 = vpop.f32.mrb[0].mxu0
        %6034 = vmatprep.mubr.bf16.mxu0 0
        %6035 = vmatmul.mubr.bf16.gmra.mrb[0].mxu0 %v5925
        %v6036 = vpop.f32.mrb[0].mxu0
        %v6037 = vadd.f32 0.0, %v6036
        %v6038 = vpop.f32.mrb[0].mxu0
        %v6039 = vpop.f32.mrb[0].mxu0
        %v6040 = vadd.f32 0.0, %v6039
        %v6041 = vpop.f32.mrb[0].mxu0
        %6042 = vmatprep.mubr.bf16.mxu0 0
        %6043 = vmatmul.mubr.bf16.gmra.mrb[0].mxu0 %v5927
        %v6044 = vpop.f32.mrb[0].mxu0
        %v6045 = vadd.f32 0.0, %v6044
        %v6046 = vpop.f32.mrb[0].mxu0
        %v6047 = vpop.f32.mrb[0].mxu0
        %v6048 = vadd.f32 0.0, %v6047
        %v6049 = vpop.f32.mrb[0].mxu0
        %6050 = vmatprep.mubr.bf16.mxu0 0
        %6051 = vmatmul.mubr.bf16.gmra.mrb[0].mxu0 %v5929
        %v6052 = vpop.f32.mrb[0].mxu0
        %v6053 = vadd.f32 0.0, %v6052
        %v6054 = vpop.f32.mrb[0].mxu0
        %v6055 = vpop.f32.mrb[0].mxu0
        %v6056 = vadd.f32 0.0, %v6055
        %v6057 = vpop.f32.mrb[0].mxu0
        %6058 = vmatprep.mubr.bf16.mxu0 0
        %6059 = vmatmul.mubr.bf16.gmra.mrb[0].mxu0 %v5931
        %v6060 = vpop.f32.mrb[0].mxu0
        %v6061 = vadd.f32 0.0, %v6060
        %v6062 = vpop.f32.mrb[0].mxu0
        %v6063 = vpop.f32.mrb[0].mxu0
        %v6064 = vadd.f32 0.0, %v6063
        %v6065 = vpop.f32.mrb[0].mxu0
        %6066 = vmatprep.mubr.bf16.mxu0 0
        %6067 = vmatmul.mubr.bf16.gmra.mrb[0].mxu0 %v5933
        %v6068 = vpop.f32.mrb[0].mxu0
        %v6069 = vadd.f32 0.0, %v6068
        %v6070 = vpop.f32.mrb[0].mxu0
        %v6071 = vpop.f32.mrb[0].mxu0
        %v6072 = vadd.f32 0.0, %v6071
        %v6073 = vpop.f32.mrb[0].mxu0
        %6074 = vmatprep.mubr.bf16.mxu0 0
        %6075 = vmatmul.mubr.bf16.gmra.mrb[0].mxu0 %v5935
        %v6076 = vpop.f32.mrb[0].mxu0
        %v6077 = vadd.f32 0.0, %v6076
        %v6078 = vpop.f32.mrb[0].mxu0
        %v6079 = vpop.f32.mrb[0].mxu0
        %v6080 = vadd.f32 0.0, %v6079
        %v6081 = vpop.f32.mrb[0].mxu0
        %6082 = vmatprep.mubr.bf16.mxu0 0
        %6083 = vmatmul.mubr.bf16.gmra.mrb[0].mxu0 %v5937
        %v6084 = vpop.f32.mrb[0].mxu0
        %v6085 = vadd.f32 0.0, %v6084
        %v6086 = vpop.f32.mrb[0].mxu0
        %v6087 = vpop.f32.mrb[0].mxu0
        %v6088 = vadd.f32 0.0, %v6087
        %v6089 = vpop.f32.mrb[0].mxu0
        %6090 = vmatprep.mubr.bf16.mxu0 0
        %6091 = vmatmul.mubr.bf16.gmra.mrb[0].mxu0 %v5939
        %v6092 = vpop.f32.mrb[0].mxu0
        %v6093 = vadd.f32 0.0, %v6092
        %v6094 = vpop.f32.mrb[0].mxu0
        %v6095 = vpop.f32.mrb[0].mxu0
        %v6096 = vadd.f32 0.0, %v6095
        %v6097 = vpop.f32.mrb[0].mxu0
        %6098 = vmatprep.mubr.bf16.mxu0 0
        %6099 = vmatmul.mubr.bf16.gmra.mrb[0].mxu0 %v5941
        %v6100 = vpop.f32.mrb[0].mxu0
        %v6101 = vadd.f32 0.0, %v6100
        %v6102 = vpop.f32.mrb[0].mxu0
        %v6103 = vpop.f32.mrb[0].mxu0
        %v6104 = vadd.f32 0.0, %v6103
        %v6105 = vpop.f32.mrb[0].mxu0
        %6106 = vdwg.mxu0
        %v6109 = vunpack.c.l.b16 %v5293
        %v6110 = vunpack.c.l.b16 %v5294
        %v6111 = vpack.c.b16 %v6110, %v6109
        %v6112 = vsel %vm2331, %v5262, 0
        %v6114 = vsel %vm2331, %v5264, 0
        %v6116 = vsel %vm2331, %v5266, 0
        %v6118 = vsel %vm2331, %v5268, 0
        %v6120 = vsel %vm2331, %v5270, 0
        %v6122 = vsel %vm2331, %v5272, 0
        %v6124 = vsel %vm2331, %v5274, 0
        %v6126 = vsel %vm2331, %v5276, 0
        %v6128 = vsel %vm2331, %v5278, 0
        %v6130 = vsel %vm2331, %v5280, 0
        %v6132 = vsel %vm2331, %v5282, 0
        %v6134 = vsel %vm2331, %v5284, 0
        %v6136 = vsel %vm2331, %v5286, 0
        %v6138 = vsel %vm2331, %v5288, 0
        %v6140 = vsel %vm2331, %v5290, 0
        %v6142 = vsel %vm2331, %v5292, 0
        %v6145 = vsel %vm2364, %v6111, 0
        %6147 = vmatprep.subr.bf16.mxu0 0
        %6148 = vmatpush1.bf16.msra.mxu0 %v6145
        %6149 = vmatprep.subr.bf16.mxu0 0
        %6150 = vmatpush1.bf16.msra.mxu0 0
        %6151 = vmatprep.subr.bf16.mxu0 0
        %6152 = vmatpush1.bf16.msra.mxu0 0
        %6153 = vmatprep.subr.bf16.mxu0 0
        %6154 = vmatpush1.bf16.msra.mxu0 0
        %6155 = vmatprep.subr.bf16.mxu0 0
        %6156 = vmatpush1.bf16.msra.mxu0 0
        %6157 = vmatprep.subr.bf16.mxu0 0
        %6158 = vmatpush1.bf16.msra.mxu0 0
        %6159 = vmatprep.subr.bf16.mxu0 0
        %6160 = vmatpush1.bf16.msra.mxu0 0
        %6161 = vmatprep.subr.bf16.mxu0 0
        %6162 = vmatpush1.bf16.msra.mxu0 0
        %6163 = vmatprep.subr.bf16.mxu0 0
        %6164 = vmatpush1.bf16.msra.mxu0 0
        %6165 = vmatprep.subr.bf16.mxu0 0
        %6166 = vmatpush1.bf16.msra.mxu0 0
        %6167 = vmatprep.subr.bf16.mxu0 0
        %6168 = vmatpush1.bf16.msra.mxu0 0
        %6169 = vmatprep.subr.bf16.mxu0 0
        %6170 = vmatpush1.bf16.msra.mxu0 0
        %6171 = vmatprep.subr.bf16.mxu0 0
        %6172 = vmatpush1.bf16.msra.mxu0 0
        %6173 = vmatprep.subr.bf16.mxu0 0
        %6174 = vmatpush1.bf16.msra.mxu0 0
        %6175 = vmatprep.subr.bf16.mxu0 0
        %6176 = vmatpush1.bf16.msra.mxu0 0
        %6177 = vmatprep.subr.bf16.mxu0 0
        %6178 = vmatpush1.bf16.msra.mxu0 0
        %6179 = vmatprep.mubr.bf16.mxu0 0
        %6180 = vmatmul.mubr.bf16.gmra.mrb[0].mxu0 %v6112
        %v6181 = vpop.f32.mrb[0].mxu0
        %v6182 = vadd.f32 %v5981, %v6181
        %v6183 = vpop.f32.mrb[0].mxu0
        %v6184 = vpop.f32.mrb[0].mxu0
        %v6185 = vadd.f32 %v5984, %v6184
        %v6186 = vpop.f32.mrb[0].mxu0
        %6187 = vmatprep.mubr.bf16.mxu0 0
        %6188 = vmatmul.mubr.bf16.gmra.mrb[0].mxu0 %v6114
        %v6189 = vpop.f32.mrb[0].mxu0
        %v6190 = vadd.f32 %v5989, %v6189
        %v6191 = vpop.f32.mrb[0].mxu0
        %v6192 = vpop.f32.mrb[0].mxu0
        %v6193 = vadd.f32 %v5992, %v6192
        %v6194 = vpop.f32.mrb[0].mxu0
        %6195 = vmatprep.mubr.bf16.mxu0 0
        %6196 = vmatmul.mubr.bf16.gmra.mrb[0].mxu0 %v6116
        %v6197 = vpop.f32.mrb[0].mxu0
        %v6198 = vadd.f32 %v5997, %v6197
        %v6199 = vpop.f32.mrb[0].mxu0
        %v6200 = vpop.f32.mrb[0].mxu0
        %v6201 = vadd.f32 %v6000, %v6200
        %v6202 = vpop.f32.mrb[0].mxu0
        %6203 = vmatprep.mubr.bf16.mxu0 0
        %6204 = vmatmul.mubr.bf16.gmra.mrb[0].mxu0 %v6118
        %v6205 = vpop.f32.mrb[0].mxu0
        %v6206 = vadd.f32 %v6005, %v6205
        %v6207 = vpop.f32.mrb[0].mxu0
        %v6208 = vpop.f32.mrb[0].mxu0
        %v6209 = vadd.f32 %v6008, %v6208
        %v6210 = vpop.f32.mrb[0].mxu0
        %6211 = vmatprep.mubr.bf16.mxu0 0
        %6212 = vmatmul.mubr.bf16.gmra.mrb[0].mxu0 %v6120
        %v6213 = vpop.f32.mrb[0].mxu0
        %v6214 = vadd.f32 %v6013, %v6213
        %v6215 = vpop.f32.mrb[0].mxu0
        %v6216 = vpop.f32.mrb[0].mxu0
        %v6217 = vadd.f32 %v6016, %v6216
        %v6218 = vpop.f32.mrb[0].mxu0
        %6219 = vmatprep.mubr.bf16.mxu0 0
        %6220 = vmatmul.mubr.bf16.gmra.mrb[0].mxu0 %v6122
        %v6221 = vpop.f32.mrb[0].mxu0
        %v6222 = vadd.f32 %v6021, %v6221
        %v6223 = vpop.f32.mrb[0].mxu0
        %v6224 = vpop.f32.mrb[0].mxu0
        %v6225 = vadd.f32 %v6024, %v6224
        %v6226 = vpop.f32.mrb[0].mxu0
        %6227 = vmatprep.mubr.bf16.mxu0 0
        %6228 = vmatmul.mubr.bf16.gmra.mrb[0].mxu0 %v6124
        %v6229 = vpop.f32.mrb[0].mxu0
        %v6230 = vadd.f32 %v6029, %v6229
        %v6231 = vpop.f32.mrb[0].mxu0
        %v6232 = vpop.f32.mrb[0].mxu0
        %v6233 = vadd.f32 %v6032, %v6232
        %v6234 = vpop.f32.mrb[0].mxu0
        %6235 = vmatprep.mubr.bf16.mxu0 0
        %6236 = vmatmul.mubr.bf16.gmra.mrb[0].mxu0 %v6126
        %v6237 = vpop.f32.mrb[0].mxu0
        %v6238 = vadd.f32 %v6037, %v6237
        %v6239 = vpop.f32.mrb[0].mxu0
        %v6240 = vpop.f32.mrb[0].mxu0
        %v6241 = vadd.f32 %v6040, %v6240
        %v6242 = vpop.f32.mrb[0].mxu0
        %6243 = vmatprep.mubr.bf16.mxu0 0
        %6244 = vmatmul.mubr.bf16.gmra.mrb[0].mxu0 %v6128
        %v6245 = vpop.f32.mrb[0].mxu0
        %v6246 = vadd.f32 %v6045, %v6245
        %v6247 = vpop.f32.mrb[0].mxu0
        %v6248 = vpop.f32.mrb[0].mxu0
        %v6249 = vadd.f32 %v6048, %v6248
        %v6250 = vpop.f32.mrb[0].mxu0
        %6251 = vmatprep.mubr.bf16.mxu0 0
        %6252 = vmatmul.mubr.bf16.gmra.mrb[0].mxu0 %v6130
        %v6253 = vpop.f32.mrb[0].mxu0
        %v6254 = vadd.f32 %v6053, %v6253
        %v6255 = vpop.f32.mrb[0].mxu0
        %v6256 = vpop.f32.mrb[0].mxu0
        %v6257 = vadd.f32 %v6056, %v6256
        %v6258 = vpop.f32.mrb[0].mxu0
        %6259 = vmatprep.mubr.bf16.mxu0 0
        %6260 = vmatmul.mubr.bf16.gmra.mrb[0].mxu0 %v6132
        %v6261 = vpop.f32.mrb[0].mxu0
        %v6262 = vadd.f32 %v6061, %v6261
        %v6263 = vpop.f32.mrb[0].mxu0
        %v6264 = vpop.f32.mrb[0].mxu0
        %v6265 = vadd.f32 %v6064, %v6264
        %v6266 = vpop.f32.mrb[0].mxu0
        %6267 = vmatprep.mubr.bf16.mxu0 0
        %6268 = vmatmul.mubr.bf16.gmra.mrb[0].mxu0 %v6134
        %v6269 = vpop.f32.mrb[0].mxu0
        %v6270 = vadd.f32 %v6069, %v6269
        %v6271 = vpop.f32.mrb[0].mxu0
        %v6272 = vpop.f32.mrb[0].mxu0
        %v6273 = vadd.f32 %v6072, %v6272
        %v6274 = vpop.f32.mrb[0].mxu0
        %6275 = vmatprep.mubr.bf16.mxu0 0
        %6276 = vmatmul.mubr.bf16.gmra.mrb[0].mxu0 %v6136
        %v6277 = vpop.f32.mrb[0].mxu0
        %v6278 = vadd.f32 %v6077, %v6277
        %v6279 = vpop.f32.mrb[0].mxu0
        %v6280 = vpop.f32.mrb[0].mxu0
        %v6281 = vadd.f32 %v6080, %v6280
        %v6282 = vpop.f32.mrb[0].mxu0
        %6283 = vmatprep.mubr.bf16.mxu0 0
        %6284 = vmatmul.mubr.bf16.gmra.mrb[0].mxu0 %v6138
        %v6285 = vpop.f32.mrb[0].mxu0
        %v6286 = vadd.f32 %v6085, %v6285
        %v6287 = vpop.f32.mrb[0].mxu0
        %v6288 = vpop.f32.mrb[0].mxu0
        %v6289 = vadd.f32 %v6088, %v6288
        %v6290 = vpop.f32.mrb[0].mxu0
        %6291 = vmatprep.mubr.bf16.mxu0 0
        %6292 = vmatmul.mubr.bf16.gmra.mrb[0].mxu0 %v6140
        %v6293 = vpop.f32.mrb[0].mxu0
        %v6294 = vadd.f32 %v6093, %v6293
        %v6295 = vpop.f32.mrb[0].mxu0
        %v6296 = vpop.f32.mrb[0].mxu0
        %v6297 = vadd.f32 %v6096, %v6296
        %v6298 = vpop.f32.mrb[0].mxu0
        %6299 = vmatprep.mubr.bf16.mxu0 0
        %6300 = vmatmul.mubr.bf16.gmra.mrb[0].mxu0 %v6142
        %v6301 = vpop.f32.mrb[0].mxu0
        %v6302 = vadd.f32 %v6101, %v6301
        %v6303 = vpop.f32.mrb[0].mxu0
        %v6304 = vpop.f32.mrb[0].mxu0
        %v6305 = vadd.f32 %v6104, %v6304
        %v6306 = vpop.f32.mrb[0].mxu0
        %6307 = vdwg.mxu0
        %v6308 = vld [vmem:[%s4374] sm:$0xf]
        %v6309 = vld [vmem:[%s4374 + $0x4] sm:$0xf]
        %v6310 = vld [vmem:[%s4374 + $0xc] sm:$0xf]
        %v6311 = vld [vmem:[%s4374 + $0x10] sm:$0xf]
        %v6312 = vld [vmem:[%s4374 + $0x18] sm:$0xf]
        %v6313 = vld [vmem:[%s4374 + $0x1c] sm:$0xf]
        %v6314 = vld [vmem:[%s4374 + $0x24] sm:$0xf]
        %v6315 = vld [vmem:[%s4374 + $0x28] sm:$0xf]
        %v6316 = vld [vmem:[%s4374 + $0x30] sm:$0xf]
        %v6317 = vld [vmem:[%s4374 + $0x34] sm:$0xf]
        %v6318 = vld [vmem:[%s4374 + $0x3c] sm:$0xf]
        %v6319 = vld [vmem:[%s4374 + $0x40] sm:$0xf]
        %v6320 = vld [vmem:[%s4374 + $0x48] sm:$0xf]
        %v6321 = vld [vmem:[%s4374 + $0x4c] sm:$0xf]
        %v6322 = vld [vmem:[%s4374 + $0x54] sm:$0xf]
        %v6323 = vld [vmem:[%s4374 + $0x58] sm:$0xf]
        %v6324 = vld [vmem:[%s4374 + $0x60] sm:$0xf]
        %v6325 = vld [vmem:[%s4374 + $0x64] sm:$0xf]
        %v6326 = vld [vmem:[%s4374 + $0x6c] sm:$0xf]
        %v6327 = vld [vmem:[%s4374 + $0x70] sm:$0xf]
        %v6328 = vld [vmem:[%s4374 + $0x78] sm:$0xf]
        %v6329 = vld [vmem:[%s4374 + $0x7c] sm:$0xf]
        %v6330 = vld [vmem:[%s4374 + $0x84] sm:$0xf]
        %v6331 = vld [vmem:[%s4374 + $0x88] sm:$0xf]
        %v6332 = vld [vmem:[%s4374 + $0x90] sm:$0xf]
        %v6333 = vld [vmem:[%s4374 + $0x94] sm:$0xf]
        %v6334 = vld [vmem:[%s4374 + $0x9c] sm:$0xf]
        %v6335 = vld [vmem:[%s4374 + $0xa0] sm:$0xf]
        %v6336 = vld [vmem:[%s4374 + $0xa8] sm:$0xf]
        %v6337 = vld [vmem:[%s4374 + $0xac] sm:$0xf]
        %v6338 = vld [vmem:[%s4374 + $0xb4] sm:$0xf]
        %v6339 = vld [vmem:[%s4374 + $0xb8] sm:$0xf]
        %v6340 = vld [vmem:[%s4374 + $0x8] sm:$0x1]
        %v6341 = vld [vmem:[%s4374 + $0x14] sm:$0x1]
        %v6342 = vld [vmem:[%s4374 + $0x20] sm:$0x1]
        %v6343 = vld [vmem:[%s4374 + $0x2c] sm:$0x1]
        %v6344 = vld [vmem:[%s4374 + $0x38] sm:$0x1]
        %v6345 = vld [vmem:[%s4374 + $0x44] sm:$0x1]
        %v6346 = vld [vmem:[%s4374 + $0x50] sm:$0x1]
        %v6347 = vld [vmem:[%s4374 + $0x5c] sm:$0x1]
        %v6348 = vld [vmem:[%s4374 + $0x68] sm:$0x1]
        %v6349 = vld [vmem:[%s4374 + $0x74] sm:$0x1]
        %v6350 = vld [vmem:[%s4374 + $0x80] sm:$0x1]
        %v6351 = vld [vmem:[%s4374 + $0x8c] sm:$0x1]
        %v6352 = vld [vmem:[%s4374 + $0x98] sm:$0x1]
        %v6353 = vld [vmem:[%s4374 + $0xa4] sm:$0x1]
        %v6354 = vld [vmem:[%s4374 + $0xb0] sm:$0x1]
        %v6355 = vld [vmem:[%s4374 + $0xbc] sm:$0x1]
        %v6356 = vld [vmem:[%s4374] sm:$0xe]
        %v6357 = vld [vmem:[%s4374 + $0xc] sm:$0xe]
        %v6358 = vld [vmem:[%s4374 + $0x18] sm:$0xe]
        %v6359 = vld [vmem:[%s4374 + $0x24] sm:$0xe]
        %v6360 = vld [vmem:[%s4374 + $0x30] sm:$0xe]
        %v6361 = vld [vmem:[%s4374 + $0x3c] sm:$0xe]
        %v6362 = vld [vmem:[%s4374 + $0x48] sm:$0xe]
        %v6363 = vld [vmem:[%s4374 + $0x54] sm:$0xe]
        %v6364 = vld [vmem:[%s4374 + $0x60] sm:$0xe]
        %v6365 = vld [vmem:[%s4374 + $0x6c] sm:$0xe]
        %v6366 = vld [vmem:[%s4374 + $0x78] sm:$0xe]
        %v6367 = vld [vmem:[%s4374 + $0x84] sm:$0xe]
        %v6368 = vld [vmem:[%s4374 + $0x90] sm:$0xe]
        %v6369 = vld [vmem:[%s4374 + $0x9c] sm:$0xe]
        %v6370 = vld [vmem:[%s4374 + $0xa8] sm:$0xe]
        %v6371 = vld [vmem:[%s4374 + $0xb4] sm:$0xe]
        %v6404 = vunpack.c.l.b16 %v6308
        %v6405 = vunpack.c.l.b16 %v6309
        %v6406 = vunpack.c.l.b16 %v6310
        %v6407 = vunpack.c.l.b16 %v6311
        %v6408 = vunpack.c.l.b16 %v6312
        %v6409 = vunpack.c.l.b16 %v6313
        %v6410 = vunpack.c.l.b16 %v6314
        %v6411 = vunpack.c.l.b16 %v6315
        %v6412 = vunpack.c.l.b16 %v6316
        %v6413 = vunpack.c.l.b16 %v6317
        %v6414 = vunpack.c.l.b16 %v6318
        %v6415 = vunpack.c.l.b16 %v6319
        %v6416 = vunpack.c.l.b16 %v6320
        %v6417 = vunpack.c.l.b16 %v6321
        %v6418 = vunpack.c.l.b16 %v6322
        %v6419 = vunpack.c.l.b16 %v6323
        %v6420 = vunpack.c.l.b16 %v6324
        %v6421 = vunpack.c.l.b16 %v6325
        %v6422 = vunpack.c.l.b16 %v6326
        %v6423 = vunpack.c.l.b16 %v6327
        %v6424 = vunpack.c.l.b16 %v6328
        %v6425 = vunpack.c.l.b16 %v6329
        %v6426 = vunpack.c.l.b16 %v6330
        %v6427 = vunpack.c.l.b16 %v6331
        %v6428 = vunpack.c.l.b16 %v6332
        %v6429 = vunpack.c.l.b16 %v6333
        %v6430 = vunpack.c.l.b16 %v6334
        %v6431 = vunpack.c.l.b16 %v6335
        %v6432 = vunpack.c.l.b16 %v6336
        %v6433 = vunpack.c.l.b16 %v6337
        %v6434 = vunpack.c.l.b16 %v6338
        %v6435 = vunpack.c.l.b16 %v6339
        %v6436 = vpack.c.b16 %v6405, %v6404
        %v6437 = vpack.c.b16 %v6407, %v6406
        %v6438 = vpack.c.b16 %v6409, %v6408
        %v6439 = vpack.c.b16 %v6411, %v6410
        %v6440 = vpack.c.b16 %v6413, %v6412
        %v6441 = vpack.c.b16 %v6415, %v6414
        %v6442 = vpack.c.b16 %v6417, %v6416
        %v6443 = vpack.c.b16 %v6419, %v6418
        %v6444 = vpack.c.b16 %v6421, %v6420
        %v6445 = vpack.c.b16 %v6423, %v6422
        %v6446 = vpack.c.b16 %v6425, %v6424
        %v6447 = vpack.c.b16 %v6427, %v6426
        %v6448 = vpack.c.b16 %v6429, %v6428
        %v6449 = vpack.c.b16 %v6431, %v6430
        %v6450 = vpack.c.b16 %v6433, %v6432
        %v6451 = vpack.c.b16 %v6435, %v6434
        %v6468 = vunpack.c.l.b16 %v6340
        %v6469 = vunpack.c.l.b16 %v6341
        %v6470 = vunpack.c.l.b16 %v6342
        %v6471 = vunpack.c.l.b16 %v6343
        %v6472 = vunpack.c.l.b16 %v6344
        %v6473 = vunpack.c.l.b16 %v6345
        %v6474 = vunpack.c.l.b16 %v6346
        %v6475 = vunpack.c.l.b16 %v6347
        %v6476 = vunpack.c.l.b16 %v6348
        %v6477 = vunpack.c.l.b16 %v6349
        %v6478 = vunpack.c.l.b16 %v6350
        %v6479 = vunpack.c.l.b16 %v6351
        %v6480 = vunpack.c.l.b16 %v6352
        %v6481 = vunpack.c.l.b16 %v6353
        %v6482 = vunpack.c.l.b16 %v6354
        %v6483 = vunpack.c.l.b16 %v6355
        %v6484 = vpack.c.b16 %v6468, %v6468
        %v6485 = vpack.c.b16 %v6469, %v6469
        %v6486 = vpack.c.b16 %v6470, %v6470
        %v6487 = vpack.c.b16 %v6471, %v6471
        %v6488 = vpack.c.b16 %v6472, %v6472
        %v6489 = vpack.c.b16 %v6473, %v6473
        %v6490 = vpack.c.b16 %v6474, %v6474
        %v6491 = vpack.c.b16 %v6475, %v6475
        %v6492 = vpack.c.b16 %v6476, %v6476
        %v6493 = vpack.c.b16 %v6477, %v6477
        %v6494 = vpack.c.b16 %v6478, %v6478
        %v6495 = vpack.c.b16 %v6479, %v6479
        %v6496 = vpack.c.b16 %v6480, %v6480
        %v6497 = vpack.c.b16 %v6481, %v6481
        %v6498 = vpack.c.b16 %v6482, %v6482
        %v6499 = vpack.c.b16 %v6483, %v6483
        %v6501 = vshrl.u32 %v6436, 16
        %v6503 = vshll.u32 %v6436, 16
        %v6505 = vrot.slane %v6503, 1
        %v6506 = vor.u32 %v6501, %v6505
        %v6508 = vshll.u32 %v6484, 16
        %v6510 = vrot.slane %v6508, 1
        %v6511 = vsel %vm1293, %v6506, %v6510
        %v6513 = vshrl.u32 %v6437, 16
        %v6515 = vshll.u32 %v6437, 16
        %v6517 = vrot.slane %v6515, 1
        %v6518 = vor.u32 %v6513, %v6517
        %v6520 = vshll.u32 %v6485, 16
        %v6522 = vrot.slane %v6520, 1
        %v6523 = vsel %vm1293, %v6518, %v6522
        %v6525 = vshrl.u32 %v6438, 16
        %v6527 = vshll.u32 %v6438, 16
        %v6529 = vrot.slane %v6527, 1
        %v6530 = vor.u32 %v6525, %v6529
        %v6532 = vshll.u32 %v6486, 16
        %v6534 = vrot.slane %v6532, 1
        %v6535 = vsel %vm1293, %v6530, %v6534
        %v6537 = vshrl.u32 %v6439, 16
        %v6539 = vshll.u32 %v6439, 16
        %v6541 = vrot.slane %v6539, 1
        %v6542 = vor.u32 %v6537, %v6541
        %v6544 = vshll.u32 %v6487, 16
        %v6546 = vrot.slane %v6544, 1
        %v6547 = vsel %vm1293, %v6542, %v6546
        %v6549 = vshrl.u32 %v6440, 16
        %v6551 = vshll.u32 %v6440, 16
        %v6553 = vrot.slane %v6551, 1
        %v6554 = vor.u32 %v6549, %v6553
        %v6556 = vshll.u32 %v6488, 16
        %v6558 = vrot.slane %v6556, 1
        %v6559 = vsel %vm1293, %v6554, %v6558
        %v6561 = vshrl.u32 %v6441, 16
        %v6563 = vshll.u32 %v6441, 16
        %v6565 = vrot.slane %v6563, 1
        %v6566 = vor.u32 %v6561, %v6565
        %v6568 = vshll.u32 %v6489, 16
        %v6570 = vrot.slane %v6568, 1
        %v6571 = vsel %vm1293, %v6566, %v6570
        %v6573 = vshrl.u32 %v6442, 16
        %v6575 = vshll.u32 %v6442, 16
        %v6577 = vrot.slane %v6575, 1
        %v6578 = vor.u32 %v6573, %v6577
        %v6580 = vshll.u32 %v6490, 16
        %v6582 = vrot.slane %v6580, 1
        %v6583 = vsel %vm1293, %v6578, %v6582
        %v6585 = vshrl.u32 %v6443, 16
        %v6587 = vshll.u32 %v6443, 16
        %v6589 = vrot.slane %v6587, 1
        %v6590 = vor.u32 %v6585, %v6589
        %v6592 = vshll.u32 %v6491, 16
        %v6594 = vrot.slane %v6592, 1
        %v6595 = vsel %vm1293, %v6590, %v6594
        %v6597 = vshrl.u32 %v6444, 16
        %v6599 = vshll.u32 %v6444, 16
        %v6601 = vrot.slane %v6599, 1
        %v6602 = vor.u32 %v6597, %v6601
        %v6604 = vshll.u32 %v6492, 16
        %v6606 = vrot.slane %v6604, 1
        %v6607 = vsel %vm1293, %v6602, %v6606
        %v6609 = vshrl.u32 %v6445, 16
        %v6611 = vshll.u32 %v6445, 16
        %v6613 = vrot.slane %v6611, 1
        %v6614 = vor.u32 %v6609, %v6613
        %v6616 = vshll.u32 %v6493, 16
        %v6618 = vrot.slane %v6616, 1
        %v6619 = vsel %vm1293, %v6614, %v6618
        %v6621 = vshrl.u32 %v6446, 16
        %v6623 = vshll.u32 %v6446, 16
        %v6625 = vrot.slane %v6623, 1
        %v6626 = vor.u32 %v6621, %v6625
        %v6628 = vshll.u32 %v6494, 16
        %v6630 = vrot.slane %v6628, 1
        %v6631 = vsel %vm1293, %v6626, %v6630
        %v6633 = vshrl.u32 %v6447, 16
        %v6635 = vshll.u32 %v6447, 16
        %v6637 = vrot.slane %v6635, 1
        %v6638 = vor.u32 %v6633, %v6637
        %v6640 = vshll.u32 %v6495, 16
        %v6642 = vrot.slane %v6640, 1
        %v6643 = vsel %vm1293, %v6638, %v6642
        %v6645 = vshrl.u32 %v6448, 16
        %v6647 = vshll.u32 %v6448, 16
        %v6649 = vrot.slane %v6647, 1
        %v6650 = vor.u32 %v6645, %v6649
        %v6652 = vshll.u32 %v6496, 16
        %v6654 = vrot.slane %v6652, 1
        %v6655 = vsel %vm1293, %v6650, %v6654
        %v6657 = vshrl.u32 %v6449, 16
        %v6659 = vshll.u32 %v6449, 16
        %v6661 = vrot.slane %v6659, 1
        %v6662 = vor.u32 %v6657, %v6661
        %v6664 = vshll.u32 %v6497, 16
        %v6666 = vrot.slane %v6664, 1
        %v6667 = vsel %vm1293, %v6662, %v6666
        %v6669 = vshrl.u32 %v6450, 16
        %v6671 = vshll.u32 %v6450, 16
        %v6673 = vrot.slane %v6671, 1
        %v6674 = vor.u32 %v6669, %v6673
        %v6676 = vshll.u32 %v6498, 16
        %v6678 = vrot.slane %v6676, 1
        %v6679 = vsel %vm1293, %v6674, %v6678
        %v6681 = vshrl.u32 %v6451, 16
        %v6683 = vshll.u32 %v6451, 16
        %v6685 = vrot.slane %v6683, 1
        %v6686 = vor.u32 %v6681, %v6685
        %v6688 = vshll.u32 %v6499, 16
        %v6690 = vrot.slane %v6688, 1
        %v6691 = vsel %vm1293, %v6686, %v6690
        %6692 = vrot.lane.b32.xlu0 %v6511, 4
        %v6693 = vpop.permute.xlu0 %6692
        %6694 = vrot.lane.b32.xlu0 %v6523, 4
        %v6695 = vpop.permute.xlu0 %6694
        %6696 = vrot.lane.b32.xlu0 %v6535, 4
        %v6697 = vpop.permute.xlu0 %6696
        %6698 = vrot.lane.b32.xlu0 %v6547, 4
        %v6699 = vpop.permute.xlu0 %6698
        %6700 = vrot.lane.b32.xlu0 %v6559, 4
        %v6701 = vpop.permute.xlu0 %6700
        %6702 = vrot.lane.b32.xlu0 %v6571, 4
        %v6703 = vpop.permute.xlu0 %6702
        %6704 = vrot.lane.b32.xlu0 %v6583, 4
        %v6705 = vpop.permute.xlu0 %6704
        %6706 = vrot.lane.b32.xlu0 %v6595, 4
        %v6707 = vpop.permute.xlu0 %6706
        %6708 = vrot.lane.b32.xlu0 %v6607, 4
        %v6709 = vpop.permute.xlu0 %6708
        %6710 = vrot.lane.b32.xlu0 %v6619, 4
        %v6711 = vpop.permute.xlu0 %6710
        %6712 = vrot.lane.b32.xlu0 %v6631, 4
        %v6713 = vpop.permute.xlu0 %6712
        %6714 = vrot.lane.b32.xlu0 %v6643, 4
        %v6715 = vpop.permute.xlu0 %6714
        %6716 = vrot.lane.b32.xlu0 %v6655, 4
        %v6717 = vpop.permute.xlu0 %6716
        %6718 = vrot.lane.b32.xlu0 %v6667, 4
        %v6719 = vpop.permute.xlu0 %6718
        %6720 = vrot.lane.b32.xlu0 %v6679, 4
        %v6721 = vpop.permute.xlu0 %6720
        %6722 = vrot.lane.b32.xlu0 %v6691, 4
        %v6723 = vpop.permute.xlu0 %6722
        %v6740 = vunpack.c.l.b16 %v6356
        %v6741 = vunpack.c.l.b16 %v6357
        %v6742 = vunpack.c.l.b16 %v6358
        %v6743 = vunpack.c.l.b16 %v6359
        %v6744 = vunpack.c.l.b16 %v6360
        %v6745 = vunpack.c.l.b16 %v6361
        %v6746 = vunpack.c.l.b16 %v6362
        %v6747 = vunpack.c.l.b16 %v6363
        %v6748 = vunpack.c.l.b16 %v6364
        %v6749 = vunpack.c.l.b16 %v6365
        %v6750 = vunpack.c.l.b16 %v6366
        %v6751 = vunpack.c.l.b16 %v6367
        %v6752 = vunpack.c.l.b16 %v6368
        %v6753 = vunpack.c.l.b16 %v6369
        %v6754 = vunpack.c.l.b16 %v6370
        %v6755 = vunpack.c.l.b16 %v6371
        %v6756 = vpack.c.b16 %v6405, %v6740
        %v6757 = vpack.c.b16 %v6407, %v6741
        %v6758 = vpack.c.b16 %v6409, %v6742
        %v6759 = vpack.c.b16 %v6411, %v6743
        %v6760 = vpack.c.b16 %v6413, %v6744
        %v6761 = vpack.c.b16 %v6415, %v6745
        %v6762 = vpack.c.b16 %v6417, %v6746
        %v6763 = vpack.c.b16 %v6419, %v6747
        %v6764 = vpack.c.b16 %v6421, %v6748
        %v6765 = vpack.c.b16 %v6423, %v6749
        %v6766 = vpack.c.b16 %v6425, %v6750
        %v6767 = vpack.c.b16 %v6427, %v6751
        %v6768 = vpack.c.b16 %v6429, %v6752
        %v6769 = vpack.c.b16 %v6431, %v6753
        %v6770 = vpack.c.b16 %v6433, %v6754
        %v6771 = vpack.c.b16 %v6435, %v6755
        %v6772 = vrot.slane %v6756, 1
        %v6773 = vrot.slane %v6484, 1
        %v6774 = vsel %vm1566, %v6772, %v6773
        %v6775 = vrot.slane %v6757, 1
        %v6776 = vrot.slane %v6485, 1
        %v6777 = vsel %vm1566, %v6775, %v6776
        %v6778 = vrot.slane %v6758, 1
        %v6779 = vrot.slane %v6486, 1
        %v6780 = vsel %vm1566, %v6778, %v6779
        %v6781 = vrot.slane %v6759, 1
        %v6782 = vrot.slane %v6487, 1
        %v6783 = vsel %vm1566, %v6781, %v6782
        %v6784 = vrot.slane %v6760, 1
        %v6785 = vrot.slane %v6488, 1
        %v6786 = vsel %vm1566, %v6784, %v6785
        %v6787 = vrot.slane %v6761, 1
        %v6788 = vrot.slane %v6489, 1
        %v6789 = vsel %vm1566, %v6787, %v6788
        %v6790 = vrot.slane %v6762, 1
        %v6791 = vrot.slane %v6490, 1
        %v6792 = vsel %vm1566, %v6790, %v6791
        %v6793 = vrot.slane %v6763, 1
        %v6794 = vrot.slane %v6491, 1
        %v6795 = vsel %vm1566, %v6793, %v6794
        %v6796 = vrot.slane %v6764, 1
        %v6797 = vrot.slane %v6492, 1
        %v6798 = vsel %vm1566, %v6796, %v6797
        %v6799 = vrot.slane %v6765, 1
        %v6800 = vrot.slane %v6493, 1
        %v6801 = vsel %vm1566, %v6799, %v6800
        %v6802 = vrot.slane %v6766, 1
        %v6803 = vrot.slane %v6494, 1
        %v6804 = vsel %vm1566, %v6802, %v6803
        %v6805 = vrot.slane %v6767, 1
        %v6806 = vrot.slane %v6495, 1
        %v6807 = vsel %vm1566, %v6805, %v6806
        %v6808 = vrot.slane %v6768, 1
        %v6809 = vrot.slane %v6496, 1
        %v6810 = vsel %vm1566, %v6808, %v6809
        %v6811 = vrot.slane %v6769, 1
        %v6812 = vrot.slane %v6497, 1
        %v6813 = vsel %vm1566, %v6811, %v6812
        %v6814 = vrot.slane %v6770, 1
        %v6815 = vrot.slane %v6498, 1
        %v6816 = vsel %vm1566, %v6814, %v6815
        %v6817 = vrot.slane %v6771, 1
        %v6818 = vrot.slane %v6499, 1
        %v6819 = vsel %vm1566, %v6817, %v6818
        %6820 = vrot.lane.b32.xlu0 %v6774, 8
        %v6821 = vpop.permute.xlu0 %6820
        %6822 = vrot.lane.b32.xlu0 %v6777, 8
        %v6823 = vpop.permute.xlu0 %6822
        %6824 = vrot.lane.b32.xlu0 %v6780, 8
        %v6825 = vpop.permute.xlu0 %6824
        %6826 = vrot.lane.b32.xlu0 %v6783, 8
        %v6827 = vpop.permute.xlu0 %6826
        %6828 = vrot.lane.b32.xlu0 %v6786, 8
        %v6829 = vpop.permute.xlu0 %6828
        %6830 = vrot.lane.b32.xlu0 %v6789, 8
        %v6831 = vpop.permute.xlu0 %6830
        %6832 = vrot.lane.b32.xlu0 %v6792, 8
        %v6833 = vpop.permute.xlu0 %6832
        %6834 = vrot.lane.b32.xlu0 %v6795, 8
        %v6835 = vpop.permute.xlu0 %6834
        %6836 = vrot.lane.b32.xlu0 %v6798, 8
        %v6837 = vpop.permute.xlu0 %6836
        %6838 = vrot.lane.b32.xlu0 %v6801, 8
        %v6839 = vpop.permute.xlu0 %6838
        %6840 = vrot.lane.b32.xlu0 %v6804, 8
        %v6841 = vpop.permute.xlu0 %6840
        %6842 = vrot.lane.b32.xlu0 %v6807, 8
        %v6843 = vpop.permute.xlu0 %6842
        %6844 = vrot.lane.b32.xlu0 %v6810, 8
        %v6845 = vpop.permute.xlu0 %6844
        %6846 = vrot.lane.b32.xlu0 %v6813, 8
        %v6847 = vpop.permute.xlu0 %6846
        %6848 = vrot.lane.b32.xlu0 %v6816, 8
        %v6849 = vpop.permute.xlu0 %6848
        %6850 = vrot.lane.b32.xlu0 %v6819, 8
        %v6851 = vpop.permute.xlu0 %6850
        %v6853 = vsel %vm1647, %v6436, %v6693
        %v6855 = vsel %vm1647, %v6437, %v6695
        %v6857 = vsel %vm1647, %v6438, %v6697
        %v6859 = vsel %vm1647, %v6439, %v6699
        %v6861 = vsel %vm1647, %v6440, %v6701
        %v6863 = vsel %vm1647, %v6441, %v6703
        %v6865 = vsel %vm1647, %v6442, %v6705
        %v6867 = vsel %vm1647, %v6443, %v6707
        %v6869 = vsel %vm1647, %v6444, %v6709
        %v6871 = vsel %vm1647, %v6445, %v6711
        %v6873 = vsel %vm1647, %v6446, %v6713
        %v6875 = vsel %vm1647, %v6447, %v6715
        %v6877 = vsel %vm1647, %v6448, %v6717
        %v6879 = vsel %vm1647, %v6449, %v6719
        %v6881 = vsel %vm1647, %v6450, %v6721
        %v6883 = vsel %vm1647, %v6451, %v6723
        %v6885 = vsel %vm1680, %v6853, %v6821
        %v6887 = vsel %vm1680, %v6855, %v6823
        %v6889 = vsel %vm1680, %v6857, %v6825
        %v6891 = vsel %vm1680, %v6859, %v6827
        %v6893 = vsel %vm1680, %v6861, %v6829
        %v6895 = vsel %vm1680, %v6863, %v6831
        %v6897 = vsel %vm1680, %v6865, %v6833
        %v6899 = vsel %vm1680, %v6867, %v6835
        %v6901 = vsel %vm1680, %v6869, %v6837
        %v6903 = vsel %vm1680, %v6871, %v6839
        %v6905 = vsel %vm1680, %v6873, %v6841
        %v6907 = vsel %vm1680, %v6875, %v6843
        %v6909 = vsel %vm1680, %v6877, %v6845
        %v6911 = vsel %vm1680, %v6879, %v6847
        %v6913 = vsel %vm1680, %v6881, %v6849
        %v6915 = vsel %vm1680, %v6883, %v6851
        %s6916 = scalar_lea.vmem [#allocation9], 16
        %v6917 = vld [vmem:[%s6916] sm:$0xf]
        %v6918 = vld [vmem:[%s6916 + $0x4] sm:$0x3]
        %v6921 = vunpack.c.l.b16 %v6917
        %v6922 = vunpack.c.l.b16 %v6918
        %v6923 = vpack.c.b16 %v6922, %v6921
        %v6924 = vsel %vm2331, %v6885, 0
        %v6926 = vsel %vm2331, %v6887, 0
        %v6928 = vsel %vm2331, %v6889, 0
        %v6930 = vsel %vm2331, %v6891, 0
        %v6932 = vsel %vm2331, %v6893, 0
        %v6934 = vsel %vm2331, %v6895, 0
        %v6936 = vsel %vm2331, %v6897, 0
        %v6938 = vsel %vm2331, %v6899, 0
        %v6940 = vsel %vm2331, %v6901, 0
        %v6942 = vsel %vm2331, %v6903, 0
        %v6944 = vsel %vm2331, %v6905, 0
        %v6946 = vsel %vm2331, %v6907, 0
        %v6948 = vsel %vm2331, %v6909, 0
        %v6950 = vsel %vm2331, %v6911, 0
        %v6952 = vsel %vm2331, %v6913, 0
        %v6954 = vsel %vm2331, %v6915, 0
        %v6957 = vsel %vm2364, %v6923, 0
        %6959 = vmatprep.subr.bf16.mxu0 0
        %6960 = vmatpush1.bf16.msra.mxu0 %v6957
        %6961 = vmatprep.subr.bf16.mxu0 0
        %6962 = vmatpush1.bf16.msra.mxu0 0
        %6963 = vmatprep.subr.bf16.mxu0 0
        %6964 = vmatpush1.bf16.msra.mxu0 0
        %6965 = vmatprep.subr.bf16.mxu0 0
        %6966 = vmatpush1.bf16.msra.mxu0 0
        %6967 = vmatprep.subr.bf16.mxu0 0
        %6968 = vmatpush1.bf16.msra.mxu0 0
        %6969 = vmatprep.subr.bf16.mxu0 0
        %6970 = vmatpush1.bf16.msra.mxu0 0
        %6971 = vmatprep.subr.bf16.mxu0 0
        %6972 = vmatpush1.bf16.msra.mxu0 0
        %6973 = vmatprep.subr.bf16.mxu0 0
        %6974 = vmatpush1.bf16.msra.mxu0 0
        %6975 = vmatprep.subr.bf16.mxu0 0
        %6976 = vmatpush1.bf16.msra.mxu0 0
        %6977 = vmatprep.subr.bf16.mxu0 0
        %6978 = vmatpush1.bf16.msra.mxu0 0
        %6979 = vmatprep.subr.bf16.mxu0 0
        %6980 = vmatpush1.bf16.msra.mxu0 0
        %6981 = vmatprep.subr.bf16.mxu0 0
        %6982 = vmatpush1.bf16.msra.mxu0 0
        %6983 = vmatprep.subr.bf16.mxu0 0
        %6984 = vmatpush1.bf16.msra.mxu0 0
        %6985 = vmatprep.subr.bf16.mxu0 0
        %6986 = vmatpush1.bf16.msra.mxu0 0
        %6987 = vmatprep.subr.bf16.mxu0 0
        %6988 = vmatpush1.bf16.msra.mxu0 0
        %6989 = vmatprep.subr.bf16.mxu0 0
        %6990 = vmatpush1.bf16.msra.mxu0 0
        %6991 = vmatprep.mubr.bf16.mxu0 0
        %6992 = vmatmul.mubr.bf16.gmra.mrb[0].mxu0 %v6924
        %v6993 = vpop.f32.mrb[0].mxu0
        %v6994 = vadd.f32 0.0, %v6993
        %v6995 = vpop.f32.mrb[0].mxu0
        %v6996 = vpop.f32.mrb[0].mxu0
        %v6997 = vadd.f32 0.0, %v6996
        %v6998 = vpop.f32.mrb[0].mxu0
        %6999 = vmatprep.mubr.bf16.mxu0 0
        %7000 = vmatmul.mubr.bf16.gmra.mrb[0].mxu0 %v6926
        %v7001 = vpop.f32.mrb[0].mxu0
        %v7002 = vadd.f32 0.0, %v7001
        %v7003 = vpop.f32.mrb[0].mxu0
        %v7004 = vpop.f32.mrb[0].mxu0
        %v7005 = vadd.f32 0.0, %v7004
        %v7006 = vpop.f32.mrb[0].mxu0
        %7007 = vmatprep.mubr.bf16.mxu0 0
        %7008 = vmatmul.mubr.bf16.gmra.mrb[0].mxu0 %v6928
        %v7009 = vpop.f32.mrb[0].mxu0
        %v7010 = vadd.f32 0.0, %v7009
        %v7011 = vpop.f32.mrb[0].mxu0
        %v7012 = vpop.f32.mrb[0].mxu0
        %v7013 = vadd.f32 0.0, %v7012
        %v7014 = vpop.f32.mrb[0].mxu0
        %7015 = vmatprep.mubr.bf16.mxu0 0
        %7016 = vmatmul.mubr.bf16.gmra.mrb[0].mxu0 %v6930
        %v7017 = vpop.f32.mrb[0].mxu0
        %v7018 = vadd.f32 0.0, %v7017
        %v7019 = vpop.f32.mrb[0].mxu0
        %v7020 = vpop.f32.mrb[0].mxu0
        %v7021 = vadd.f32 0.0, %v7020
        %v7022 = vpop.f32.mrb[0].mxu0
        %7023 = vmatprep.mubr.bf16.mxu0 0
        %7024 = vmatmul.mubr.bf16.gmra.mrb[0].mxu0 %v6932
        %v7025 = vpop.f32.mrb[0].mxu0
        %v7026 = vadd.f32 0.0, %v7025
        %v7027 = vpop.f32.mrb[0].mxu0
        %v7028 = vpop.f32.mrb[0].mxu0
        %v7029 = vadd.f32 0.0, %v7028
        %v7030 = vpop.f32.mrb[0].mxu0
        %7031 = vmatprep.mubr.bf16.mxu0 0
        %7032 = vmatmul.mubr.bf16.gmra.mrb[0].mxu0 %v6934
        %v7033 = vpop.f32.mrb[0].mxu0
        %v7034 = vadd.f32 0.0, %v7033
        %v7035 = vpop.f32.mrb[0].mxu0
        %v7036 = vpop.f32.mrb[0].mxu0
        %v7037 = vadd.f32 0.0, %v7036
        %v7038 = vpop.f32.mrb[0].mxu0
        %7039 = vmatprep.mubr.bf16.mxu0 0
        %7040 = vmatmul.mubr.bf16.gmra.mrb[0].mxu0 %v6936
        %v7041 = vpop.f32.mrb[0].mxu0
        %v7042 = vadd.f32 0.0, %v7041
        %v7043 = vpop.f32.mrb[0].mxu0
        %v7044 = vpop.f32.mrb[0].mxu0
        %v7045 = vadd.f32 0.0, %v7044
        %v7046 = vpop.f32.mrb[0].mxu0
        %7047 = vmatprep.mubr.bf16.mxu0 0
        %7048 = vmatmul.mubr.bf16.gmra.mrb[0].mxu0 %v6938
        %v7049 = vpop.f32.mrb[0].mxu0
        %v7050 = vadd.f32 0.0, %v7049
        %v7051 = vpop.f32.mrb[0].mxu0
        %v7052 = vpop.f32.mrb[0].mxu0
        %v7053 = vadd.f32 0.0, %v7052
        %v7054 = vpop.f32.mrb[0].mxu0
        %7055 = vmatprep.mubr.bf16.mxu0 0
        %7056 = vmatmul.mubr.bf16.gmra.mrb[0].mxu0 %v6940
        %v7057 = vpop.f32.mrb[0].mxu0
        %v7058 = vadd.f32 0.0, %v7057
        %v7059 = vpop.f32.mrb[0].mxu0
        %v7060 = vpop.f32.mrb[0].mxu0
        %v7061 = vadd.f32 0.0, %v7060
        %v7062 = vpop.f32.mrb[0].mxu0
        %7063 = vmatprep.mubr.bf16.mxu0 0
        %7064 = vmatmul.mubr.bf16.gmra.mrb[0].mxu0 %v6942
        %v7065 = vpop.f32.mrb[0].mxu0
        %v7066 = vadd.f32 0.0, %v7065
        %v7067 = vpop.f32.mrb[0].mxu0
        %v7068 = vpop.f32.mrb[0].mxu0
        %v7069 = vadd.f32 0.0, %v7068
        %v7070 = vpop.f32.mrb[0].mxu0
        %7071 = vmatprep.mubr.bf16.mxu0 0
        %7072 = vmatmul.mubr.bf16.gmra.mrb[0].mxu0 %v6944
        %v7073 = vpop.f32.mrb[0].mxu0
        %v7074 = vadd.f32 0.0, %v7073
        %v7075 = vpop.f32.mrb[0].mxu0
        %v7076 = vpop.f32.mrb[0].mxu0
        %v7077 = vadd.f32 0.0, %v7076
        %v7078 = vpop.f32.mrb[0].mxu0
        %7079 = vmatprep.mubr.bf16.mxu0 0
        %7080 = vmatmul.mubr.bf16.gmra.mrb[0].mxu0 %v6946
        %v7081 = vpop.f32.mrb[0].mxu0
        %v7082 = vadd.f32 0.0, %v7081
        %v7083 = vpop.f32.mrb[0].mxu0
        %v7084 = vpop.f32.mrb[0].mxu0
        %v7085 = vadd.f32 0.0, %v7084
        %v7086 = vpop.f32.mrb[0].mxu0
        %7087 = vmatprep.mubr.bf16.mxu0 0
        %7088 = vmatmul.mubr.bf16.gmra.mrb[0].mxu0 %v6948
        %v7089 = vpop.f32.mrb[0].mxu0
        %v7090 = vadd.f32 0.0, %v7089
        %v7091 = vpop.f32.mrb[0].mxu0
        %v7092 = vpop.f32.mrb[0].mxu0
        %v7093 = vadd.f32 0.0, %v7092
        %v7094 = vpop.f32.mrb[0].mxu0
        %7095 = vmatprep.mubr.bf16.mxu0 0
        %7096 = vmatmul.mubr.bf16.gmra.mrb[0].mxu0 %v6950
        %v7097 = vpop.f32.mrb[0].mxu0
        %v7098 = vadd.f32 0.0, %v7097
        %v7099 = vpop.f32.mrb[0].mxu0
        %v7100 = vpop.f32.mrb[0].mxu0
        %v7101 = vadd.f32 0.0, %v7100
        %v7102 = vpop.f32.mrb[0].mxu0
        %7103 = vmatprep.mubr.bf16.mxu0 0
        %7104 = vmatmul.mubr.bf16.gmra.mrb[0].mxu0 %v6952
        %v7105 = vpop.f32.mrb[0].mxu0
        %v7106 = vadd.f32 0.0, %v7105
        %v7107 = vpop.f32.mrb[0].mxu0
        %v7108 = vpop.f32.mrb[0].mxu0
        %v7109 = vadd.f32 0.0, %v7108
        %v7110 = vpop.f32.mrb[0].mxu0
        %7111 = vmatprep.mubr.bf16.mxu0 0
        %7112 = vmatmul.mubr.bf16.gmra.mrb[0].mxu0 %v6954
        %v7113 = vpop.f32.mrb[0].mxu0
        %v7114 = vadd.f32 0.0, %v7113
        %v7115 = vpop.f32.mrb[0].mxu0
        %v7116 = vpop.f32.mrb[0].mxu0
        %v7117 = vadd.f32 0.0, %v7116
        %v7118 = vpop.f32.mrb[0].mxu0
        %7119 = vdwg.mxu0
        %v7120 = vadd.f32 %v6182, %v6994
        %v7121 = vadd.f32 %v6185, %v6997
        %v7122 = vadd.f32 %v6190, %v7002
        %v7123 = vadd.f32 %v6193, %v7005
        %v7124 = vadd.f32 %v6198, %v7010
        %v7125 = vadd.f32 %v6201, %v7013
        %v7126 = vadd.f32 %v6206, %v7018
        %v7127 = vadd.f32 %v6209, %v7021
        %v7128 = vadd.f32 %v6214, %v7026
        %v7129 = vadd.f32 %v6217, %v7029
        %v7130 = vadd.f32 %v6222, %v7034
        %v7131 = vadd.f32 %v6225, %v7037
        %v7132 = vadd.f32 %v6230, %v7042
        %v7133 = vadd.f32 %v6233, %v7045
        %v7134 = vadd.f32 %v6238, %v7050
        %v7135 = vadd.f32 %v6241, %v7053
        %v7136 = vadd.f32 %v6246, %v7058
        %v7137 = vadd.f32 %v6249, %v7061
        %v7138 = vadd.f32 %v6254, %v7066
        %v7139 = vadd.f32 %v6257, %v7069
        %v7140 = vadd.f32 %v6262, %v7074
        %v7141 = vadd.f32 %v6265, %v7077
        %v7142 = vadd.f32 %v6270, %v7082
        %v7143 = vadd.f32 %v6273, %v7085
        %v7144 = vadd.f32 %v6278, %v7090
        %v7145 = vadd.f32 %v6281, %v7093
        %v7146 = vadd.f32 %v6286, %v7098
        %v7147 = vadd.f32 %v6289, %v7101
        %v7148 = vadd.f32 %v6294, %v7106
        %v7149 = vadd.f32 %v6297, %v7109
        %v7150 = vadd.f32 %v6302, %v7114
        %v7151 = vadd.f32 %v6305, %v7117
        %v7152 = vsel %vm1647, %v7120, 0.0
        %v7153 = vsel %vm1647, %v7121, 0.0
        %v7154 = vadd.f32 %v7152, %v7153
        %v7155 = vsel %vm1647, %v7122, 0.0
        %v7156 = vadd.f32 %v7154, %v7155
        %v7157 = vsel %vm1647, %v7123, 0.0
        %v7158 = vadd.f32 %v7156, %v7157
        %v7159 = vsel %vm1647, %v7124, 0.0
        %v7160 = vadd.f32 %v7158, %v7159
        %v7161 = vsel %vm1647, %v7125, 0.0
        %v7162 = vadd.f32 %v7160, %v7161
        %v7163 = vsel %vm1647, %v7126, 0.0
        %v7164 = vadd.f32 %v7162, %v7163
        %v7165 = vsel %vm1647, %v7127, 0.0
        %v7166 = vadd.f32 %v7164, %v7165
        %v7167 = vsel %vm1647, %v7128, 0.0
        %v7168 = vadd.f32 %v7166, %v7167
        %v7169 = vsel %vm1647, %v7129, 0.0
        %v7170 = vadd.f32 %v7168, %v7169
        %v7171 = vsel %vm1647, %v7130, 0.0
        %v7172 = vadd.f32 %v7170, %v7171
        %v7173 = vsel %vm1647, %v7131, 0.0
        %v7174 = vadd.f32 %v7172, %v7173
        %v7175 = vsel %vm1647, %v7132, 0.0
        %v7176 = vadd.f32 %v7174, %v7175
        %v7177 = vsel %vm1647, %v7133, 0.0
        %v7178 = vadd.f32 %v7176, %v7177
        %v7179 = vsel %vm1647, %v7134, 0.0
        %v7180 = vadd.f32 %v7178, %v7179
        %v7181 = vsel %vm1647, %v7135, 0.0
        %v7182 = vadd.f32 %v7180, %v7181
        %v7183 = vsel %vm1647, %v7136, 0.0
        %v7184 = vadd.f32 %v7182, %v7183
        %v7185 = vsel %vm1647, %v7137, 0.0
        %v7186 = vadd.f32 %v7184, %v7185
        %v7187 = vsel %vm1647, %v7138, 0.0
        %v7188 = vadd.f32 %v7186, %v7187
        %v7189 = vsel %vm1647, %v7139, 0.0
        %v7190 = vadd.f32 %v7188, %v7189
        %v7191 = vsel %vm1647, %v7140, 0.0
        %v7192 = vadd.f32 %v7190, %v7191
        %v7193 = vsel %vm1647, %v7141, 0.0
        %v7194 = vadd.f32 %v7192, %v7193
        %v7195 = vsel %vm1647, %v7142, 0.0
        %v7196 = vadd.f32 %v7194, %v7195
        %v7197 = vsel %vm1647, %v7143, 0.0
        %v7198 = vadd.f32 %v7196, %v7197
        %v7199 = vsel %vm1647, %v7144, 0.0
        %v7200 = vadd.f32 %v7198, %v7199
        %v7201 = vsel %vm1647, %v7145, 0.0
        %v7202 = vadd.f32 %v7200, %v7201
        %v7203 = vsel %vm1647, %v7146, 0.0
        %v7204 = vadd.f32 %v7202, %v7203
        %v7205 = vsel %vm1647, %v7147, 0.0
        %v7206 = vadd.f32 %v7204, %v7205
        %v7207 = vsel %vm1647, %v7148, 0.0
        %v7208 = vadd.f32 %v7206, %v7207
        %v7209 = vsel %vm1647, %v7149, 0.0
        %v7210 = vadd.f32 %v7208, %v7209
        %v7211 = vsel %vm1647, %v7150, 0.0
        %v7212 = vadd.f32 %v7210, %v7211
        %v7213 = vsel %vm1647, %v7151, 0.0
        %v7214 = vadd.f32 %v7212, %v7213
        %v7215 = vrot.slane %v7214, 4
        %v7216 = vadd.f32 %v7214, %v7215
        %v7217 = vrot.slane %v7216, 2
        %v7218 = vadd.f32 %v7216, %v7217
        %v7219 = vrot.slane %v7218, 1
        %v7220 = vadd.f32 %v7218, %v7219
        %v7221 = vmul.f32 %v7220, %v3643
        %v7222 = vsub.f32 %v7120, %v7221
        %v7223 = vsub.f32 %v7121, %v7221
        %v7224 = vsub.f32 %v7122, %v7221
        %v7225 = vsub.f32 %v7123, %v7221
        %v7226 = vsub.f32 %v7124, %v7221
        %v7227 = vsub.f32 %v7125, %v7221
        %v7228 = vsub.f32 %v7126, %v7221
        %v7229 = vsub.f32 %v7127, %v7221
        %v7230 = vsub.f32 %v7128, %v7221
        %v7231 = vsub.f32 %v7129, %v7221
        %v7232 = vsub.f32 %v7130, %v7221
        %v7233 = vsub.f32 %v7131, %v7221
        %v7234 = vsub.f32 %v7132, %v7221
        %v7235 = vsub.f32 %v7133, %v7221
        %v7236 = vsub.f32 %v7134, %v7221
        %v7237 = vsub.f32 %v7135, %v7221
        %v7238 = vsub.f32 %v7136, %v7221
        %v7239 = vsub.f32 %v7137, %v7221
        %v7240 = vsub.f32 %v7138, %v7221
        %v7241 = vsub.f32 %v7139, %v7221
        %v7242 = vsub.f32 %v7140, %v7221
        %v7243 = vsub.f32 %v7141, %v7221
        %v7244 = vsub.f32 %v7142, %v7221
        %v7245 = vsub.f32 %v7143, %v7221
        %v7246 = vsub.f32 %v7144, %v7221
        %v7247 = vsub.f32 %v7145, %v7221
        %v7248 = vsub.f32 %v7146, %v7221
        %v7249 = vsub.f32 %v7147, %v7221
        %v7250 = vsub.f32 %v7148, %v7221
        %v7251 = vsub.f32 %v7149, %v7221
        %v7252 = vsub.f32 %v7150, %v7221
        %v7253 = vsub.f32 %v7151, %v7221
        %v7254 = vmul.f32 %v7222, %v7222
        %v7255 = vmul.f32 %v7223, %v7223
        %v7256 = vmul.f32 %v7224, %v7224
        %v7257 = vmul.f32 %v7225, %v7225
        %v7258 = vmul.f32 %v7226, %v7226
        %v7259 = vmul.f32 %v7227, %v7227
        %v7260 = vmul.f32 %v7228, %v7228
        %v7261 = vmul.f32 %v7229, %v7229
        %v7262 = vmul.f32 %v7230, %v7230
        %v7263 = vmul.f32 %v7231, %v7231
        %v7264 = vmul.f32 %v7232, %v7232
        %v7265 = vmul.f32 %v7233, %v7233
        %v7266 = vmul.f32 %v7234, %v7234
        %v7267 = vmul.f32 %v7235, %v7235
        %v7268 = vmul.f32 %v7236, %v7236
        %v7269 = vmul.f32 %v7237, %v7237
        %v7270 = vmul.f32 %v7238, %v7238
        %v7271 = vmul.f32 %v7239, %v7239
        %v7272 = vmul.f32 %v7240, %v7240
        %v7273 = vmul.f32 %v7241, %v7241
        %v7274 = vmul.f32 %v7242, %v7242
        %v7275 = vmul.f32 %v7243, %v7243
        %v7276 = vmul.f32 %v7244, %v7244
        %v7277 = vmul.f32 %v7245, %v7245
        %v7278 = vmul.f32 %v7246, %v7246
        %v7279 = vmul.f32 %v7247, %v7247
        %v7280 = vmul.f32 %v7248, %v7248
        %v7281 = vmul.f32 %v7249, %v7249
        %v7282 = vmul.f32 %v7250, %v7250
        %v7283 = vmul.f32 %v7251, %v7251
        %v7284 = vmul.f32 %v7252, %v7252
        %v7285 = vmul.f32 %v7253, %v7253
        %v7286 = vsel %vm1647, %v7254, 0.0
        %v7287 = vsel %vm1647, %v7255, 0.0
        %v7288 = vadd.f32 %v7286, %v7287
        %v7289 = vsel %vm1647, %v7256, 0.0
        %v7290 = vadd.f32 %v7288, %v7289
        %v7291 = vsel %vm1647, %v7257, 0.0
        %v7292 = vadd.f32 %v7290, %v7291
        %v7293 = vsel %vm1647, %v7258, 0.0
        %v7294 = vadd.f32 %v7292, %v7293
        %v7295 = vsel %vm1647, %v7259, 0.0
        %v7296 = vadd.f32 %v7294, %v7295
        %v7297 = vsel %vm1647, %v7260, 0.0
        %v7298 = vadd.f32 %v7296, %v7297
        %v7299 = vsel %vm1647, %v7261, 0.0
        %v7300 = vadd.f32 %v7298, %v7299
        %v7301 = vsel %vm1647, %v7262, 0.0
        %v7302 = vadd.f32 %v7300, %v7301
        %v7303 = vsel %vm1647, %v7263, 0.0
        %v7304 = vadd.f32 %v7302, %v7303
        %v7305 = vsel %vm1647, %v7264, 0.0
        %v7306 = vadd.f32 %v7304, %v7305
        %v7307 = vsel %vm1647, %v7265, 0.0
        %v7308 = vadd.f32 %v7306, %v7307
        %v7309 = vsel %vm1647, %v7266, 0.0
        %v7310 = vadd.f32 %v7308, %v7309
        %v7311 = vsel %vm1647, %v7267, 0.0
        %v7312 = vadd.f32 %v7310, %v7311
        %v7313 = vsel %vm1647, %v7268, 0.0
        %v7314 = vadd.f32 %v7312, %v7313
        %v7315 = vsel %vm1647, %v7269, 0.0
        %v7316 = vadd.f32 %v7314, %v7315
        %v7317 = vsel %vm1647, %v7270, 0.0
        %v7318 = vadd.f32 %v7316, %v7317
        %v7319 = vsel %vm1647, %v7271, 0.0
        %v7320 = vadd.f32 %v7318, %v7319
        %v7321 = vsel %vm1647, %v7272, 0.0
        %v7322 = vadd.f32 %v7320, %v7321
        %v7323 = vsel %vm1647, %v7273, 0.0
        %v7324 = vadd.f32 %v7322, %v7323
        %v7325 = vsel %vm1647, %v7274, 0.0
        %v7326 = vadd.f32 %v7324, %v7325
        %v7327 = vsel %vm1647, %v7275, 0.0
        %v7328 = vadd.f32 %v7326, %v7327
        %v7329 = vsel %vm1647, %v7276, 0.0
        %v7330 = vadd.f32 %v7328, %v7329
        %v7331 = vsel %vm1647, %v7277, 0.0
        %v7332 = vadd.f32 %v7330, %v7331
        %v7333 = vsel %vm1647, %v7278, 0.0
        %v7334 = vadd.f32 %v7332, %v7333
        %v7335 = vsel %vm1647, %v7279, 0.0
        %v7336 = vadd.f32 %v7334, %v7335
        %v7337 = vsel %vm1647, %v7280, 0.0
        %v7338 = vadd.f32 %v7336, %v7337
        %v7339 = vsel %vm1647, %v7281, 0.0
        %v7340 = vadd.f32 %v7338, %v7339
        %v7341 = vsel %vm1647, %v7282, 0.0
        %v7342 = vadd.f32 %v7340, %v7341
        %v7343 = vsel %vm1647, %v7283, 0.0
        %v7344 = vadd.f32 %v7342, %v7343
        %v7345 = vsel %vm1647, %v7284, 0.0
        %v7346 = vadd.f32 %v7344, %v7345
        %v7347 = vsel %vm1647, %v7285, 0.0
        %v7348 = vadd.f32 %v7346, %v7347
        %v7349 = vrot.slane %v7348, 4
        %v7350 = vadd.f32 %v7348, %v7349
        %v7351 = vrot.slane %v7350, 2
        %v7352 = vadd.f32 %v7350, %v7351
        %v7353 = vrot.slane %v7352, 1
        %v7354 = vadd.f32 %v7352, %v7353
        %v7355 = vmul.f32 %v7354, %v3643
        %v7356 = vadd.f32 %v7355, 1e-05
        %v7357 = vrsqrt.pop %v7356
        %v7358 = vmul.f32 %v7222, %v7357
        %v7359 = vmul.f32 %v7223, %v7357
        %v7360 = vmul.f32 %v7224, %v7357
        %v7361 = vmul.f32 %v7225, %v7357
        %v7362 = vmul.f32 %v7226, %v7357
        %v7363 = vmul.f32 %v7227, %v7357
        %v7364 = vmul.f32 %v7228, %v7357
        %v7365 = vmul.f32 %v7229, %v7357
        %v7366 = vmul.f32 %v7230, %v7357
        %v7367 = vmul.f32 %v7231, %v7357
        %v7368 = vmul.f32 %v7232, %v7357
        %v7369 = vmul.f32 %v7233, %v7357
        %v7370 = vmul.f32 %v7234, %v7357
        %v7371 = vmul.f32 %v7235, %v7357
        %v7372 = vmul.f32 %v7236, %v7357
        %v7373 = vmul.f32 %v7237, %v7357
        %v7374 = vmul.f32 %v7238, %v7357
        %v7375 = vmul.f32 %v7239, %v7357
        %v7376 = vmul.f32 %v7240, %v7357
        %v7377 = vmul.f32 %v7241, %v7357
        %v7378 = vmul.f32 %v7242, %v7357
        %v7379 = vmul.f32 %v7243, %v7357
        %v7380 = vmul.f32 %v7244, %v7357
        %v7381 = vmul.f32 %v7245, %v7357
        %v7382 = vmul.f32 %v7246, %v7357
        %v7383 = vmul.f32 %v7247, %v7357
        %v7384 = vmul.f32 %v7248, %v7357
        %v7385 = vmul.f32 %v7249, %v7357
        %v7386 = vmul.f32 %v7250, %v7357
        %v7387 = vmul.f32 %v7251, %v7357
        %v7388 = vmul.f32 %v7252, %v7357
        %v7389 = vmul.f32 %v7253, %v7357
        %v7390 = vld [vmem:[%s187] sm:$0xff]
        %v7391 = vld [vmem:[%s187 + $0x8] sm:$0xff]
        %v7392 = vld [vmem:[%s187 + $0x10] sm:$0xff]
        %v7393 = vld [vmem:[%s187 + $0x18] sm:$0xff]
        %v7394 = vld [vmem:[%s187 + $0x20] sm:$0xff]
        %v7395 = vld [vmem:[%s187 + $0x28] sm:$0xff]
        %v7396 = vld [vmem:[%s187 + $0x30] sm:$0xff]
        %v7397 = vld [vmem:[%s187 + $0x38] sm:$0xff]
        %v7398 = vld [vmem:[%s187 + $0x40] sm:$0xff]
        %v7399 = vld [vmem:[%s187 + $0x48] sm:$0xff]
        %v7400 = vld [vmem:[%s187 + $0x50] sm:$0xff]
        %v7401 = vld [vmem:[%s187 + $0x58] sm:$0xff]
        %v7402 = vld [vmem:[%s187 + $0x60] sm:$0xff]
        %v7403 = vld [vmem:[%s187 + $0x68] sm:$0xff]
        %v7404 = vld [vmem:[%s187 + $0x70] sm:$0xff]
        %v7405 = vld [vmem:[%s187 + $0x78] sm:$0xff]
        %v7406 = vld [vmem:[%s187 + $0x80] sm:$0xff]
        %v7407 = vld [vmem:[%s187 + $0x88] sm:$0xff]
        %v7408 = vld [vmem:[%s187 + $0x90] sm:$0xff]
        %v7409 = vld [vmem:[%s187 + $0x98] sm:$0xff]
        %v7410 = vld [vmem:[%s187 + $0xa0] sm:$0xff]
        %v7411 = vld [vmem:[%s187 + $0xa8] sm:$0xff]
        %v7412 = vld [vmem:[%s187 + $0xb0] sm:$0xff]
        %v7413 = vld [vmem:[%s187 + $0xb8] sm:$0xff]
        %v7414 = vld [vmem:[%s187 + $0xc0] sm:$0xff]
        %v7415 = vld [vmem:[%s187 + $0xc8] sm:$0xff]
        %v7416 = vld [vmem:[%s187 + $0xd0] sm:$0xff]
        %v7417 = vld [vmem:[%s187 + $0xd8] sm:$0xff]
        %v7418 = vld [vmem:[%s187 + $0xe0] sm:$0xff]
        %v7419 = vld [vmem:[%s187 + $0xe8] sm:$0xff]
        %v7420 = vld [vmem:[%s187 + $0xf0] sm:$0xff]
        %v7421 = vld [vmem:[%s187 + $0xf8] sm:$0xff]
        %v7422 = vadd.f32 %v7358, %v7390
        %v7423 = vadd.f32 %v7359, %v7391
        %v7424 = vadd.f32 %v7360, %v7392
        %v7425 = vadd.f32 %v7361, %v7393
        %v7426 = vadd.f32 %v7362, %v7394
        %v7427 = vadd.f32 %v7363, %v7395
        %v7428 = vadd.f32 %v7364, %v7396
        %v7429 = vadd.f32 %v7365, %v7397
        %v7430 = vadd.f32 %v7366, %v7398
        %v7431 = vadd.f32 %v7367, %v7399
        %v7432 = vadd.f32 %v7368, %v7400
        %v7433 = vadd.f32 %v7369, %v7401
        %v7434 = vadd.f32 %v7370, %v7402
        %v7435 = vadd.f32 %v7371, %v7403
        %v7436 = vadd.f32 %v7372, %v7404
        %v7437 = vadd.f32 %v7373, %v7405
        %v7438 = vadd.f32 %v7374, %v7406
        %v7439 = vadd.f32 %v7375, %v7407
        %v7440 = vadd.f32 %v7376, %v7408
        %v7441 = vadd.f32 %v7377, %v7409
        %v7442 = vadd.f32 %v7378, %v7410
        %v7443 = vadd.f32 %v7379, %v7411
        %v7444 = vadd.f32 %v7380, %v7412
        %v7445 = vadd.f32 %v7381, %v7413
        %v7446 = vadd.f32 %v7382, %v7414
        %v7447 = vadd.f32 %v7383, %v7415
        %v7448 = vadd.f32 %v7384, %v7416
        %v7449 = vadd.f32 %v7385, %v7417
        %v7450 = vadd.f32 %v7386, %v7418
        %v7451 = vadd.f32 %v7387, %v7419
        %v7452 = vadd.f32 %v7388, %v7420
        %v7453 = vadd.f32 %v7389, %v7421
        %7454 = vst.msk [vmem:[%s217] sm:$0xff] %vm1647, %v7422
        %7455 = vst.msk [vmem:[%s217 + $0x8] sm:$0xff] %vm1647, %v7423
        %7456 = vst.msk [vmem:[%s217 + $0x10] sm:$0xff] %vm1647, %v7424
        %7457 = vst.msk [vmem:[%s217 + $0x18] sm:$0xff] %vm1647, %v7425
        %7458 = vst.msk [vmem:[%s217 + $0x20] sm:$0xff] %vm1647, %v7426
        %7459 = vst.msk [vmem:[%s217 + $0x28] sm:$0xff] %vm1647, %v7427
        %7460 = vst.msk [vmem:[%s217 + $0x30] sm:$0xff] %vm1647, %v7428
        %7461 = vst.msk [vmem:[%s217 + $0x38] sm:$0xff] %vm1647, %v7429
        %7462 = vst.msk [vmem:[%s217 + $0x40] sm:$0xff] %vm1647, %v7430
        %7463 = vst.msk [vmem:[%s217 + $0x48] sm:$0xff] %vm1647, %v7431
        %7464 = vst.msk [vmem:[%s217 + $0x50] sm:$0xff] %vm1647, %v7432
        %7465 = vst.msk [vmem:[%s217 + $0x58] sm:$0xff] %vm1647, %v7433
        %7466 = vst.msk [vmem:[%s217 + $0x60] sm:$0xff] %vm1647, %v7434
        %7467 = vst.msk [vmem:[%s217 + $0x68] sm:$0xff] %vm1647, %v7435
        %7468 = vst.msk [vmem:[%s217 + $0x70] sm:$0xff] %vm1647, %v7436
        %7469 = vst.msk [vmem:[%s217 + $0x78] sm:$0xff] %vm1647, %v7437
        %7470 = vst.msk [vmem:[%s217 + $0x80] sm:$0xff] %vm1647, %v7438
        %7471 = vst.msk [vmem:[%s217 + $0x88] sm:$0xff] %vm1647, %v7439
        %7472 = vst.msk [vmem:[%s217 + $0x90] sm:$0xff] %vm1647, %v7440
        %7473 = vst.msk [vmem:[%s217 + $0x98] sm:$0xff] %vm1647, %v7441
        %7474 = vst.msk [vmem:[%s217 + $0xa0] sm:$0xff] %vm1647, %v7442
        %7475 = vst.msk [vmem:[%s217 + $0xa8] sm:$0xff] %vm1647, %v7443
        %7476 = vst.msk [vmem:[%s217 + $0xb0] sm:$0xff] %vm1647, %v7444
        %7477 = vst.msk [vmem:[%s217 + $0xb8] sm:$0xff] %vm1647, %v7445
        %7478 = vst.msk [vmem:[%s217 + $0xc0] sm:$0xff] %vm1647, %v7446
        %7479 = vst.msk [vmem:[%s217 + $0xc8] sm:$0xff] %vm1647, %v7447
        %7480 = vst.msk [vmem:[%s217 + $0xd0] sm:$0xff] %vm1647, %v7448
        %7481 = vst.msk [vmem:[%s217 + $0xd8] sm:$0xff] %vm1647, %v7449
        %7482 = vst.msk [vmem:[%s217 + $0xe0] sm:$0xff] %vm1647, %v7450
        %7483 = vst.msk [vmem:[%s217 + $0xe8] sm:$0xff] %vm1647, %v7451
        %7484 = vst.msk [vmem:[%s217 + $0xf0] sm:$0xff] %vm1647, %v7452
        %7485 = vst.msk [vmem:[%s217 + $0xf8] sm:$0xff] %vm1647, %v7453
        %s7486 = sand.u32 %s97, 1
        %s7487 = scalar_lea.sflag [#allocation6], %s7486
        %s7488 = sand.u32 %s97, 1
        %s7489 = smul.addr %s7488, 256
        %s7490 = scalar_lea.vmem [#allocation10], %s7489
        // Predicated region
        $region45: #{residual_block.1} parent=31 // pred_check
          %p7491 = pneg %p107
        $region46: #{residual_block.1} parent=31 // pred_check_branch
          %7493 = sbr.rel (%p7491) target = $region48
        $region47: #{residual_block.1} parent=31 // pred_region
          %s7495 = ssub.s32 4096, 4096
          %7496 = vsyncadd %s7487, %s7495
          %s7497 = smul.addr %s21, 32
          %s7498 = smul.addr %s7497, 128
          %s7499 = scalar_lea.hbm %s3, %s7498
          %s7500 = sshll.u32 %s7490, 4
          %s7501 = int_to_ptr.vmem [resolvable:$true] %s7500
          %7506 = dma.vmem_to_hbm [thread:$0]  %s7501, 4096, %s7499, %s7487, 128, 128, 8
        $region48: #{residual_block.1} parent=31 // pred_fallthru
          _
      $region32: #{residual_block.1} parent=5 // pred_fallthru
        _
      %p7507 = scmp.le.s32.totalorder 2, %s16
      // Predicated region
      $region49: #{residual_block.1} parent=5 // pred_check
        %p7508 = pneg %p7507
      $region50: #{residual_block.1} parent=5 // pred_check_branch
        %7510 = sbr.rel (%p7508) target = $region52
      $region51: #{residual_block.1} parent=5 // pred_region
        %s7511 = ssub.s32 %s16, 2
        // Predicated region
        $region53: #{residual_block.1} parent=51 // pred_check
          %p7512 = pneg %p113
        $region54: #{residual_block.1} parent=51 // pred_check_branch
          %7514 = sbr.rel (%p7512) target = $region56
        $region55: #{residual_block.1} parent=51 // pred_region
          %s7515 = sand.u32 %s98, 1
          %s7516 = scalar_lea.sflag [#allocation6], %s7515
          %s7517 = sand.u32 %s98, 1
          %s7518 = smul.addr %s7517, 256
          %s7519 = scalar_lea.vmem [#allocation10], %s7518
          %7520 = dma.done %s7516, 4096
        $region56: #{residual_block.1} parent=51 // pred_fallthru
          _
      $region52: #{residual_block.1} parent=5 // pred_fallthru
        _
    $region6: #{residual_block.1} parent=1 // loop_footer
      %s20 = sadd.s32 1, %s16
    $region7: #{residual_block.1} parent=1 // loop_footer_branch
      %15 = sbr.rel target = $region3
    $region8: #{residual_block.1} parent=1 // loop_exit
      _
    %7521 = vsyncpa [#allocation5], 1
    %s7522 = scalar_lea.sflag [#allocation5], 1
    %7523 = vsyncpa %s7522, 1
    %7524 = vsyncpa [#allocation8], 1
    %7525 = vsyncpa [#allocation6], 1
    %s7526 = scalar_lea.sflag [#allocation6], 1
    %7527 = vsyncpa %s7526, 1

</llo_original>
